<compile_context>
chip_gen: v7x
topology: tpu7x:2x2x1
jax: 0.10.0
libtpu: 0.0.40
codegen_flags: <defaults>
</compile_context>

<pallas_src>
import functools

import jax
import jax.numpy as jnp
from jax.experimental import pallas as pl
from jax.experimental.pallas import tpu as pltpu


# ----------------------------------------------------------------------------
# In-kernel helpers
# ----------------------------------------------------------------------------

def _layernorm(x, g, b, eps):
    mu = jnp.mean(x, axis=-1, keepdims=True)
    var = jnp.mean((x - mu) ** 2, axis=-1, keepdims=True)
    return (x - mu) * jax.lax.rsqrt(var + eps) * g + b


def _gelu_new(x):
    # GPT2 "gelu_new": 0.5*x*(1 + tanh(sqrt(2/pi)*(x + 0.044715*x^3)))  (f32)
    return 0.5 * x * (1.0 + jnp.tanh(0.7978845608028654 * (x + 0.044715 * x * x * x)))


def _mxu(a, w):
    # bf16 operands on the MXU, f32 accumulation.
    return jnp.dot(a.astype(jnp.bfloat16), w.astype(jnp.bfloat16),
                   preferred_element_type=jnp.float32)


# ----------------------------------------------------------------------------
# Fused LLM4TS kernel.  grid = (row_tiles,); one grid step runs the whole forward
# for a tile of (batch*channel) rows with all layer weights resident in VMEM.
# ----------------------------------------------------------------------------

def _llm4ts_kernel(
    stats_ref, patches_ref,
    in_w_ref, in_b_ref, wpe_ref,
    ln1_g_ref, ln1_b_ref, qkv_w_ref, qkv_b_ref, proj_w_ref, proj_b_ref,
    ln2_g_ref, ln2_b_ref, fc_w_ref, fc_b_ref, fc2_w_ref, fc2_b_ref,
    lnf_g_ref, lnf_b_ref, out_w_ref, out_b_ref,
    o_ref,
    *, n_heads, n_layers, revin_eps, ln_eps,
):
    TB, N, P = patches_ref.shape
    d = in_w_ref.shape[1]
    H = n_heads
    Dh = d // H
    R = TB * N
    scale = 1.0 / float(Dh) ** 0.5

    # Packed per-row scalars: [mean, std, revin_w, revin_b]  (TB, 4) -> tiny lane slices.
    st = stats_ref[...].astype(jnp.float32)
    mu, std = st[:, 0:1], st[:, 1:2]
    rw, rb = st[:, 2:3], st[:, 3:4]

    # --------------- RevIN 'norm' + patch embedding + positional embedding ---------------
    pr = patches_ref[...].astype(jnp.float32)                       # raw patches (TB, N, P)
    pn = (pr - mu[:, :, None]) / std[:, :, None] * rw[:, :, None] + rb[:, :, None]
    h = _mxu(pn.reshape(R, P), in_w_ref[...]) + in_b_ref[...]       # (R, d) f32
    h = (h.reshape(TB, N, d) + wpe_ref[...][None].astype(jnp.float32)).reshape(R, d)

    # causal mask (static)
    rr = jax.lax.broadcasted_iota(jnp.int32, (N, N), 0)
    cc = jax.lax.broadcasted_iota(jnp.int32, (N, N), 1)
    causal = (cc <= rr)[None]                                       # (1, N, N)

    # --------------------- GPT2 blocks: static unroll over layers ------------------------
    # Per-head weight stacks (pre-split in the wrapper) avoid any non-128-aligned lane
    # slicing of QKV and any head-merge concatenate: each head's context is folded
    # directly into the output-projection accumulator.
    for l in range(n_layers):
        a_in = _layernorm(h, ln1_g_ref[l], ln1_b_ref[l], ln_eps).astype(jnp.bfloat16)
        attn = jnp.zeros((R, d), jnp.float32)
        for hh in range(H):
            iq = (l * 3 + 0) * H + hh
            ik = (l * 3 + 1) * H + hh
            iv = (l * 3 + 2) * H + hh
            q = (jnp.dot(a_in, qkv_w_ref[iq], preferred_element_type=jnp.float32)
                 + qkv_b_ref[iq]).reshape(TB, N, Dh)
            k = (jnp.dot(a_in, qkv_w_ref[ik], preferred_element_type=jnp.float32)
                 + qkv_b_ref[ik]).reshape(TB, N, Dh)
            v = (jnp.dot(a_in, qkv_w_ref[iv], preferred_element_type=jnp.float32)
                 + qkv_b_ref[iv]).reshape(TB, N, Dh)
            s = jnp.einsum("bnd,bmd->bnm", q.astype(jnp.bfloat16), k.astype(jnp.bfloat16),
                           preferred_element_type=jnp.float32) * scale
            s = jnp.where(causal, s, -1e30)
            s = s - jnp.max(s, axis=-1, keepdims=True)
            p = jnp.exp(s)
            p = p / jnp.sum(p, axis=-1, keepdims=True)              # exact softmax denom
            o_h = jnp.einsum("bnm,bmd->bnd", p.astype(jnp.bfloat16), v.astype(jnp.bfloat16),
                             preferred_element_type=jnp.float32).reshape(R, Dh)
            # fold this head's rows of the output projection (no head concat needed)
            attn = attn + jnp.dot(o_h.astype(jnp.bfloat16), proj_w_ref[l * H + hh],
                                  preferred_element_type=jnp.float32)
        h = h + attn + proj_b_ref[l]

        m_in = _layernorm(h, ln2_g_ref[l], ln2_b_ref[l], ln_eps)
        m_h = _gelu_new(_mxu(m_in, fc_w_ref[l]) + fc_b_ref[l]).astype(jnp.bfloat16)
        h = h + jnp.dot(m_h, fc2_w_ref[l], preferred_element_type=jnp.float32) + fc2_b_ref[l]

    # ------------- final LN + out projection + RevIN 'denorm' (lane-dense store) ---------
    hf = _layernorm(h, lnf_g_ref[...], lnf_b_ref[...], ln_eps)
    out = (_mxu(hf, out_w_ref[...]) + out_b_ref[...]).reshape(TB, N, P)
    y3 = (out - rb[:, :, None]) / (rw[:, :, None] + revin_eps * revin_eps)
    y3 = y3 * std[:, :, None] + mu[:, :, None]
    # Assemble the lane-dense (TB, N*P) output row (one dense store instead of N*P/128
    # masked 4-lane stores).  N is small here; for large N prefer a reshape/grid split.
    y = jnp.concatenate([y3[:, n, :] for n in range(N)], axis=-1)   # (TB, N*P)
    o_ref[...] = y.astype(o_ref.dtype)


# ----------------------------------------------------------------------------
# Wrapper: JAX glue (transpose / unfold / per-row stats) + one pallas_call
# ----------------------------------------------------------------------------

def _pick_row_tile(bm, target=64):
    """Row tile for the 'parallel' grid axis.

    Prefers >= 2 sublane(8)-aligned tiles so both v7x TensorCores get work (accepting
    that each extra tile re-fetches the layer weights); falls back to one full tile
    (always BlockSpec-legal).  For bm <= 8 a single tile is used and one v7x core idles.
    """
    upper = min(target, bm // 2)
    upper -= upper % 8
    for t in range(upper, 7, -8):
        if bm % t == 0:
            return t
    return bm


def model_forward(params, x, cfg):
    B, L, M = x.shape
    P, S = cfg["patch_len"], cfg["stride"]
    N = (L - P) // S + 1
    d = cfg["d_model"]
    H = cfg["n_heads"]
    Dh = d // H
    LYR = cfg["llm_layers"]
    BM = B * M
    NP = N * P
    assert LYR >= 1 and d % H == 0

    # (b l m) -> (b m l): one raw series per (batch, channel) row, L on lanes.
    xt = jnp.transpose(x, (0, 2, 1)).reshape(BM, L)
    # Per-row RevIN statistics (full series, biased variance) -- correct for any
    # stride/patch_len; packed with the per-channel affine params into one (BM, 4) array.
    mu = jnp.mean(xt, axis=-1, keepdims=True)
    std = jnp.sqrt(jnp.mean((xt - mu) ** 2, axis=-1, keepdims=True) + 1e-5)
    rw = jnp.tile(params["revin_w"], B).reshape(BM, 1)
    rb = jnp.tile(params["revin_b"], B).reshape(BM, 1)
    row_stats = jnp.concatenate([mu, std, rw, rb], axis=-1)          # (BM, 4)

    # Unfold the RAW series into patches; RevIN's per-row normalisation commutes with
    # patch extraction and is applied inside the kernel.
    idx = jnp.arange(N)[:, None] * S + jnp.arange(P)[None, :]
    patches = xt[:, idx]                                             # (BM, N, P)
    wpe = params["wpe"][:N]                                          # (N, d)

    TB = _pick_row_tile(BM)
    grid = (BM // TB,)

    def _full(shape):
        return pl.BlockSpec(shape, lambda i, n=len(shape): (0,) * n)

    rows2 = lambda i: (i, 0)
    rows3 = lambda i: (i, 0, 0)

    in_specs = [
        pl.BlockSpec((TB, 4), rows2),          # packed per-row [mean, std, w, b]
        pl.BlockSpec((TB, N, P), rows3),       # raw patches
        _full((P, d)),                         # in_layer weight
        _full((1, d)),                         # in_layer bias
        _full((N, d)),                         # positional embedding
        _full((LYR, 1, d)),                    # ln1 gamma
        _full((LYR, 1, d)),                    # ln1 beta
        _full((LYR * 3 * H, d, Dh)),           # per-(layer, q/k/v, head) weights
        _full((LYR * 3 * H, 1, Dh)),           # per-(layer, q/k/v, head) biases
        _full((LYR * H, Dh, d)),               # per-(layer, head) out-proj rows
        _full((LYR, 1, d)),                    # out-proj bias
        _full((LYR, 1, d)),                    # ln2 gamma
        _full((LYR, 1, d)),                    # ln2 beta
        _full((LYR, d, 4 * d)),                # mlp c_fc weight
        _full((LYR, 1, 4 * d)),                # mlp c_fc bias
        _full((LYR, 4 * d, d)),                # mlp c_proj weight
        _full((LYR, 1, d)),                    # mlp c_proj bias
        _full((1, d)),                         # ln_f gamma
        _full((1, d)),                         # ln_f beta
        _full((d, P)),                         # out_layer weight
        _full((1, P)),                         # out_layer bias
    ]
    out_specs = pl.BlockSpec((TB, NP), rows2)  # lane-dense output rows

    kernel = functools.partial(
        _llm4ts_kernel, n_heads=H, n_layers=LYR, revin_eps=1e-5, ln_eps=1e-5)

    # NOTE: all layer weights are VMEM-resident (grid has no layer axis).  For GPT2-scale
    # d_model (weights >> VMEM) switch back to a layer-pipelined ("arbitrary") grid axis
    # with per-layer weight blocks; here the whole stack is a few hundred KiB.
    out = pl.pallas_call(
        kernel,
        grid=grid,
        in_specs=in_specs,
        out_specs=out_specs,
        out_shape=jax.ShapeDtypeStruct((BM, NP), x.dtype),
        compiler_params=pltpu.CompilerParams(
            dimension_semantics=("parallel",),
            # fits v7x's 64 MiB physical VMEM with headroom; plenty for v5e/v6e (128 MiB)
            vmem_limit_bytes=48 * 1024 * 1024,
        ),
    )(
        row_stats, patches,
        params["in_w"], params["in_b"], wpe,
        params["ln1_g"], params["ln1_b"], params["qkv_w"], params["qkv_b"],
        params["proj_w"], params["proj_b"], params["ln2_g"], params["ln2_b"],
        params["fc_w"], params["fc_b"], params["fc2_w"], params["fc2_b"],
        params["lnf_g"], params["lnf_b"], params["out_w"], params["out_b"],
    )
    return out.reshape(B, M, N, P)


# ----------------------------------------------------------------------------
# Parameter init (deterministic GPT2-style std=0.02; matmul weights bf16, norms/biases
# f32).  QKV / out-proj weights are stored pre-split per head (layer-major, then q/k/v,
# then head) so the kernel never slices lanes at non-aligned offsets.
# ----------------------------------------------------------------------------

def init_params(key, cfg):
    d = cfg["d_model"]
    P = cfg["patch_len"]
    M = cfg["enc_in"]
    LYR = cfg["llm_layers"]
    H = cfg["n_heads"]
    Dh = d // H

    def nrm(k, shape, dtype=jnp.bfloat16):
        return (0.02 * jax.random.normal(k, shape, jnp.float32)).astype(dtype)

    ks = jax.random.split(key, 7)
    return {
        "revin_w": jnp.ones((M,), jnp.float32),
        "revin_b": jnp.zeros((M,), jnp.float32),
        "in_w": nrm(ks[0], (P, d)),
        "in_b": jnp.zeros((1, d), jnp.float32),
        "out_w": nrm(ks[1], (d, P)),
        "out_b": jnp.zeros((1, P), jnp.float32),
        "wpe": nrm(ks[2], (cfg["n_positions"], d), jnp.float32),
        "lnf_g": jnp.ones((1, d), jnp.float32),
        "lnf_b": jnp.zeros((1, d), jnp.float32),
        "ln1_g": jnp.ones((LYR, 1, d), jnp.float32),
        "ln1_b": jnp.zeros((LYR, 1, d), jnp.float32),
        "qkv_w": nrm(ks[3], (LYR * 3 * H, d, Dh)),
        "qkv_b": jnp.zeros((LYR * 3 * H, 1, Dh), jnp.float32),
        "proj_w": nrm(ks[4], (LYR * H, Dh, d)),
        "proj_b": jnp.zeros((LYR, 1, d), jnp.float32),
        "ln2_g": jnp.ones((LYR, 1, d), jnp.float32),
        "ln2_b": jnp.zeros((LYR, 1, d), jnp.float32),
        "fc_w": nrm(ks[5], (LYR, d, 4 * d)),
        "fc_b": jnp.zeros((LYR, 1, 4 * d), jnp.float32),
        "fc2_w": nrm(ks[6], (LYR, 4 * d, d)),
        "fc2_b": jnp.zeros((LYR, 1, d), jnp.float32),
    }


# ----------------------------------------------------------------------------
# Main
# ----------------------------------------------------------------------------

if __name__ == "__main__":
    cfg = {
        "seq_len": 16,
        "patch_len": 4,
        "stride": 4,
        "enc_in": 4,       # M channels
        "d_model": 32,
        "n_heads": 2,
        "llm_layers": 2,
        "n_positions": 64,
    }

    key = jax.random.PRNGKey(0)
    k_x, k_p = jax.random.split(key)
    B, L, M = 2, cfg["seq_len"], cfg["enc_in"]
    x = jax.random.normal(k_x, (B, L, M), jnp.float32)
    params = init_params(k_p, cfg)

    fwd = jax.jit(functools.partial(model_forward, cfg=cfg))
    out = jax.block_until_ready(fwd(params, x))

    patch_num = (L - cfg["patch_len"]) // cfg["stride"] + 1
    assert out.shape == (B, M, patch_num, cfg["patch_len"]), out.shape
    assert bool(jnp.all(jnp.isfinite(out)))
    print("KERNEL_OK")
</pallas_src>

<mosaic_0001>
module attributes {stable_mosaic.version = 11 : i64} {
  func.func @_llm4ts_kernel(%arg0: i32, %arg1: memref<8x4xf32, #tpu.memory_space<vmem>>, %arg2: memref<8x4x4xf32, #tpu.memory_space<vmem>>, %arg3: memref<4x32xbf16, #tpu.memory_space<vmem>>, %arg4: memref<1x32xf32, #tpu.memory_space<vmem>>, %arg5: memref<4x32xf32, #tpu.memory_space<vmem>>, %arg6: memref<2x1x32xf32, #tpu.memory_space<vmem>>, %arg7: memref<2x1x32xf32, #tpu.memory_space<vmem>>, %arg8: memref<12x32x16xbf16, #tpu.memory_space<vmem>>, %arg9: memref<12x1x16xf32, #tpu.memory_space<vmem>>, %arg10: memref<4x16x32xbf16, #tpu.memory_space<vmem>>, %arg11: memref<2x1x32xf32, #tpu.memory_space<vmem>>, %arg12: memref<2x1x32xf32, #tpu.memory_space<vmem>>, %arg13: memref<2x1x32xf32, #tpu.memory_space<vmem>>, %arg14: memref<2x32x128xbf16, #tpu.memory_space<vmem>>, %arg15: memref<2x1x128xf32, #tpu.memory_space<vmem>>, %arg16: memref<2x128x32xbf16, #tpu.memory_space<vmem>>, %arg17: memref<2x1x32xf32, #tpu.memory_space<vmem>>, %arg18: memref<1x32xf32, #tpu.memory_space<vmem>>, %arg19: memref<1x32xf32, #tpu.memory_space<vmem>>, %arg20: memref<32x4xbf16, #tpu.memory_space<vmem>>, %arg21: memref<1x4xf32, #tpu.memory_space<vmem>>, %arg22: memref<8x16xf32, #tpu.memory_space<vmem>>) attributes {dimension_semantics = [#tpu.dimension_semantics<parallel>], iteration_bounds = array<i64: 1>, scalar_prefetch = 0 : i64, scratch_operands = 0 : i64, tpu.core_type = #tpu.core_type<tc>, window_params = [{transform_indices = @transform_0, window_bounds = array<i64: 8, 4>}, {transform_indices = @transform_1, window_bounds = array<i64: 8, 4, 4>}, {pipeline_mode = #tpu.pipeline_mode<synchronous>, transform_indices = @transform_2, window_bounds = array<i64: 4, 32>}, {pipeline_mode = #tpu.pipeline_mode<synchronous>, transform_indices = @transform_3, window_bounds = array<i64: 1, 32>}, {pipeline_mode = #tpu.pipeline_mode<synchronous>, transform_indices = @transform_4, window_bounds = array<i64: 4, 32>}, {pipeline_mode = #tpu.pipeline_mode<synchronous>, transform_indices = @transform_5, window_bounds = array<i64: 2, 1, 32>}, {pipeline_mode = #tpu.pipeline_mode<synchronous>, transform_indices = @transform_6, window_bounds = array<i64: 2, 1, 32>}, {pipeline_mode = #tpu.pipeline_mode<synchronous>, transform_indices = @transform_7, window_bounds = array<i64: 12, 32, 16>}, {pipeline_mode = #tpu.pipeline_mode<synchronous>, transform_indices = @transform_8, window_bounds = array<i64: 12, 1, 16>}, {pipeline_mode = #tpu.pipeline_mode<synchronous>, transform_indices = @transform_9, window_bounds = array<i64: 4, 16, 32>}, {pipeline_mode = #tpu.pipeline_mode<synchronous>, transform_indices = @transform_10, window_bounds = array<i64: 2, 1, 32>}, {pipeline_mode = #tpu.pipeline_mode<synchronous>, transform_indices = @transform_11, window_bounds = array<i64: 2, 1, 32>}, {pipeline_mode = #tpu.pipeline_mode<synchronous>, transform_indices = @transform_12, window_bounds = array<i64: 2, 1, 32>}, {pipeline_mode = #tpu.pipeline_mode<synchronous>, transform_indices = @transform_13, window_bounds = array<i64: 2, 32, 128>}, {pipeline_mode = #tpu.pipeline_mode<synchronous>, transform_indices = @transform_14, window_bounds = array<i64: 2, 1, 128>}, {pipeline_mode = #tpu.pipeline_mode<synchronous>, transform_indices = @transform_15, window_bounds = array<i64: 2, 128, 32>}, {pipeline_mode = #tpu.pipeline_mode<synchronous>, transform_indices = @transform_16, window_bounds = array<i64: 2, 1, 32>}, {pipeline_mode = #tpu.pipeline_mode<synchronous>, transform_indices = @transform_17, window_bounds = array<i64: 1, 32>}, {pipeline_mode = #tpu.pipeline_mode<synchronous>, transform_indices = @transform_18, window_bounds = array<i64: 1, 32>}, {pipeline_mode = #tpu.pipeline_mode<synchronous>, transform_indices = @transform_19, window_bounds = array<i64: 32, 4>}, {pipeline_mode = #tpu.pipeline_mode<synchronous>, transform_indices = @transform_20, window_bounds = array<i64: 1, 4>}, {transform_indices = @transform_21, window_bounds = array<i64: 8, 16>}]} {
    %c0 = arith.constant 0 : index
    %c0_0 = arith.constant 0 : index
    %0 = vector.load %arg1[%c0, %c0_0] : memref<8x4xf32, #tpu.memory_space<vmem>>, vector<8x4xf32>
    %1 = vector.extract_strided_slice %0 {offsets = [0, 0], sizes = [8, 1], strides = [1, 1]} : vector<8x4xf32> to vector<8x1xf32>
    %2 = vector.extract_strided_slice %0 {offsets = [0, 1], sizes = [8, 1], strides = [1, 1]} : vector<8x4xf32> to vector<8x1xf32>
    %3 = vector.extract_strided_slice %0 {offsets = [0, 2], sizes = [8, 1], strides = [1, 1]} : vector<8x4xf32> to vector<8x1xf32>
    %4 = vector.extract_strided_slice %0 {offsets = [0, 3], sizes = [8, 1], strides = [1, 1]} : vector<8x4xf32> to vector<8x1xf32>
    %c0_1 = arith.constant 0 : index
    %c0_2 = arith.constant 0 : index
    %c0_3 = arith.constant 0 : index
    %5 = vector.load %arg2[%c0_1, %c0_2, %c0_3] : memref<8x4x4xf32, #tpu.memory_space<vmem>>, vector<8x4x4xf32>
    %6 = vector.shape_cast %1 : vector<8x1xf32> to vector<8x1x1xf32>
    %7 = vector.broadcast %6 : vector<8x1x1xf32> to vector<8x4x4xf32>
    %8 = arith.subf %5, %7 : vector<8x4x4xf32>
    %9 = vector.shape_cast %2 : vector<8x1xf32> to vector<8x1x1xf32>
    %10 = vector.broadcast %9 : vector<8x1x1xf32> to vector<8x4x4xf32>
    %11 = arith.divf %8, %10 : vector<8x4x4xf32>
    %12 = vector.shape_cast %3 : vector<8x1xf32> to vector<8x1x1xf32>
    %13 = vector.broadcast %12 : vector<8x1x1xf32> to vector<8x4x4xf32>
    %14 = arith.mulf %11, %13 : vector<8x4x4xf32>
    %15 = vector.shape_cast %4 : vector<8x1xf32> to vector<8x1x1xf32>
    %16 = vector.broadcast %15 : vector<8x1x1xf32> to vector<8x4x4xf32>
    %17 = arith.addf %14, %16 : vector<8x4x4xf32>
    %18 = vector.shape_cast %17 : vector<8x4x4xf32> to vector<32x4xf32>
    %c0_4 = arith.constant 0 : index
    %c0_5 = arith.constant 0 : index
    %19 = vector.load %arg3[%c0_4, %c0_5] : memref<4x32xbf16, #tpu.memory_space<vmem>>, vector<4x32xbf16>
    %20 = arith.truncf %18 : vector<32x4xf32> to vector<32x4xbf16>
    %cst = arith.constant dense<0.000000e+00> : vector<32x32xf32>
    %21 = tpu.matmul %20, %19, %cst {dimension_numbers = #tpu.dot_dimension_numbers<[1], [0], [0], [1], [0, 0, 1, 1], [], []>} : vector<32x4xbf16>, vector<4x32xbf16>, vector<32x32xf32> -> vector<32x32xf32>
    %c0_6 = arith.constant 0 : index
    %c0_7 = arith.constant 0 : index
    %22 = vector.load %arg4[%c0_6, %c0_7] : memref<1x32xf32, #tpu.memory_space<vmem>>, vector<1x32xf32>
    %23 = vector.broadcast %22 : vector<1x32xf32> to vector<32x32xf32>
    %24 = arith.addf %21, %23 : vector<32x32xf32>
    %25 = vector.shape_cast %24 : vector<32x32xf32> to vector<8x4x32xf32>
    %c0_8 = arith.constant 0 : index
    %c0_9 = arith.constant 0 : index
    %26 = vector.load %arg5[%c0_8, %c0_9] : memref<4x32xf32, #tpu.memory_space<vmem>>, vector<4x32xf32>
    %27 = vector.shape_cast %26 : vector<4x32xf32> to vector<1x4x32xf32>
    %28 = vector.broadcast %27 : vector<1x4x32xf32> to vector<8x4x32xf32>
    %29 = arith.addf %25, %28 : vector<8x4x32xf32>
    %30 = vector.shape_cast %29 : vector<8x4x32xf32> to vector<32x32xf32>
    %31 = tpu.iota {dimensions = array<i32: 0>} : vector<4x4xi32>
    %32 = tpu.iota {dimensions = array<i32: 1>} : vector<4x4xi32>
    %33 = arith.cmpi sle, %32, %31 : vector<4x4xi32>
    %34 = vector.shape_cast %33 : vector<4x4xi1> to vector<1x4x4xi1>
    %c0_10 = arith.constant 0 : index
    %c0_11 = arith.constant 0 : index
    %c0_12 = arith.constant 0 : index
    %35 = vector.load %arg6[%c0_10, %c0_11, %c0_12] : memref<2x1x32xf32, #tpu.memory_space<vmem>>, vector<1x1x32xf32>
    %36 = vector.shape_cast %35 : vector<1x1x32xf32> to vector<1x32xf32>
    %c0_13 = arith.constant 0 : index
    %c0_14 = arith.constant 0 : index
    %c0_15 = arith.constant 0 : index
    %37 = vector.load %arg7[%c0_13, %c0_14, %c0_15] : memref<2x1x32xf32, #tpu.memory_space<vmem>>, vector<1x1x32xf32>
    %38 = vector.shape_cast %37 : vector<1x1x32xf32> to vector<1x32xf32>
    %cst_16 = arith.constant dense<0.000000e+00> : vector<32xf32>
    %39 = vector.multi_reduction <add>, %30, %cst_16 [1] : vector<32x32xf32> to vector<32xf32>
    %40 = vector.shape_cast %39 : vector<32xf32> to vector<32x1xf32>
    %cst_17 = arith.constant 3.200000e+01 : f32
    %41 = vector.broadcast %cst_17 : f32 to vector<32x1xf32>
    %42 = arith.divf %40, %41 : vector<32x1xf32>
    %43 = vector.broadcast %42 : vector<32x1xf32> to vector<32x32xf32>
    %44 = arith.subf %30, %43 : vector<32x32xf32>
    %45 = arith.mulf %44, %44 : vector<32x32xf32>
    %cst_18 = arith.constant dense<0.000000e+00> : vector<32xf32>
    %46 = vector.multi_reduction <add>, %45, %cst_18 [1] : vector<32x32xf32> to vector<32xf32>
    %47 = vector.shape_cast %46 : vector<32xf32> to vector<32x1xf32>
    %cst_19 = arith.constant 3.200000e+01 : f32
    %48 = vector.broadcast %cst_19 : f32 to vector<32x1xf32>
    %49 = arith.divf %47, %48 : vector<32x1xf32>
    %50 = vector.broadcast %42 : vector<32x1xf32> to vector<32x32xf32>
    %51 = arith.subf %30, %50 : vector<32x32xf32>
    %cst_20 = arith.constant 9.99999974E-6 : f32
    %52 = vector.broadcast %cst_20 : f32 to vector<32x1xf32>
    %53 = arith.addf %49, %52 : vector<32x1xf32>
    %54 = math.rsqrt %53 : vector<32x1xf32>
    %55 = vector.broadcast %54 : vector<32x1xf32> to vector<32x32xf32>
    %56 = arith.mulf %51, %55 : vector<32x32xf32>
    %57 = vector.broadcast %36 : vector<1x32xf32> to vector<32x32xf32>
    %58 = arith.mulf %56, %57 : vector<32x32xf32>
    %59 = vector.broadcast %38 : vector<1x32xf32> to vector<32x32xf32>
    %60 = arith.addf %58, %59 : vector<32x32xf32>
    %61 = arith.truncf %60 : vector<32x32xf32> to vector<32x32xbf16>
    %cst_21 = arith.constant 0.000000e+00 : f32
    %62 = vector.broadcast %cst_21 : f32 to vector<32x32xf32>
    %c0_22 = arith.constant 0 : index
    %c0_23 = arith.constant 0 : index
    %c0_24 = arith.constant 0 : index
    %63 = vector.load %arg8[%c0_22, %c0_23, %c0_24] : memref<12x32x16xbf16, #tpu.memory_space<vmem>>, vector<1x32x16xbf16>
    %64 = vector.shape_cast %63 : vector<1x32x16xbf16> to vector<32x16xbf16>
    %cst_25 = arith.constant dense<0.000000e+00> : vector<32x16xf32>
    %65 = tpu.matmul %61, %64, %cst_25 {dimension_numbers = #tpu.dot_dimension_numbers<[1], [0], [0], [1], [0, 0, 1, 1], [], []>} : vector<32x32xbf16>, vector<32x16xbf16>, vector<32x16xf32> -> vector<32x16xf32>
    %c0_26 = arith.constant 0 : index
    %c0_27 = arith.constant 0 : index
    %c0_28 = arith.constant 0 : index
    %66 = vector.load %arg9[%c0_26, %c0_27, %c0_28] : memref<12x1x16xf32, #tpu.memory_space<vmem>>, vector<1x1x16xf32>
    %67 = vector.shape_cast %66 : vector<1x1x16xf32> to vector<1x16xf32>
    %68 = vector.broadcast %67 : vector<1x16xf32> to vector<32x16xf32>
    %69 = arith.addf %65, %68 : vector<32x16xf32>
    %70 = vector.shape_cast %69 : vector<32x16xf32> to vector<8x4x16xf32>
    %c2 = arith.constant 2 : index
    %c0_29 = arith.constant 0 : index
    %c0_30 = arith.constant 0 : index
    %71 = vector.load %arg8[%c2, %c0_29, %c0_30] : memref<12x32x16xbf16, #tpu.memory_space<vmem>>, vector<1x32x16xbf16>
    %72 = vector.shape_cast %71 : vector<1x32x16xbf16> to vector<32x16xbf16>
    %cst_31 = arith.constant dense<0.000000e+00> : vector<32x16xf32>
    %73 = tpu.matmul %61, %72, %cst_31 {dimension_numbers = #tpu.dot_dimension_numbers<[1], [0], [0], [1], [0, 0, 1, 1], [], []>} : vector<32x32xbf16>, vector<32x16xbf16>, vector<32x16xf32> -> vector<32x16xf32>
    %c2_32 = arith.constant 2 : index
    %c0_33 = arith.constant 0 : index
    %c0_34 = arith.constant 0 : index
    %74 = vector.load %arg9[%c2_32, %c0_33, %c0_34] : memref<12x1x16xf32, #tpu.memory_space<vmem>>, vector<1x1x16xf32>
    %75 = vector.shape_cast %74 : vector<1x1x16xf32> to vector<1x16xf32>
    %76 = vector.broadcast %75 : vector<1x16xf32> to vector<32x16xf32>
    %77 = arith.addf %73, %76 : vector<32x16xf32>
    %78 = vector.shape_cast %77 : vector<32x16xf32> to vector<8x4x16xf32>
    %c4 = arith.constant 4 : index
    %c0_35 = arith.constant 0 : index
    %c0_36 = arith.constant 0 : index
    %79 = vector.load %arg8[%c4, %c0_35, %c0_36] : memref<12x32x16xbf16, #tpu.memory_space<vmem>>, vector<1x32x16xbf16>
    %80 = vector.shape_cast %79 : vector<1x32x16xbf16> to vector<32x16xbf16>
    %cst_37 = arith.constant dense<0.000000e+00> : vector<32x16xf32>
    %81 = tpu.matmul %61, %80, %cst_37 {dimension_numbers = #tpu.dot_dimension_numbers<[1], [0], [0], [1], [0, 0, 1, 1], [], []>} : vector<32x32xbf16>, vector<32x16xbf16>, vector<32x16xf32> -> vector<32x16xf32>
    %c4_38 = arith.constant 4 : index
    %c0_39 = arith.constant 0 : index
    %c0_40 = arith.constant 0 : index
    %82 = vector.load %arg9[%c4_38, %c0_39, %c0_40] : memref<12x1x16xf32, #tpu.memory_space<vmem>>, vector<1x1x16xf32>
    %83 = vector.shape_cast %82 : vector<1x1x16xf32> to vector<1x16xf32>
    %84 = vector.broadcast %83 : vector<1x16xf32> to vector<32x16xf32>
    %85 = arith.addf %81, %84 : vector<32x16xf32>
    %86 = vector.shape_cast %85 : vector<32x16xf32> to vector<8x4x16xf32>
    %87 = arith.truncf %70 : vector<8x4x16xf32> to vector<8x4x16xbf16>
    %88 = arith.truncf %78 : vector<8x4x16xf32> to vector<8x4x16xbf16>
    "tpu.trace_start"() <{level = 10 : i32, message = "bnd,bmd->bnm"}> : () -> ()
    %cst_41 = arith.constant dense<0.000000e+00> : vector<8x4x4xf32>
    %89 = tpu.matmul %87, %88, %cst_41 {dimension_numbers = #tpu.dot_dimension_numbers<[2], [2], [1], [1], [0, 0, 0, 1, 1, 1], [0], [0]>} : vector<8x4x16xbf16>, vector<8x4x16xbf16>, vector<8x4x4xf32> -> vector<8x4x4xf32>
    "tpu.trace_stop"() : () -> ()
    %cst_42 = arith.constant 2.500000e-01 : f32
    %90 = vector.broadcast %cst_42 : f32 to vector<8x4x4xf32>
    %91 = arith.mulf %89, %90 : vector<8x4x4xf32>
    %cst_43 = arith.constant -1.000000e+30 : f32
    %92 = vector.shape_cast %34 : vector<1x4x4xi1> to vector<1x4x4xi1>
    %93 = vector.broadcast %92 : vector<1x4x4xi1> to vector<8x4x4xi1>
    %94 = vector.broadcast %cst_43 : f32 to vector<8x4x4xf32>
    %95 = arith.select %93, %91, %94 : vector<8x4x4xi1>, vector<8x4x4xf32>
    %cst_44 = arith.constant dense<0xFF800000> : vector<8x4xf32>
    %96 = vector.multi_reduction <maximumf>, %95, %cst_44 [2] : vector<8x4x4xf32> to vector<8x4xf32>
    %97 = vector.shape_cast %96 : vector<8x4xf32> to vector<8x4x1xf32>
    %98 = vector.broadcast %97 : vector<8x4x1xf32> to vector<8x4x4xf32>
    %99 = arith.subf %95, %98 : vector<8x4x4xf32>
    %100 = math.exp %99 : vector<8x4x4xf32>
    %cst_45 = arith.constant dense<0.000000e+00> : vector<8x4xf32>
    %101 = vector.multi_reduction <add>, %100, %cst_45 [2] : vector<8x4x4xf32> to vector<8x4xf32>
    %102 = vector.shape_cast %101 : vector<8x4xf32> to vector<8x4x1xf32>
    %103 = vector.broadcast %102 : vector<8x4x1xf32> to vector<8x4x4xf32>
    %104 = arith.divf %100, %103 : vector<8x4x4xf32>
    %105 = arith.truncf %104 : vector<8x4x4xf32> to vector<8x4x4xbf16>
    %106 = arith.truncf %86 : vector<8x4x16xf32> to vector<8x4x16xbf16>
    "tpu.trace_start"() <{level = 10 : i32, message = "bnm,bmd->bnd"}> : () -> ()
    %cst_46 = arith.constant dense<0.000000e+00> : vector<8x4x16xf32>
    %107 = tpu.matmul %105, %106, %cst_46 {dimension_numbers = #tpu.dot_dimension_numbers<[2], [1], [1], [2], [0, 0, 0, 1, 1, 2], [0], [0]>} : vector<8x4x4xbf16>, vector<8x4x16xbf16>, vector<8x4x16xf32> -> vector<8x4x16xf32>
    "tpu.trace_stop"() : () -> ()
    %108 = vector.shape_cast %107 : vector<8x4x16xf32> to vector<32x16xf32>
    %109 = arith.truncf %108 : vector<32x16xf32> to vector<32x16xbf16>
    %c0_47 = arith.constant 0 : index
    %c0_48 = arith.constant 0 : index
    %c0_49 = arith.constant 0 : index
    %110 = vector.load %arg10[%c0_47, %c0_48, %c0_49] : memref<4x16x32xbf16, #tpu.memory_space<vmem>>, vector<1x16x32xbf16>
    %111 = vector.shape_cast %110 : vector<1x16x32xbf16> to vector<16x32xbf16>
    %cst_50 = arith.constant dense<0.000000e+00> : vector<32x32xf32>
    %112 = tpu.matmul %109, %111, %cst_50 {dimension_numbers = #tpu.dot_dimension_numbers<[1], [0], [0], [1], [0, 0, 1, 1], [], []>} : vector<32x16xbf16>, vector<16x32xbf16>, vector<32x32xf32> -> vector<32x32xf32>
    %113 = arith.addf %62, %112 : vector<32x32xf32>
    %c1 = arith.constant 1 : index
    %c0_51 = arith.constant 0 : index
    %c0_52 = arith.constant 0 : index
    %114 = vector.load %arg8[%c1, %c0_51, %c0_52] : memref<12x32x16xbf16, #tpu.memory_space<vmem>>, vector<1x32x16xbf16>
    %115 = vector.shape_cast %114 : vector<1x32x16xbf16> to vector<32x16xbf16>
    %cst_53 = arith.constant dense<0.000000e+00> : vector<32x16xf32>
    %116 = tpu.matmul %61, %115, %cst_53 {dimension_numbers = #tpu.dot_dimension_numbers<[1], [0], [0], [1], [0, 0, 1, 1], [], []>} : vector<32x32xbf16>, vector<32x16xbf16>, vector<32x16xf32> -> vector<32x16xf32>
    %c1_54 = arith.constant 1 : index
    %c0_55 = arith.constant 0 : index
    %c0_56 = arith.constant 0 : index
    %117 = vector.load %arg9[%c1_54, %c0_55, %c0_56] : memref<12x1x16xf32, #tpu.memory_space<vmem>>, vector<1x1x16xf32>
    %118 = vector.shape_cast %117 : vector<1x1x16xf32> to vector<1x16xf32>
    %119 = vector.broadcast %118 : vector<1x16xf32> to vector<32x16xf32>
    %120 = arith.addf %116, %119 : vector<32x16xf32>
    %121 = vector.shape_cast %120 : vector<32x16xf32> to vector<8x4x16xf32>
    %c3 = arith.constant 3 : index
    %c0_57 = arith.constant 0 : index
    %c0_58 = arith.constant 0 : index
    %122 = vector.load %arg8[%c3, %c0_57, %c0_58] : memref<12x32x16xbf16, #tpu.memory_space<vmem>>, vector<1x32x16xbf16>
    %123 = vector.shape_cast %122 : vector<1x32x16xbf16> to vector<32x16xbf16>
    %cst_59 = arith.constant dense<0.000000e+00> : vector<32x16xf32>
    %124 = tpu.matmul %61, %123, %cst_59 {dimension_numbers = #tpu.dot_dimension_numbers<[1], [0], [0], [1], [0, 0, 1, 1], [], []>} : vector<32x32xbf16>, vector<32x16xbf16>, vector<32x16xf32> -> vector<32x16xf32>
    %c3_60 = arith.constant 3 : index
    %c0_61 = arith.constant 0 : index
    %c0_62 = arith.constant 0 : index
    %125 = vector.load %arg9[%c3_60, %c0_61, %c0_62] : memref<12x1x16xf32, #tpu.memory_space<vmem>>, vector<1x1x16xf32>
    %126 = vector.shape_cast %125 : vector<1x1x16xf32> to vector<1x16xf32>
    %127 = vector.broadcast %126 : vector<1x16xf32> to vector<32x16xf32>
    %128 = arith.addf %124, %127 : vector<32x16xf32>
    %129 = vector.shape_cast %128 : vector<32x16xf32> to vector<8x4x16xf32>
    %c5 = arith.constant 5 : index
    %c0_63 = arith.constant 0 : index
    %c0_64 = arith.constant 0 : index
    %130 = vector.load %arg8[%c5, %c0_63, %c0_64] : memref<12x32x16xbf16, #tpu.memory_space<vmem>>, vector<1x32x16xbf16>
    %131 = vector.shape_cast %130 : vector<1x32x16xbf16> to vector<32x16xbf16>
    %cst_65 = arith.constant dense<0.000000e+00> : vector<32x16xf32>
    %132 = tpu.matmul %61, %131, %cst_65 {dimension_numbers = #tpu.dot_dimension_numbers<[1], [0], [0], [1], [0, 0, 1, 1], [], []>} : vector<32x32xbf16>, vector<32x16xbf16>, vector<32x16xf32> -> vector<32x16xf32>
    %c5_66 = arith.constant 5 : index
    %c0_67 = arith.constant 0 : index
    %c0_68 = arith.constant 0 : index
    %133 = vector.load %arg9[%c5_66, %c0_67, %c0_68] : memref<12x1x16xf32, #tpu.memory_space<vmem>>, vector<1x1x16xf32>
    %134 = vector.shape_cast %133 : vector<1x1x16xf32> to vector<1x16xf32>
    %135 = vector.broadcast %134 : vector<1x16xf32> to vector<32x16xf32>
    %136 = arith.addf %132, %135 : vector<32x16xf32>
    %137 = vector.shape_cast %136 : vector<32x16xf32> to vector<8x4x16xf32>
    %138 = arith.truncf %121 : vector<8x4x16xf32> to vector<8x4x16xbf16>
    %139 = arith.truncf %129 : vector<8x4x16xf32> to vector<8x4x16xbf16>
    "tpu.trace_start"() <{level = 10 : i32, message = "bnd,bmd->bnm"}> : () -> ()
    %cst_69 = arith.constant dense<0.000000e+00> : vector<8x4x4xf32>
    %140 = tpu.matmul %138, %139, %cst_69 {dimension_numbers = #tpu.dot_dimension_numbers<[2], [2], [1], [1], [0, 0, 0, 1, 1, 1], [0], [0]>} : vector<8x4x16xbf16>, vector<8x4x16xbf16>, vector<8x4x4xf32> -> vector<8x4x4xf32>
    "tpu.trace_stop"() : () -> ()
    %cst_70 = arith.constant 2.500000e-01 : f32
    %141 = vector.broadcast %cst_70 : f32 to vector<8x4x4xf32>
    %142 = arith.mulf %140, %141 : vector<8x4x4xf32>
    %cst_71 = arith.constant -1.000000e+30 : f32
    %143 = vector.shape_cast %34 : vector<1x4x4xi1> to vector<1x4x4xi1>
    %144 = vector.broadcast %143 : vector<1x4x4xi1> to vector<8x4x4xi1>
    %145 = vector.broadcast %cst_71 : f32 to vector<8x4x4xf32>
    %146 = arith.select %144, %142, %145 : vector<8x4x4xi1>, vector<8x4x4xf32>
    %cst_72 = arith.constant dense<0xFF800000> : vector<8x4xf32>
    %147 = vector.multi_reduction <maximumf>, %146, %cst_72 [2] : vector<8x4x4xf32> to vector<8x4xf32>
    %148 = vector.shape_cast %147 : vector<8x4xf32> to vector<8x4x1xf32>
    %149 = vector.broadcast %148 : vector<8x4x1xf32> to vector<8x4x4xf32>
    %150 = arith.subf %146, %149 : vector<8x4x4xf32>
    %151 = math.exp %150 : vector<8x4x4xf32>
    %cst_73 = arith.constant dense<0.000000e+00> : vector<8x4xf32>
    %152 = vector.multi_reduction <add>, %151, %cst_73 [2] : vector<8x4x4xf32> to vector<8x4xf32>
    %153 = vector.shape_cast %152 : vector<8x4xf32> to vector<8x4x1xf32>
    %154 = vector.broadcast %153 : vector<8x4x1xf32> to vector<8x4x4xf32>
    %155 = arith.divf %151, %154 : vector<8x4x4xf32>
    %156 = arith.truncf %155 : vector<8x4x4xf32> to vector<8x4x4xbf16>
    %157 = arith.truncf %137 : vector<8x4x16xf32> to vector<8x4x16xbf16>
    "tpu.trace_start"() <{level = 10 : i32, message = "bnm,bmd->bnd"}> : () -> ()
    %cst_74 = arith.constant dense<0.000000e+00> : vector<8x4x16xf32>
    %158 = tpu.matmul %156, %157, %cst_74 {dimension_numbers = #tpu.dot_dimension_numbers<[2], [1], [1], [2], [0, 0, 0, 1, 1, 2], [0], [0]>} : vector<8x4x4xbf16>, vector<8x4x16xbf16>, vector<8x4x16xf32> -> vector<8x4x16xf32>
    "tpu.trace_stop"() : () -> ()
    %159 = vector.shape_cast %158 : vector<8x4x16xf32> to vector<32x16xf32>
    %160 = arith.truncf %159 : vector<32x16xf32> to vector<32x16xbf16>
    %c1_75 = arith.constant 1 : index
    %c0_76 = arith.constant 0 : index
    %c0_77 = arith.constant 0 : index
    %161 = vector.load %arg10[%c1_75, %c0_76, %c0_77] : memref<4x16x32xbf16, #tpu.memory_space<vmem>>, vector<1x16x32xbf16>
    %162 = vector.shape_cast %161 : vector<1x16x32xbf16> to vector<16x32xbf16>
    %cst_78 = arith.constant dense<0.000000e+00> : vector<32x32xf32>
    %163 = tpu.matmul %160, %162, %cst_78 {dimension_numbers = #tpu.dot_dimension_numbers<[1], [0], [0], [1], [0, 0, 1, 1], [], []>} : vector<32x16xbf16>, vector<16x32xbf16>, vector<32x32xf32> -> vector<32x32xf32>
    %164 = arith.addf %113, %163 : vector<32x32xf32>
    %165 = arith.addf %30, %164 : vector<32x32xf32>
    %c0_79 = arith.constant 0 : index
    %c0_80 = arith.constant 0 : index
    %c0_81 = arith.constant 0 : index
    %166 = vector.load %arg11[%c0_79, %c0_80, %c0_81] : memref<2x1x32xf32, #tpu.memory_space<vmem>>, vector<1x1x32xf32>
    %167 = vector.shape_cast %166 : vector<1x1x32xf32> to vector<1x32xf32>
    %168 = vector.broadcast %167 : vector<1x32xf32> to vector<32x32xf32>
    %169 = arith.addf %165, %168 : vector<32x32xf32>
    %c0_82 = arith.constant 0 : index
    %c0_83 = arith.constant 0 : index
    %c0_84 = arith.constant 0 : index
    %170 = vector.load %arg12[%c0_82, %c0_83, %c0_84] : memref<2x1x32xf32, #tpu.memory_space<vmem>>, vector<1x1x32xf32>
    %171 = vector.shape_cast %170 : vector<1x1x32xf32> to vector<1x32xf32>
    %c0_85 = arith.constant 0 : index
    %c0_86 = arith.constant 0 : index
    %c0_87 = arith.constant 0 : index
    %172 = vector.load %arg13[%c0_85, %c0_86, %c0_87] : memref<2x1x32xf32, #tpu.memory_space<vmem>>, vector<1x1x32xf32>
    %173 = vector.shape_cast %172 : vector<1x1x32xf32> to vector<1x32xf32>
    %cst_88 = arith.constant dense<0.000000e+00> : vector<32xf32>
    %174 = vector.multi_reduction <add>, %169, %cst_88 [1] : vector<32x32xf32> to vector<32xf32>
    %175 = vector.shape_cast %174 : vector<32xf32> to vector<32x1xf32>
    %cst_89 = arith.constant 3.200000e+01 : f32
    %176 = vector.broadcast %cst_89 : f32 to vector<32x1xf32>
    %177 = arith.divf %175, %176 : vector<32x1xf32>
    %178 = vector.broadcast %177 : vector<32x1xf32> to vector<32x32xf32>
    %179 = arith.subf %169, %178 : vector<32x32xf32>
    %180 = arith.mulf %179, %179 : vector<32x32xf32>
    %cst_90 = arith.constant dense<0.000000e+00> : vector<32xf32>
    %181 = vector.multi_reduction <add>, %180, %cst_90 [1] : vector<32x32xf32> to vector<32xf32>
    %182 = vector.shape_cast %181 : vector<32xf32> to vector<32x1xf32>
    %cst_91 = arith.constant 3.200000e+01 : f32
    %183 = vector.broadcast %cst_91 : f32 to vector<32x1xf32>
    %184 = arith.divf %182, %183 : vector<32x1xf32>
    %185 = vector.broadcast %177 : vector<32x1xf32> to vector<32x32xf32>
    %186 = arith.subf %169, %185 : vector<32x32xf32>
    %cst_92 = arith.constant 9.99999974E-6 : f32
    %187 = vector.broadcast %cst_92 : f32 to vector<32x1xf32>
    %188 = arith.addf %184, %187 : vector<32x1xf32>
    %189 = math.rsqrt %188 : vector<32x1xf32>
    %190 = vector.broadcast %189 : vector<32x1xf32> to vector<32x32xf32>
    %191 = arith.mulf %186, %190 : vector<32x32xf32>
    %192 = vector.broadcast %171 : vector<1x32xf32> to vector<32x32xf32>
    %193 = arith.mulf %191, %192 : vector<32x32xf32>
    %194 = vector.broadcast %173 : vector<1x32xf32> to vector<32x32xf32>
    %195 = arith.addf %193, %194 : vector<32x32xf32>
    %c0_93 = arith.constant 0 : index
    %c0_94 = arith.constant 0 : index
    %c0_95 = arith.constant 0 : index
    %196 = vector.load %arg14[%c0_93, %c0_94, %c0_95] : memref<2x32x128xbf16, #tpu.memory_space<vmem>>, vector<1x32x128xbf16>
    %197 = vector.shape_cast %196 : vector<1x32x128xbf16> to vector<32x128xbf16>
    %198 = arith.truncf %195 : vector<32x32xf32> to vector<32x32xbf16>
    %cst_96 = arith.constant dense<0.000000e+00> : vector<32x128xf32>
    %199 = tpu.matmul %198, %197, %cst_96 {dimension_numbers = #tpu.dot_dimension_numbers<[1], [0], [0], [1], [0, 0, 1, 1], [], []>} : vector<32x32xbf16>, vector<32x128xbf16>, vector<32x128xf32> -> vector<32x128xf32>
    %c0_97 = arith.constant 0 : index
    %c0_98 = arith.constant 0 : index
    %c0_99 = arith.constant 0 : index
    %200 = vector.load %arg15[%c0_97, %c0_98, %c0_99] : memref<2x1x128xf32, #tpu.memory_space<vmem>>, vector<1x1x128xf32>
    %201 = vector.shape_cast %200 : vector<1x1x128xf32> to vector<1x128xf32>
    %202 = vector.broadcast %201 : vector<1x128xf32> to vector<32x128xf32>
    %203 = arith.addf %199, %202 : vector<32x128xf32>
    %cst_100 = arith.constant 5.000000e-01 : f32
    %204 = vector.broadcast %cst_100 : f32 to vector<32x128xf32>
    %205 = arith.mulf %204, %203 : vector<32x128xf32>
    %cst_101 = arith.constant 4.471500e-02 : f32
    %206 = vector.broadcast %cst_101 : f32 to vector<32x128xf32>
    %207 = arith.mulf %206, %203 : vector<32x128xf32>
    %208 = arith.mulf %207, %203 : vector<32x128xf32>
    %209 = arith.mulf %208, %203 : vector<32x128xf32>
    %210 = arith.addf %203, %209 : vector<32x128xf32>
    %cst_102 = arith.constant 0.797884583 : f32
    %211 = vector.broadcast %cst_102 : f32 to vector<32x128xf32>
    %212 = arith.mulf %211, %210 : vector<32x128xf32>
    %213 = math.tanh %212 : vector<32x128xf32>
    %cst_103 = arith.constant 1.000000e+00 : f32
    %214 = vector.broadcast %cst_103 : f32 to vector<32x128xf32>
    %215 = arith.addf %214, %213 : vector<32x128xf32>
    %216 = arith.mulf %205, %215 : vector<32x128xf32>
    %217 = arith.truncf %216 : vector<32x128xf32> to vector<32x128xbf16>
    %c0_104 = arith.constant 0 : index
    %c0_105 = arith.constant 0 : index
    %c0_106 = arith.constant 0 : index
    %218 = vector.load %arg16[%c0_104, %c0_105, %c0_106] : memref<2x128x32xbf16, #tpu.memory_space<vmem>>, vector<1x128x32xbf16>
    %219 = vector.shape_cast %218 : vector<1x128x32xbf16> to vector<128x32xbf16>
    %cst_107 = arith.constant dense<0.000000e+00> : vector<32x32xf32>
    %220 = tpu.matmul %217, %219, %cst_107 {dimension_numbers = #tpu.dot_dimension_numbers<[1], [0], [0], [1], [0, 0, 1, 1], [], []>} : vector<32x128xbf16>, vector<128x32xbf16>, vector<32x32xf32> -> vector<32x32xf32>
    %221 = arith.addf %169, %220 : vector<32x32xf32>
    %c0_108 = arith.constant 0 : index
    %c0_109 = arith.constant 0 : index
    %c0_110 = arith.constant 0 : index
    %222 = vector.load %arg17[%c0_108, %c0_109, %c0_110] : memref<2x1x32xf32, #tpu.memory_space<vmem>>, vector<1x1x32xf32>
    %223 = vector.shape_cast %222 : vector<1x1x32xf32> to vector<1x32xf32>
    %224 = vector.broadcast %223 : vector<1x32xf32> to vector<32x32xf32>
    %225 = arith.addf %221, %224 : vector<32x32xf32>
    %c1_111 = arith.constant 1 : index
    %c0_112 = arith.constant 0 : index
    %c0_113 = arith.constant 0 : index
    %226 = vector.load %arg6[%c1_111, %c0_112, %c0_113] : memref<2x1x32xf32, #tpu.memory_space<vmem>>, vector<1x1x32xf32>
    %227 = vector.shape_cast %226 : vector<1x1x32xf32> to vector<1x32xf32>
    %c1_114 = arith.constant 1 : index
    %c0_115 = arith.constant 0 : index
    %c0_116 = arith.constant 0 : index
    %228 = vector.load %arg7[%c1_114, %c0_115, %c0_116] : memref<2x1x32xf32, #tpu.memory_space<vmem>>, vector<1x1x32xf32>
    %229 = vector.shape_cast %228 : vector<1x1x32xf32> to vector<1x32xf32>
    %cst_117 = arith.constant dense<0.000000e+00> : vector<32xf32>
    %230 = vector.multi_reduction <add>, %225, %cst_117 [1] : vector<32x32xf32> to vector<32xf32>
    %231 = vector.shape_cast %230 : vector<32xf32> to vector<32x1xf32>
    %cst_118 = arith.constant 3.200000e+01 : f32
    %232 = vector.broadcast %cst_118 : f32 to vector<32x1xf32>
    %233 = arith.divf %231, %232 : vector<32x1xf32>
    %234 = vector.broadcast %233 : vector<32x1xf32> to vector<32x32xf32>
    %235 = arith.subf %225, %234 : vector<32x32xf32>
    %236 = arith.mulf %235, %235 : vector<32x32xf32>
    %cst_119 = arith.constant dense<0.000000e+00> : vector<32xf32>
    %237 = vector.multi_reduction <add>, %236, %cst_119 [1] : vector<32x32xf32> to vector<32xf32>
    %238 = vector.shape_cast %237 : vector<32xf32> to vector<32x1xf32>
    %cst_120 = arith.constant 3.200000e+01 : f32
    %239 = vector.broadcast %cst_120 : f32 to vector<32x1xf32>
    %240 = arith.divf %238, %239 : vector<32x1xf32>
    %241 = vector.broadcast %233 : vector<32x1xf32> to vector<32x32xf32>
    %242 = arith.subf %225, %241 : vector<32x32xf32>
    %cst_121 = arith.constant 9.99999974E-6 : f32
    %243 = vector.broadcast %cst_121 : f32 to vector<32x1xf32>
    %244 = arith.addf %240, %243 : vector<32x1xf32>
    %245 = math.rsqrt %244 : vector<32x1xf32>
    %246 = vector.broadcast %245 : vector<32x1xf32> to vector<32x32xf32>
    %247 = arith.mulf %242, %246 : vector<32x32xf32>
    %248 = vector.broadcast %227 : vector<1x32xf32> to vector<32x32xf32>
    %249 = arith.mulf %247, %248 : vector<32x32xf32>
    %250 = vector.broadcast %229 : vector<1x32xf32> to vector<32x32xf32>
    %251 = arith.addf %249, %250 : vector<32x32xf32>
    %252 = arith.truncf %251 : vector<32x32xf32> to vector<32x32xbf16>
    %cst_122 = arith.constant 0.000000e+00 : f32
    %253 = vector.broadcast %cst_122 : f32 to vector<32x32xf32>
    %c6 = arith.constant 6 : index
    %c0_123 = arith.constant 0 : index
    %c0_124 = arith.constant 0 : index
    %254 = vector.load %arg8[%c6, %c0_123, %c0_124] : memref<12x32x16xbf16, #tpu.memory_space<vmem>>, vector<1x32x16xbf16>
    %255 = vector.shape_cast %254 : vector<1x32x16xbf16> to vector<32x16xbf16>
    %cst_125 = arith.constant dense<0.000000e+00> : vector<32x16xf32>
    %256 = tpu.matmul %252, %255, %cst_125 {dimension_numbers = #tpu.dot_dimension_numbers<[1], [0], [0], [1], [0, 0, 1, 1], [], []>} : vector<32x32xbf16>, vector<32x16xbf16>, vector<32x16xf32> -> vector<32x16xf32>
    %c6_126 = arith.constant 6 : index
    %c0_127 = arith.constant 0 : index
    %c0_128 = arith.constant 0 : index
    %257 = vector.load %arg9[%c6_126, %c0_127, %c0_128] : memref<12x1x16xf32, #tpu.memory_space<vmem>>, vector<1x1x16xf32>
    %258 = vector.shape_cast %257 : vector<1x1x16xf32> to vector<1x16xf32>
    %259 = vector.broadcast %258 : vector<1x16xf32> to vector<32x16xf32>
    %260 = arith.addf %256, %259 : vector<32x16xf32>
    %261 = vector.shape_cast %260 : vector<32x16xf32> to vector<8x4x16xf32>
    %c8 = arith.constant 8 : index
    %c0_129 = arith.constant 0 : index
    %c0_130 = arith.constant 0 : index
    %262 = vector.load %arg8[%c8, %c0_129, %c0_130] : memref<12x32x16xbf16, #tpu.memory_space<vmem>>, vector<1x32x16xbf16>
    %263 = vector.shape_cast %262 : vector<1x32x16xbf16> to vector<32x16xbf16>
    %cst_131 = arith.constant dense<0.000000e+00> : vector<32x16xf32>
    %264 = tpu.matmul %252, %263, %cst_131 {dimension_numbers = #tpu.dot_dimension_numbers<[1], [0], [0], [1], [0, 0, 1, 1], [], []>} : vector<32x32xbf16>, vector<32x16xbf16>, vector<32x16xf32> -> vector<32x16xf32>
    %c8_132 = arith.constant 8 : index
    %c0_133 = arith.constant 0 : index
    %c0_134 = arith.constant 0 : index
    %265 = vector.load %arg9[%c8_132, %c0_133, %c0_134] : memref<12x1x16xf32, #tpu.memory_space<vmem>>, vector<1x1x16xf32>
    %266 = vector.shape_cast %265 : vector<1x1x16xf32> to vector<1x16xf32>
    %267 = vector.broadcast %266 : vector<1x16xf32> to vector<32x16xf32>
    %268 = arith.addf %264, %267 : vector<32x16xf32>
    %269 = vector.shape_cast %268 : vector<32x16xf32> to vector<8x4x16xf32>
    %c10 = arith.constant 10 : index
    %c0_135 = arith.constant 0 : index
    %c0_136 = arith.constant 0 : index
    %270 = vector.load %arg8[%c10, %c0_135, %c0_136] : memref<12x32x16xbf16, #tpu.memory_space<vmem>>, vector<1x32x16xbf16>
    %271 = vector.shape_cast %270 : vector<1x32x16xbf16> to vector<32x16xbf16>
    %cst_137 = arith.constant dense<0.000000e+00> : vector<32x16xf32>
    %272 = tpu.matmul %252, %271, %cst_137 {dimension_numbers = #tpu.dot_dimension_numbers<[1], [0], [0], [1], [0, 0, 1, 1], [], []>} : vector<32x32xbf16>, vector<32x16xbf16>, vector<32x16xf32> -> vector<32x16xf32>
    %c10_138 = arith.constant 10 : index
    %c0_139 = arith.constant 0 : index
    %c0_140 = arith.constant 0 : index
    %273 = vector.load %arg9[%c10_138, %c0_139, %c0_140] : memref<12x1x16xf32, #tpu.memory_space<vmem>>, vector<1x1x16xf32>
    %274 = vector.shape_cast %273 : vector<1x1x16xf32> to vector<1x16xf32>
    %275 = vector.broadcast %274 : vector<1x16xf32> to vector<32x16xf32>
    %276 = arith.addf %272, %275 : vector<32x16xf32>
    %277 = vector.shape_cast %276 : vector<32x16xf32> to vector<8x4x16xf32>
    %278 = arith.truncf %261 : vector<8x4x16xf32> to vector<8x4x16xbf16>
    %279 = arith.truncf %269 : vector<8x4x16xf32> to vector<8x4x16xbf16>
    "tpu.trace_start"() <{level = 10 : i32, message = "bnd,bmd->bnm"}> : () -> ()
    %cst_141 = arith.constant dense<0.000000e+00> : vector<8x4x4xf32>
    %280 = tpu.matmul %278, %279, %cst_141 {dimension_numbers = #tpu.dot_dimension_numbers<[2], [2], [1], [1], [0, 0, 0, 1, 1, 1], [0], [0]>} : vector<8x4x16xbf16>, vector<8x4x16xbf16>, vector<8x4x4xf32> -> vector<8x4x4xf32>
    "tpu.trace_stop"() : () -> ()
    %cst_142 = arith.constant 2.500000e-01 : f32
    %281 = vector.broadcast %cst_142 : f32 to vector<8x4x4xf32>
    %282 = arith.mulf %280, %281 : vector<8x4x4xf32>
    %cst_143 = arith.constant -1.000000e+30 : f32
    %283 = vector.shape_cast %34 : vector<1x4x4xi1> to vector<1x4x4xi1>
    %284 = vector.broadcast %283 : vector<1x4x4xi1> to vector<8x4x4xi1>
    %285 = vector.broadcast %cst_143 : f32 to vector<8x4x4xf32>
    %286 = arith.select %284, %282, %285 : vector<8x4x4xi1>, vector<8x4x4xf32>
    %cst_144 = arith.constant dense<0xFF800000> : vector<8x4xf32>
    %287 = vector.multi_reduction <maximumf>, %286, %cst_144 [2] : vector<8x4x4xf32> to vector<8x4xf32>
    %288 = vector.shape_cast %287 : vector<8x4xf32> to vector<8x4x1xf32>
    %289 = vector.broadcast %288 : vector<8x4x1xf32> to vector<8x4x4xf32>
    %290 = arith.subf %286, %289 : vector<8x4x4xf32>
    %291 = math.exp %290 : vector<8x4x4xf32>
    %cst_145 = arith.constant dense<0.000000e+00> : vector<8x4xf32>
    %292 = vector.multi_reduction <add>, %291, %cst_145 [2] : vector<8x4x4xf32> to vector<8x4xf32>
    %293 = vector.shape_cast %292 : vector<8x4xf32> to vector<8x4x1xf32>
    %294 = vector.broadcast %293 : vector<8x4x1xf32> to vector<8x4x4xf32>
    %295 = arith.divf %291, %294 : vector<8x4x4xf32>
    %296 = arith.truncf %295 : vector<8x4x4xf32> to vector<8x4x4xbf16>
    %297 = arith.truncf %277 : vector<8x4x16xf32> to vector<8x4x16xbf16>
    "tpu.trace_start"() <{level = 10 : i32, message = "bnm,bmd->bnd"}> : () -> ()
    %cst_146 = arith.constant dense<0.000000e+00> : vector<8x4x16xf32>
    %298 = tpu.matmul %296, %297, %cst_146 {dimension_numbers = #tpu.dot_dimension_numbers<[2], [1], [1], [2], [0, 0, 0, 1, 1, 2], [0], [0]>} : vector<8x4x4xbf16>, vector<8x4x16xbf16>, vector<8x4x16xf32> -> vector<8x4x16xf32>
    "tpu.trace_stop"() : () -> ()
    %299 = vector.shape_cast %298 : vector<8x4x16xf32> to vector<32x16xf32>
    %300 = arith.truncf %299 : vector<32x16xf32> to vector<32x16xbf16>
    %c2_147 = arith.constant 2 : index
    %c0_148 = arith.constant 0 : index
    %c0_149 = arith.constant 0 : index
    %301 = vector.load %arg10[%c2_147, %c0_148, %c0_149] : memref<4x16x32xbf16, #tpu.memory_space<vmem>>, vector<1x16x32xbf16>
    %302 = vector.shape_cast %301 : vector<1x16x32xbf16> to vector<16x32xbf16>
    %cst_150 = arith.constant dense<0.000000e+00> : vector<32x32xf32>
    %303 = tpu.matmul %300, %302, %cst_150 {dimension_numbers = #tpu.dot_dimension_numbers<[1], [0], [0], [1], [0, 0, 1, 1], [], []>} : vector<32x16xbf16>, vector<16x32xbf16>, vector<32x32xf32> -> vector<32x32xf32>
    %304 = arith.addf %253, %303 : vector<32x32xf32>
    %c7 = arith.constant 7 : index
    %c0_151 = arith.constant 0 : index
    %c0_152 = arith.constant 0 : index
    %305 = vector.load %arg8[%c7, %c0_151, %c0_152] : memref<12x32x16xbf16, #tpu.memory_space<vmem>>, vector<1x32x16xbf16>
    %306 = vector.shape_cast %305 : vector<1x32x16xbf16> to vector<32x16xbf16>
    %cst_153 = arith.constant dense<0.000000e+00> : vector<32x16xf32>
    %307 = tpu.matmul %252, %306, %cst_153 {dimension_numbers = #tpu.dot_dimension_numbers<[1], [0], [0], [1], [0, 0, 1, 1], [], []>} : vector<32x32xbf16>, vector<32x16xbf16>, vector<32x16xf32> -> vector<32x16xf32>
    %c7_154 = arith.constant 7 : index
    %c0_155 = arith.constant 0 : index
    %c0_156 = arith.constant 0 : index
    %308 = vector.load %arg9[%c7_154, %c0_155, %c0_156] : memref<12x1x16xf32, #tpu.memory_space<vmem>>, vector<1x1x16xf32>
    %309 = vector.shape_cast %308 : vector<1x1x16xf32> to vector<1x16xf32>
    %310 = vector.broadcast %309 : vector<1x16xf32> to vector<32x16xf32>
    %311 = arith.addf %307, %310 : vector<32x16xf32>
    %312 = vector.shape_cast %311 : vector<32x16xf32> to vector<8x4x16xf32>
    %c9 = arith.constant 9 : index
    %c0_157 = arith.constant 0 : index
    %c0_158 = arith.constant 0 : index
    %313 = vector.load %arg8[%c9, %c0_157, %c0_158] : memref<12x32x16xbf16, #tpu.memory_space<vmem>>, vector<1x32x16xbf16>
    %314 = vector.shape_cast %313 : vector<1x32x16xbf16> to vector<32x16xbf16>
    %cst_159 = arith.constant dense<0.000000e+00> : vector<32x16xf32>
    %315 = tpu.matmul %252, %314, %cst_159 {dimension_numbers = #tpu.dot_dimension_numbers<[1], [0], [0], [1], [0, 0, 1, 1], [], []>} : vector<32x32xbf16>, vector<32x16xbf16>, vector<32x16xf32> -> vector<32x16xf32>
    %c9_160 = arith.constant 9 : index
    %c0_161 = arith.constant 0 : index
    %c0_162 = arith.constant 0 : index
    %316 = vector.load %arg9[%c9_160, %c0_161, %c0_162] : memref<12x1x16xf32, #tpu.memory_space<vmem>>, vector<1x1x16xf32>
    %317 = vector.shape_cast %316 : vector<1x1x16xf32> to vector<1x16xf32>
    %318 = vector.broadcast %317 : vector<1x16xf32> to vector<32x16xf32>
    %319 = arith.addf %315, %318 : vector<32x16xf32>
    %320 = vector.shape_cast %319 : vector<32x16xf32> to vector<8x4x16xf32>
    %c11 = arith.constant 11 : index
    %c0_163 = arith.constant 0 : index
    %c0_164 = arith.constant 0 : index
    %321 = vector.load %arg8[%c11, %c0_163, %c0_164] : memref<12x32x16xbf16, #tpu.memory_space<vmem>>, vector<1x32x16xbf16>
    %322 = vector.shape_cast %321 : vector<1x32x16xbf16> to vector<32x16xbf16>
    %cst_165 = arith.constant dense<0.000000e+00> : vector<32x16xf32>
    %323 = tpu.matmul %252, %322, %cst_165 {dimension_numbers = #tpu.dot_dimension_numbers<[1], [0], [0], [1], [0, 0, 1, 1], [], []>} : vector<32x32xbf16>, vector<32x16xbf16>, vector<32x16xf32> -> vector<32x16xf32>
    %c11_166 = arith.constant 11 : index
    %c0_167 = arith.constant 0 : index
    %c0_168 = arith.constant 0 : index
    %324 = vector.load %arg9[%c11_166, %c0_167, %c0_168] : memref<12x1x16xf32, #tpu.memory_space<vmem>>, vector<1x1x16xf32>
    %325 = vector.shape_cast %324 : vector<1x1x16xf32> to vector<1x16xf32>
    %326 = vector.broadcast %325 : vector<1x16xf32> to vector<32x16xf32>
    %327 = arith.addf %323, %326 : vector<32x16xf32>
    %328 = vector.shape_cast %327 : vector<32x16xf32> to vector<8x4x16xf32>
    %329 = arith.truncf %312 : vector<8x4x16xf32> to vector<8x4x16xbf16>
    %330 = arith.truncf %320 : vector<8x4x16xf32> to vector<8x4x16xbf16>
    "tpu.trace_start"() <{level = 10 : i32, message = "bnd,bmd->bnm"}> : () -> ()
    %cst_169 = arith.constant dense<0.000000e+00> : vector<8x4x4xf32>
    %331 = tpu.matmul %329, %330, %cst_169 {dimension_numbers = #tpu.dot_dimension_numbers<[2], [2], [1], [1], [0, 0, 0, 1, 1, 1], [0], [0]>} : vector<8x4x16xbf16>, vector<8x4x16xbf16>, vector<8x4x4xf32> -> vector<8x4x4xf32>
    "tpu.trace_stop"() : () -> ()
    %cst_170 = arith.constant 2.500000e-01 : f32
    %332 = vector.broadcast %cst_170 : f32 to vector<8x4x4xf32>
    %333 = arith.mulf %331, %332 : vector<8x4x4xf32>
    %cst_171 = arith.constant -1.000000e+30 : f32
    %334 = vector.shape_cast %34 : vector<1x4x4xi1> to vector<1x4x4xi1>
    %335 = vector.broadcast %334 : vector<1x4x4xi1> to vector<8x4x4xi1>
    %336 = vector.broadcast %cst_171 : f32 to vector<8x4x4xf32>
    %337 = arith.select %335, %333, %336 : vector<8x4x4xi1>, vector<8x4x4xf32>
    %cst_172 = arith.constant dense<0xFF800000> : vector<8x4xf32>
    %338 = vector.multi_reduction <maximumf>, %337, %cst_172 [2] : vector<8x4x4xf32> to vector<8x4xf32>
    %339 = vector.shape_cast %338 : vector<8x4xf32> to vector<8x4x1xf32>
    %340 = vector.broadcast %339 : vector<8x4x1xf32> to vector<8x4x4xf32>
    %341 = arith.subf %337, %340 : vector<8x4x4xf32>
    %342 = math.exp %341 : vector<8x4x4xf32>
    %cst_173 = arith.constant dense<0.000000e+00> : vector<8x4xf32>
    %343 = vector.multi_reduction <add>, %342, %cst_173 [2] : vector<8x4x4xf32> to vector<8x4xf32>
    %344 = vector.shape_cast %343 : vector<8x4xf32> to vector<8x4x1xf32>
    %345 = vector.broadcast %344 : vector<8x4x1xf32> to vector<8x4x4xf32>
    %346 = arith.divf %342, %345 : vector<8x4x4xf32>
    %347 = arith.truncf %346 : vector<8x4x4xf32> to vector<8x4x4xbf16>
    %348 = arith.truncf %328 : vector<8x4x16xf32> to vector<8x4x16xbf16>
    "tpu.trace_start"() <{level = 10 : i32, message = "bnm,bmd->bnd"}> : () -> ()
    %cst_174 = arith.constant dense<0.000000e+00> : vector<8x4x16xf32>
    %349 = tpu.matmul %347, %348, %cst_174 {dimension_numbers = #tpu.dot_dimension_numbers<[2], [1], [1], [2], [0, 0, 0, 1, 1, 2], [0], [0]>} : vector<8x4x4xbf16>, vector<8x4x16xbf16>, vector<8x4x16xf32> -> vector<8x4x16xf32>
    "tpu.trace_stop"() : () -> ()
    %350 = vector.shape_cast %349 : vector<8x4x16xf32> to vector<32x16xf32>
    %351 = arith.truncf %350 : vector<32x16xf32> to vector<32x16xbf16>
    %c3_175 = arith.constant 3 : index
    %c0_176 = arith.constant 0 : index
    %c0_177 = arith.constant 0 : index
    %352 = vector.load %arg10[%c3_175, %c0_176, %c0_177] : memref<4x16x32xbf16, #tpu.memory_space<vmem>>, vector<1x16x32xbf16>
    %353 = vector.shape_cast %352 : vector<1x16x32xbf16> to vector<16x32xbf16>
    %cst_178 = arith.constant dense<0.000000e+00> : vector<32x32xf32>
    %354 = tpu.matmul %351, %353, %cst_178 {dimension_numbers = #tpu.dot_dimension_numbers<[1], [0], [0], [1], [0, 0, 1, 1], [], []>} : vector<32x16xbf16>, vector<16x32xbf16>, vector<32x32xf32> -> vector<32x32xf32>
    %355 = arith.addf %304, %354 : vector<32x32xf32>
    %356 = arith.addf %225, %355 : vector<32x32xf32>
    %c1_179 = arith.constant 1 : index
    %c0_180 = arith.constant 0 : index
    %c0_181 = arith.constant 0 : index
    %357 = vector.load %arg11[%c1_179, %c0_180, %c0_181] : memref<2x1x32xf32, #tpu.memory_space<vmem>>, vector<1x1x32xf32>
    %358 = vector.shape_cast %357 : vector<1x1x32xf32> to vector<1x32xf32>
    %359 = vector.broadcast %358 : vector<1x32xf32> to vector<32x32xf32>
    %360 = arith.addf %356, %359 : vector<32x32xf32>
    %c1_182 = arith.constant 1 : index
    %c0_183 = arith.constant 0 : index
    %c0_184 = arith.constant 0 : index
    %361 = vector.load %arg12[%c1_182, %c0_183, %c0_184] : memref<2x1x32xf32, #tpu.memory_space<vmem>>, vector<1x1x32xf32>
    %362 = vector.shape_cast %361 : vector<1x1x32xf32> to vector<1x32xf32>
    %c1_185 = arith.constant 1 : index
    %c0_186 = arith.constant 0 : index
    %c0_187 = arith.constant 0 : index
    %363 = vector.load %arg13[%c1_185, %c0_186, %c0_187] : memref<2x1x32xf32, #tpu.memory_space<vmem>>, vector<1x1x32xf32>
    %364 = vector.shape_cast %363 : vector<1x1x32xf32> to vector<1x32xf32>
    %cst_188 = arith.constant dense<0.000000e+00> : vector<32xf32>
    %365 = vector.multi_reduction <add>, %360, %cst_188 [1] : vector<32x32xf32> to vector<32xf32>
    %366 = vector.shape_cast %365 : vector<32xf32> to vector<32x1xf32>
    %cst_189 = arith.constant 3.200000e+01 : f32
    %367 = vector.broadcast %cst_189 : f32 to vector<32x1xf32>
    %368 = arith.divf %366, %367 : vector<32x1xf32>
    %369 = vector.broadcast %368 : vector<32x1xf32> to vector<32x32xf32>
    %370 = arith.subf %360, %369 : vector<32x32xf32>
    %371 = arith.mulf %370, %370 : vector<32x32xf32>
    %cst_190 = arith.constant dense<0.000000e+00> : vector<32xf32>
    %372 = vector.multi_reduction <add>, %371, %cst_190 [1] : vector<32x32xf32> to vector<32xf32>
    %373 = vector.shape_cast %372 : vector<32xf32> to vector<32x1xf32>
    %cst_191 = arith.constant 3.200000e+01 : f32
    %374 = vector.broadcast %cst_191 : f32 to vector<32x1xf32>
    %375 = arith.divf %373, %374 : vector<32x1xf32>
    %376 = vector.broadcast %368 : vector<32x1xf32> to vector<32x32xf32>
    %377 = arith.subf %360, %376 : vector<32x32xf32>
    %cst_192 = arith.constant 9.99999974E-6 : f32
    %378 = vector.broadcast %cst_192 : f32 to vector<32x1xf32>
    %379 = arith.addf %375, %378 : vector<32x1xf32>
    %380 = math.rsqrt %379 : vector<32x1xf32>
    %381 = vector.broadcast %380 : vector<32x1xf32> to vector<32x32xf32>
    %382 = arith.mulf %377, %381 : vector<32x32xf32>
    %383 = vector.broadcast %362 : vector<1x32xf32> to vector<32x32xf32>
    %384 = arith.mulf %382, %383 : vector<32x32xf32>
    %385 = vector.broadcast %364 : vector<1x32xf32> to vector<32x32xf32>
    %386 = arith.addf %384, %385 : vector<32x32xf32>
    %c1_193 = arith.constant 1 : index
    %c0_194 = arith.constant 0 : index
    %c0_195 = arith.constant 0 : index
    %387 = vector.load %arg14[%c1_193, %c0_194, %c0_195] : memref<2x32x128xbf16, #tpu.memory_space<vmem>>, vector<1x32x128xbf16>
    %388 = vector.shape_cast %387 : vector<1x32x128xbf16> to vector<32x128xbf16>
    %389 = arith.truncf %386 : vector<32x32xf32> to vector<32x32xbf16>
    %cst_196 = arith.constant dense<0.000000e+00> : vector<32x128xf32>
    %390 = tpu.matmul %389, %388, %cst_196 {dimension_numbers = #tpu.dot_dimension_numbers<[1], [0], [0], [1], [0, 0, 1, 1], [], []>} : vector<32x32xbf16>, vector<32x128xbf16>, vector<32x128xf32> -> vector<32x128xf32>
    %c1_197 = arith.constant 1 : index
    %c0_198 = arith.constant 0 : index
    %c0_199 = arith.constant 0 : index
    %391 = vector.load %arg15[%c1_197, %c0_198, %c0_199] : memref<2x1x128xf32, #tpu.memory_space<vmem>>, vector<1x1x128xf32>
    %392 = vector.shape_cast %391 : vector<1x1x128xf32> to vector<1x128xf32>
    %393 = vector.broadcast %392 : vector<1x128xf32> to vector<32x128xf32>
    %394 = arith.addf %390, %393 : vector<32x128xf32>
    %cst_200 = arith.constant 5.000000e-01 : f32
    %395 = vector.broadcast %cst_200 : f32 to vector<32x128xf32>
    %396 = arith.mulf %395, %394 : vector<32x128xf32>
    %cst_201 = arith.constant 4.471500e-02 : f32
    %397 = vector.broadcast %cst_201 : f32 to vector<32x128xf32>
    %398 = arith.mulf %397, %394 : vector<32x128xf32>
    %399 = arith.mulf %398, %394 : vector<32x128xf32>
    %400 = arith.mulf %399, %394 : vector<32x128xf32>
    %401 = arith.addf %394, %400 : vector<32x128xf32>
    %cst_202 = arith.constant 0.797884583 : f32
    %402 = vector.broadcast %cst_202 : f32 to vector<32x128xf32>
    %403 = arith.mulf %402, %401 : vector<32x128xf32>
    %404 = math.tanh %403 : vector<32x128xf32>
    %cst_203 = arith.constant 1.000000e+00 : f32
    %405 = vector.broadcast %cst_203 : f32 to vector<32x128xf32>
    %406 = arith.addf %405, %404 : vector<32x128xf32>
    %407 = arith.mulf %396, %406 : vector<32x128xf32>
    %408 = arith.truncf %407 : vector<32x128xf32> to vector<32x128xbf16>
    %c1_204 = arith.constant 1 : index
    %c0_205 = arith.constant 0 : index
    %c0_206 = arith.constant 0 : index
    %409 = vector.load %arg16[%c1_204, %c0_205, %c0_206] : memref<2x128x32xbf16, #tpu.memory_space<vmem>>, vector<1x128x32xbf16>
    %410 = vector.shape_cast %409 : vector<1x128x32xbf16> to vector<128x32xbf16>
    %cst_207 = arith.constant dense<0.000000e+00> : vector<32x32xf32>
    %411 = tpu.matmul %408, %410, %cst_207 {dimension_numbers = #tpu.dot_dimension_numbers<[1], [0], [0], [1], [0, 0, 1, 1], [], []>} : vector<32x128xbf16>, vector<128x32xbf16>, vector<32x32xf32> -> vector<32x32xf32>
    %412 = arith.addf %360, %411 : vector<32x32xf32>
    %c1_208 = arith.constant 1 : index
    %c0_209 = arith.constant 0 : index
    %c0_210 = arith.constant 0 : index
    %413 = vector.load %arg17[%c1_208, %c0_209, %c0_210] : memref<2x1x32xf32, #tpu.memory_space<vmem>>, vector<1x1x32xf32>
    %414 = vector.shape_cast %413 : vector<1x1x32xf32> to vector<1x32xf32>
    %415 = vector.broadcast %414 : vector<1x32xf32> to vector<32x32xf32>
    %416 = arith.addf %412, %415 : vector<32x32xf32>
    %c0_211 = arith.constant 0 : index
    %c0_212 = arith.constant 0 : index
    %417 = vector.load %arg18[%c0_211, %c0_212] : memref<1x32xf32, #tpu.memory_space<vmem>>, vector<1x32xf32>
    %c0_213 = arith.constant 0 : index
    %c0_214 = arith.constant 0 : index
    %418 = vector.load %arg19[%c0_213, %c0_214] : memref<1x32xf32, #tpu.memory_space<vmem>>, vector<1x32xf32>
    %cst_215 = arith.constant dense<0.000000e+00> : vector<32xf32>
    %419 = vector.multi_reduction <add>, %416, %cst_215 [1] : vector<32x32xf32> to vector<32xf32>
    %420 = vector.shape_cast %419 : vector<32xf32> to vector<32x1xf32>
    %cst_216 = arith.constant 3.200000e+01 : f32
    %421 = vector.broadcast %cst_216 : f32 to vector<32x1xf32>
    %422 = arith.divf %420, %421 : vector<32x1xf32>
    %423 = vector.broadcast %422 : vector<32x1xf32> to vector<32x32xf32>
    %424 = arith.subf %416, %423 : vector<32x32xf32>
    %425 = arith.mulf %424, %424 : vector<32x32xf32>
    %cst_217 = arith.constant dense<0.000000e+00> : vector<32xf32>
    %426 = vector.multi_reduction <add>, %425, %cst_217 [1] : vector<32x32xf32> to vector<32xf32>
    %427 = vector.shape_cast %426 : vector<32xf32> to vector<32x1xf32>
    %cst_218 = arith.constant 3.200000e+01 : f32
    %428 = vector.broadcast %cst_218 : f32 to vector<32x1xf32>
    %429 = arith.divf %427, %428 : vector<32x1xf32>
    %430 = vector.broadcast %422 : vector<32x1xf32> to vector<32x32xf32>
    %431 = arith.subf %416, %430 : vector<32x32xf32>
    %cst_219 = arith.constant 9.99999974E-6 : f32
    %432 = vector.broadcast %cst_219 : f32 to vector<32x1xf32>
    %433 = arith.addf %429, %432 : vector<32x1xf32>
    %434 = math.rsqrt %433 : vector<32x1xf32>
    %435 = vector.broadcast %434 : vector<32x1xf32> to vector<32x32xf32>
    %436 = arith.mulf %431, %435 : vector<32x32xf32>
    %437 = vector.broadcast %417 : vector<1x32xf32> to vector<32x32xf32>
    %438 = arith.mulf %436, %437 : vector<32x32xf32>
    %439 = vector.broadcast %418 : vector<1x32xf32> to vector<32x32xf32>
    %440 = arith.addf %438, %439 : vector<32x32xf32>
    %c0_220 = arith.constant 0 : index
    %c0_221 = arith.constant 0 : index
    %441 = vector.load %arg20[%c0_220, %c0_221] : memref<32x4xbf16, #tpu.memory_space<vmem>>, vector<32x4xbf16>
    %442 = arith.truncf %440 : vector<32x32xf32> to vector<32x32xbf16>
    %cst_222 = arith.constant dense<0.000000e+00> : vector<32x4xf32>
    %443 = tpu.matmul %442, %441, %cst_222 {dimension_numbers = #tpu.dot_dimension_numbers<[1], [0], [0], [1], [0, 0, 1, 1], [], []>} : vector<32x32xbf16>, vector<32x4xbf16>, vector<32x4xf32> -> vector<32x4xf32>
    %c0_223 = arith.constant 0 : index
    %c0_224 = arith.constant 0 : index
    %444 = vector.load %arg21[%c0_223, %c0_224] : memref<1x4xf32, #tpu.memory_space<vmem>>, vector<1x4xf32>
    %445 = vector.broadcast %444 : vector<1x4xf32> to vector<32x4xf32>
    %446 = arith.addf %443, %445 : vector<32x4xf32>
    %447 = vector.shape_cast %446 : vector<32x4xf32> to vector<8x4x4xf32>
    %448 = vector.shape_cast %4 : vector<8x1xf32> to vector<8x1x1xf32>
    %449 = vector.broadcast %448 : vector<8x1x1xf32> to vector<8x4x4xf32>
    %450 = arith.subf %447, %449 : vector<8x4x4xf32>
    %451 = vector.shape_cast %3 : vector<8x1xf32> to vector<8x1x1xf32>
    %cst_225 = arith.constant 1.000000e-10 : f32
    %452 = vector.broadcast %cst_225 : f32 to vector<8x1x1xf32>
    %453 = arith.addf %451, %452 : vector<8x1x1xf32>
    %454 = vector.broadcast %453 : vector<8x1x1xf32> to vector<8x4x4xf32>
    %455 = arith.divf %450, %454 : vector<8x4x4xf32>
    %456 = vector.shape_cast %2 : vector<8x1xf32> to vector<8x1x1xf32>
    %457 = vector.broadcast %456 : vector<8x1x1xf32> to vector<8x4x4xf32>
    %458 = arith.mulf %455, %457 : vector<8x4x4xf32>
    %459 = vector.shape_cast %1 : vector<8x1xf32> to vector<8x1x1xf32>
    %460 = vector.broadcast %459 : vector<8x1x1xf32> to vector<8x4x4xf32>
    %461 = arith.addf %458, %460 : vector<8x4x4xf32>
    %462 = vector.extract_strided_slice %461 {offsets = [0, 0, 0], sizes = [8, 1, 4], strides = [1, 1, 1]} : vector<8x4x4xf32> to vector<8x1x4xf32>
    %463 = vector.shape_cast %462 : vector<8x1x4xf32> to vector<8x4xf32>
    %464 = vector.extract_strided_slice %461 {offsets = [0, 1, 0], sizes = [8, 1, 4], strides = [1, 1, 1]} : vector<8x4x4xf32> to vector<8x1x4xf32>
    %465 = vector.shape_cast %464 : vector<8x1x4xf32> to vector<8x4xf32>
    %466 = vector.extract_strided_slice %461 {offsets = [0, 2, 0], sizes = [8, 1, 4], strides = [1, 1, 1]} : vector<8x4x4xf32> to vector<8x1x4xf32>
    %467 = vector.shape_cast %466 : vector<8x1x4xf32> to vector<8x4xf32>
    %468 = vector.extract_strided_slice %461 {offsets = [0, 3, 0], sizes = [8, 1, 4], strides = [1, 1, 1]} : vector<8x4x4xf32> to vector<8x1x4xf32>
    %469 = vector.shape_cast %468 : vector<8x1x4xf32> to vector<8x4xf32>
    %470 = tpu.concatenate %463, %465, %467, %469 in 1 : vector<8x4xf32>, vector<8x4xf32>, vector<8x4xf32>, vector<8x4xf32> -> vector<8x16xf32>
    %c0_226 = arith.constant 0 : index
    %c0_227 = arith.constant 0 : index
    %471 = vector.load %arg22[%c0_226, %c0_227] : memref<8x16xf32, #tpu.memory_space<vmem>>, vector<8x16xf32>
    tpu.vector_store %arg22[%c0_226, %c0_227], %470 {strides = array<i32>} : memref<8x16xf32, #tpu.memory_space<vmem>>, vector<8x16xf32>,
    return
  }
  func.func @transform_0(%arg0: i32) -> (i32, i32) {
    %c0_i32 = arith.constant 0 : i32
    %c0_i32_0 = arith.constant 0 : i32
    return %arg0, %c0_i32 : i32, i32
  }
  func.func @transform_1(%arg0: i32) -> (i32, i32, i32) {
    %c0_i32 = arith.constant 0 : i32
    %c0_i32_0 = arith.constant 0 : i32
    %c0_i32_1 = arith.constant 0 : i32
    return %arg0, %c0_i32, %c0_i32_0 : i32, i32, i32
  }
  func.func @transform_2(%arg0: i32) -> (i32, i32) {
    %c0_i32 = arith.constant 0 : i32
    %c0_i32_0 = arith.constant 0 : i32
    %c0_i32_1 = arith.constant 0 : i32
    return %c0_i32, %c0_i32_0 : i32, i32
  }
  func.func @transform_3(%arg0: i32) -> (i32, i32) {
    %c0_i32 = arith.constant 0 : i32
    %c0_i32_0 = arith.constant 0 : i32
    %c0_i32_1 = arith.constant 0 : i32
    return %c0_i32, %c0_i32_0 : i32, i32
  }
  func.func @transform_4(%arg0: i32) -> (i32, i32) {
    %c0_i32 = arith.constant 0 : i32
    %c0_i32_0 = arith.constant 0 : i32
    %c0_i32_1 = arith.constant 0 : i32
    return %c0_i32, %c0_i32_0 : i32, i32
  }
  func.func @transform_5(%arg0: i32) -> (i32, i32, i32) {
    %c0_i32 = arith.constant 0 : i32
    %c0_i32_0 = arith.constant 0 : i32
    %c0_i32_1 = arith.constant 0 : i32
    %c0_i32_2 = arith.constant 0 : i32
    return %c0_i32, %c0_i32_0, %c0_i32_1 : i32, i32, i32
  }
  func.func @transform_6(%arg0: i32) -> (i32, i32, i32) {
    %c0_i32 = arith.constant 0 : i32
    %c0_i32_0 = arith.constant 0 : i32
    %c0_i32_1 = arith.constant 0 : i32
    %c0_i32_2 = arith.constant 0 : i32
    return %c0_i32, %c0_i32_0, %c0_i32_1 : i32, i32, i32
  }
  func.func @transform_7(%arg0: i32) -> (i32, i32, i32) {
    %c0_i32 = arith.constant 0 : i32
    %c0_i32_0 = arith.constant 0 : i32
    %c0_i32_1 = arith.constant 0 : i32
    %c0_i32_2 = arith.constant 0 : i32
    return %c0_i32, %c0_i32_0, %c0_i32_1 : i32, i32, i32
  }
  func.func @transform_8(%arg0: i32) -> (i32, i32, i32) {
    %c0_i32 = arith.constant 0 : i32
    %c0_i32_0 = arith.constant 0 : i32
    %c0_i32_1 = arith.constant 0 : i32
    %c0_i32_2 = arith.constant 0 : i32
    return %c0_i32, %c0_i32_0, %c0_i32_1 : i32, i32, i32
  }
  func.func @transform_9(%arg0: i32) -> (i32, i32, i32) {
    %c0_i32 = arith.constant 0 : i32
    %c0_i32_0 = arith.constant 0 : i32
    %c0_i32_1 = arith.constant 0 : i32
    %c0_i32_2 = arith.constant 0 : i32
    return %c0_i32, %c0_i32_0, %c0_i32_1 : i32, i32, i32
  }
  func.func @transform_10(%arg0: i32) -> (i32, i32, i32) {
    %c0_i32 = arith.constant 0 : i32
    %c0_i32_0 = arith.constant 0 : i32
    %c0_i32_1 = arith.constant 0 : i32
    %c0_i32_2 = arith.constant 0 : i32
    return %c0_i32, %c0_i32_0, %c0_i32_1 : i32, i32, i32
  }
  func.func @transform_11(%arg0: i32) -> (i32, i32, i32) {
    %c0_i32 = arith.constant 0 : i32
    %c0_i32_0 = arith.constant 0 : i32
    %c0_i32_1 = arith.constant 0 : i32
    %c0_i32_2 = arith.constant 0 : i32
    return %c0_i32, %c0_i32_0, %c0_i32_1 : i32, i32, i32
  }
  func.func @transform_12(%arg0: i32) -> (i32, i32, i32) {
    %c0_i32 = arith.constant 0 : i32
    %c0_i32_0 = arith.constant 0 : i32
    %c0_i32_1 = arith.constant 0 : i32
    %c0_i32_2 = arith.constant 0 : i32
    return %c0_i32, %c0_i32_0, %c0_i32_1 : i32, i32, i32
  }
  func.func @transform_13(%arg0: i32) -> (i32, i32, i32) {
    %c0_i32 = arith.constant 0 : i32
    %c0_i32_0 = arith.constant 0 : i32
    %c0_i32_1 = arith.constant 0 : i32
    %c0_i32_2 = arith.constant 0 : i32
    return %c0_i32, %c0_i32_0, %c0_i32_1 : i32, i32, i32
  }
  func.func @transform_14(%arg0: i32) -> (i32, i32, i32) {
    %c0_i32 = arith.constant 0 : i32
    %c0_i32_0 = arith.constant 0 : i32
    %c0_i32_1 = arith.constant 0 : i32
    %c0_i32_2 = arith.constant 0 : i32
    return %c0_i32, %c0_i32_0, %c0_i32_1 : i32, i32, i32
  }
  func.func @transform_15(%arg0: i32) -> (i32, i32, i32) {
    %c0_i32 = arith.constant 0 : i32
    %c0_i32_0 = arith.constant 0 : i32
    %c0_i32_1 = arith.constant 0 : i32
    %c0_i32_2 = arith.constant 0 : i32
    return %c0_i32, %c0_i32_0, %c0_i32_1 : i32, i32, i32
  }
  func.func @transform_16(%arg0: i32) -> (i32, i32, i32) {
    %c0_i32 = arith.constant 0 : i32
    %c0_i32_0 = arith.constant 0 : i32
    %c0_i32_1 = arith.constant 0 : i32
    %c0_i32_2 = arith.constant 0 : i32
    return %c0_i32, %c0_i32_0, %c0_i32_1 : i32, i32, i32
  }
  func.func @transform_17(%arg0: i32) -> (i32, i32) {
    %c0_i32 = arith.constant 0 : i32
    %c0_i32_0 = arith.constant 0 : i32
    %c0_i32_1 = arith.constant 0 : i32
    return %c0_i32, %c0_i32_0 : i32, i32
  }
  func.func @transform_18(%arg0: i32) -> (i32, i32) {
    %c0_i32 = arith.constant 0 : i32
    %c0_i32_0 = arith.constant 0 : i32
    %c0_i32_1 = arith.constant 0 : i32
    return %c0_i32, %c0_i32_0 : i32, i32
  }
  func.func @transform_19(%arg0: i32) -> (i32, i32) {
    %c0_i32 = arith.constant 0 : i32
    %c0_i32_0 = arith.constant 0 : i32
    %c0_i32_1 = arith.constant 0 : i32
    return %c0_i32, %c0_i32_0 : i32, i32
  }
  func.func @transform_20(%arg0: i32) -> (i32, i32) {
    %c0_i32 = arith.constant 0 : i32
    %c0_i32_0 = arith.constant 0 : i32
    %c0_i32_1 = arith.constant 0 : i32
    return %c0_i32, %c0_i32_0 : i32, i32
  }
  func.func @transform_21(%arg0: i32) -> (i32, i32) {
    %c0_i32 = arith.constant 0 : i32
    %c0_i32_0 = arith.constant 0 : i32
    return %arg0, %c0_i32 : i32, i32
  }
}

</mosaic_0001>

<llo_original>
// kernel: tile.18
$region0: #{tile.18}
  #allocation0 [shape = 's32[1]{0}', space=sflag, size = 0x4, scoped, tag = 'scoped memory for tile.18']
  %s0 = inlined_call_operand.vmem [shape: f32[4], index: 0, kind: input, shape index: {}]
  %s1 = inlined_call_operand.vmem [shape: f32[2,4], index: 1, kind: output, shape index: {}]
  // Predicated region
  $region2: #{tile.18} parent=0 // pred_check
    _
  $region3: #{tile.18} parent=0 // pred_check_branch
    %3 = sbr.rel (0) target = $region5
  $region4: #{tile.18} parent=0 // pred_region
    _
  $region5: #{tile.18} parent=0 // pred_fallthru
    _
  %v4 = vld [vmem:[%s0] ss:$0 sm:$0xff]
  %5 = vst [vmem:[%s1] sm:$0x3] %v4

// kernel: model_forward.1
$region0: #{model_forward.1}
  #allocation0 [shape = 'u32[]', space=smem, size = 0x4, offset = 0x4, fixed_abs, tag = 'smem constant byte address 0x4 - core index']
  #allocation1 [shape = 'u32[144,128]{1,0:T(1,128)}', space=vmem, size = 0x12000, scoped, tag = 'internal scratch']
  %s0 = inlined_call_operand.vmem [shape: f32[8,4], index: 0, kind: input, shape index: {}]
  %s1 = inlined_call_operand.vmem [shape: f32[8,4,4], index: 1, kind: input, shape index: {}]
  %s2 = inlined_call_operand.vmem [shape: bf16[4,32], index: 2, kind: input, shape index: {}]
  %s3 = inlined_call_operand.vmem [shape: f32[1,32], index: 3, kind: input, shape index: {}]
  %s4 = inlined_call_operand.vmem [shape: f32[4,32], index: 4, kind: input, shape index: {}]
  %s5 = inlined_call_operand.vmem [shape: f32[2,1,32], index: 5, kind: input, shape index: {}]
  %s6 = inlined_call_operand.vmem [shape: f32[2,1,32], index: 6, kind: input, shape index: {}]
  %s7 = inlined_call_operand.vmem [shape: bf16[12,32,16], index: 7, kind: input, shape index: {}]
  %s8 = inlined_call_operand.vmem [shape: f32[12,1,16], index: 8, kind: input, shape index: {}]
  %s9 = inlined_call_operand.vmem [shape: bf16[4,16,32], index: 9, kind: input, shape index: {}]
  %s10 = inlined_call_operand.vmem [shape: f32[2,1,32], index: 10, kind: input, shape index: {}]
  %s11 = inlined_call_operand.vmem [shape: f32[2,1,32], index: 11, kind: input, shape index: {}]
  %s12 = inlined_call_operand.vmem [shape: f32[2,1,32], index: 12, kind: input, shape index: {}]
  %s13 = inlined_call_operand.vmem [shape: bf16[2,32,128], index: 13, kind: input, shape index: {}]
  %s14 = inlined_call_operand.vmem [shape: f32[2,1,128], index: 14, kind: input, shape index: {}]
  %s15 = inlined_call_operand.vmem [shape: bf16[2,128,32], index: 15, kind: input, shape index: {}]
  %s16 = inlined_call_operand.vmem [shape: f32[2,1,32], index: 16, kind: input, shape index: {}]
  %s17 = inlined_call_operand.vmem [shape: f32[1,32], index: 17, kind: input, shape index: {}]
  %s18 = inlined_call_operand.vmem [shape: f32[1,32], index: 18, kind: input, shape index: {}]
  %s19 = inlined_call_operand.vmem [shape: bf16[32,4], index: 19, kind: input, shape index: {}]
  %s20 = inlined_call_operand.vmem [shape: f32[1,4], index: 20, kind: input, shape index: {}]
  %s21 = inlined_call_operand.vmem [shape: f32[8,16], index: 21, kind: output, shape index: {}]
  %s22 = sld [smem:[#allocation0]]
  $region94: #{model_forward.1} parent=0
    _
  %s24 = ssub.s32 1, %s22
  %s25 = scalar_select 0, %s24, %s22
  // Predicated region
  $region2: #{model_forward.1} parent=0 // pred_check
    _
  $region3: #{model_forward.1} parent=0 // pred_check_branch
    %27 = sbr.rel (0) target = $region5
  $region4: #{model_forward.1} parent=0 // pred_region
    _
  $region5: #{model_forward.1} parent=0 // pred_fallthru
    _
  // Predicated region
  $region6: #{model_forward.1} parent=0 // pred_check
    _
  $region7: #{model_forward.1} parent=0 // pred_check_branch
    %29 = sbr.rel (0) target = $region9
  $region8: #{model_forward.1} parent=0 // pred_region
    _
  $region9: #{model_forward.1} parent=0 // pred_fallthru
    _
  // Predicated region
  $region10: #{model_forward.1} parent=0 // pred_check
    _
  $region11: #{model_forward.1} parent=0 // pred_check_branch
    %31 = sbr.rel (0) target = $region13
  $region12: #{model_forward.1} parent=0 // pred_region
    _
  $region13: #{model_forward.1} parent=0 // pred_fallthru
    _
  // Predicated region
  $region14: #{model_forward.1} parent=0 // pred_check
    _
  $region15: #{model_forward.1} parent=0 // pred_check_branch
    %33 = sbr.rel (0) target = $region17
  $region16: #{model_forward.1} parent=0 // pred_region
    _
  $region17: #{model_forward.1} parent=0 // pred_fallthru
    _
  // Predicated region
  $region18: #{model_forward.1} parent=0 // pred_check
    _
  $region19: #{model_forward.1} parent=0 // pred_check_branch
    %35 = sbr.rel (0) target = $region21
  $region20: #{model_forward.1} parent=0 // pred_region
    _
  $region21: #{model_forward.1} parent=0 // pred_fallthru
    _
  // Predicated region
  $region22: #{model_forward.1} parent=0 // pred_check
    _
  $region23: #{model_forward.1} parent=0 // pred_check_branch
    %37 = sbr.rel (0) target = $region25
  $region24: #{model_forward.1} parent=0 // pred_region
    _
  $region25: #{model_forward.1} parent=0 // pred_fallthru
    _
  // Predicated region
  $region26: #{model_forward.1} parent=0 // pred_check
    _
  $region27: #{model_forward.1} parent=0 // pred_check_branch
    %39 = sbr.rel (0) target = $region29
  $region28: #{model_forward.1} parent=0 // pred_region
    _
  $region29: #{model_forward.1} parent=0 // pred_fallthru
    _
  // Predicated region
  $region30: #{model_forward.1} parent=0 // pred_check
    _
  $region31: #{model_forward.1} parent=0 // pred_check_branch
    %41 = sbr.rel (0) target = $region33
  $region32: #{model_forward.1} parent=0 // pred_region
    _
  $region33: #{model_forward.1} parent=0 // pred_fallthru
    _
  // Predicated region
  $region34: #{model_forward.1} parent=0 // pred_check
    _
  $region35: #{model_forward.1} parent=0 // pred_check_branch
    %43 = sbr.rel (0) target = $region37
  $region36: #{model_forward.1} parent=0 // pred_region
    _
  $region37: #{model_forward.1} parent=0 // pred_fallthru
    _
  // Predicated region
  $region38: #{model_forward.1} parent=0 // pred_check
    _
  $region39: #{model_forward.1} parent=0 // pred_check_branch
    %45 = sbr.rel (0) target = $region41
  $region40: #{model_forward.1} parent=0 // pred_region
    _
  $region41: #{model_forward.1} parent=0 // pred_fallthru
    _
  // Predicated region
  $region42: #{model_forward.1} parent=0 // pred_check
    _
  $region43: #{model_forward.1} parent=0 // pred_check_branch
    %47 = sbr.rel (0) target = $region45
  $region44: #{model_forward.1} parent=0 // pred_region
    _
  $region45: #{model_forward.1} parent=0 // pred_fallthru
    _
  // Predicated region
  $region46: #{model_forward.1} parent=0 // pred_check
    _
  $region47: #{model_forward.1} parent=0 // pred_check_branch
    %49 = sbr.rel (0) target = $region49
  $region48: #{model_forward.1} parent=0 // pred_region
    _
  $region49: #{model_forward.1} parent=0 // pred_fallthru
    _
  // Predicated region
  $region50: #{model_forward.1} parent=0 // pred_check
    _
  $region51: #{model_forward.1} parent=0 // pred_check_branch
    %51 = sbr.rel (0) target = $region53
  $region52: #{model_forward.1} parent=0 // pred_region
    _
  $region53: #{model_forward.1} parent=0 // pred_fallthru
    _
  // Predicated region
  $region54: #{model_forward.1} parent=0 // pred_check
    _
  $region55: #{model_forward.1} parent=0 // pred_check_branch
    %53 = sbr.rel (0) target = $region57
  $region56: #{model_forward.1} parent=0 // pred_region
    _
  $region57: #{model_forward.1} parent=0 // pred_fallthru
    _
  // Predicated region
  $region58: #{model_forward.1} parent=0 // pred_check
    _
  $region59: #{model_forward.1} parent=0 // pred_check_branch
    %55 = sbr.rel (0) target = $region61
  $region60: #{model_forward.1} parent=0 // pred_region
    _
  $region61: #{model_forward.1} parent=0 // pred_fallthru
    _
  // Predicated region
  $region62: #{model_forward.1} parent=0 // pred_check
    _
  $region63: #{model_forward.1} parent=0 // pred_check_branch
    %57 = sbr.rel (0) target = $region65
  $region64: #{model_forward.1} parent=0 // pred_region
    _
  $region65: #{model_forward.1} parent=0 // pred_fallthru
    _
  // Predicated region
  $region66: #{model_forward.1} parent=0 // pred_check
    _
  $region67: #{model_forward.1} parent=0 // pred_check_branch
    %59 = sbr.rel (0) target = $region69
  $region68: #{model_forward.1} parent=0 // pred_region
    _
  $region69: #{model_forward.1} parent=0 // pred_fallthru
    _
  // Predicated region
  $region70: #{model_forward.1} parent=0 // pred_check
    _
  $region71: #{model_forward.1} parent=0 // pred_check_branch
    %61 = sbr.rel (0) target = $region73
  $region72: #{model_forward.1} parent=0 // pred_region
    _
  $region73: #{model_forward.1} parent=0 // pred_fallthru
    _
  // Predicated region
  $region74: #{model_forward.1} parent=0 // pred_check
    _
  $region75: #{model_forward.1} parent=0 // pred_check_branch
    %63 = sbr.rel (0) target = $region77
  $region76: #{model_forward.1} parent=0 // pred_region
    _
  $region77: #{model_forward.1} parent=0 // pred_fallthru
    _
  // Predicated region
  $region78: #{model_forward.1} parent=0 // pred_check
    _
  $region79: #{model_forward.1} parent=0 // pred_check_branch
    %65 = sbr.rel (0) target = $region81
  $region80: #{model_forward.1} parent=0 // pred_region
    _
  $region81: #{model_forward.1} parent=0 // pred_fallthru
    _
  // Predicated region
  $region82: #{model_forward.1} parent=0 // pred_check
    _
  $region83: #{model_forward.1} parent=0 // pred_check_branch
    %67 = sbr.rel (0) target = $region85
  $region84: #{model_forward.1} parent=0 // pred_region
    _
  $region85: #{model_forward.1} parent=0 // pred_fallthru
    _
  %v69 = vld [vmem:[%s0] sm:$0xff]
  %v70 = vld [vmem:[%s1] sm:$0xf]
  %v71 = vld [vmem:[%s1 + $0x4] sm:$0xf]
  %v72 = vld [vmem:[%s1 + $0x8] sm:$0xf]
  %v73 = vld [vmem:[%s1 + $0xc] sm:$0xf]
  %v74 = vld [vmem:[%s1 + $0x10] sm:$0xf]
  %v75 = vld [vmem:[%s1 + $0x14] sm:$0xf]
  %v76 = vld [vmem:[%s1 + $0x18] sm:$0xf]
  %v77 = vld [vmem:[%s1 + $0x1c] sm:$0xf]
  %v79 = vcombine.high %v69, %v69
  %v81 = vunpack.c.l.s4 1966171168
  %v82 = vunpack.c.0.s8 %v81
  %v83 = vlaneseq
  %v84 = vshrl.u32 %v83, 7
  %v85 = vsub.s32 %v82, %v84
  %v86 = vrot.slane %v69, %v85
  %v88 = vunpack.c.l.s4 1966171168
  %v89 = vunpack.c.0.s8 %v88
  %v90 = vlaneseq
  %v91 = vshrl.u32 %v90, 7
  %v92 = vsub.s32 %v89, %v91
  %v93 = vrot.slane %v79, %v92
  %v94 = vcombine.high %v86, %v86
  %v95 = vcombine.high %v93, %v93
  %v97 = vunpack.c.l.s4 1966171168
  %v98 = vunpack.c.0.s8 %v97
  %v99 = vlaneseq
  %v100 = vshrl.u32 %v99, 7
  %v101 = vsub.s32 %v98, %v100
  %v102 = vrot.slane %v86, %v101
  %v104 = vunpack.c.l.s4 1966171168
  %v105 = vunpack.c.0.s8 %v104
  %v106 = vlaneseq
  %v107 = vshrl.u32 %v106, 7
  %v108 = vsub.s32 %v105, %v107
  %v109 = vrot.slane %v93, %v108
  %v111 = vunpack.c.l.s4 1966171168
  %v112 = vunpack.c.0.s8 %v111
  %v113 = vlaneseq
  %v114 = vshrl.u32 %v113, 7
  %v115 = vsub.s32 %v112, %v114
  %v116 = vrot.slane %v94, %v115
  %v118 = vunpack.c.l.s4 1966171168
  %v119 = vunpack.c.0.s8 %v118
  %v120 = vlaneseq
  %v121 = vshrl.u32 %v120, 7
  %v122 = vsub.s32 %v119, %v121
  %v123 = vrot.slane %v95, %v122
  %v124 = vcombine.high %v102, %v102
  %v125 = vcombine.high %v109, %v109
  %v126 = vcombine.high %v116, %v116
  %v127 = vcombine.high %v123, %v123
  %v128 = vlaneseq
  %v129 = vshrl.u32 %v128, 7
  %v130 = vsub.s32 0, %v129
  %v131 = vrot.slane %v102, %v130
  %v132 = vlaneseq
  %v133 = vshrl.u32 %v132, 7
  %v134 = vsub.s32 0, %v133
  %v135 = vrot.slane %v116, %v134
  %v136 = vlaneseq
  %v137 = vshrl.u32 %v136, 7
  %v138 = vsub.s32 0, %v137
  %v139 = vrot.slane %v124, %v138
  %v140 = vlaneseq
  %v141 = vshrl.u32 %v140, 7
  %v142 = vsub.s32 0, %v141
  %v143 = vrot.slane %v126, %v142
  %v144 = vlaneseq
  %v145 = vshrl.u32 %v144, 7
  %v146 = vsub.s32 0, %v145
  %v147 = vrot.slane %v109, %v146
  %v148 = vlaneseq
  %v149 = vshrl.u32 %v148, 7
  %v150 = vsub.s32 0, %v149
  %v151 = vrot.slane %v123, %v150
  %v152 = vlaneseq
  %v153 = vshrl.u32 %v152, 7
  %v154 = vsub.s32 0, %v153
  %v155 = vrot.slane %v125, %v154
  %v156 = vlaneseq
  %v157 = vshrl.u32 %v156, 7
  %v158 = vsub.s32 0, %v157
  %v159 = vrot.slane %v127, %v158
  %160 = vset.pattern.permute.xlu0 0
  %161 = vperm.xlu0 %160, %v131
  %v162 = vpop.permute.xlu0 %161
  %164 = vset.pattern.permute.xlu0 0
  %165 = vperm.xlu0 %164, %v135
  %v166 = vpop.permute.xlu0 %165
  %168 = vset.pattern.permute.xlu0 0
  %169 = vperm.xlu0 %168, %v139
  %v170 = vpop.permute.xlu0 %169
  %172 = vset.pattern.permute.xlu0 0
  %173 = vperm.xlu0 %172, %v143
  %v174 = vpop.permute.xlu0 %173
  %176 = vset.pattern.permute.xlu0 0
  %177 = vperm.xlu0 %176, %v147
  %v178 = vpop.permute.xlu0 %177
  %180 = vset.pattern.permute.xlu0 0
  %181 = vperm.xlu0 %180, %v151
  %v182 = vpop.permute.xlu0 %181
  %184 = vset.pattern.permute.xlu0 0
  %185 = vperm.xlu0 %184, %v155
  %v186 = vpop.permute.xlu0 %185
  %188 = vset.pattern.permute.xlu0 0
  %189 = vperm.xlu0 %188, %v159
  %v190 = vpop.permute.xlu0 %189
  %v192 = vsub.f32 %v70, %v162
  %v193 = vsub.f32 %v71, %v166
  %v194 = vsub.f32 %v72, %v170
  %v195 = vsub.f32 %v73, %v174
  %v196 = vsub.f32 %v74, %v178
  %v197 = vsub.f32 %v75, %v182
  %v198 = vsub.f32 %v76, %v186
  %v199 = vsub.f32 %v77, %v190
  %200 = vset.pattern.permute.xlu0 1
  %201 = vperm.xlu0 %200, %v131
  %v202 = vpop.permute.xlu0 %201
  %204 = vset.pattern.permute.xlu0 1
  %205 = vperm.xlu0 %204, %v135
  %v206 = vpop.permute.xlu0 %205
  %208 = vset.pattern.permute.xlu0 1
  %209 = vperm.xlu0 %208, %v139
  %v210 = vpop.permute.xlu0 %209
  %212 = vset.pattern.permute.xlu0 1
  %213 = vperm.xlu0 %212, %v143
  %v214 = vpop.permute.xlu0 %213
  %216 = vset.pattern.permute.xlu0 1
  %217 = vperm.xlu0 %216, %v147
  %v218 = vpop.permute.xlu0 %217
  %220 = vset.pattern.permute.xlu0 1
  %221 = vperm.xlu0 %220, %v151
  %v222 = vpop.permute.xlu0 %221
  %224 = vset.pattern.permute.xlu0 1
  %225 = vperm.xlu0 %224, %v155
  %v226 = vpop.permute.xlu0 %225
  %228 = vset.pattern.permute.xlu0 1
  %229 = vperm.xlu0 %228, %v159
  %v230 = vpop.permute.xlu0 %229
  %v232 = vrcp.pop %v202
  %v233 = vmul.f32 %v192, %v232
  %v234 = vrcp.pop %v206
  %v235 = vmul.f32 %v193, %v234
  %v236 = vrcp.pop %v210
  %v237 = vmul.f32 %v194, %v236
  %v238 = vrcp.pop %v214
  %v239 = vmul.f32 %v195, %v238
  %v240 = vrcp.pop %v218
  %v241 = vmul.f32 %v196, %v240
  %v242 = vrcp.pop %v222
  %v243 = vmul.f32 %v197, %v242
  %v244 = vrcp.pop %v226
  %v245 = vmul.f32 %v198, %v244
  %v246 = vrcp.pop %v230
  %v247 = vmul.f32 %v199, %v246
  %256 = vset.pattern.permute.xlu0 2
  %257 = vperm.xlu0 %256, %v131
  %v258 = vpop.permute.xlu0 %257
  %260 = vset.pattern.permute.xlu0 2
  %261 = vperm.xlu0 %260, %v135
  %v262 = vpop.permute.xlu0 %261
  %264 = vset.pattern.permute.xlu0 2
  %265 = vperm.xlu0 %264, %v139
  %v266 = vpop.permute.xlu0 %265
  %268 = vset.pattern.permute.xlu0 2
  %269 = vperm.xlu0 %268, %v143
  %v270 = vpop.permute.xlu0 %269
  %272 = vset.pattern.permute.xlu0 2
  %273 = vperm.xlu0 %272, %v147
  %v274 = vpop.permute.xlu0 %273
  %276 = vset.pattern.permute.xlu0 2
  %277 = vperm.xlu0 %276, %v151
  %v278 = vpop.permute.xlu0 %277
  %280 = vset.pattern.permute.xlu0 2
  %281 = vperm.xlu0 %280, %v155
  %v282 = vpop.permute.xlu0 %281
  %284 = vset.pattern.permute.xlu0 2
  %285 = vperm.xlu0 %284, %v159
  %v286 = vpop.permute.xlu0 %285
  %v288 = vmul.f32 %v233, %v258
  %v289 = vmul.f32 %v235, %v262
  %v290 = vmul.f32 %v237, %v266
  %v291 = vmul.f32 %v239, %v270
  %v292 = vmul.f32 %v241, %v274
  %v293 = vmul.f32 %v243, %v278
  %v294 = vmul.f32 %v245, %v282
  %v295 = vmul.f32 %v247, %v286
  %296 = vset.pattern.permute.xlu0 3
  %297 = vperm.xlu0 %296, %v131
  %v298 = vpop.permute.xlu0 %297
  %300 = vset.pattern.permute.xlu0 3
  %301 = vperm.xlu0 %300, %v135
  %v302 = vpop.permute.xlu0 %301
  %304 = vset.pattern.permute.xlu0 3
  %305 = vperm.xlu0 %304, %v139
  %v306 = vpop.permute.xlu0 %305
  %308 = vset.pattern.permute.xlu0 3
  %309 = vperm.xlu0 %308, %v143
  %v310 = vpop.permute.xlu0 %309
  %312 = vset.pattern.permute.xlu0 3
  %313 = vperm.xlu0 %312, %v147
  %v314 = vpop.permute.xlu0 %313
  %316 = vset.pattern.permute.xlu0 3
  %317 = vperm.xlu0 %316, %v151
  %v318 = vpop.permute.xlu0 %317
  %320 = vset.pattern.permute.xlu0 3
  %321 = vperm.xlu0 %320, %v155
  %v322 = vpop.permute.xlu0 %321
  %324 = vset.pattern.permute.xlu0 3
  %325 = vperm.xlu0 %324, %v159
  %v326 = vpop.permute.xlu0 %325
  %v328 = vadd.f32 %v288, %v298
  %v329 = vadd.f32 %v289, %v302
  %v330 = vadd.f32 %v290, %v306
  %v331 = vadd.f32 %v291, %v310
  %v332 = vadd.f32 %v292, %v314
  %v333 = vadd.f32 %v293, %v318
  %v334 = vadd.f32 %v294, %v322
  %v335 = vadd.f32 %v295, %v326
  %v336 = vld [vmem:[%s2] sm:$0x3]
  %v345 = vcombine.low %v328, %v329
  %v346 = vcombine.low %v330, %v331
  %v347 = vcombine.low %v332, %v333
  %v348 = vcombine.low %v334, %v335
  %v353 = vpack.c.bf16 %v346, %v345
  %v354 = vpack.c.bf16 %v348, %v347
  %v355 = vld [vmem:[%s3] sm:$0x1]
  %v357 = vlaneseq
  %v358 = vshrl.u32 %v357, 7
  %v359 = vsub.s32 0, %v358
  %v360 = vrot.slane %v355, %v359
  %vm362 = vcmask 31744
  %v364 = vsel %vm362, %v353, 0
  %v367 = vsel %vm362, %v354, 0
  %vm369 = vcmask 1041408
  %v371 = vsel %vm369, %v336, 0
  %373 = vmatprep.subr.bf16.mxu0 0
  %374 = vmatpush1.bf16.msra.mxu0 %v371
  %375 = vmatprep.subr.bf16.mxu0 0
  %376 = vmatpush1.bf16.msra.mxu0 0
  %377 = vmatprep.subr.bf16.mxu0 0
  %378 = vmatpush1.bf16.msra.mxu0 0
  %379 = vmatprep.subr.bf16.mxu0 0
  %380 = vmatpush1.bf16.msra.mxu0 0
  %381 = vmatprep.subr.bf16.mxu0 0
  %382 = vmatpush1.bf16.msra.mxu0 0
  %383 = vmatprep.subr.bf16.mxu0 0
  %384 = vmatpush1.bf16.msra.mxu0 0
  %385 = vmatprep.subr.bf16.mxu0 0
  %386 = vmatpush1.bf16.msra.mxu0 0
  %387 = vmatprep.subr.bf16.mxu0 0
  %388 = vmatpush1.bf16.msra.mxu0 0
  %389 = vmatprep.subr.bf16.mxu0 0
  %390 = vmatpush1.bf16.msra.mxu0 0
  %391 = vmatprep.subr.bf16.mxu0 0
  %392 = vmatpush1.bf16.msra.mxu0 0
  %393 = vmatprep.subr.bf16.mxu0 0
  %394 = vmatpush1.bf16.msra.mxu0 0
  %395 = vmatprep.subr.bf16.mxu0 0
  %396 = vmatpush1.bf16.msra.mxu0 0
  %397 = vmatprep.subr.bf16.mxu0 0
  %398 = vmatpush1.bf16.msra.mxu0 0
  %399 = vmatprep.subr.bf16.mxu0 0
  %400 = vmatpush1.bf16.msra.mxu0 0
  %401 = vmatprep.subr.bf16.mxu0 0
  %402 = vmatpush1.bf16.msra.mxu0 0
  %403 = vmatprep.subr.bf16.mxu0 0
  %404 = vmatpush1.bf16.msra.mxu0 0
  %405 = vmatprep.mubr.bf16.mxu0 0
  %406 = vmatmul.mubr.bf16.gmra.mrb[0].mxu0 %v364
  %v407 = vpop.f32.mrb[0].mxu0
  %v408 = vadd.f32 %v360, %v407
  %v409 = vpop.f32.mrb[0].mxu0
  %v410 = vpop.f32.mrb[0].mxu0
  %v411 = vadd.f32 %v360, %v410
  %v412 = vpop.f32.mrb[0].mxu0
  %413 = vmatprep.mubr.bf16.mxu0 0
  %414 = vmatmul.mubr.bf16.gmra.mrb[0].mxu0 %v367
  %v415 = vpop.f32.mrb[0].mxu0
  %v416 = vadd.f32 %v360, %v415
  %v417 = vpop.f32.mrb[0].mxu0
  %v418 = vpop.f32.mrb[0].mxu0
  %v419 = vadd.f32 %v360, %v418
  %v420 = vpop.f32.mrb[0].mxu0
  %421 = vdwg.mxu0
  %v426 = vcombine.high %v408, %v408
  %v427 = vcombine.high %v411, %v411
  %v428 = vcombine.high %v416, %v416
  %v429 = vcombine.high %v419, %v419
  %v434 = vld [vmem:[%s4] sm:$0xf]
  %v435 = vadd.f32 %v408, %v434
  %v436 = vadd.f32 %v426, %v434
  %v437 = vadd.f32 %v411, %v434
  %v438 = vadd.f32 %v427, %v434
  %v439 = vadd.f32 %v416, %v434
  %v440 = vadd.f32 %v428, %v434
  %v441 = vadd.f32 %v419, %v434
  %v442 = vadd.f32 %v429, %v434
  %v443 = vlaneseq
  %v444 = vshrl.u32 %v443, 7
  %v445 = vlaneseq
  %v446 = vand.u32 %v445, 127
  %vm447 = vcmp.le.s32.totalorder %v446, %v444
  %v448 = vld [vmem:[%s5] sm:$0x1]
  %v449 = vld [vmem:[%s6] sm:$0x1]
  %v458 = vcombine.low %v435, %v436
  %v459 = vcombine.low %v437, %v438
  %v460 = vcombine.low %v439, %v440
  %v461 = vcombine.low %v441, %v442
  %vm466 = vcmask 261120
  %v467 = vsel %vm466, %v458, 0.0
  %468 = vadd.xlane.f32.xlu0 %v467
  %v469 = vpop.xlane.xlu0 %468
  %v470 = vsel %vm466, %v459, 0.0
  %471 = vadd.xlane.f32.xlu0 %v470
  %v472 = vpop.xlane.xlu0 %471
  %v473 = vsel %vm466, %v460, 0.0
  %474 = vadd.xlane.f32.xlu0 %v473
  %v475 = vpop.xlane.xlu0 %474
  %v476 = vsel %vm466, %v461, 0.0
  %477 = vadd.xlane.f32.xlu0 %v476
  %v478 = vpop.xlane.xlu0 %477
  %v479 = vrcp.pop 32.0
  %v480 = vmul.f32 %v469, %v479
  %v481 = vmul.f32 %v472, %v479
  %v482 = vmul.f32 %v475, %v479
  %v483 = vmul.f32 %v478, %v479
  %v489 = vunpack.c.l.s4 839922192
  %v490 = vunpack.c.0.s8 %v489
  %v491 = vlaneseq
  %v492 = vshrl.u32 %v491, 7
  %v493 = vsub.s32 %v490, %v492
  %v494 = vrot.slane %v480, %v493
  %v496 = vunpack.c.l.s4 1985246804
  %v497 = vunpack.c.0.s8 %v496
  %v498 = vlaneseq
  %v499 = vshrl.u32 %v498, 7
  %v500 = vsub.s32 %v497, %v499
  %v501 = vrot.slane %v480, %v500
  %v503 = vunpack.c.l.s4 839922192
  %v504 = vunpack.c.0.s8 %v503
  %v505 = vlaneseq
  %v506 = vshrl.u32 %v505, 7
  %v507 = vsub.s32 %v504, %v506
  %v508 = vrot.slane %v481, %v507
  %v510 = vunpack.c.l.s4 1985246804
  %v511 = vunpack.c.0.s8 %v510
  %v512 = vlaneseq
  %v513 = vshrl.u32 %v512, 7
  %v514 = vsub.s32 %v511, %v513
  %v515 = vrot.slane %v481, %v514
  %v517 = vunpack.c.l.s4 839922192
  %v518 = vunpack.c.0.s8 %v517
  %v519 = vlaneseq
  %v520 = vshrl.u32 %v519, 7
  %v521 = vsub.s32 %v518, %v520
  %v522 = vrot.slane %v482, %v521
  %v524 = vunpack.c.l.s4 1985246804
  %v525 = vunpack.c.0.s8 %v524
  %v526 = vlaneseq
  %v527 = vshrl.u32 %v526, 7
  %v528 = vsub.s32 %v525, %v527
  %v529 = vrot.slane %v482, %v528
  %v531 = vunpack.c.l.s4 839922192
  %v532 = vunpack.c.0.s8 %v531
  %v533 = vlaneseq
  %v534 = vshrl.u32 %v533, 7
  %v535 = vsub.s32 %v532, %v534
  %v536 = vrot.slane %v483, %v535
  %v538 = vunpack.c.l.s4 1985246804
  %v539 = vunpack.c.0.s8 %v538
  %v540 = vlaneseq
  %v541 = vshrl.u32 %v540, 7
  %v542 = vsub.s32 %v539, %v541
  %v543 = vrot.slane %v483, %v542
  %v552 = vsub.f32 %v435, %v494
  %v553 = vsub.f32 %v436, %v501
  %v554 = vsub.f32 %v437, %v508
  %v555 = vsub.f32 %v438, %v515
  %v556 = vsub.f32 %v439, %v522
  %v557 = vsub.f32 %v440, %v529
  %v558 = vsub.f32 %v441, %v536
  %v559 = vsub.f32 %v442, %v543
  %v560 = vmul.f32 %v552, %v552
  %v561 = vmul.f32 %v553, %v553
  %v562 = vmul.f32 %v554, %v554
  %v563 = vmul.f32 %v555, %v555
  %v564 = vmul.f32 %v556, %v556
  %v565 = vmul.f32 %v557, %v557
  %v566 = vmul.f32 %v558, %v558
  %v567 = vmul.f32 %v559, %v559
  %v576 = vcombine.low %v560, %v561
  %v577 = vcombine.low %v562, %v563
  %v578 = vcombine.low %v564, %v565
  %v579 = vcombine.low %v566, %v567
  %v584 = vsel %vm466, %v576, 0.0
  %585 = vadd.xlane.f32.xlu0 %v584
  %v586 = vpop.xlane.xlu0 %585
  %v587 = vsel %vm466, %v577, 0.0
  %588 = vadd.xlane.f32.xlu0 %v587
  %v589 = vpop.xlane.xlu0 %588
  %v590 = vsel %vm466, %v578, 0.0
  %591 = vadd.xlane.f32.xlu0 %v590
  %v592 = vpop.xlane.xlu0 %591
  %v593 = vsel %vm466, %v579, 0.0
  %594 = vadd.xlane.f32.xlu0 %v593
  %v595 = vpop.xlane.xlu0 %594
  %v596 = vmul.f32 %v586, %v479
  %v597 = vmul.f32 %v589, %v479
  %v598 = vmul.f32 %v592, %v479
  %v599 = vmul.f32 %v595, %v479
  %v600 = vadd.f32 %v596, 1e-05
  %v601 = vadd.f32 %v597, 1e-05
  %v602 = vadd.f32 %v598, 1e-05
  %v603 = vadd.f32 %v599, 1e-05
  %v604 = vrsqrt.pop %v600
  %v605 = vrsqrt.pop %v601
  %v606 = vrsqrt.pop %v602
  %v607 = vrsqrt.pop %v603
  %v613 = vunpack.c.l.s4 839922192
  %v614 = vunpack.c.0.s8 %v613
  %v615 = vlaneseq
  %v616 = vshrl.u32 %v615, 7
  %v617 = vsub.s32 %v614, %v616
  %v618 = vrot.slane %v604, %v617
  %v620 = vunpack.c.l.s4 1985246804
  %v621 = vunpack.c.0.s8 %v620
  %v622 = vlaneseq
  %v623 = vshrl.u32 %v622, 7
  %v624 = vsub.s32 %v621, %v623
  %v625 = vrot.slane %v604, %v624
  %v627 = vunpack.c.l.s4 839922192
  %v628 = vunpack.c.0.s8 %v627
  %v629 = vlaneseq
  %v630 = vshrl.u32 %v629, 7
  %v631 = vsub.s32 %v628, %v630
  %v632 = vrot.slane %v605, %v631
  %v634 = vunpack.c.l.s4 1985246804
  %v635 = vunpack.c.0.s8 %v634
  %v636 = vlaneseq
  %v637 = vshrl.u32 %v636, 7
  %v638 = vsub.s32 %v635, %v637
  %v639 = vrot.slane %v605, %v638
  %v641 = vunpack.c.l.s4 839922192
  %v642 = vunpack.c.0.s8 %v641
  %v643 = vlaneseq
  %v644 = vshrl.u32 %v643, 7
  %v645 = vsub.s32 %v642, %v644
  %v646 = vrot.slane %v606, %v645
  %v648 = vunpack.c.l.s4 1985246804
  %v649 = vunpack.c.0.s8 %v648
  %v650 = vlaneseq
  %v651 = vshrl.u32 %v650, 7
  %v652 = vsub.s32 %v649, %v651
  %v653 = vrot.slane %v606, %v652
  %v655 = vunpack.c.l.s4 839922192
  %v656 = vunpack.c.0.s8 %v655
  %v657 = vlaneseq
  %v658 = vshrl.u32 %v657, 7
  %v659 = vsub.s32 %v656, %v658
  %v660 = vrot.slane %v607, %v659
  %v662 = vunpack.c.l.s4 1985246804
  %v663 = vunpack.c.0.s8 %v662
  %v664 = vlaneseq
  %v665 = vshrl.u32 %v664, 7
  %v666 = vsub.s32 %v663, %v665
  %v667 = vrot.slane %v607, %v666
  %v676 = vmul.f32 %v552, %v618
  %v677 = vmul.f32 %v553, %v625
  %v678 = vmul.f32 %v554, %v632
  %v679 = vmul.f32 %v555, %v639
  %v680 = vmul.f32 %v556, %v646
  %v681 = vmul.f32 %v557, %v653
  %v682 = vmul.f32 %v558, %v660
  %v683 = vmul.f32 %v559, %v667
  %v685 = vlaneseq
  %v686 = vshrl.u32 %v685, 7
  %v687 = vsub.s32 0, %v686
  %v688 = vrot.slane %v448, %v687
  %v690 = vcombine.high %v688, %v688
  %v692 = vmul.f32 %v676, %v688
  %v693 = vmul.f32 %v677, %v690
  %v694 = vmul.f32 %v678, %v688
  %v695 = vmul.f32 %v679, %v690
  %v696 = vmul.f32 %v680, %v688
  %v697 = vmul.f32 %v681, %v690
  %v698 = vmul.f32 %v682, %v688
  %v699 = vmul.f32 %v683, %v690
  %v701 = vlaneseq
  %v702 = vshrl.u32 %v701, 7
  %v703 = vsub.s32 0, %v702
  %v704 = vrot.slane %v449, %v703
  %v706 = vcombine.high %v704, %v704
  %v708 = vadd.f32 %v692, %v704
  %v709 = vadd.f32 %v693, %v706
  %v710 = vadd.f32 %v694, %v704
  %v711 = vadd.f32 %v695, %v706
  %v712 = vadd.f32 %v696, %v704
  %v713 = vadd.f32 %v697, %v706
  %v714 = vadd.f32 %v698, %v704
  %v715 = vadd.f32 %v699, %v706
  %v724 = vcombine.low %v708, %v709
  %v725 = vcombine.low %v710, %v711
  %v726 = vcombine.low %v712, %v713
  %v727 = vcombine.low %v714, %v715
  %v732 = vpack.c.bf16 %v725, %v724
  %v733 = vpack.c.bf16 %v727, %v726
  %v734 = vld [vmem:[%s7] sm:$0xf]
  %v735 = vld [vmem:[%s7 + $0x4] sm:$0xf]
  %v736 = vld [vmem:[%s7 + $0x8] sm:$0xf]
  %v737 = vld [vmem:[%s7 + $0xc] sm:$0xf]
  %v738 = vld [vmem:[%s8] sm:$0x1]
  %v740 = vlaneseq
  %v741 = vshrl.u32 %v740, 7
  %v742 = vsub.s32 0, %v741
  %v743 = vrot.slane %v738, %v742
  %v749 = vunpack.c.l.b16 %v734
  %v750 = vunpack.c.l.b16 %v735
  %v751 = vunpack.c.l.b16 %v736
  %v752 = vunpack.c.l.b16 %v737
  %v753 = vpack.c.b16 %v750, %v749
  %v754 = vpack.c.b16 %v752, %v751
  %v758 = vsel %vm466, %v732, 0
  %v761 = vsel %vm466, %v733, 0
  %763 = vmatprep.subr.bf16.mxu0 0
  %764 = vmatpush1.bf16.msra.mxu0 %v753
  %765 = vmatprep.subr.bf16.mxu0 0
  %766 = vmatpush1.bf16.msra.mxu0 %v754
  %767 = vmatprep.subr.bf16.mxu0 0
  %768 = vmatpush1.bf16.msra.mxu0 0
  %769 = vmatprep.subr.bf16.mxu0 0
  %770 = vmatpush1.bf16.msra.mxu0 0
  %771 = vmatprep.subr.bf16.mxu0 0
  %772 = vmatpush1.bf16.msra.mxu0 0
  %773 = vmatprep.subr.bf16.mxu0 0
  %774 = vmatpush1.bf16.msra.mxu0 0
  %775 = vmatprep.subr.bf16.mxu0 0
  %776 = vmatpush1.bf16.msra.mxu0 0
  %777 = vmatprep.subr.bf16.mxu0 0
  %778 = vmatpush1.bf16.msra.mxu0 0
  %779 = vmatprep.subr.bf16.mxu0 0
  %780 = vmatpush1.bf16.msra.mxu0 0
  %781 = vmatprep.subr.bf16.mxu0 0
  %782 = vmatpush1.bf16.msra.mxu0 0
  %783 = vmatprep.subr.bf16.mxu0 0
  %784 = vmatpush1.bf16.msra.mxu0 0
  %785 = vmatprep.subr.bf16.mxu0 0
  %786 = vmatpush1.bf16.msra.mxu0 0
  %787 = vmatprep.subr.bf16.mxu0 0
  %788 = vmatpush1.bf16.msra.mxu0 0
  %789 = vmatprep.subr.bf16.mxu0 0
  %790 = vmatpush1.bf16.msra.mxu0 0
  %791 = vmatprep.subr.bf16.mxu0 0
  %792 = vmatpush1.bf16.msra.mxu0 0
  %793 = vmatprep.subr.bf16.mxu0 0
  %794 = vmatpush1.bf16.msra.mxu0 0
  %795 = vmatprep.mubr.bf16.mxu0 0
  %796 = vmatmul.mubr.bf16.gmra.mrb[0].mxu0 %v758
  %v797 = vpop.f32.mrb[0].mxu0
  %v798 = vadd.f32 %v743, %v797
  %v799 = vpop.f32.mrb[0].mxu0
  %v800 = vpop.f32.mrb[0].mxu0
  %v801 = vadd.f32 %v743, %v800
  %v802 = vpop.f32.mrb[0].mxu0
  %803 = vmatprep.mubr.bf16.mxu0 0
  %804 = vmatmul.mubr.bf16.gmra.mrb[0].mxu0 %v761
  %v805 = vpop.f32.mrb[0].mxu0
  %v806 = vadd.f32 %v743, %v805
  %v807 = vpop.f32.mrb[0].mxu0
  %v808 = vpop.f32.mrb[0].mxu0
  %v809 = vadd.f32 %v743, %v808
  %v810 = vpop.f32.mrb[0].mxu0
  %811 = vdwg.mxu0
  %v816 = vcombine.high %v798, %v798
  %v817 = vcombine.high %v801, %v801
  %v818 = vcombine.high %v806, %v806
  %v819 = vcombine.high %v809, %v809
  %s824 = scalar_lea.vmem %s7, 32
  %v825 = vld [vmem:[%s824] sm:$0xf]
  %v826 = vld [vmem:[%s824 + $0x4] sm:$0xf]
  %v827 = vld [vmem:[%s824 + $0x8] sm:$0xf]
  %v828 = vld [vmem:[%s824 + $0xc] sm:$0xf]
  %s829 = scalar_lea.vmem %s8, 2
  %v830 = vld [vmem:[%s829] sm:$0x1]
  %v832 = vlaneseq
  %v833 = vshrl.u32 %v832, 7
  %v834 = vsub.s32 0, %v833
  %v835 = vrot.slane %v830, %v834
  %v841 = vunpack.c.l.b16 %v825
  %v842 = vunpack.c.l.b16 %v826
  %v843 = vunpack.c.l.b16 %v827
  %v844 = vunpack.c.l.b16 %v828
  %v845 = vpack.c.b16 %v842, %v841
  %v846 = vpack.c.b16 %v844, %v843
  %849 = vmatprep.subr.bf16.mxu0 0
  %850 = vmatpush1.bf16.msra.mxu0 %v845
  %851 = vmatprep.subr.bf16.mxu0 0
  %852 = vmatpush1.bf16.msra.mxu0 %v846
  %853 = vmatprep.subr.bf16.mxu0 0
  %854 = vmatpush1.bf16.msra.mxu0 0
  %855 = vmatprep.subr.bf16.mxu0 0
  %856 = vmatpush1.bf16.msra.mxu0 0
  %857 = vmatprep.subr.bf16.mxu0 0
  %858 = vmatpush1.bf16.msra.mxu0 0
  %859 = vmatprep.subr.bf16.mxu0 0
  %860 = vmatpush1.bf16.msra.mxu0 0
  %861 = vmatprep.subr.bf16.mxu0 0
  %862 = vmatpush1.bf16.msra.mxu0 0
  %863 = vmatprep.subr.bf16.mxu0 0
  %864 = vmatpush1.bf16.msra.mxu0 0
  %865 = vmatprep.subr.bf16.mxu0 0
  %866 = vmatpush1.bf16.msra.mxu0 0
  %867 = vmatprep.subr.bf16.mxu0 0
  %868 = vmatpush1.bf16.msra.mxu0 0
  %869 = vmatprep.subr.bf16.mxu0 0
  %870 = vmatpush1.bf16.msra.mxu0 0
  %871 = vmatprep.subr.bf16.mxu0 0
  %872 = vmatpush1.bf16.msra.mxu0 0
  %873 = vmatprep.subr.bf16.mxu0 0
  %874 = vmatpush1.bf16.msra.mxu0 0
  %875 = vmatprep.subr.bf16.mxu0 0
  %876 = vmatpush1.bf16.msra.mxu0 0
  %877 = vmatprep.subr.bf16.mxu0 0
  %878 = vmatpush1.bf16.msra.mxu0 0
  %879 = vmatprep.subr.bf16.mxu0 0
  %880 = vmatpush1.bf16.msra.mxu0 0
  %881 = vmatprep.mubr.bf16.mxu0 0
  %882 = vmatmul.mubr.bf16.gmra.mrb[0].mxu0 %v758
  %v883 = vpop.f32.mrb[0].mxu0
  %v884 = vadd.f32 %v835, %v883
  %v885 = vpop.f32.mrb[0].mxu0
  %v886 = vpop.f32.mrb[0].mxu0
  %v887 = vadd.f32 %v835, %v886
  %v888 = vpop.f32.mrb[0].mxu0
  %889 = vmatprep.mubr.bf16.mxu0 0
  %890 = vmatmul.mubr.bf16.gmra.mrb[0].mxu0 %v761
  %v891 = vpop.f32.mrb[0].mxu0
  %v892 = vadd.f32 %v835, %v891
  %v893 = vpop.f32.mrb[0].mxu0
  %v894 = vpop.f32.mrb[0].mxu0
  %v895 = vadd.f32 %v835, %v894
  %v896 = vpop.f32.mrb[0].mxu0
  %897 = vdwg.mxu0
  %v902 = vcombine.high %v884, %v884
  %v903 = vcombine.high %v887, %v887
  %v904 = vcombine.high %v892, %v892
  %v905 = vcombine.high %v895, %v895
  %s910 = scalar_lea.vmem %s7, 64
  %v911 = vld [vmem:[%s910] sm:$0xf]
  %v912 = vld [vmem:[%s910 + $0x4] sm:$0xf]
  %v913 = vld [vmem:[%s910 + $0x8] sm:$0xf]
  %v914 = vld [vmem:[%s910 + $0xc] sm:$0xf]
  %s915 = scalar_lea.vmem %s8, 4
  %v916 = vld [vmem:[%s915] sm:$0x1]
  %v918 = vlaneseq
  %v919 = vshrl.u32 %v918, 7
  %v920 = vsub.s32 0, %v919
  %v921 = vrot.slane %v916, %v920
  %v927 = vunpack.c.l.b16 %v911
  %v928 = vunpack.c.l.b16 %v912
  %v929 = vunpack.c.l.b16 %v913
  %v930 = vunpack.c.l.b16 %v914
  %v931 = vpack.c.b16 %v928, %v927
  %v932 = vpack.c.b16 %v930, %v929
  %935 = vmatprep.subr.bf16.mxu0 0
  %936 = vmatpush1.bf16.msra.mxu0 %v931
  %937 = vmatprep.subr.bf16.mxu0 0
  %938 = vmatpush1.bf16.msra.mxu0 %v932
  %939 = vmatprep.subr.bf16.mxu0 0
  %940 = vmatpush1.bf16.msra.mxu0 0
  %941 = vmatprep.subr.bf16.mxu0 0
  %942 = vmatpush1.bf16.msra.mxu0 0
  %943 = vmatprep.subr.bf16.mxu0 0
  %944 = vmatpush1.bf16.msra.mxu0 0
  %945 = vmatprep.subr.bf16.mxu0 0
  %946 = vmatpush1.bf16.msra.mxu0 0
  %947 = vmatprep.subr.bf16.mxu0 0
  %948 = vmatpush1.bf16.msra.mxu0 0
  %949 = vmatprep.subr.bf16.mxu0 0
  %950 = vmatpush1.bf16.msra.mxu0 0
  %951 = vmatprep.subr.bf16.mxu0 0
  %952 = vmatpush1.bf16.msra.mxu0 0
  %953 = vmatprep.subr.bf16.mxu0 0
  %954 = vmatpush1.bf16.msra.mxu0 0
  %955 = vmatprep.subr.bf16.mxu0 0
  %956 = vmatpush1.bf16.msra.mxu0 0
  %957 = vmatprep.subr.bf16.mxu0 0
  %958 = vmatpush1.bf16.msra.mxu0 0
  %959 = vmatprep.subr.bf16.mxu0 0
  %960 = vmatpush1.bf16.msra.mxu0 0
  %961 = vmatprep.subr.bf16.mxu0 0
  %962 = vmatpush1.bf16.msra.mxu0 0
  %963 = vmatprep.subr.bf16.mxu0 0
  %964 = vmatpush1.bf16.msra.mxu0 0
  %965 = vmatprep.subr.bf16.mxu0 0
  %966 = vmatpush1.bf16.msra.mxu0 0
  %967 = vmatprep.mubr.bf16.mxu0 0
  %968 = vmatmul.mubr.bf16.gmra.mrb[0].mxu0 %v758
  %v969 = vpop.f32.mrb[0].mxu0
  %v970 = vadd.f32 %v921, %v969
  %v971 = vpop.f32.mrb[0].mxu0
  %v972 = vpop.f32.mrb[0].mxu0
  %v973 = vadd.f32 %v921, %v972
  %v974 = vpop.f32.mrb[0].mxu0
  %975 = vmatprep.mubr.bf16.mxu0 0
  %976 = vmatmul.mubr.bf16.gmra.mrb[0].mxu0 %v761
  %v977 = vpop.f32.mrb[0].mxu0
  %v978 = vadd.f32 %v921, %v977
  %v979 = vpop.f32.mrb[0].mxu0
  %v980 = vpop.f32.mrb[0].mxu0
  %v981 = vadd.f32 %v921, %v980
  %v982 = vpop.f32.mrb[0].mxu0
  %983 = vdwg.mxu0
  %v988 = vcombine.high %v970, %v970
  %v989 = vcombine.high %v973, %v973
  %v990 = vcombine.high %v978, %v978
  %v991 = vcombine.high %v981, %v981
  %v996 = vpack.c.bf16 %v798, %v798
  %v997 = vpack.c.bf16 %v816, %v816
  %v998 = vpack.c.bf16 %v801, %v801
  %v999 = vpack.c.bf16 %v817, %v817
  %v1000 = vpack.c.bf16 %v806, %v806
  %v1001 = vpack.c.bf16 %v818, %v818
  %v1002 = vpack.c.bf16 %v809, %v809
  %v1003 = vpack.c.bf16 %v819, %v819
  %v1004 = vpack.c.bf16 %v884, %v884
  %v1005 = vpack.c.bf16 %v902, %v902
  %v1006 = vpack.c.bf16 %v887, %v887
  %v1007 = vpack.c.bf16 %v903, %v903
  %v1008 = vpack.c.bf16 %v892, %v892
  %v1009 = vpack.c.bf16 %v904, %v904
  %v1010 = vpack.c.bf16 %v895, %v895
  %v1011 = vpack.c.bf16 %v905, %v905
  %vm1012 = vcmask 130048
  %v1014 = vsel %vm1012, %v996, 0
  %v1017 = vsel %vm1012, %v1004, 0
  %1019 = vmatprep.subr.bf16.mxu0 0
  %1020 = vmatpush1.bf16.xpose.msra.mxu0 %v1017
  %1021 = vmatprep.subr.bf16.mxu0 0
  %1022 = vmatpush1.bf16.xpose.msra.mxu0 0
  %1023 = vmatprep.subr.bf16.mxu0 0
  %1024 = vmatpush1.bf16.xpose.msra.mxu0 0
  %1025 = vmatprep.subr.bf16.mxu0 0
  %1026 = vmatpush1.bf16.xpose.msra.mxu0 0
  %1027 = vmatprep.subr.bf16.mxu0 0
  %1028 = vmatpush1.bf16.xpose.msra.mxu0 0
  %1029 = vmatprep.subr.bf16.mxu0 0
  %1030 = vmatpush1.bf16.xpose.msra.mxu0 0
  %1031 = vmatprep.subr.bf16.mxu0 0
  %1032 = vmatpush1.bf16.xpose.msra.mxu0 0
  %1033 = vmatprep.subr.bf16.mxu0 0
  %1034 = vmatpush1.bf16.xpose.msra.mxu0 0
  %1035 = vmatprep.subr.bf16.mxu0 0
  %1036 = vmatpush1.bf16.xpose.msra.mxu0 0
  %1037 = vmatprep.subr.bf16.mxu0 0
  %1038 = vmatpush1.bf16.xpose.msra.mxu0 0
  %1039 = vmatprep.subr.bf16.mxu0 0
  %1040 = vmatpush1.bf16.xpose.msra.mxu0 0
  %1041 = vmatprep.subr.bf16.mxu0 0
  %1042 = vmatpush1.bf16.xpose.msra.mxu0 0
  %1043 = vmatprep.subr.bf16.mxu0 0
  %1044 = vmatpush1.bf16.xpose.msra.mxu0 0
  %1045 = vmatprep.subr.bf16.mxu0 0
  %1046 = vmatpush1.bf16.xpose.msra.mxu0 0
  %1047 = vmatprep.subr.bf16.mxu0 0
  %1048 = vmatpush1.bf16.xpose.msra.mxu0 0
  %1049 = vmatprep.subr.bf16.mxu0 0
  %1050 = vmatpush1.bf16.xpose.msra.mxu0 0
  %1051 = vmatprep.mubr.bf16.mxu0 0
  %1052 = vmatmul.mubr.bf16.gmra.mrb[0].mxu0 %v1014
  %v1053 = vpop.f32.mrb[0].mxu0
  %v1054 = vadd.f32 0.0, %v1053
  %v1055 = vpop.f32.mrb[0].mxu0
  %v1056 = vpop.f32.mrb[0].mxu0
  %v1057 = vpop.f32.mrb[0].mxu0
  %1058 = vdwg.mxu0
  %v1060 = vsel %vm1012, %v997, 0
  %v1063 = vsel %vm1012, %v1005, 0
  %1065 = vmatprep.subr.bf16.mxu0 0
  %1066 = vmatpush1.bf16.xpose.msra.mxu0 %v1063
  %1067 = vmatprep.subr.bf16.mxu0 0
  %1068 = vmatpush1.bf16.xpose.msra.mxu0 0
  %1069 = vmatprep.subr.bf16.mxu0 0
  %1070 = vmatpush1.bf16.xpose.msra.mxu0 0
  %1071 = vmatprep.subr.bf16.mxu0 0
  %1072 = vmatpush1.bf16.xpose.msra.mxu0 0
  %1073 = vmatprep.subr.bf16.mxu0 0
  %1074 = vmatpush1.bf16.xpose.msra.mxu0 0
  %1075 = vmatprep.subr.bf16.mxu0 0
  %1076 = vmatpush1.bf16.xpose.msra.mxu0 0
  %1077 = vmatprep.subr.bf16.mxu0 0
  %1078 = vmatpush1.bf16.xpose.msra.mxu0 0
  %1079 = vmatprep.subr.bf16.mxu0 0
  %1080 = vmatpush1.bf16.xpose.msra.mxu0 0
  %1081 = vmatprep.subr.bf16.mxu0 0
  %1082 = vmatpush1.bf16.xpose.msra.mxu0 0
  %1083 = vmatprep.subr.bf16.mxu0 0
  %1084 = vmatpush1.bf16.xpose.msra.mxu0 0
  %1085 = vmatprep.subr.bf16.mxu0 0
  %1086 = vmatpush1.bf16.xpose.msra.mxu0 0
  %1087 = vmatprep.subr.bf16.mxu0 0
  %1088 = vmatpush1.bf16.xpose.msra.mxu0 0
  %1089 = vmatprep.subr.bf16.mxu0 0
  %1090 = vmatpush1.bf16.xpose.msra.mxu0 0
  %1091 = vmatprep.subr.bf16.mxu0 0
  %1092 = vmatpush1.bf16.xpose.msra.mxu0 0
  %1093 = vmatprep.subr.bf16.mxu0 0
  %1094 = vmatpush1.bf16.xpose.msra.mxu0 0
  %1095 = vmatprep.subr.bf16.mxu0 0
  %1096 = vmatpush1.bf16.xpose.msra.mxu0 0
  %1097 = vmatprep.mubr.bf16.mxu0 0
  %1098 = vmatmul.mubr.bf16.gmra.mrb[0].mxu0 %v1060
  %v1099 = vpop.f32.mrb[0].mxu0
  %v1100 = vadd.f32 0.0, %v1099
  %v1101 = vpop.f32.mrb[0].mxu0
  %v1102 = vpop.f32.mrb[0].mxu0
  %v1103 = vpop.f32.mrb[0].mxu0
  %1104 = vdwg.mxu0
  %v1106 = vsel %vm1012, %v998, 0
  %v1109 = vsel %vm1012, %v1006, 0
  %1111 = vmatprep.subr.bf16.mxu0 0
  %1112 = vmatpush1.bf16.xpose.msra.mxu0 %v1109
  %1113 = vmatprep.subr.bf16.mxu0 0
  %1114 = vmatpush1.bf16.xpose.msra.mxu0 0
  %1115 = vmatprep.subr.bf16.mxu0 0
  %1116 = vmatpush1.bf16.xpose.msra.mxu0 0
  %1117 = vmatprep.subr.bf16.mxu0 0
  %1118 = vmatpush1.bf16.xpose.msra.mxu0 0
  %1119 = vmatprep.subr.bf16.mxu0 0
  %1120 = vmatpush1.bf16.xpose.msra.mxu0 0
  %1121 = vmatprep.subr.bf16.mxu0 0
  %1122 = vmatpush1.bf16.xpose.msra.mxu0 0
  %1123 = vmatprep.subr.bf16.mxu0 0
  %1124 = vmatpush1.bf16.xpose.msra.mxu0 0
  %1125 = vmatprep.subr.bf16.mxu0 0
  %1126 = vmatpush1.bf16.xpose.msra.mxu0 0
  %1127 = vmatprep.subr.bf16.mxu0 0
  %1128 = vmatpush1.bf16.xpose.msra.mxu0 0
  %1129 = vmatprep.subr.bf16.mxu0 0
  %1130 = vmatpush1.bf16.xpose.msra.mxu0 0
  %1131 = vmatprep.subr.bf16.mxu0 0
  %1132 = vmatpush1.bf16.xpose.msra.mxu0 0
  %1133 = vmatprep.subr.bf16.mxu0 0
  %1134 = vmatpush1.bf16.xpose.msra.mxu0 0
  %1135 = vmatprep.subr.bf16.mxu0 0
  %1136 = vmatpush1.bf16.xpose.msra.mxu0 0
  %1137 = vmatprep.subr.bf16.mxu0 0
  %1138 = vmatpush1.bf16.xpose.msra.mxu0 0
  %1139 = vmatprep.subr.bf16.mxu0 0
  %1140 = vmatpush1.bf16.xpose.msra.mxu0 0
  %1141 = vmatprep.subr.bf16.mxu0 0
  %1142 = vmatpush1.bf16.xpose.msra.mxu0 0
  %1143 = vmatprep.mubr.bf16.mxu0 0
  %1144 = vmatmul.mubr.bf16.gmra.mrb[0].mxu0 %v1106
  %v1145 = vpop.f32.mrb[0].mxu0
  %v1146 = vadd.f32 0.0, %v1145
  %v1147 = vpop.f32.mrb[0].mxu0
  %v1148 = vpop.f32.mrb[0].mxu0
  %v1149 = vpop.f32.mrb[0].mxu0
  %1150 = vdwg.mxu0
  %v1152 = vsel %vm1012, %v999, 0
  %v1155 = vsel %vm1012, %v1007, 0
  %1157 = vmatprep.subr.bf16.mxu0 0
  %1158 = vmatpush1.bf16.xpose.msra.mxu0 %v1155
  %1159 = vmatprep.subr.bf16.mxu0 0
  %1160 = vmatpush1.bf16.xpose.msra.mxu0 0
  %1161 = vmatprep.subr.bf16.mxu0 0
  %1162 = vmatpush1.bf16.xpose.msra.mxu0 0
  %1163 = vmatprep.subr.bf16.mxu0 0
  %1164 = vmatpush1.bf16.xpose.msra.mxu0 0
  %1165 = vmatprep.subr.bf16.mxu0 0
  %1166 = vmatpush1.bf16.xpose.msra.mxu0 0
  %1167 = vmatprep.subr.bf16.mxu0 0
  %1168 = vmatpush1.bf16.xpose.msra.mxu0 0
  %1169 = vmatprep.subr.bf16.mxu0 0
  %1170 = vmatpush1.bf16.xpose.msra.mxu0 0
  %1171 = vmatprep.subr.bf16.mxu0 0
  %1172 = vmatpush1.bf16.xpose.msra.mxu0 0
  %1173 = vmatprep.subr.bf16.mxu0 0
  %1174 = vmatpush1.bf16.xpose.msra.mxu0 0
  %1175 = vmatprep.subr.bf16.mxu0 0
  %1176 = vmatpush1.bf16.xpose.msra.mxu0 0
  %1177 = vmatprep.subr.bf16.mxu0 0
  %1178 = vmatpush1.bf16.xpose.msra.mxu0 0
  %1179 = vmatprep.subr.bf16.mxu0 0
  %1180 = vmatpush1.bf16.xpose.msra.mxu0 0
  %1181 = vmatprep.subr.bf16.mxu0 0
  %1182 = vmatpush1.bf16.xpose.msra.mxu0 0
  %1183 = vmatprep.subr.bf16.mxu0 0
  %1184 = vmatpush1.bf16.xpose.msra.mxu0 0
  %1185 = vmatprep.subr.bf16.mxu0 0
  %1186 = vmatpush1.bf16.xpose.msra.mxu0 0
  %1187 = vmatprep.subr.bf16.mxu0 0
  %1188 = vmatpush1.bf16.xpose.msra.mxu0 0
  %1189 = vmatprep.mubr.bf16.mxu0 0
  %1190 = vmatmul.mubr.bf16.gmra.mrb[0].mxu0 %v1152
  %v1191 = vpop.f32.mrb[0].mxu0
  %v1192 = vadd.f32 0.0, %v1191
  %v1193 = vpop.f32.mrb[0].mxu0
  %v1194 = vpop.f32.mrb[0].mxu0
  %v1195 = vpop.f32.mrb[0].mxu0
  %1196 = vdwg.mxu0
  %v1198 = vsel %vm1012, %v1000, 0
  %v1201 = vsel %vm1012, %v1008, 0
  %1203 = vmatprep.subr.bf16.mxu0 0
  %1204 = vmatpush1.bf16.xpose.msra.mxu0 %v1201
  %1205 = vmatprep.subr.bf16.mxu0 0
  %1206 = vmatpush1.bf16.xpose.msra.mxu0 0
  %1207 = vmatprep.subr.bf16.mxu0 0
  %1208 = vmatpush1.bf16.xpose.msra.mxu0 0
  %1209 = vmatprep.subr.bf16.mxu0 0
  %1210 = vmatpush1.bf16.xpose.msra.mxu0 0
  %1211 = vmatprep.subr.bf16.mxu0 0
  %1212 = vmatpush1.bf16.xpose.msra.mxu0 0
  %1213 = vmatprep.subr.bf16.mxu0 0
  %1214 = vmatpush1.bf16.xpose.msra.mxu0 0
  %1215 = vmatprep.subr.bf16.mxu0 0
  %1216 = vmatpush1.bf16.xpose.msra.mxu0 0
  %1217 = vmatprep.subr.bf16.mxu0 0
  %1218 = vmatpush1.bf16.xpose.msra.mxu0 0
  %1219 = vmatprep.subr.bf16.mxu0 0
  %1220 = vmatpush1.bf16.xpose.msra.mxu0 0
  %1221 = vmatprep.subr.bf16.mxu0 0
  %1222 = vmatpush1.bf16.xpose.msra.mxu0 0
  %1223 = vmatprep.subr.bf16.mxu0 0
  %1224 = vmatpush1.bf16.xpose.msra.mxu0 0
  %1225 = vmatprep.subr.bf16.mxu0 0
  %1226 = vmatpush1.bf16.xpose.msra.mxu0 0
  %1227 = vmatprep.subr.bf16.mxu0 0
  %1228 = vmatpush1.bf16.xpose.msra.mxu0 0
  %1229 = vmatprep.subr.bf16.mxu0 0
  %1230 = vmatpush1.bf16.xpose.msra.mxu0 0
  %1231 = vmatprep.subr.bf16.mxu0 0
  %1232 = vmatpush1.bf16.xpose.msra.mxu0 0
  %1233 = vmatprep.subr.bf16.mxu0 0
  %1234 = vmatpush1.bf16.xpose.msra.mxu0 0
  %1235 = vmatprep.mubr.bf16.mxu0 0
  %1236 = vmatmul.mubr.bf16.gmra.mrb[0].mxu0 %v1198
  %v1237 = vpop.f32.mrb[0].mxu0
  %v1238 = vadd.f32 0.0, %v1237
  %v1239 = vpop.f32.mrb[0].mxu0
  %v1240 = vpop.f32.mrb[0].mxu0
  %v1241 = vpop.f32.mrb[0].mxu0
  %1242 = vdwg.mxu0
  %v1244 = vsel %vm1012, %v1001, 0
  %v1247 = vsel %vm1012, %v1009, 0
  %1249 = vmatprep.subr.bf16.mxu0 0
  %1250 = vmatpush1.bf16.xpose.msra.mxu0 %v1247
  %1251 = vmatprep.subr.bf16.mxu0 0
  %1252 = vmatpush1.bf16.xpose.msra.mxu0 0
  %1253 = vmatprep.subr.bf16.mxu0 0
  %1254 = vmatpush1.bf16.xpose.msra.mxu0 0
  %1255 = vmatprep.subr.bf16.mxu0 0
  %1256 = vmatpush1.bf16.xpose.msra.mxu0 0
  %1257 = vmatprep.subr.bf16.mxu0 0
  %1258 = vmatpush1.bf16.xpose.msra.mxu0 0
  %1259 = vmatprep.subr.bf16.mxu0 0
  %1260 = vmatpush1.bf16.xpose.msra.mxu0 0
  %1261 = vmatprep.subr.bf16.mxu0 0
  %1262 = vmatpush1.bf16.xpose.msra.mxu0 0
  %1263 = vmatprep.subr.bf16.mxu0 0
  %1264 = vmatpush1.bf16.xpose.msra.mxu0 0
  %1265 = vmatprep.subr.bf16.mxu0 0
  %1266 = vmatpush1.bf16.xpose.msra.mxu0 0
  %1267 = vmatprep.subr.bf16.mxu0 0
  %1268 = vmatpush1.bf16.xpose.msra.mxu0 0
  %1269 = vmatprep.subr.bf16.mxu0 0
  %1270 = vmatpush1.bf16.xpose.msra.mxu0 0
  %1271 = vmatprep.subr.bf16.mxu0 0
  %1272 = vmatpush1.bf16.xpose.msra.mxu0 0
  %1273 = vmatprep.subr.bf16.mxu0 0
  %1274 = vmatpush1.bf16.xpose.msra.mxu0 0
  %1275 = vmatprep.subr.bf16.mxu0 0
  %1276 = vmatpush1.bf16.xpose.msra.mxu0 0
  %1277 = vmatprep.subr.bf16.mxu0 0
  %1278 = vmatpush1.bf16.xpose.msra.mxu0 0
  %1279 = vmatprep.subr.bf16.mxu0 0
  %1280 = vmatpush1.bf16.xpose.msra.mxu0 0
  %1281 = vmatprep.mubr.bf16.mxu0 0
  %1282 = vmatmul.mubr.bf16.gmra.mrb[0].mxu0 %v1244
  %v1283 = vpop.f32.mrb[0].mxu0
  %v1284 = vadd.f32 0.0, %v1283
  %v1285 = vpop.f32.mrb[0].mxu0
  %v1286 = vpop.f32.mrb[0].mxu0
  %v1287 = vpop.f32.mrb[0].mxu0
  %1288 = vdwg.mxu0
  %v1290 = vsel %vm1012, %v1002, 0
  %v1293 = vsel %vm1012, %v1010, 0
  %1295 = vmatprep.subr.bf16.mxu0 0
  %1296 = vmatpush1.bf16.xpose.msra.mxu0 %v1293
  %1297 = vmatprep.subr.bf16.mxu0 0
  %1298 = vmatpush1.bf16.xpose.msra.mxu0 0
  %1299 = vmatprep.subr.bf16.mxu0 0
  %1300 = vmatpush1.bf16.xpose.msra.mxu0 0
  %1301 = vmatprep.subr.bf16.mxu0 0
  %1302 = vmatpush1.bf16.xpose.msra.mxu0 0
  %1303 = vmatprep.subr.bf16.mxu0 0
  %1304 = vmatpush1.bf16.xpose.msra.mxu0 0
  %1305 = vmatprep.subr.bf16.mxu0 0
  %1306 = vmatpush1.bf16.xpose.msra.mxu0 0
  %1307 = vmatprep.subr.bf16.mxu0 0
  %1308 = vmatpush1.bf16.xpose.msra.mxu0 0
  %1309 = vmatprep.subr.bf16.mxu0 0
  %1310 = vmatpush1.bf16.xpose.msra.mxu0 0
  %1311 = vmatprep.subr.bf16.mxu0 0
  %1312 = vmatpush1.bf16.xpose.msra.mxu0 0
  %1313 = vmatprep.subr.bf16.mxu0 0
  %1314 = vmatpush1.bf16.xpose.msra.mxu0 0
  %1315 = vmatprep.subr.bf16.mxu0 0
  %1316 = vmatpush1.bf16.xpose.msra.mxu0 0
  %1317 = vmatprep.subr.bf16.mxu0 0
  %1318 = vmatpush1.bf16.xpose.msra.mxu0 0
  %1319 = vmatprep.subr.bf16.mxu0 0
  %1320 = vmatpush1.bf16.xpose.msra.mxu0 0
  %1321 = vmatprep.subr.bf16.mxu0 0
  %1322 = vmatpush1.bf16.xpose.msra.mxu0 0
  %1323 = vmatprep.subr.bf16.mxu0 0
  %1324 = vmatpush1.bf16.xpose.msra.mxu0 0
  %1325 = vmatprep.subr.bf16.mxu0 0
  %1326 = vmatpush1.bf16.xpose.msra.mxu0 0
  %1327 = vmatprep.mubr.bf16.mxu0 0
  %1328 = vmatmul.mubr.bf16.gmra.mrb[0].mxu0 %v1290
  %v1329 = vpop.f32.mrb[0].mxu0
  %v1330 = vadd.f32 0.0, %v1329
  %v1331 = vpop.f32.mrb[0].mxu0
  %v1332 = vpop.f32.mrb[0].mxu0
  %v1333 = vpop.f32.mrb[0].mxu0
  %1334 = vdwg.mxu0
  %v1336 = vsel %vm1012, %v1003, 0
  %v1339 = vsel %vm1012, %v1011, 0
  %1341 = vmatprep.subr.bf16.mxu0 0
  %1342 = vmatpush1.bf16.xpose.msra.mxu0 %v1339
  %1343 = vmatprep.subr.bf16.mxu0 0
  %1344 = vmatpush1.bf16.xpose.msra.mxu0 0
  %1345 = vmatprep.subr.bf16.mxu0 0
  %1346 = vmatpush1.bf16.xpose.msra.mxu0 0
  %1347 = vmatprep.subr.bf16.mxu0 0
  %1348 = vmatpush1.bf16.xpose.msra.mxu0 0
  %1349 = vmatprep.subr.bf16.mxu0 0
  %1350 = vmatpush1.bf16.xpose.msra.mxu0 0
  %1351 = vmatprep.subr.bf16.mxu0 0
  %1352 = vmatpush1.bf16.xpose.msra.mxu0 0
  %1353 = vmatprep.subr.bf16.mxu0 0
  %1354 = vmatpush1.bf16.xpose.msra.mxu0 0
  %1355 = vmatprep.subr.bf16.mxu0 0
  %1356 = vmatpush1.bf16.xpose.msra.mxu0 0
  %1357 = vmatprep.subr.bf16.mxu0 0
  %1358 = vmatpush1.bf16.xpose.msra.mxu0 0
  %1359 = vmatprep.subr.bf16.mxu0 0
  %1360 = vmatpush1.bf16.xpose.msra.mxu0 0
  %1361 = vmatprep.subr.bf16.mxu0 0
  %1362 = vmatpush1.bf16.xpose.msra.mxu0 0
  %1363 = vmatprep.subr.bf16.mxu0 0
  %1364 = vmatpush1.bf16.xpose.msra.mxu0 0
  %1365 = vmatprep.subr.bf16.mxu0 0
  %1366 = vmatpush1.bf16.xpose.msra.mxu0 0
  %1367 = vmatprep.subr.bf16.mxu0 0
  %1368 = vmatpush1.bf16.xpose.msra.mxu0 0
  %1369 = vmatprep.subr.bf16.mxu0 0
  %1370 = vmatpush1.bf16.xpose.msra.mxu0 0
  %1371 = vmatprep.subr.bf16.mxu0 0
  %1372 = vmatpush1.bf16.xpose.msra.mxu0 0
  %1373 = vmatprep.mubr.bf16.mxu0 0
  %1374 = vmatmul.mubr.bf16.gmra.mrb[0].mxu0 %v1336
  %v1375 = vpop.f32.mrb[0].mxu0
  %v1376 = vadd.f32 0.0, %v1375
  %v1377 = vpop.f32.mrb[0].mxu0
  %v1378 = vpop.f32.mrb[0].mxu0
  %v1379 = vpop.f32.mrb[0].mxu0
  %1380 = vdwg.mxu0
  %v1381 = vmul.f32 %v1054, 0.25
  %v1382 = vmul.f32 %v1100, 0.25
  %v1383 = vmul.f32 %v1146, 0.25
  %v1384 = vmul.f32 %v1192, 0.25
  %v1385 = vmul.f32 %v1238, 0.25
  %v1386 = vmul.f32 %v1284, 0.25
  %v1387 = vmul.f32 %v1330, 0.25
  %v1388 = vmul.f32 %v1376, 0.25
  %v1389 = vsel %vm447, 1, 0
  %vm1390 = vcmp.eq.s32.totalorder %v1389, 1
  %v1391 = vsel %vm1390, %v1381, -1e+30
  %v1392 = vsel %vm1390, %v1382, -1e+30
  %v1393 = vsel %vm1390, %v1383, -1e+30
  %v1394 = vsel %vm1390, %v1384, -1e+30
  %v1395 = vsel %vm1390, %v1385, -1e+30
  %v1396 = vsel %vm1390, %v1386, -1e+30
  %v1397 = vsel %vm1390, %v1387, -1e+30
  %v1398 = vsel %vm1390, %v1388, -1e+30
  %vm1399 = vcmask 27648
  %v1400 = vsel %vm1399, %v1391, -inf
  %1401 = vmax.xlane.f32.xlu0 %v1400
  %v1402 = vpop.xlane.xlu0 %1401
  %v1403 = vsel %vm1399, %v1392, -inf
  %1404 = vmax.xlane.f32.xlu0 %v1403
  %v1405 = vpop.xlane.xlu0 %1404
  %v1406 = vsel %vm1399, %v1393, -inf
  %1407 = vmax.xlane.f32.xlu0 %v1406
  %v1408 = vpop.xlane.xlu0 %1407
  %v1409 = vsel %vm1399, %v1394, -inf
  %1410 = vmax.xlane.f32.xlu0 %v1409
  %v1411 = vpop.xlane.xlu0 %1410
  %v1412 = vsel %vm1399, %v1395, -inf
  %1413 = vmax.xlane.f32.xlu0 %v1412
  %v1414 = vpop.xlane.xlu0 %1413
  %v1415 = vsel %vm1399, %v1396, -inf
  %1416 = vmax.xlane.f32.xlu0 %v1415
  %v1417 = vpop.xlane.xlu0 %1416
  %v1418 = vsel %vm1399, %v1397, -inf
  %1419 = vmax.xlane.f32.xlu0 %v1418
  %v1420 = vpop.xlane.xlu0 %1419
  %v1421 = vsel %vm1399, %v1398, -inf
  %1422 = vmax.xlane.f32.xlu0 %v1421
  %v1423 = vpop.xlane.xlu0 %1422
  %v1424 = vsub.f32 %v1391, %v1402
  %v1425 = vsub.f32 %v1392, %v1405
  %v1426 = vsub.f32 %v1393, %v1408
  %v1427 = vsub.f32 %v1394, %v1411
  %v1428 = vsub.f32 %v1395, %v1414
  %v1429 = vsub.f32 %v1396, %v1417
  %v1430 = vsub.f32 %v1397, %v1420
  %v1431 = vsub.f32 %v1398, %v1423
  %v1432 = vmul.f32 %v1424, 1.442695
  %v1433 = vpow.pop %v1432
  %v1434 = vmul.f32 %v1425, 1.442695
  %v1435 = vpow.pop %v1434
  %v1436 = vmul.f32 %v1426, 1.442695
  %v1437 = vpow.pop %v1436
  %v1438 = vmul.f32 %v1427, 1.442695
  %v1439 = vpow.pop %v1438
  %v1440 = vmul.f32 %v1428, 1.442695
  %v1441 = vpow.pop %v1440
  %v1442 = vmul.f32 %v1429, 1.442695
  %v1443 = vpow.pop %v1442
  %v1444 = vmul.f32 %v1430, 1.442695
  %v1445 = vpow.pop %v1444
  %v1446 = vmul.f32 %v1431, 1.442695
  %v1447 = vpow.pop %v1446
  %v1448 = vsel %vm1399, %v1433, 0.0
  %1449 = vadd.xlane.f32.xlu0 %v1448
  %v1450 = vpop.xlane.xlu0 %1449
  %v1451 = vsel %vm1399, %v1435, 0.0
  %1452 = vadd.xlane.f32.xlu0 %v1451
  %v1453 = vpop.xlane.xlu0 %1452
  %v1454 = vsel %vm1399, %v1437, 0.0
  %1455 = vadd.xlane.f32.xlu0 %v1454
  %v1456 = vpop.xlane.xlu0 %1455
  %v1457 = vsel %vm1399, %v1439, 0.0
  %1458 = vadd.xlane.f32.xlu0 %v1457
  %v1459 = vpop.xlane.xlu0 %1458
  %v1460 = vsel %vm1399, %v1441, 0.0
  %1461 = vadd.xlane.f32.xlu0 %v1460
  %v1462 = vpop.xlane.xlu0 %1461
  %v1463 = vsel %vm1399, %v1443, 0.0
  %1464 = vadd.xlane.f32.xlu0 %v1463
  %v1465 = vpop.xlane.xlu0 %1464
  %v1466 = vsel %vm1399, %v1445, 0.0
  %1467 = vadd.xlane.f32.xlu0 %v1466
  %v1468 = vpop.xlane.xlu0 %1467
  %v1469 = vsel %vm1399, %v1447, 0.0
  %1470 = vadd.xlane.f32.xlu0 %v1469
  %v1471 = vpop.xlane.xlu0 %1470
  %v1472 = vrcp.pop %v1450
  %v1473 = vmul.f32 %v1433, %v1472
  %v1474 = vrcp.pop %v1453
  %v1475 = vmul.f32 %v1435, %v1474
  %v1476 = vrcp.pop %v1456
  %v1477 = vmul.f32 %v1437, %v1476
  %v1478 = vrcp.pop %v1459
  %v1479 = vmul.f32 %v1439, %v1478
  %v1480 = vrcp.pop %v1462
  %v1481 = vmul.f32 %v1441, %v1480
  %v1482 = vrcp.pop %v1465
  %v1483 = vmul.f32 %v1443, %v1482
  %v1484 = vrcp.pop %v1468
  %v1485 = vmul.f32 %v1445, %v1484
  %v1486 = vrcp.pop %v1471
  %v1487 = vmul.f32 %v1447, %v1486
  %v1488 = vpack.c.bf16 %v1473, %v1473
  %v1489 = vpack.c.bf16 %v1475, %v1475
  %v1490 = vpack.c.bf16 %v1477, %v1477
  %v1491 = vpack.c.bf16 %v1479, %v1479
  %v1492 = vpack.c.bf16 %v1481, %v1481
  %v1493 = vpack.c.bf16 %v1483, %v1483
  %v1494 = vpack.c.bf16 %v1485, %v1485
  %v1495 = vpack.c.bf16 %v1487, %v1487
  %v1496 = vpack.c.bf16 %v970, %v970
  %v1497 = vpack.c.bf16 %v988, %v988
  %v1498 = vpack.c.bf16 %v973, %v973
  %v1499 = vpack.c.bf16 %v989, %v989
  %v1500 = vpack.c.bf16 %v978, %v978
  %v1501 = vpack.c.bf16 %v990, %v990
  %v1502 = vpack.c.bf16 %v981, %v981
  %v1503 = vpack.c.bf16 %v991, %v991
  %v1505 = vsel %vm362, %v1488, 0
  %v1508 = vsel %vm369, %v1496, 0
  %1510 = vmatprep.subr.bf16.mxu0 0
  %1511 = vmatpush1.bf16.msra.mxu0 %v1508
  %1512 = vmatprep.subr.bf16.mxu0 0
  %1513 = vmatpush1.bf16.msra.mxu0 0
  %1514 = vmatprep.subr.bf16.mxu0 0
  %1515 = vmatpush1.bf16.msra.mxu0 0
  %1516 = vmatprep.subr.bf16.mxu0 0
  %1517 = vmatpush1.bf16.msra.mxu0 0
  %1518 = vmatprep.subr.bf16.mxu0 0
  %1519 = vmatpush1.bf16.msra.mxu0 0
  %1520 = vmatprep.subr.bf16.mxu0 0
  %1521 = vmatpush1.bf16.msra.mxu0 0
  %1522 = vmatprep.subr.bf16.mxu0 0
  %1523 = vmatpush1.bf16.msra.mxu0 0
  %1524 = vmatprep.subr.bf16.mxu0 0
  %1525 = vmatpush1.bf16.msra.mxu0 0
  %1526 = vmatprep.subr.bf16.mxu0 0
  %1527 = vmatpush1.bf16.msra.mxu0 0
  %1528 = vmatprep.subr.bf16.mxu0 0
  %1529 = vmatpush1.bf16.msra.mxu0 0
  %1530 = vmatprep.subr.bf16.mxu0 0
  %1531 = vmatpush1.bf16.msra.mxu0 0
  %1532 = vmatprep.subr.bf16.mxu0 0
  %1533 = vmatpush1.bf16.msra.mxu0 0
  %1534 = vmatprep.subr.bf16.mxu0 0
  %1535 = vmatpush1.bf16.msra.mxu0 0
  %1536 = vmatprep.subr.bf16.mxu0 0
  %1537 = vmatpush1.bf16.msra.mxu0 0
  %1538 = vmatprep.subr.bf16.mxu0 0
  %1539 = vmatpush1.bf16.msra.mxu0 0
  %1540 = vmatprep.subr.bf16.mxu0 0
  %1541 = vmatpush1.bf16.msra.mxu0 0
  %1542 = vmatprep.mubr.bf16.mxu0 0
  %1543 = vmatmul.mubr.bf16.gmra.mrb[0].mxu0 %v1505
  %v1544 = vpop.f32.mrb[0].mxu0
  %v1545 = vadd.f32 0.0, %v1544
  %v1546 = vpop.f32.mrb[0].mxu0
  %v1547 = vpop.f32.mrb[0].mxu0
  %v1548 = vpop.f32.mrb[0].mxu0
  %1549 = vdwg.mxu0
  %v1551 = vsel %vm362, %v1489, 0
  %v1554 = vsel %vm369, %v1497, 0
  %1556 = vmatprep.subr.bf16.mxu0 0
  %1557 = vmatpush1.bf16.msra.mxu0 %v1554
  %1558 = vmatprep.subr.bf16.mxu0 0
  %1559 = vmatpush1.bf16.msra.mxu0 0
  %1560 = vmatprep.subr.bf16.mxu0 0
  %1561 = vmatpush1.bf16.msra.mxu0 0
  %1562 = vmatprep.subr.bf16.mxu0 0
  %1563 = vmatpush1.bf16.msra.mxu0 0
  %1564 = vmatprep.subr.bf16.mxu0 0
  %1565 = vmatpush1.bf16.msra.mxu0 0
  %1566 = vmatprep.subr.bf16.mxu0 0
  %1567 = vmatpush1.bf16.msra.mxu0 0
  %1568 = vmatprep.subr.bf16.mxu0 0
  %1569 = vmatpush1.bf16.msra.mxu0 0
  %1570 = vmatprep.subr.bf16.mxu0 0
  %1571 = vmatpush1.bf16.msra.mxu0 0
  %1572 = vmatprep.subr.bf16.mxu0 0
  %1573 = vmatpush1.bf16.msra.mxu0 0
  %1574 = vmatprep.subr.bf16.mxu0 0
  %1575 = vmatpush1.bf16.msra.mxu0 0
  %1576 = vmatprep.subr.bf16.mxu0 0
  %1577 = vmatpush1.bf16.msra.mxu0 0
  %1578 = vmatprep.subr.bf16.mxu0 0
  %1579 = vmatpush1.bf16.msra.mxu0 0
  %1580 = vmatprep.subr.bf16.mxu0 0
  %1581 = vmatpush1.bf16.msra.mxu0 0
  %1582 = vmatprep.subr.bf16.mxu0 0
  %1583 = vmatpush1.bf16.msra.mxu0 0
  %1584 = vmatprep.subr.bf16.mxu0 0
  %1585 = vmatpush1.bf16.msra.mxu0 0
  %1586 = vmatprep.subr.bf16.mxu0 0
  %1587 = vmatpush1.bf16.msra.mxu0 0
  %1588 = vmatprep.mubr.bf16.mxu0 0
  %1589 = vmatmul.mubr.bf16.gmra.mrb[0].mxu0 %v1551
  %v1590 = vpop.f32.mrb[0].mxu0
  %v1591 = vadd.f32 0.0, %v1590
  %v1592 = vpop.f32.mrb[0].mxu0
  %v1593 = vpop.f32.mrb[0].mxu0
  %v1594 = vpop.f32.mrb[0].mxu0
  %1595 = vdwg.mxu0
  %v1597 = vsel %vm362, %v1490, 0
  %v1600 = vsel %vm369, %v1498, 0
  %1602 = vmatprep.subr.bf16.mxu0 0
  %1603 = vmatpush1.bf16.msra.mxu0 %v1600
  %1604 = vmatprep.subr.bf16.mxu0 0
  %1605 = vmatpush1.bf16.msra.mxu0 0
  %1606 = vmatprep.subr.bf16.mxu0 0
  %1607 = vmatpush1.bf16.msra.mxu0 0
  %1608 = vmatprep.subr.bf16.mxu0 0
  %1609 = vmatpush1.bf16.msra.mxu0 0
  %1610 = vmatprep.subr.bf16.mxu0 0
  %1611 = vmatpush1.bf16.msra.mxu0 0
  %1612 = vmatprep.subr.bf16.mxu0 0
  %1613 = vmatpush1.bf16.msra.mxu0 0
  %1614 = vmatprep.subr.bf16.mxu0 0
  %1615 = vmatpush1.bf16.msra.mxu0 0
  %1616 = vmatprep.subr.bf16.mxu0 0
  %1617 = vmatpush1.bf16.msra.mxu0 0
  %1618 = vmatprep.subr.bf16.mxu0 0
  %1619 = vmatpush1.bf16.msra.mxu0 0
  %1620 = vmatprep.subr.bf16.mxu0 0
  %1621 = vmatpush1.bf16.msra.mxu0 0
  %1622 = vmatprep.subr.bf16.mxu0 0
  %1623 = vmatpush1.bf16.msra.mxu0 0
  %1624 = vmatprep.subr.bf16.mxu0 0
  %1625 = vmatpush1.bf16.msra.mxu0 0
  %1626 = vmatprep.subr.bf16.mxu0 0
  %1627 = vmatpush1.bf16.msra.mxu0 0
  %1628 = vmatprep.subr.bf16.mxu0 0
  %1629 = vmatpush1.bf16.msra.mxu0 0
  %1630 = vmatprep.subr.bf16.mxu0 0
  %1631 = vmatpush1.bf16.msra.mxu0 0
  %1632 = vmatprep.subr.bf16.mxu0 0
  %1633 = vmatpush1.bf16.msra.mxu0 0
  %1634 = vmatprep.mubr.bf16.mxu0 0
  %1635 = vmatmul.mubr.bf16.gmra.mrb[0].mxu0 %v1597
  %v1636 = vpop.f32.mrb[0].mxu0
  %v1637 = vadd.f32 0.0, %v1636
  %v1638 = vpop.f32.mrb[0].mxu0
  %v1639 = vpop.f32.mrb[0].mxu0
  %v1640 = vpop.f32.mrb[0].mxu0
  %1641 = vdwg.mxu0
  %v1643 = vsel %vm362, %v1491, 0
  %v1646 = vsel %vm369, %v1499, 0
  %1648 = vmatprep.subr.bf16.mxu0 0
  %1649 = vmatpush1.bf16.msra.mxu0 %v1646
  %1650 = vmatprep.subr.bf16.mxu0 0
  %1651 = vmatpush1.bf16.msra.mxu0 0
  %1652 = vmatprep.subr.bf16.mxu0 0
  %1653 = vmatpush1.bf16.msra.mxu0 0
  %1654 = vmatprep.subr.bf16.mxu0 0
  %1655 = vmatpush1.bf16.msra.mxu0 0
  %1656 = vmatprep.subr.bf16.mxu0 0
  %1657 = vmatpush1.bf16.msra.mxu0 0
  %1658 = vmatprep.subr.bf16.mxu0 0
  %1659 = vmatpush1.bf16.msra.mxu0 0
  %1660 = vmatprep.subr.bf16.mxu0 0
  %1661 = vmatpush1.bf16.msra.mxu0 0
  %1662 = vmatprep.subr.bf16.mxu0 0
  %1663 = vmatpush1.bf16.msra.mxu0 0
  %1664 = vmatprep.subr.bf16.mxu0 0
  %1665 = vmatpush1.bf16.msra.mxu0 0
  %1666 = vmatprep.subr.bf16.mxu0 0
  %1667 = vmatpush1.bf16.msra.mxu0 0
  %1668 = vmatprep.subr.bf16.mxu0 0
  %1669 = vmatpush1.bf16.msra.mxu0 0
  %1670 = vmatprep.subr.bf16.mxu0 0
  %1671 = vmatpush1.bf16.msra.mxu0 0
  %1672 = vmatprep.subr.bf16.mxu0 0
  %1673 = vmatpush1.bf16.msra.mxu0 0
  %1674 = vmatprep.subr.bf16.mxu0 0
  %1675 = vmatpush1.bf16.msra.mxu0 0
  %1676 = vmatprep.subr.bf16.mxu0 0
  %1677 = vmatpush1.bf16.msra.mxu0 0
  %1678 = vmatprep.subr.bf16.mxu0 0
  %1679 = vmatpush1.bf16.msra.mxu0 0
  %1680 = vmatprep.mubr.bf16.mxu0 0
  %1681 = vmatmul.mubr.bf16.gmra.mrb[0].mxu0 %v1643
  %v1682 = vpop.f32.mrb[0].mxu0
  %v1683 = vadd.f32 0.0, %v1682
  %v1684 = vpop.f32.mrb[0].mxu0
  %v1685 = vpop.f32.mrb[0].mxu0
  %v1686 = vpop.f32.mrb[0].mxu0
  %1687 = vdwg.mxu0
  %v1689 = vsel %vm362, %v1492, 0
  %v1692 = vsel %vm369, %v1500, 0
  %1694 = vmatprep.subr.bf16.mxu0 0
  %1695 = vmatpush1.bf16.msra.mxu0 %v1692
  %1696 = vmatprep.subr.bf16.mxu0 0
  %1697 = vmatpush1.bf16.msra.mxu0 0
  %1698 = vmatprep.subr.bf16.mxu0 0
  %1699 = vmatpush1.bf16.msra.mxu0 0
  %1700 = vmatprep.subr.bf16.mxu0 0
  %1701 = vmatpush1.bf16.msra.mxu0 0
  %1702 = vmatprep.subr.bf16.mxu0 0
  %1703 = vmatpush1.bf16.msra.mxu0 0
  %1704 = vmatprep.subr.bf16.mxu0 0
  %1705 = vmatpush1.bf16.msra.mxu0 0
  %1706 = vmatprep.subr.bf16.mxu0 0
  %1707 = vmatpush1.bf16.msra.mxu0 0
  %1708 = vmatprep.subr.bf16.mxu0 0
  %1709 = vmatpush1.bf16.msra.mxu0 0
  %1710 = vmatprep.subr.bf16.mxu0 0
  %1711 = vmatpush1.bf16.msra.mxu0 0
  %1712 = vmatprep.subr.bf16.mxu0 0
  %1713 = vmatpush1.bf16.msra.mxu0 0
  %1714 = vmatprep.subr.bf16.mxu0 0
  %1715 = vmatpush1.bf16.msra.mxu0 0
  %1716 = vmatprep.subr.bf16.mxu0 0
  %1717 = vmatpush1.bf16.msra.mxu0 0
  %1718 = vmatprep.subr.bf16.mxu0 0
  %1719 = vmatpush1.bf16.msra.mxu0 0
  %1720 = vmatprep.subr.bf16.mxu0 0
  %1721 = vmatpush1.bf16.msra.mxu0 0
  %1722 = vmatprep.subr.bf16.mxu0 0
  %1723 = vmatpush1.bf16.msra.mxu0 0
  %1724 = vmatprep.subr.bf16.mxu0 0
  %1725 = vmatpush1.bf16.msra.mxu0 0
  %1726 = vmatprep.mubr.bf16.mxu0 0
  %1727 = vmatmul.mubr.bf16.gmra.mrb[0].mxu0 %v1689
  %v1728 = vpop.f32.mrb[0].mxu0
  %v1729 = vadd.f32 0.0, %v1728
  %v1730 = vpop.f32.mrb[0].mxu0
  %v1731 = vpop.f32.mrb[0].mxu0
  %v1732 = vpop.f32.mrb[0].mxu0
  %1733 = vdwg.mxu0
  %v1735 = vsel %vm362, %v1493, 0
  %v1738 = vsel %vm369, %v1501, 0
  %1740 = vmatprep.subr.bf16.mxu0 0
  %1741 = vmatpush1.bf16.msra.mxu0 %v1738
  %1742 = vmatprep.subr.bf16.mxu0 0
  %1743 = vmatpush1.bf16.msra.mxu0 0
  %1744 = vmatprep.subr.bf16.mxu0 0
  %1745 = vmatpush1.bf16.msra.mxu0 0
  %1746 = vmatprep.subr.bf16.mxu0 0
  %1747 = vmatpush1.bf16.msra.mxu0 0
  %1748 = vmatprep.subr.bf16.mxu0 0
  %1749 = vmatpush1.bf16.msra.mxu0 0
  %1750 = vmatprep.subr.bf16.mxu0 0
  %1751 = vmatpush1.bf16.msra.mxu0 0
  %1752 = vmatprep.subr.bf16.mxu0 0
  %1753 = vmatpush1.bf16.msra.mxu0 0
  %1754 = vmatprep.subr.bf16.mxu0 0
  %1755 = vmatpush1.bf16.msra.mxu0 0
  %1756 = vmatprep.subr.bf16.mxu0 0
  %1757 = vmatpush1.bf16.msra.mxu0 0
  %1758 = vmatprep.subr.bf16.mxu0 0
  %1759 = vmatpush1.bf16.msra.mxu0 0
  %1760 = vmatprep.subr.bf16.mxu0 0
  %1761 = vmatpush1.bf16.msra.mxu0 0
  %1762 = vmatprep.subr.bf16.mxu0 0
  %1763 = vmatpush1.bf16.msra.mxu0 0
  %1764 = vmatprep.subr.bf16.mxu0 0
  %1765 = vmatpush1.bf16.msra.mxu0 0
  %1766 = vmatprep.subr.bf16.mxu0 0
  %1767 = vmatpush1.bf16.msra.mxu0 0
  %1768 = vmatprep.subr.bf16.mxu0 0
  %1769 = vmatpush1.bf16.msra.mxu0 0
  %1770 = vmatprep.subr.bf16.mxu0 0
  %1771 = vmatpush1.bf16.msra.mxu0 0
  %1772 = vmatprep.mubr.bf16.mxu0 0
  %1773 = vmatmul.mubr.bf16.gmra.mrb[0].mxu0 %v1735
  %v1774 = vpop.f32.mrb[0].mxu0
  %v1775 = vadd.f32 0.0, %v1774
  %v1776 = vpop.f32.mrb[0].mxu0
  %v1777 = vpop.f32.mrb[0].mxu0
  %v1778 = vpop.f32.mrb[0].mxu0
  %1779 = vdwg.mxu0
  %v1781 = vsel %vm362, %v1494, 0
  %v1784 = vsel %vm369, %v1502, 0
  %1786 = vmatprep.subr.bf16.mxu0 0
  %1787 = vmatpush1.bf16.msra.mxu0 %v1784
  %1788 = vmatprep.subr.bf16.mxu0 0
  %1789 = vmatpush1.bf16.msra.mxu0 0
  %1790 = vmatprep.subr.bf16.mxu0 0
  %1791 = vmatpush1.bf16.msra.mxu0 0
  %1792 = vmatprep.subr.bf16.mxu0 0
  %1793 = vmatpush1.bf16.msra.mxu0 0
  %1794 = vmatprep.subr.bf16.mxu0 0
  %1795 = vmatpush1.bf16.msra.mxu0 0
  %1796 = vmatprep.subr.bf16.mxu0 0
  %1797 = vmatpush1.bf16.msra.mxu0 0
  %1798 = vmatprep.subr.bf16.mxu0 0
  %1799 = vmatpush1.bf16.msra.mxu0 0
  %1800 = vmatprep.subr.bf16.mxu0 0
  %1801 = vmatpush1.bf16.msra.mxu0 0
  %1802 = vmatprep.subr.bf16.mxu0 0
  %1803 = vmatpush1.bf16.msra.mxu0 0
  %1804 = vmatprep.subr.bf16.mxu0 0
  %1805 = vmatpush1.bf16.msra.mxu0 0
  %1806 = vmatprep.subr.bf16.mxu0 0
  %1807 = vmatpush1.bf16.msra.mxu0 0
  %1808 = vmatprep.subr.bf16.mxu0 0
  %1809 = vmatpush1.bf16.msra.mxu0 0
  %1810 = vmatprep.subr.bf16.mxu0 0
  %1811 = vmatpush1.bf16.msra.mxu0 0
  %1812 = vmatprep.subr.bf16.mxu0 0
  %1813 = vmatpush1.bf16.msra.mxu0 0
  %1814 = vmatprep.subr.bf16.mxu0 0
  %1815 = vmatpush1.bf16.msra.mxu0 0
  %1816 = vmatprep.subr.bf16.mxu0 0
  %1817 = vmatpush1.bf16.msra.mxu0 0
  %1818 = vmatprep.mubr.bf16.mxu0 0
  %1819 = vmatmul.mubr.bf16.gmra.mrb[0].mxu0 %v1781
  %v1820 = vpop.f32.mrb[0].mxu0
  %v1821 = vadd.f32 0.0, %v1820
  %v1822 = vpop.f32.mrb[0].mxu0
  %v1823 = vpop.f32.mrb[0].mxu0
  %v1824 = vpop.f32.mrb[0].mxu0
  %1825 = vdwg.mxu0
  %v1827 = vsel %vm362, %v1495, 0
  %v1830 = vsel %vm369, %v1503, 0
  %1832 = vmatprep.subr.bf16.mxu0 0
  %1833 = vmatpush1.bf16.msra.mxu0 %v1830
  %1834 = vmatprep.subr.bf16.mxu0 0
  %1835 = vmatpush1.bf16.msra.mxu0 0
  %1836 = vmatprep.subr.bf16.mxu0 0
  %1837 = vmatpush1.bf16.msra.mxu0 0
  %1838 = vmatprep.subr.bf16.mxu0 0
  %1839 = vmatpush1.bf16.msra.mxu0 0
  %1840 = vmatprep.subr.bf16.mxu0 0
  %1841 = vmatpush1.bf16.msra.mxu0 0
  %1842 = vmatprep.subr.bf16.mxu0 0
  %1843 = vmatpush1.bf16.msra.mxu0 0
  %1844 = vmatprep.subr.bf16.mxu0 0
  %1845 = vmatpush1.bf16.msra.mxu0 0
  %1846 = vmatprep.subr.bf16.mxu0 0
  %1847 = vmatpush1.bf16.msra.mxu0 0
  %1848 = vmatprep.subr.bf16.mxu0 0
  %1849 = vmatpush1.bf16.msra.mxu0 0
  %1850 = vmatprep.subr.bf16.mxu0 0
  %1851 = vmatpush1.bf16.msra.mxu0 0
  %1852 = vmatprep.subr.bf16.mxu0 0
  %1853 = vmatpush1.bf16.msra.mxu0 0
  %1854 = vmatprep.subr.bf16.mxu0 0
  %1855 = vmatpush1.bf16.msra.mxu0 0
  %1856 = vmatprep.subr.bf16.mxu0 0
  %1857 = vmatpush1.bf16.msra.mxu0 0
  %1858 = vmatprep.subr.bf16.mxu0 0
  %1859 = vmatpush1.bf16.msra.mxu0 0
  %1860 = vmatprep.subr.bf16.mxu0 0
  %1861 = vmatpush1.bf16.msra.mxu0 0
  %1862 = vmatprep.subr.bf16.mxu0 0
  %1863 = vmatpush1.bf16.msra.mxu0 0
  %1864 = vmatprep.mubr.bf16.mxu0 0
  %1865 = vmatmul.mubr.bf16.gmra.mrb[0].mxu0 %v1827
  %v1866 = vpop.f32.mrb[0].mxu0
  %v1867 = vadd.f32 0.0, %v1866
  %v1868 = vpop.f32.mrb[0].mxu0
  %v1869 = vpop.f32.mrb[0].mxu0
  %v1870 = vpop.f32.mrb[0].mxu0
  %1871 = vdwg.mxu0
  %v1880 = vcombine.low %v1545, %v1591
  %v1881 = vcombine.low %v1637, %v1683
  %v1882 = vcombine.low %v1729, %v1775
  %v1883 = vcombine.low %v1821, %v1867
  %v1888 = vpack.c.bf16 %v1881, %v1880
  %v1889 = vpack.c.bf16 %v1883, %v1882
  %v1890 = vld [vmem:[%s9] sm:$0xf]
  %v1891 = vld [vmem:[%s9 + $0x4] sm:$0xf]
  %s1892 = scalar_lea.vmem %s7, 16
  %v1893 = vld [vmem:[%s1892] sm:$0xf]
  %v1894 = vld [vmem:[%s1892 + $0x4] sm:$0xf]
  %v1895 = vld [vmem:[%s1892 + $0x8] sm:$0xf]
  %v1896 = vld [vmem:[%s1892 + $0xc] sm:$0xf]
  %s1897 = scalar_lea.vmem %s8, 1
  %v1898 = vld [vmem:[%s1897] sm:$0x1]
  %v1900 = vlaneseq
  %v1901 = vshrl.u32 %v1900, 7
  %v1902 = vsub.s32 0, %v1901
  %v1903 = vrot.slane %v1898, %v1902
  %v1909 = vunpack.c.l.b16 %v1893
  %v1910 = vunpack.c.l.b16 %v1894
  %v1911 = vunpack.c.l.b16 %v1895
  %v1912 = vunpack.c.l.b16 %v1896
  %v1913 = vpack.c.b16 %v1910, %v1909
  %v1914 = vpack.c.b16 %v1912, %v1911
  %1917 = vmatprep.subr.bf16.mxu0 0
  %1918 = vmatpush1.bf16.msra.mxu0 %v1913
  %1919 = vmatprep.subr.bf16.mxu0 0
  %1920 = vmatpush1.bf16.msra.mxu0 %v1914
  %1921 = vmatprep.subr.bf16.mxu0 0
  %1922 = vmatpush1.bf16.msra.mxu0 0
  %1923 = vmatprep.subr.bf16.mxu0 0
  %1924 = vmatpush1.bf16.msra.mxu0 0
  %1925 = vmatprep.subr.bf16.mxu0 0
  %1926 = vmatpush1.bf16.msra.mxu0 0
  %1927 = vmatprep.subr.bf16.mxu0 0
  %1928 = vmatpush1.bf16.msra.mxu0 0
  %1929 = vmatprep.subr.bf16.mxu0 0
  %1930 = vmatpush1.bf16.msra.mxu0 0
  %1931 = vmatprep.subr.bf16.mxu0 0
  %1932 = vmatpush1.bf16.msra.mxu0 0
  %1933 = vmatprep.subr.bf16.mxu0 0
  %1934 = vmatpush1.bf16.msra.mxu0 0
  %1935 = vmatprep.subr.bf16.mxu0 0
  %1936 = vmatpush1.bf16.msra.mxu0 0
  %1937 = vmatprep.subr.bf16.mxu0 0
  %1938 = vmatpush1.bf16.msra.mxu0 0
  %1939 = vmatprep.subr.bf16.mxu0 0
  %1940 = vmatpush1.bf16.msra.mxu0 0
  %1941 = vmatprep.subr.bf16.mxu0 0
  %1942 = vmatpush1.bf16.msra.mxu0 0
  %1943 = vmatprep.subr.bf16.mxu0 0
  %1944 = vmatpush1.bf16.msra.mxu0 0
  %1945 = vmatprep.subr.bf16.mxu0 0
  %1946 = vmatpush1.bf16.msra.mxu0 0
  %1947 = vmatprep.subr.bf16.mxu0 0
  %1948 = vmatpush1.bf16.msra.mxu0 0
  %1949 = vmatprep.mubr.bf16.mxu0 0
  %1950 = vmatmul.mubr.bf16.gmra.mrb[0].mxu0 %v758
  %v1951 = vpop.f32.mrb[0].mxu0
  %v1952 = vadd.f32 %v1903, %v1951
  %v1953 = vpop.f32.mrb[0].mxu0
  %v1954 = vpop.f32.mrb[0].mxu0
  %v1955 = vadd.f32 %v1903, %v1954
  %v1956 = vpop.f32.mrb[0].mxu0
  %1957 = vmatprep.mubr.bf16.mxu0 0
  %1958 = vmatmul.mubr.bf16.gmra.mrb[0].mxu0 %v761
  %v1959 = vpop.f32.mrb[0].mxu0
  %v1960 = vadd.f32 %v1903, %v1959
  %v1961 = vpop.f32.mrb[0].mxu0
  %v1962 = vpop.f32.mrb[0].mxu0
  %v1963 = vadd.f32 %v1903, %v1962
  %v1964 = vpop.f32.mrb[0].mxu0
  %1965 = vdwg.mxu0
  %v1970 = vcombine.high %v1952, %v1952
  %v1971 = vcombine.high %v1955, %v1955
  %v1972 = vcombine.high %v1960, %v1960
  %v1973 = vcombine.high %v1963, %v1963
  %s1978 = scalar_lea.vmem %s7, 48
  %v1979 = vld [vmem:[%s1978] sm:$0xf]
  %v1980 = vld [vmem:[%s1978 + $0x4] sm:$0xf]
  %v1981 = vld [vmem:[%s1978 + $0x8] sm:$0xf]
  %v1982 = vld [vmem:[%s1978 + $0xc] sm:$0xf]
  %s1983 = scalar_lea.vmem %s8, 3
  %v1984 = vld [vmem:[%s1983] sm:$0x1]
  %v1986 = vlaneseq
  %v1987 = vshrl.u32 %v1986, 7
  %v1988 = vsub.s32 0, %v1987
  %v1989 = vrot.slane %v1984, %v1988
  %v1995 = vunpack.c.l.b16 %v1979
  %v1996 = vunpack.c.l.b16 %v1980
  %v1997 = vunpack.c.l.b16 %v1981
  %v1998 = vunpack.c.l.b16 %v1982
  %v1999 = vpack.c.b16 %v1996, %v1995
  %v2000 = vpack.c.b16 %v1998, %v1997
  %2003 = vmatprep.subr.bf16.mxu0 0
  %2004 = vmatpush1.bf16.msra.mxu0 %v1999
  %2005 = vmatprep.subr.bf16.mxu0 0
  %2006 = vmatpush1.bf16.msra.mxu0 %v2000
  %2007 = vmatprep.subr.bf16.mxu0 0
  %2008 = vmatpush1.bf16.msra.mxu0 0
  %2009 = vmatprep.subr.bf16.mxu0 0
  %2010 = vmatpush1.bf16.msra.mxu0 0
  %2011 = vmatprep.subr.bf16.mxu0 0
  %2012 = vmatpush1.bf16.msra.mxu0 0
  %2013 = vmatprep.subr.bf16.mxu0 0
  %2014 = vmatpush1.bf16.msra.mxu0 0
  %2015 = vmatprep.subr.bf16.mxu0 0
  %2016 = vmatpush1.bf16.msra.mxu0 0
  %2017 = vmatprep.subr.bf16.mxu0 0
  %2018 = vmatpush1.bf16.msra.mxu0 0
  %2019 = vmatprep.subr.bf16.mxu0 0
  %2020 = vmatpush1.bf16.msra.mxu0 0
  %2021 = vmatprep.subr.bf16.mxu0 0
  %2022 = vmatpush1.bf16.msra.mxu0 0
  %2023 = vmatprep.subr.bf16.mxu0 0
  %2024 = vmatpush1.bf16.msra.mxu0 0
  %2025 = vmatprep.subr.bf16.mxu0 0
  %2026 = vmatpush1.bf16.msra.mxu0 0
  %2027 = vmatprep.subr.bf16.mxu0 0
  %2028 = vmatpush1.bf16.msra.mxu0 0
  %2029 = vmatprep.subr.bf16.mxu0 0
  %2030 = vmatpush1.bf16.msra.mxu0 0
  %2031 = vmatprep.subr.bf16.mxu0 0
  %2032 = vmatpush1.bf16.msra.mxu0 0
  %2033 = vmatprep.subr.bf16.mxu0 0
  %2034 = vmatpush1.bf16.msra.mxu0 0
  %2035 = vmatprep.mubr.bf16.mxu0 0
  %2036 = vmatmul.mubr.bf16.gmra.mrb[0].mxu0 %v758
  %v2037 = vpop.f32.mrb[0].mxu0
  %v2038 = vadd.f32 %v1989, %v2037
  %v2039 = vpop.f32.mrb[0].mxu0
  %v2040 = vpop.f32.mrb[0].mxu0
  %v2041 = vadd.f32 %v1989, %v2040
  %v2042 = vpop.f32.mrb[0].mxu0
  %2043 = vmatprep.mubr.bf16.mxu0 0
  %2044 = vmatmul.mubr.bf16.gmra.mrb[0].mxu0 %v761
  %v2045 = vpop.f32.mrb[0].mxu0
  %v2046 = vadd.f32 %v1989, %v2045
  %v2047 = vpop.f32.mrb[0].mxu0
  %v2048 = vpop.f32.mrb[0].mxu0
  %v2049 = vadd.f32 %v1989, %v2048
  %v2050 = vpop.f32.mrb[0].mxu0
  %2051 = vdwg.mxu0
  %v2056 = vcombine.high %v2038, %v2038
  %v2057 = vcombine.high %v2041, %v2041
  %v2058 = vcombine.high %v2046, %v2046
  %v2059 = vcombine.high %v2049, %v2049
  %s2064 = scalar_lea.vmem %s7, 80
  %v2065 = vld [vmem:[%s2064] sm:$0xf]
  %v2066 = vld [vmem:[%s2064 + $0x4] sm:$0xf]
  %v2067 = vld [vmem:[%s2064 + $0x8] sm:$0xf]
  %v2068 = vld [vmem:[%s2064 + $0xc] sm:$0xf]
  %s2069 = scalar_lea.vmem %s8, 5
  %v2070 = vld [vmem:[%s2069] sm:$0x1]
  %v2072 = vlaneseq
  %v2073 = vshrl.u32 %v2072, 7
  %v2074 = vsub.s32 0, %v2073
  %v2075 = vrot.slane %v2070, %v2074
  %v2081 = vunpack.c.l.b16 %v2065
  %v2082 = vunpack.c.l.b16 %v2066
  %v2083 = vunpack.c.l.b16 %v2067
  %v2084 = vunpack.c.l.b16 %v2068
  %v2085 = vpack.c.b16 %v2082, %v2081
  %v2086 = vpack.c.b16 %v2084, %v2083
  %2089 = vmatprep.subr.bf16.mxu0 0
  %2090 = vmatpush1.bf16.msra.mxu0 %v2085
  %2091 = vmatprep.subr.bf16.mxu0 0
  %2092 = vmatpush1.bf16.msra.mxu0 %v2086
  %2093 = vmatprep.subr.bf16.mxu0 0
  %2094 = vmatpush1.bf16.msra.mxu0 0
  %2095 = vmatprep.subr.bf16.mxu0 0
  %2096 = vmatpush1.bf16.msra.mxu0 0
  %2097 = vmatprep.subr.bf16.mxu0 0
  %2098 = vmatpush1.bf16.msra.mxu0 0
  %2099 = vmatprep.subr.bf16.mxu0 0
  %2100 = vmatpush1.bf16.msra.mxu0 0
  %2101 = vmatprep.subr.bf16.mxu0 0
  %2102 = vmatpush1.bf16.msra.mxu0 0
  %2103 = vmatprep.subr.bf16.mxu0 0
  %2104 = vmatpush1.bf16.msra.mxu0 0
  %2105 = vmatprep.subr.bf16.mxu0 0
  %2106 = vmatpush1.bf16.msra.mxu0 0
  %2107 = vmatprep.subr.bf16.mxu0 0
  %2108 = vmatpush1.bf16.msra.mxu0 0
  %2109 = vmatprep.subr.bf16.mxu0 0
  %2110 = vmatpush1.bf16.msra.mxu0 0
  %2111 = vmatprep.subr.bf16.mxu0 0
  %2112 = vmatpush1.bf16.msra.mxu0 0
  %2113 = vmatprep.subr.bf16.mxu0 0
  %2114 = vmatpush1.bf16.msra.mxu0 0
  %2115 = vmatprep.subr.bf16.mxu0 0
  %2116 = vmatpush1.bf16.msra.mxu0 0
  %2117 = vmatprep.subr.bf16.mxu0 0
  %2118 = vmatpush1.bf16.msra.mxu0 0
  %2119 = vmatprep.subr.bf16.mxu0 0
  %2120 = vmatpush1.bf16.msra.mxu0 0
  %2121 = vmatprep.mubr.bf16.mxu0 0
  %2122 = vmatmul.mubr.bf16.gmra.mrb[0].mxu0 %v758
  %v2123 = vpop.f32.mrb[0].mxu0
  %v2124 = vadd.f32 %v2075, %v2123
  %v2125 = vpop.f32.mrb[0].mxu0
  %v2126 = vpop.f32.mrb[0].mxu0
  %v2127 = vadd.f32 %v2075, %v2126
  %v2128 = vpop.f32.mrb[0].mxu0
  %2129 = vmatprep.mubr.bf16.mxu0 0
  %2130 = vmatmul.mubr.bf16.gmra.mrb[0].mxu0 %v761
  %v2131 = vpop.f32.mrb[0].mxu0
  %v2132 = vadd.f32 %v2075, %v2131
  %v2133 = vpop.f32.mrb[0].mxu0
  %v2134 = vpop.f32.mrb[0].mxu0
  %v2135 = vadd.f32 %v2075, %v2134
  %v2136 = vpop.f32.mrb[0].mxu0
  %2137 = vdwg.mxu0
  %v2142 = vcombine.high %v2124, %v2124
  %v2143 = vcombine.high %v2127, %v2127
  %v2144 = vcombine.high %v2132, %v2132
  %v2145 = vcombine.high %v2135, %v2135
  %v2150 = vpack.c.bf16 %v1952, %v1952
  %v2151 = vpack.c.bf16 %v1970, %v1970
  %v2152 = vpack.c.bf16 %v1955, %v1955
  %v2153 = vpack.c.bf16 %v1971, %v1971
  %v2154 = vpack.c.bf16 %v1960, %v1960
  %v2155 = vpack.c.bf16 %v1972, %v1972
  %v2156 = vpack.c.bf16 %v1963, %v1963
  %v2157 = vpack.c.bf16 %v1973, %v1973
  %v2158 = vpack.c.bf16 %v2038, %v2038
  %v2159 = vpack.c.bf16 %v2056, %v2056
  %v2160 = vpack.c.bf16 %v2041, %v2041
  %v2161 = vpack.c.bf16 %v2057, %v2057
  %v2162 = vpack.c.bf16 %v2046, %v2046
  %v2163 = vpack.c.bf16 %v2058, %v2058
  %v2164 = vpack.c.bf16 %v2049, %v2049
  %v2165 = vpack.c.bf16 %v2059, %v2059
  %v2167 = vsel %vm1012, %v2150, 0
  %v2170 = vsel %vm1012, %v2158, 0
  %2172 = vmatprep.subr.bf16.mxu0 0
  %2173 = vmatpush1.bf16.xpose.msra.mxu0 %v2170
  %2174 = vmatprep.subr.bf16.mxu0 0
  %2175 = vmatpush1.bf16.xpose.msra.mxu0 0
  %2176 = vmatprep.subr.bf16.mxu0 0
  %2177 = vmatpush1.bf16.xpose.msra.mxu0 0
  %2178 = vmatprep.subr.bf16.mxu0 0
  %2179 = vmatpush1.bf16.xpose.msra.mxu0 0
  %2180 = vmatprep.subr.bf16.mxu0 0
  %2181 = vmatpush1.bf16.xpose.msra.mxu0 0
  %2182 = vmatprep.subr.bf16.mxu0 0
  %2183 = vmatpush1.bf16.xpose.msra.mxu0 0
  %2184 = vmatprep.subr.bf16.mxu0 0
  %2185 = vmatpush1.bf16.xpose.msra.mxu0 0
  %2186 = vmatprep.subr.bf16.mxu0 0
  %2187 = vmatpush1.bf16.xpose.msra.mxu0 0
  %2188 = vmatprep.subr.bf16.mxu0 0
  %2189 = vmatpush1.bf16.xpose.msra.mxu0 0
  %2190 = vmatprep.subr.bf16.mxu0 0
  %2191 = vmatpush1.bf16.xpose.msra.mxu0 0
  %2192 = vmatprep.subr.bf16.mxu0 0
  %2193 = vmatpush1.bf16.xpose.msra.mxu0 0
  %2194 = vmatprep.subr.bf16.mxu0 0
  %2195 = vmatpush1.bf16.xpose.msra.mxu0 0
  %2196 = vmatprep.subr.bf16.mxu0 0
  %2197 = vmatpush1.bf16.xpose.msra.mxu0 0
  %2198 = vmatprep.subr.bf16.mxu0 0
  %2199 = vmatpush1.bf16.xpose.msra.mxu0 0
  %2200 = vmatprep.subr.bf16.mxu0 0
  %2201 = vmatpush1.bf16.xpose.msra.mxu0 0
  %2202 = vmatprep.subr.bf16.mxu0 0
  %2203 = vmatpush1.bf16.xpose.msra.mxu0 0
  %2204 = vmatprep.mubr.bf16.mxu0 0
  %2205 = vmatmul.mubr.bf16.gmra.mrb[0].mxu0 %v2167
  %v2206 = vpop.f32.mrb[0].mxu0
  %v2207 = vadd.f32 0.0, %v2206
  %v2208 = vpop.f32.mrb[0].mxu0
  %v2209 = vpop.f32.mrb[0].mxu0
  %v2210 = vpop.f32.mrb[0].mxu0
  %2211 = vdwg.mxu0
  %v2213 = vsel %vm1012, %v2151, 0
  %v2216 = vsel %vm1012, %v2159, 0
  %2218 = vmatprep.subr.bf16.mxu0 0
  %2219 = vmatpush1.bf16.xpose.msra.mxu0 %v2216
  %2220 = vmatprep.subr.bf16.mxu0 0
  %2221 = vmatpush1.bf16.xpose.msra.mxu0 0
  %2222 = vmatprep.subr.bf16.mxu0 0
  %2223 = vmatpush1.bf16.xpose.msra.mxu0 0
  %2224 = vmatprep.subr.bf16.mxu0 0
  %2225 = vmatpush1.bf16.xpose.msra.mxu0 0
  %2226 = vmatprep.subr.bf16.mxu0 0
  %2227 = vmatpush1.bf16.xpose.msra.mxu0 0
  %2228 = vmatprep.subr.bf16.mxu0 0
  %2229 = vmatpush1.bf16.xpose.msra.mxu0 0
  %2230 = vmatprep.subr.bf16.mxu0 0
  %2231 = vmatpush1.bf16.xpose.msra.mxu0 0
  %2232 = vmatprep.subr.bf16.mxu0 0
  %2233 = vmatpush1.bf16.xpose.msra.mxu0 0
  %2234 = vmatprep.subr.bf16.mxu0 0
  %2235 = vmatpush1.bf16.xpose.msra.mxu0 0
  %2236 = vmatprep.subr.bf16.mxu0 0
  %2237 = vmatpush1.bf16.xpose.msra.mxu0 0
  %2238 = vmatprep.subr.bf16.mxu0 0
  %2239 = vmatpush1.bf16.xpose.msra.mxu0 0
  %2240 = vmatprep.subr.bf16.mxu0 0
  %2241 = vmatpush1.bf16.xpose.msra.mxu0 0
  %2242 = vmatprep.subr.bf16.mxu0 0
  %2243 = vmatpush1.bf16.xpose.msra.mxu0 0
  %2244 = vmatprep.subr.bf16.mxu0 0
  %2245 = vmatpush1.bf16.xpose.msra.mxu0 0
  %2246 = vmatprep.subr.bf16.mxu0 0
  %2247 = vmatpush1.bf16.xpose.msra.mxu0 0
  %2248 = vmatprep.subr.bf16.mxu0 0
  %2249 = vmatpush1.bf16.xpose.msra.mxu0 0
  %2250 = vmatprep.mubr.bf16.mxu0 0
  %2251 = vmatmul.mubr.bf16.gmra.mrb[0].mxu0 %v2213
  %v2252 = vpop.f32.mrb[0].mxu0
  %v2253 = vadd.f32 0.0, %v2252
  %v2254 = vpop.f32.mrb[0].mxu0
  %v2255 = vpop.f32.mrb[0].mxu0
  %v2256 = vpop.f32.mrb[0].mxu0
  %2257 = vdwg.mxu0
  %v2259 = vsel %vm1012, %v2152, 0
  %v2262 = vsel %vm1012, %v2160, 0
  %2264 = vmatprep.subr.bf16.mxu0 0
  %2265 = vmatpush1.bf16.xpose.msra.mxu0 %v2262
  %2266 = vmatprep.subr.bf16.mxu0 0
  %2267 = vmatpush1.bf16.xpose.msra.mxu0 0
  %2268 = vmatprep.subr.bf16.mxu0 0
  %2269 = vmatpush1.bf16.xpose.msra.mxu0 0
  %2270 = vmatprep.subr.bf16.mxu0 0
  %2271 = vmatpush1.bf16.xpose.msra.mxu0 0
  %2272 = vmatprep.subr.bf16.mxu0 0
  %2273 = vmatpush1.bf16.xpose.msra.mxu0 0
  %2274 = vmatprep.subr.bf16.mxu0 0
  %2275 = vmatpush1.bf16.xpose.msra.mxu0 0
  %2276 = vmatprep.subr.bf16.mxu0 0
  %2277 = vmatpush1.bf16.xpose.msra.mxu0 0
  %2278 = vmatprep.subr.bf16.mxu0 0
  %2279 = vmatpush1.bf16.xpose.msra.mxu0 0
  %2280 = vmatprep.subr.bf16.mxu0 0
  %2281 = vmatpush1.bf16.xpose.msra.mxu0 0
  %2282 = vmatprep.subr.bf16.mxu0 0
  %2283 = vmatpush1.bf16.xpose.msra.mxu0 0
  %2284 = vmatprep.subr.bf16.mxu0 0
  %2285 = vmatpush1.bf16.xpose.msra.mxu0 0
  %2286 = vmatprep.subr.bf16.mxu0 0
  %2287 = vmatpush1.bf16.xpose.msra.mxu0 0
  %2288 = vmatprep.subr.bf16.mxu0 0
  %2289 = vmatpush1.bf16.xpose.msra.mxu0 0
  %2290 = vmatprep.subr.bf16.mxu0 0
  %2291 = vmatpush1.bf16.xpose.msra.mxu0 0
  %2292 = vmatprep.subr.bf16.mxu0 0
  %2293 = vmatpush1.bf16.xpose.msra.mxu0 0
  %2294 = vmatprep.subr.bf16.mxu0 0
  %2295 = vmatpush1.bf16.xpose.msra.mxu0 0
  %2296 = vmatprep.mubr.bf16.mxu0 0
  %2297 = vmatmul.mubr.bf16.gmra.mrb[0].mxu0 %v2259
  %v2298 = vpop.f32.mrb[0].mxu0
  %v2299 = vadd.f32 0.0, %v2298
  %v2300 = vpop.f32.mrb[0].mxu0
  %v2301 = vpop.f32.mrb[0].mxu0
  %v2302 = vpop.f32.mrb[0].mxu0
  %2303 = vdwg.mxu0
  %v2305 = vsel %vm1012, %v2153, 0
  %v2308 = vsel %vm1012, %v2161, 0
  %2310 = vmatprep.subr.bf16.mxu0 0
  %2311 = vmatpush1.bf16.xpose.msra.mxu0 %v2308
  %2312 = vmatprep.subr.bf16.mxu0 0
  %2313 = vmatpush1.bf16.xpose.msra.mxu0 0
  %2314 = vmatprep.subr.bf16.mxu0 0
  %2315 = vmatpush1.bf16.xpose.msra.mxu0 0
  %2316 = vmatprep.subr.bf16.mxu0 0
  %2317 = vmatpush1.bf16.xpose.msra.mxu0 0
  %2318 = vmatprep.subr.bf16.mxu0 0
  %2319 = vmatpush1.bf16.xpose.msra.mxu0 0
  %2320 = vmatprep.subr.bf16.mxu0 0
  %2321 = vmatpush1.bf16.xpose.msra.mxu0 0
  %2322 = vmatprep.subr.bf16.mxu0 0
  %2323 = vmatpush1.bf16.xpose.msra.mxu0 0
  %2324 = vmatprep.subr.bf16.mxu0 0
  %2325 = vmatpush1.bf16.xpose.msra.mxu0 0
  %2326 = vmatprep.subr.bf16.mxu0 0
  %2327 = vmatpush1.bf16.xpose.msra.mxu0 0
  %2328 = vmatprep.subr.bf16.mxu0 0
  %2329 = vmatpush1.bf16.xpose.msra.mxu0 0
  %2330 = vmatprep.subr.bf16.mxu0 0
  %2331 = vmatpush1.bf16.xpose.msra.mxu0 0
  %2332 = vmatprep.subr.bf16.mxu0 0
  %2333 = vmatpush1.bf16.xpose.msra.mxu0 0
  %2334 = vmatprep.subr.bf16.mxu0 0
  %2335 = vmatpush1.bf16.xpose.msra.mxu0 0
  %2336 = vmatprep.subr.bf16.mxu0 0
  %2337 = vmatpush1.bf16.xpose.msra.mxu0 0
  %2338 = vmatprep.subr.bf16.mxu0 0
  %2339 = vmatpush1.bf16.xpose.msra.mxu0 0
  %2340 = vmatprep.subr.bf16.mxu0 0
  %2341 = vmatpush1.bf16.xpose.msra.mxu0 0
  %2342 = vmatprep.mubr.bf16.mxu0 0
  %2343 = vmatmul.mubr.bf16.gmra.mrb[0].mxu0 %v2305
  %v2344 = vpop.f32.mrb[0].mxu0
  %v2345 = vadd.f32 0.0, %v2344
  %v2346 = vpop.f32.mrb[0].mxu0
  %v2347 = vpop.f32.mrb[0].mxu0
  %v2348 = vpop.f32.mrb[0].mxu0
  %2349 = vdwg.mxu0
  %v2351 = vsel %vm1012, %v2154, 0
  %v2354 = vsel %vm1012, %v2162, 0
  %2356 = vmatprep.subr.bf16.mxu0 0
  %2357 = vmatpush1.bf16.xpose.msra.mxu0 %v2354
  %2358 = vmatprep.subr.bf16.mxu0 0
  %2359 = vmatpush1.bf16.xpose.msra.mxu0 0
  %2360 = vmatprep.subr.bf16.mxu0 0
  %2361 = vmatpush1.bf16.xpose.msra.mxu0 0
  %2362 = vmatprep.subr.bf16.mxu0 0
  %2363 = vmatpush1.bf16.xpose.msra.mxu0 0
  %2364 = vmatprep.subr.bf16.mxu0 0
  %2365 = vmatpush1.bf16.xpose.msra.mxu0 0
  %2366 = vmatprep.subr.bf16.mxu0 0
  %2367 = vmatpush1.bf16.xpose.msra.mxu0 0
  %2368 = vmatprep.subr.bf16.mxu0 0
  %2369 = vmatpush1.bf16.xpose.msra.mxu0 0
  %2370 = vmatprep.subr.bf16.mxu0 0
  %2371 = vmatpush1.bf16.xpose.msra.mxu0 0
  %2372 = vmatprep.subr.bf16.mxu0 0
  %2373 = vmatpush1.bf16.xpose.msra.mxu0 0
  %2374 = vmatprep.subr.bf16.mxu0 0
  %2375 = vmatpush1.bf16.xpose.msra.mxu0 0
  %2376 = vmatprep.subr.bf16.mxu0 0
  %2377 = vmatpush1.bf16.xpose.msra.mxu0 0
  %2378 = vmatprep.subr.bf16.mxu0 0
  %2379 = vmatpush1.bf16.xpose.msra.mxu0 0
  %2380 = vmatprep.subr.bf16.mxu0 0
  %2381 = vmatpush1.bf16.xpose.msra.mxu0 0
  %2382 = vmatprep.subr.bf16.mxu0 0
  %2383 = vmatpush1.bf16.xpose.msra.mxu0 0
  %2384 = vmatprep.subr.bf16.mxu0 0
  %2385 = vmatpush1.bf16.xpose.msra.mxu0 0
  %2386 = vmatprep.subr.bf16.mxu0 0
  %2387 = vmatpush1.bf16.xpose.msra.mxu0 0
  %2388 = vmatprep.mubr.bf16.mxu0 0
  %2389 = vmatmul.mubr.bf16.gmra.mrb[0].mxu0 %v2351
  %v2390 = vpop.f32.mrb[0].mxu0
  %v2391 = vadd.f32 0.0, %v2390
  %v2392 = vpop.f32.mrb[0].mxu0
  %v2393 = vpop.f32.mrb[0].mxu0
  %v2394 = vpop.f32.mrb[0].mxu0
  %2395 = vdwg.mxu0
  %v2397 = vsel %vm1012, %v2155, 0
  %v2400 = vsel %vm1012, %v2163, 0
  %2402 = vmatprep.subr.bf16.mxu0 0
  %2403 = vmatpush1.bf16.xpose.msra.mxu0 %v2400
  %2404 = vmatprep.subr.bf16.mxu0 0
  %2405 = vmatpush1.bf16.xpose.msra.mxu0 0
  %2406 = vmatprep.subr.bf16.mxu0 0
  %2407 = vmatpush1.bf16.xpose.msra.mxu0 0
  %2408 = vmatprep.subr.bf16.mxu0 0
  %2409 = vmatpush1.bf16.xpose.msra.mxu0 0
  %2410 = vmatprep.subr.bf16.mxu0 0
  %2411 = vmatpush1.bf16.xpose.msra.mxu0 0
  %2412 = vmatprep.subr.bf16.mxu0 0
  %2413 = vmatpush1.bf16.xpose.msra.mxu0 0
  %2414 = vmatprep.subr.bf16.mxu0 0
  %2415 = vmatpush1.bf16.xpose.msra.mxu0 0
  %2416 = vmatprep.subr.bf16.mxu0 0
  %2417 = vmatpush1.bf16.xpose.msra.mxu0 0
  %2418 = vmatprep.subr.bf16.mxu0 0
  %2419 = vmatpush1.bf16.xpose.msra.mxu0 0
  %2420 = vmatprep.subr.bf16.mxu0 0
  %2421 = vmatpush1.bf16.xpose.msra.mxu0 0
  %2422 = vmatprep.subr.bf16.mxu0 0
  %2423 = vmatpush1.bf16.xpose.msra.mxu0 0
  %2424 = vmatprep.subr.bf16.mxu0 0
  %2425 = vmatpush1.bf16.xpose.msra.mxu0 0
  %2426 = vmatprep.subr.bf16.mxu0 0
  %2427 = vmatpush1.bf16.xpose.msra.mxu0 0
  %2428 = vmatprep.subr.bf16.mxu0 0
  %2429 = vmatpush1.bf16.xpose.msra.mxu0 0
  %2430 = vmatprep.subr.bf16.mxu0 0
  %2431 = vmatpush1.bf16.xpose.msra.mxu0 0
  %2432 = vmatprep.subr.bf16.mxu0 0
  %2433 = vmatpush1.bf16.xpose.msra.mxu0 0
  %2434 = vmatprep.mubr.bf16.mxu0 0
  %2435 = vmatmul.mubr.bf16.gmra.mrb[0].mxu0 %v2397
  %v2436 = vpop.f32.mrb[0].mxu0
  %v2437 = vadd.f32 0.0, %v2436
  %v2438 = vpop.f32.mrb[0].mxu0
  %v2439 = vpop.f32.mrb[0].mxu0
  %v2440 = vpop.f32.mrb[0].mxu0
  %2441 = vdwg.mxu0
  %v2443 = vsel %vm1012, %v2156, 0
  %v2446 = vsel %vm1012, %v2164, 0
  %2448 = vmatprep.subr.bf16.mxu0 0
  %2449 = vmatpush1.bf16.xpose.msra.mxu0 %v2446
  %2450 = vmatprep.subr.bf16.mxu0 0
  %2451 = vmatpush1.bf16.xpose.msra.mxu0 0
  %2452 = vmatprep.subr.bf16.mxu0 0
  %2453 = vmatpush1.bf16.xpose.msra.mxu0 0
  %2454 = vmatprep.subr.bf16.mxu0 0
  %2455 = vmatpush1.bf16.xpose.msra.mxu0 0
  %2456 = vmatprep.subr.bf16.mxu0 0
  %2457 = vmatpush1.bf16.xpose.msra.mxu0 0
  %2458 = vmatprep.subr.bf16.mxu0 0
  %2459 = vmatpush1.bf16.xpose.msra.mxu0 0
  %2460 = vmatprep.subr.bf16.mxu0 0
  %2461 = vmatpush1.bf16.xpose.msra.mxu0 0
  %2462 = vmatprep.subr.bf16.mxu0 0
  %2463 = vmatpush1.bf16.xpose.msra.mxu0 0
  %2464 = vmatprep.subr.bf16.mxu0 0
  %2465 = vmatpush1.bf16.xpose.msra.mxu0 0
  %2466 = vmatprep.subr.bf16.mxu0 0
  %2467 = vmatpush1.bf16.xpose.msra.mxu0 0
  %2468 = vmatprep.subr.bf16.mxu0 0
  %2469 = vmatpush1.bf16.xpose.msra.mxu0 0
  %2470 = vmatprep.subr.bf16.mxu0 0
  %2471 = vmatpush1.bf16.xpose.msra.mxu0 0
  %2472 = vmatprep.subr.bf16.mxu0 0
  %2473 = vmatpush1.bf16.xpose.msra.mxu0 0
  %2474 = vmatprep.subr.bf16.mxu0 0
  %2475 = vmatpush1.bf16.xpose.msra.mxu0 0
  %2476 = vmatprep.subr.bf16.mxu0 0
  %2477 = vmatpush1.bf16.xpose.msra.mxu0 0
  %2478 = vmatprep.subr.bf16.mxu0 0
  %2479 = vmatpush1.bf16.xpose.msra.mxu0 0
  %2480 = vmatprep.mubr.bf16.mxu0 0
  %2481 = vmatmul.mubr.bf16.gmra.mrb[0].mxu0 %v2443
  %v2482 = vpop.f32.mrb[0].mxu0
  %v2483 = vadd.f32 0.0, %v2482
  %v2484 = vpop.f32.mrb[0].mxu0
  %v2485 = vpop.f32.mrb[0].mxu0
  %v2486 = vpop.f32.mrb[0].mxu0
  %2487 = vdwg.mxu0
  %v2489 = vsel %vm1012, %v2157, 0
  %v2492 = vsel %vm1012, %v2165, 0
  %2494 = vmatprep.subr.bf16.mxu0 0
  %2495 = vmatpush1.bf16.xpose.msra.mxu0 %v2492
  %2496 = vmatprep.subr.bf16.mxu0 0
  %2497 = vmatpush1.bf16.xpose.msra.mxu0 0
  %2498 = vmatprep.subr.bf16.mxu0 0
  %2499 = vmatpush1.bf16.xpose.msra.mxu0 0
  %2500 = vmatprep.subr.bf16.mxu0 0
  %2501 = vmatpush1.bf16.xpose.msra.mxu0 0
  %2502 = vmatprep.subr.bf16.mxu0 0
  %2503 = vmatpush1.bf16.xpose.msra.mxu0 0
  %2504 = vmatprep.subr.bf16.mxu0 0
  %2505 = vmatpush1.bf16.xpose.msra.mxu0 0
  %2506 = vmatprep.subr.bf16.mxu0 0
  %2507 = vmatpush1.bf16.xpose.msra.mxu0 0
  %2508 = vmatprep.subr.bf16.mxu0 0
  %2509 = vmatpush1.bf16.xpose.msra.mxu0 0
  %2510 = vmatprep.subr.bf16.mxu0 0
  %2511 = vmatpush1.bf16.xpose.msra.mxu0 0
  %2512 = vmatprep.subr.bf16.mxu0 0
  %2513 = vmatpush1.bf16.xpose.msra.mxu0 0
  %2514 = vmatprep.subr.bf16.mxu0 0
  %2515 = vmatpush1.bf16.xpose.msra.mxu0 0
  %2516 = vmatprep.subr.bf16.mxu0 0
  %2517 = vmatpush1.bf16.xpose.msra.mxu0 0
  %2518 = vmatprep.subr.bf16.mxu0 0
  %2519 = vmatpush1.bf16.xpose.msra.mxu0 0
  %2520 = vmatprep.subr.bf16.mxu0 0
  %2521 = vmatpush1.bf16.xpose.msra.mxu0 0
  %2522 = vmatprep.subr.bf16.mxu0 0
  %2523 = vmatpush1.bf16.xpose.msra.mxu0 0
  %2524 = vmatprep.subr.bf16.mxu0 0
  %2525 = vmatpush1.bf16.xpose.msra.mxu0 0
  %2526 = vmatprep.mubr.bf16.mxu0 0
  %2527 = vmatmul.mubr.bf16.gmra.mrb[0].mxu0 %v2489
  %v2528 = vpop.f32.mrb[0].mxu0
  %v2529 = vadd.f32 0.0, %v2528
  %v2530 = vpop.f32.mrb[0].mxu0
  %v2531 = vpop.f32.mrb[0].mxu0
  %v2532 = vpop.f32.mrb[0].mxu0
  %2533 = vdwg.mxu0
  %v2534 = vmul.f32 %v2207, 0.25
  %v2535 = vmul.f32 %v2253, 0.25
  %v2536 = vmul.f32 %v2299, 0.25
  %v2537 = vmul.f32 %v2345, 0.25
  %v2538 = vmul.f32 %v2391, 0.25
  %v2539 = vmul.f32 %v2437, 0.25
  %v2540 = vmul.f32 %v2483, 0.25
  %v2541 = vmul.f32 %v2529, 0.25
  %v2542 = vsel %vm1390, %v2534, -1e+30
  %v2543 = vsel %vm1390, %v2535, -1e+30
  %v2544 = vsel %vm1390, %v2536, -1e+30
  %v2545 = vsel %vm1390, %v2537, -1e+30
  %v2546 = vsel %vm1390, %v2538, -1e+30
  %v2547 = vsel %vm1390, %v2539, -1e+30
  %v2548 = vsel %vm1390, %v2540, -1e+30
  %v2549 = vsel %vm1390, %v2541, -1e+30
  %v2550 = vsel %vm1399, %v2542, -inf
  %2551 = vmax.xlane.f32.xlu0 %v2550
  %v2552 = vpop.xlane.xlu0 %2551
  %v2553 = vsel %vm1399, %v2543, -inf
  %2554 = vmax.xlane.f32.xlu0 %v2553
  %v2555 = vpop.xlane.xlu0 %2554
  %v2556 = vsel %vm1399, %v2544, -inf
  %2557 = vmax.xlane.f32.xlu0 %v2556
  %v2558 = vpop.xlane.xlu0 %2557
  %v2559 = vsel %vm1399, %v2545, -inf
  %2560 = vmax.xlane.f32.xlu0 %v2559
  %v2561 = vpop.xlane.xlu0 %2560
  %v2562 = vsel %vm1399, %v2546, -inf
  %2563 = vmax.xlane.f32.xlu0 %v2562
  %v2564 = vpop.xlane.xlu0 %2563
  %v2565 = vsel %vm1399, %v2547, -inf
  %2566 = vmax.xlane.f32.xlu0 %v2565
  %v2567 = vpop.xlane.xlu0 %2566
  %v2568 = vsel %vm1399, %v2548, -inf
  %2569 = vmax.xlane.f32.xlu0 %v2568
  %v2570 = vpop.xlane.xlu0 %2569
  %v2571 = vsel %vm1399, %v2549, -inf
  %2572 = vmax.xlane.f32.xlu0 %v2571
  %v2573 = vpop.xlane.xlu0 %2572
  %v2574 = vsub.f32 %v2542, %v2552
  %v2575 = vsub.f32 %v2543, %v2555
  %v2576 = vsub.f32 %v2544, %v2558
  %v2577 = vsub.f32 %v2545, %v2561
  %v2578 = vsub.f32 %v2546, %v2564
  %v2579 = vsub.f32 %v2547, %v2567
  %v2580 = vsub.f32 %v2548, %v2570
  %v2581 = vsub.f32 %v2549, %v2573
  %v2582 = vmul.f32 %v2574, 1.442695
  %v2583 = vpow.pop %v2582
  %v2584 = vmul.f32 %v2575, 1.442695
  %v2585 = vpow.pop %v2584
  %v2586 = vmul.f32 %v2576, 1.442695
  %v2587 = vpow.pop %v2586
  %v2588 = vmul.f32 %v2577, 1.442695
  %v2589 = vpow.pop %v2588
  %v2590 = vmul.f32 %v2578, 1.442695
  %v2591 = vpow.pop %v2590
  %v2592 = vmul.f32 %v2579, 1.442695
  %v2593 = vpow.pop %v2592
  %v2594 = vmul.f32 %v2580, 1.442695
  %v2595 = vpow.pop %v2594
  %v2596 = vmul.f32 %v2581, 1.442695
  %v2597 = vpow.pop %v2596
  %v2598 = vsel %vm1399, %v2583, 0.0
  %2599 = vadd.xlane.f32.xlu0 %v2598
  %v2600 = vpop.xlane.xlu0 %2599
  %v2601 = vsel %vm1399, %v2585, 0.0
  %2602 = vadd.xlane.f32.xlu0 %v2601
  %v2603 = vpop.xlane.xlu0 %2602
  %v2604 = vsel %vm1399, %v2587, 0.0
  %2605 = vadd.xlane.f32.xlu0 %v2604
  %v2606 = vpop.xlane.xlu0 %2605
  %v2607 = vsel %vm1399, %v2589, 0.0
  %2608 = vadd.xlane.f32.xlu0 %v2607
  %v2609 = vpop.xlane.xlu0 %2608
  %v2610 = vsel %vm1399, %v2591, 0.0
  %2611 = vadd.xlane.f32.xlu0 %v2610
  %v2612 = vpop.xlane.xlu0 %2611
  %v2613 = vsel %vm1399, %v2593, 0.0
  %2614 = vadd.xlane.f32.xlu0 %v2613
  %v2615 = vpop.xlane.xlu0 %2614
  %v2616 = vsel %vm1399, %v2595, 0.0
  %2617 = vadd.xlane.f32.xlu0 %v2616
  %v2618 = vpop.xlane.xlu0 %2617
  %v2619 = vsel %vm1399, %v2597, 0.0
  %2620 = vadd.xlane.f32.xlu0 %v2619
  %v2621 = vpop.xlane.xlu0 %2620
  %v2622 = vrcp.pop %v2600
  %v2623 = vmul.f32 %v2583, %v2622
  %v2624 = vrcp.pop %v2603
  %v2625 = vmul.f32 %v2585, %v2624
  %v2626 = vrcp.pop %v2606
  %v2627 = vmul.f32 %v2587, %v2626
  %v2628 = vrcp.pop %v2609
  %v2629 = vmul.f32 %v2589, %v2628
  %v2630 = vrcp.pop %v2612
  %v2631 = vmul.f32 %v2591, %v2630
  %v2632 = vrcp.pop %v2615
  %v2633 = vmul.f32 %v2593, %v2632
  %v2634 = vrcp.pop %v2618
  %v2635 = vmul.f32 %v2595, %v2634
  %v2636 = vrcp.pop %v2621
  %v2637 = vmul.f32 %v2597, %v2636
  %v2638 = vpack.c.bf16 %v2623, %v2623
  %v2639 = vpack.c.bf16 %v2625, %v2625
  %v2640 = vpack.c.bf16 %v2627, %v2627
  %v2641 = vpack.c.bf16 %v2629, %v2629
  %v2642 = vpack.c.bf16 %v2631, %v2631
  %v2643 = vpack.c.bf16 %v2633, %v2633
  %v2644 = vpack.c.bf16 %v2635, %v2635
  %v2645 = vpack.c.bf16 %v2637, %v2637
  %v2646 = vpack.c.bf16 %v2124, %v2124
  %v2647 = vpack.c.bf16 %v2142, %v2142
  %v2648 = vpack.c.bf16 %v2127, %v2127
  %v2649 = vpack.c.bf16 %v2143, %v2143
  %v2650 = vpack.c.bf16 %v2132, %v2132
  %v2651 = vpack.c.bf16 %v2144, %v2144
  %v2652 = vpack.c.bf16 %v2135, %v2135
  %v2653 = vpack.c.bf16 %v2145, %v2145
  %v2655 = vsel %vm362, %v2638, 0
  %v2658 = vsel %vm369, %v2646, 0
  %2660 = vmatprep.subr.bf16.mxu0 0
  %2661 = vmatpush1.bf16.msra.mxu0 %v2658
  %2662 = vmatprep.subr.bf16.mxu0 0
  %2663 = vmatpush1.bf16.msra.mxu0 0
  %2664 = vmatprep.subr.bf16.mxu0 0
  %2665 = vmatpush1.bf16.msra.mxu0 0
  %2666 = vmatprep.subr.bf16.mxu0 0
  %2667 = vmatpush1.bf16.msra.mxu0 0
  %2668 = vmatprep.subr.bf16.mxu0 0
  %2669 = vmatpush1.bf16.msra.mxu0 0
  %2670 = vmatprep.subr.bf16.mxu0 0
  %2671 = vmatpush1.bf16.msra.mxu0 0
  %2672 = vmatprep.subr.bf16.mxu0 0
  %2673 = vmatpush1.bf16.msra.mxu0 0
  %2674 = vmatprep.subr.bf16.mxu0 0
  %2675 = vmatpush1.bf16.msra.mxu0 0
  %2676 = vmatprep.subr.bf16.mxu0 0
  %2677 = vmatpush1.bf16.msra.mxu0 0
  %2678 = vmatprep.subr.bf16.mxu0 0
  %2679 = vmatpush1.bf16.msra.mxu0 0
  %2680 = vmatprep.subr.bf16.mxu0 0
  %2681 = vmatpush1.bf16.msra.mxu0 0
  %2682 = vmatprep.subr.bf16.mxu0 0
  %2683 = vmatpush1.bf16.msra.mxu0 0
  %2684 = vmatprep.subr.bf16.mxu0 0
  %2685 = vmatpush1.bf16.msra.mxu0 0
  %2686 = vmatprep.subr.bf16.mxu0 0
  %2687 = vmatpush1.bf16.msra.mxu0 0
  %2688 = vmatprep.subr.bf16.mxu0 0
  %2689 = vmatpush1.bf16.msra.mxu0 0
  %2690 = vmatprep.subr.bf16.mxu0 0
  %2691 = vmatpush1.bf16.msra.mxu0 0
  %2692 = vmatprep.mubr.bf16.mxu0 0
  %2693 = vmatmul.mubr.bf16.gmra.mrb[0].mxu0 %v2655
  %v2694 = vpop.f32.mrb[0].mxu0
  %v2695 = vadd.f32 0.0, %v2694
  %v2696 = vpop.f32.mrb[0].mxu0
  %v2697 = vpop.f32.mrb[0].mxu0
  %v2698 = vpop.f32.mrb[0].mxu0
  %2699 = vdwg.mxu0
  %v2701 = vsel %vm362, %v2639, 0
  %v2704 = vsel %vm369, %v2647, 0
  %2706 = vmatprep.subr.bf16.mxu0 0
  %2707 = vmatpush1.bf16.msra.mxu0 %v2704
  %2708 = vmatprep.subr.bf16.mxu0 0
  %2709 = vmatpush1.bf16.msra.mxu0 0
  %2710 = vmatprep.subr.bf16.mxu0 0
  %2711 = vmatpush1.bf16.msra.mxu0 0
  %2712 = vmatprep.subr.bf16.mxu0 0
  %2713 = vmatpush1.bf16.msra.mxu0 0
  %2714 = vmatprep.subr.bf16.mxu0 0
  %2715 = vmatpush1.bf16.msra.mxu0 0
  %2716 = vmatprep.subr.bf16.mxu0 0
  %2717 = vmatpush1.bf16.msra.mxu0 0
  %2718 = vmatprep.subr.bf16.mxu0 0
  %2719 = vmatpush1.bf16.msra.mxu0 0
  %2720 = vmatprep.subr.bf16.mxu0 0
  %2721 = vmatpush1.bf16.msra.mxu0 0
  %2722 = vmatprep.subr.bf16.mxu0 0
  %2723 = vmatpush1.bf16.msra.mxu0 0
  %2724 = vmatprep.subr.bf16.mxu0 0
  %2725 = vmatpush1.bf16.msra.mxu0 0
  %2726 = vmatprep.subr.bf16.mxu0 0
  %2727 = vmatpush1.bf16.msra.mxu0 0
  %2728 = vmatprep.subr.bf16.mxu0 0
  %2729 = vmatpush1.bf16.msra.mxu0 0
  %2730 = vmatprep.subr.bf16.mxu0 0
  %2731 = vmatpush1.bf16.msra.mxu0 0
  %2732 = vmatprep.subr.bf16.mxu0 0
  %2733 = vmatpush1.bf16.msra.mxu0 0
  %2734 = vmatprep.subr.bf16.mxu0 0
  %2735 = vmatpush1.bf16.msra.mxu0 0
  %2736 = vmatprep.subr.bf16.mxu0 0
  %2737 = vmatpush1.bf16.msra.mxu0 0
  %2738 = vmatprep.mubr.bf16.mxu0 0
  %2739 = vmatmul.mubr.bf16.gmra.mrb[0].mxu0 %v2701
  %v2740 = vpop.f32.mrb[0].mxu0
  %v2741 = vadd.f32 0.0, %v2740
  %v2742 = vpop.f32.mrb[0].mxu0
  %v2743 = vpop.f32.mrb[0].mxu0
  %v2744 = vpop.f32.mrb[0].mxu0
  %2745 = vdwg.mxu0
  %v2747 = vsel %vm362, %v2640, 0
  %v2750 = vsel %vm369, %v2648, 0
  %2752 = vmatprep.subr.bf16.mxu0 0
  %2753 = vmatpush1.bf16.msra.mxu0 %v2750
  %2754 = vmatprep.subr.bf16.mxu0 0
  %2755 = vmatpush1.bf16.msra.mxu0 0
  %2756 = vmatprep.subr.bf16.mxu0 0
  %2757 = vmatpush1.bf16.msra.mxu0 0
  %2758 = vmatprep.subr.bf16.mxu0 0
  %2759 = vmatpush1.bf16.msra.mxu0 0
  %2760 = vmatprep.subr.bf16.mxu0 0
  %2761 = vmatpush1.bf16.msra.mxu0 0
  %2762 = vmatprep.subr.bf16.mxu0 0
  %2763 = vmatpush1.bf16.msra.mxu0 0
  %2764 = vmatprep.subr.bf16.mxu0 0
  %2765 = vmatpush1.bf16.msra.mxu0 0
  %2766 = vmatprep.subr.bf16.mxu0 0
  %2767 = vmatpush1.bf16.msra.mxu0 0
  %2768 = vmatprep.subr.bf16.mxu0 0
  %2769 = vmatpush1.bf16.msra.mxu0 0
  %2770 = vmatprep.subr.bf16.mxu0 0
  %2771 = vmatpush1.bf16.msra.mxu0 0
  %2772 = vmatprep.subr.bf16.mxu0 0
  %2773 = vmatpush1.bf16.msra.mxu0 0
  %2774 = vmatprep.subr.bf16.mxu0 0
  %2775 = vmatpush1.bf16.msra.mxu0 0
  %2776 = vmatprep.subr.bf16.mxu0 0
  %2777 = vmatpush1.bf16.msra.mxu0 0
  %2778 = vmatprep.subr.bf16.mxu0 0
  %2779 = vmatpush1.bf16.msra.mxu0 0
  %2780 = vmatprep.subr.bf16.mxu0 0
  %2781 = vmatpush1.bf16.msra.mxu0 0
  %2782 = vmatprep.subr.bf16.mxu0 0
  %2783 = vmatpush1.bf16.msra.mxu0 0
  %2784 = vmatprep.mubr.bf16.mxu0 0
  %2785 = vmatmul.mubr.bf16.gmra.mrb[0].mxu0 %v2747
  %v2786 = vpop.f32.mrb[0].mxu0
  %v2787 = vadd.f32 0.0, %v2786
  %v2788 = vpop.f32.mrb[0].mxu0
  %v2789 = vpop.f32.mrb[0].mxu0
  %v2790 = vpop.f32.mrb[0].mxu0
  %2791 = vdwg.mxu0
  %v2793 = vsel %vm362, %v2641, 0
  %v2796 = vsel %vm369, %v2649, 0
  %2798 = vmatprep.subr.bf16.mxu0 0
  %2799 = vmatpush1.bf16.msra.mxu0 %v2796
  %2800 = vmatprep.subr.bf16.mxu0 0
  %2801 = vmatpush1.bf16.msra.mxu0 0
  %2802 = vmatprep.subr.bf16.mxu0 0
  %2803 = vmatpush1.bf16.msra.mxu0 0
  %2804 = vmatprep.subr.bf16.mxu0 0
  %2805 = vmatpush1.bf16.msra.mxu0 0
  %2806 = vmatprep.subr.bf16.mxu0 0
  %2807 = vmatpush1.bf16.msra.mxu0 0
  %2808 = vmatprep.subr.bf16.mxu0 0
  %2809 = vmatpush1.bf16.msra.mxu0 0
  %2810 = vmatprep.subr.bf16.mxu0 0
  %2811 = vmatpush1.bf16.msra.mxu0 0
  %2812 = vmatprep.subr.bf16.mxu0 0
  %2813 = vmatpush1.bf16.msra.mxu0 0
  %2814 = vmatprep.subr.bf16.mxu0 0
  %2815 = vmatpush1.bf16.msra.mxu0 0
  %2816 = vmatprep.subr.bf16.mxu0 0
  %2817 = vmatpush1.bf16.msra.mxu0 0
  %2818 = vmatprep.subr.bf16.mxu0 0
  %2819 = vmatpush1.bf16.msra.mxu0 0
  %2820 = vmatprep.subr.bf16.mxu0 0
  %2821 = vmatpush1.bf16.msra.mxu0 0
  %2822 = vmatprep.subr.bf16.mxu0 0
  %2823 = vmatpush1.bf16.msra.mxu0 0
  %2824 = vmatprep.subr.bf16.mxu0 0
  %2825 = vmatpush1.bf16.msra.mxu0 0
  %2826 = vmatprep.subr.bf16.mxu0 0
  %2827 = vmatpush1.bf16.msra.mxu0 0
  %2828 = vmatprep.subr.bf16.mxu0 0
  %2829 = vmatpush1.bf16.msra.mxu0 0
  %2830 = vmatprep.mubr.bf16.mxu0 0
  %2831 = vmatmul.mubr.bf16.gmra.mrb[0].mxu0 %v2793
  %v2832 = vpop.f32.mrb[0].mxu0
  %v2833 = vadd.f32 0.0, %v2832
  %v2834 = vpop.f32.mrb[0].mxu0
  %v2835 = vpop.f32.mrb[0].mxu0
  %v2836 = vpop.f32.mrb[0].mxu0
  %2837 = vdwg.mxu0
  %v2839 = vsel %vm362, %v2642, 0
  %v2842 = vsel %vm369, %v2650, 0
  %2844 = vmatprep.subr.bf16.mxu0 0
  %2845 = vmatpush1.bf16.msra.mxu0 %v2842
  %2846 = vmatprep.subr.bf16.mxu0 0
  %2847 = vmatpush1.bf16.msra.mxu0 0
  %2848 = vmatprep.subr.bf16.mxu0 0
  %2849 = vmatpush1.bf16.msra.mxu0 0
  %2850 = vmatprep.subr.bf16.mxu0 0
  %2851 = vmatpush1.bf16.msra.mxu0 0
  %2852 = vmatprep.subr.bf16.mxu0 0
  %2853 = vmatpush1.bf16.msra.mxu0 0
  %2854 = vmatprep.subr.bf16.mxu0 0
  %2855 = vmatpush1.bf16.msra.mxu0 0
  %2856 = vmatprep.subr.bf16.mxu0 0
  %2857 = vmatpush1.bf16.msra.mxu0 0
  %2858 = vmatprep.subr.bf16.mxu0 0
  %2859 = vmatpush1.bf16.msra.mxu0 0
  %2860 = vmatprep.subr.bf16.mxu0 0
  %2861 = vmatpush1.bf16.msra.mxu0 0
  %2862 = vmatprep.subr.bf16.mxu0 0
  %2863 = vmatpush1.bf16.msra.mxu0 0
  %2864 = vmatprep.subr.bf16.mxu0 0
  %2865 = vmatpush1.bf16.msra.mxu0 0
  %2866 = vmatprep.subr.bf16.mxu0 0
  %2867 = vmatpush1.bf16.msra.mxu0 0
  %2868 = vmatprep.subr.bf16.mxu0 0
  %2869 = vmatpush1.bf16.msra.mxu0 0
  %2870 = vmatprep.subr.bf16.mxu0 0
  %2871 = vmatpush1.bf16.msra.mxu0 0
  %2872 = vmatprep.subr.bf16.mxu0 0
  %2873 = vmatpush1.bf16.msra.mxu0 0
  %2874 = vmatprep.subr.bf16.mxu0 0
  %2875 = vmatpush1.bf16.msra.mxu0 0
  %2876 = vmatprep.mubr.bf16.mxu0 0
  %2877 = vmatmul.mubr.bf16.gmra.mrb[0].mxu0 %v2839
  %v2878 = vpop.f32.mrb[0].mxu0
  %v2879 = vadd.f32 0.0, %v2878
  %v2880 = vpop.f32.mrb[0].mxu0
  %v2881 = vpop.f32.mrb[0].mxu0
  %v2882 = vpop.f32.mrb[0].mxu0
  %2883 = vdwg.mxu0
  %v2885 = vsel %vm362, %v2643, 0
  %v2888 = vsel %vm369, %v2651, 0
  %2890 = vmatprep.subr.bf16.mxu0 0
  %2891 = vmatpush1.bf16.msra.mxu0 %v2888
  %2892 = vmatprep.subr.bf16.mxu0 0
  %2893 = vmatpush1.bf16.msra.mxu0 0
  %2894 = vmatprep.subr.bf16.mxu0 0
  %2895 = vmatpush1.bf16.msra.mxu0 0
  %2896 = vmatprep.subr.bf16.mxu0 0
  %2897 = vmatpush1.bf16.msra.mxu0 0
  %2898 = vmatprep.subr.bf16.mxu0 0
  %2899 = vmatpush1.bf16.msra.mxu0 0
  %2900 = vmatprep.subr.bf16.mxu0 0
  %2901 = vmatpush1.bf16.msra.mxu0 0
  %2902 = vmatprep.subr.bf16.mxu0 0
  %2903 = vmatpush1.bf16.msra.mxu0 0
  %2904 = vmatprep.subr.bf16.mxu0 0
  %2905 = vmatpush1.bf16.msra.mxu0 0
  %2906 = vmatprep.subr.bf16.mxu0 0
  %2907 = vmatpush1.bf16.msra.mxu0 0
  %2908 = vmatprep.subr.bf16.mxu0 0
  %2909 = vmatpush1.bf16.msra.mxu0 0
  %2910 = vmatprep.subr.bf16.mxu0 0
  %2911 = vmatpush1.bf16.msra.mxu0 0
  %2912 = vmatprep.subr.bf16.mxu0 0
  %2913 = vmatpush1.bf16.msra.mxu0 0
  %2914 = vmatprep.subr.bf16.mxu0 0
  %2915 = vmatpush1.bf16.msra.mxu0 0
  %2916 = vmatprep.subr.bf16.mxu0 0
  %2917 = vmatpush1.bf16.msra.mxu0 0
  %2918 = vmatprep.subr.bf16.mxu0 0
  %2919 = vmatpush1.bf16.msra.mxu0 0
  %2920 = vmatprep.subr.bf16.mxu0 0
  %2921 = vmatpush1.bf16.msra.mxu0 0
  %2922 = vmatprep.mubr.bf16.mxu0 0
  %2923 = vmatmul.mubr.bf16.gmra.mrb[0].mxu0 %v2885
  %v2924 = vpop.f32.mrb[0].mxu0
  %v2925 = vadd.f32 0.0, %v2924
  %v2926 = vpop.f32.mrb[0].mxu0
  %v2927 = vpop.f32.mrb[0].mxu0
  %v2928 = vpop.f32.mrb[0].mxu0
  %2929 = vdwg.mxu0
  %v2931 = vsel %vm362, %v2644, 0
  %v2934 = vsel %vm369, %v2652, 0
  %2936 = vmatprep.subr.bf16.mxu0 0
  %2937 = vmatpush1.bf16.msra.mxu0 %v2934
  %2938 = vmatprep.subr.bf16.mxu0 0
  %2939 = vmatpush1.bf16.msra.mxu0 0
  %2940 = vmatprep.subr.bf16.mxu0 0
  %2941 = vmatpush1.bf16.msra.mxu0 0
  %2942 = vmatprep.subr.bf16.mxu0 0
  %2943 = vmatpush1.bf16.msra.mxu0 0
  %2944 = vmatprep.subr.bf16.mxu0 0
  %2945 = vmatpush1.bf16.msra.mxu0 0
  %2946 = vmatprep.subr.bf16.mxu0 0
  %2947 = vmatpush1.bf16.msra.mxu0 0
  %2948 = vmatprep.subr.bf16.mxu0 0
  %2949 = vmatpush1.bf16.msra.mxu0 0
  %2950 = vmatprep.subr.bf16.mxu0 0
  %2951 = vmatpush1.bf16.msra.mxu0 0
  %2952 = vmatprep.subr.bf16.mxu0 0
  %2953 = vmatpush1.bf16.msra.mxu0 0
  %2954 = vmatprep.subr.bf16.mxu0 0
  %2955 = vmatpush1.bf16.msra.mxu0 0
  %2956 = vmatprep.subr.bf16.mxu0 0
  %2957 = vmatpush1.bf16.msra.mxu0 0
  %2958 = vmatprep.subr.bf16.mxu0 0
  %2959 = vmatpush1.bf16.msra.mxu0 0
  %2960 = vmatprep.subr.bf16.mxu0 0
  %2961 = vmatpush1.bf16.msra.mxu0 0
  %2962 = vmatprep.subr.bf16.mxu0 0
  %2963 = vmatpush1.bf16.msra.mxu0 0
  %2964 = vmatprep.subr.bf16.mxu0 0
  %2965 = vmatpush1.bf16.msra.mxu0 0
  %2966 = vmatprep.subr.bf16.mxu0 0
  %2967 = vmatpush1.bf16.msra.mxu0 0
  %2968 = vmatprep.mubr.bf16.mxu0 0
  %2969 = vmatmul.mubr.bf16.gmra.mrb[0].mxu0 %v2931
  %v2970 = vpop.f32.mrb[0].mxu0
  %v2971 = vadd.f32 0.0, %v2970
  %v2972 = vpop.f32.mrb[0].mxu0
  %v2973 = vpop.f32.mrb[0].mxu0
  %v2974 = vpop.f32.mrb[0].mxu0
  %2975 = vdwg.mxu0
  %v2977 = vsel %vm362, %v2645, 0
  %v2980 = vsel %vm369, %v2653, 0
  %2982 = vmatprep.subr.bf16.mxu0 0
  %2983 = vmatpush1.bf16.msra.mxu0 %v2980
  %2984 = vmatprep.subr.bf16.mxu0 0
  %2985 = vmatpush1.bf16.msra.mxu0 0
  %2986 = vmatprep.subr.bf16.mxu0 0
  %2987 = vmatpush1.bf16.msra.mxu0 0
  %2988 = vmatprep.subr.bf16.mxu0 0
  %2989 = vmatpush1.bf16.msra.mxu0 0
  %2990 = vmatprep.subr.bf16.mxu0 0
  %2991 = vmatpush1.bf16.msra.mxu0 0
  %2992 = vmatprep.subr.bf16.mxu0 0
  %2993 = vmatpush1.bf16.msra.mxu0 0
  %2994 = vmatprep.subr.bf16.mxu0 0
  %2995 = vmatpush1.bf16.msra.mxu0 0
  %2996 = vmatprep.subr.bf16.mxu0 0
  %2997 = vmatpush1.bf16.msra.mxu0 0
  %2998 = vmatprep.subr.bf16.mxu0 0
  %2999 = vmatpush1.bf16.msra.mxu0 0
  %3000 = vmatprep.subr.bf16.mxu0 0
  %3001 = vmatpush1.bf16.msra.mxu0 0
  %3002 = vmatprep.subr.bf16.mxu0 0
  %3003 = vmatpush1.bf16.msra.mxu0 0
  %3004 = vmatprep.subr.bf16.mxu0 0
  %3005 = vmatpush1.bf16.msra.mxu0 0
  %3006 = vmatprep.subr.bf16.mxu0 0
  %3007 = vmatpush1.bf16.msra.mxu0 0
  %3008 = vmatprep.subr.bf16.mxu0 0
  %3009 = vmatpush1.bf16.msra.mxu0 0
  %3010 = vmatprep.subr.bf16.mxu0 0
  %3011 = vmatpush1.bf16.msra.mxu0 0
  %3012 = vmatprep.subr.bf16.mxu0 0
  %3013 = vmatpush1.bf16.msra.mxu0 0
  %3014 = vmatprep.mubr.bf16.mxu0 0
  %3015 = vmatmul.mubr.bf16.gmra.mrb[0].mxu0 %v2977
  %v3016 = vpop.f32.mrb[0].mxu0
  %v3017 = vadd.f32 0.0, %v3016
  %v3018 = vpop.f32.mrb[0].mxu0
  %v3019 = vpop.f32.mrb[0].mxu0
  %v3020 = vpop.f32.mrb[0].mxu0
  %3021 = vdwg.mxu0
  %v3030 = vcombine.low %v2695, %v2741
  %v3031 = vcombine.low %v2787, %v2833
  %v3032 = vcombine.low %v2879, %v2925
  %v3033 = vcombine.low %v2971, %v3017
  %v3038 = vpack.c.bf16 %v3031, %v3030
  %v3039 = vpack.c.bf16 %v3033, %v3032
  %s3040 = scalar_lea.vmem %s9, 8
  %v3041 = vld [vmem:[%s3040] sm:$0xf]
  %v3042 = vld [vmem:[%s3040 + $0x4] sm:$0xf]
  %v3045 = vunpack.c.l.b16 %v3041
  %v3046 = vunpack.c.l.b16 %v3042
  %v3047 = vpack.c.b16 %v3046, %v3045
  %v3050 = vsel %vm1012, %v3038, 0
  %v3053 = vsel %vm1012, %v3039, 0
  %3055 = vmatprep.subr.bf16.mxu0 0
  %3056 = vmatpush1.bf16.msra.mxu0 %v3047
  %3057 = vmatprep.subr.bf16.mxu0 0
  %3058 = vmatpush1.bf16.msra.mxu0 0
  %3059 = vmatprep.subr.bf16.mxu0 0
  %3060 = vmatpush1.bf16.msra.mxu0 0
  %3061 = vmatprep.subr.bf16.mxu0 0
  %3062 = vmatpush1.bf16.msra.mxu0 0
  %3063 = vmatprep.subr.bf16.mxu0 0
  %3064 = vmatpush1.bf16.msra.mxu0 0
  %3065 = vmatprep.subr.bf16.mxu0 0
  %3066 = vmatpush1.bf16.msra.mxu0 0
  %3067 = vmatprep.subr.bf16.mxu0 0
  %3068 = vmatpush1.bf16.msra.mxu0 0
  %3069 = vmatprep.subr.bf16.mxu0 0
  %3070 = vmatpush1.bf16.msra.mxu0 0
  %3071 = vmatprep.subr.bf16.mxu0 0
  %3072 = vmatpush1.bf16.msra.mxu0 0
  %3073 = vmatprep.subr.bf16.mxu0 0
  %3074 = vmatpush1.bf16.msra.mxu0 0
  %3075 = vmatprep.subr.bf16.mxu0 0
  %3076 = vmatpush1.bf16.msra.mxu0 0
  %3077 = vmatprep.subr.bf16.mxu0 0
  %3078 = vmatpush1.bf16.msra.mxu0 0
  %3079 = vmatprep.subr.bf16.mxu0 0
  %3080 = vmatpush1.bf16.msra.mxu0 0
  %3081 = vmatprep.subr.bf16.mxu0 0
  %3082 = vmatpush1.bf16.msra.mxu0 0
  %3083 = vmatprep.subr.bf16.mxu0 0
  %3084 = vmatpush1.bf16.msra.mxu0 0
  %3085 = vmatprep.subr.bf16.mxu0 0
  %3086 = vmatpush1.bf16.msra.mxu0 0
  %3087 = vmatprep.mubr.bf16.mxu0 0
  %3088 = vmatmul.mubr.bf16.gmra.mrb[0].mxu0 %v3050
  %v3089 = vpop.f32.mrb[0].mxu0
  %v3090 = vadd.f32 0.0, %v3089
  %v3091 = vpop.f32.mrb[0].mxu0
  %v3092 = vpop.f32.mrb[0].mxu0
  %v3093 = vadd.f32 0.0, %v3092
  %v3094 = vpop.f32.mrb[0].mxu0
  %3095 = vmatprep.mubr.bf16.mxu0 0
  %3096 = vmatmul.mubr.bf16.gmra.mrb[0].mxu0 %v3053
  %v3097 = vpop.f32.mrb[0].mxu0
  %v3098 = vadd.f32 0.0, %v3097
  %v3099 = vpop.f32.mrb[0].mxu0
  %v3100 = vpop.f32.mrb[0].mxu0
  %v3101 = vadd.f32 0.0, %v3100
  %v3102 = vpop.f32.mrb[0].mxu0
  %3103 = vdwg.mxu0
  %v3106 = vunpack.c.l.b16 %v1890
  %v3107 = vunpack.c.l.b16 %v1891
  %v3108 = vpack.c.b16 %v3107, %v3106
  %v3111 = vsel %vm1012, %v1888, 0
  %v3114 = vsel %vm1012, %v1889, 0
  %3116 = vmatprep.subr.bf16.mxu0 0
  %3117 = vmatpush1.bf16.msra.mxu0 %v3108
  %3118 = vmatprep.subr.bf16.mxu0 0
  %3119 = vmatpush1.bf16.msra.mxu0 0
  %3120 = vmatprep.subr.bf16.mxu0 0
  %3121 = vmatpush1.bf16.msra.mxu0 0
  %3122 = vmatprep.subr.bf16.mxu0 0
  %3123 = vmatpush1.bf16.msra.mxu0 0
  %3124 = vmatprep.subr.bf16.mxu0 0
  %3125 = vmatpush1.bf16.msra.mxu0 0
  %3126 = vmatprep.subr.bf16.mxu0 0
  %3127 = vmatpush1.bf16.msra.mxu0 0
  %3128 = vmatprep.subr.bf16.mxu0 0
  %3129 = vmatpush1.bf16.msra.mxu0 0
  %3130 = vmatprep.subr.bf16.mxu0 0
  %3131 = vmatpush1.bf16.msra.mxu0 0
  %3132 = vmatprep.subr.bf16.mxu0 0
  %3133 = vmatpush1.bf16.msra.mxu0 0
  %3134 = vmatprep.subr.bf16.mxu0 0
  %3135 = vmatpush1.bf16.msra.mxu0 0
  %3136 = vmatprep.subr.bf16.mxu0 0
  %3137 = vmatpush1.bf16.msra.mxu0 0
  %3138 = vmatprep.subr.bf16.mxu0 0
  %3139 = vmatpush1.bf16.msra.mxu0 0
  %3140 = vmatprep.subr.bf16.mxu0 0
  %3141 = vmatpush1.bf16.msra.mxu0 0
  %3142 = vmatprep.subr.bf16.mxu0 0
  %3143 = vmatpush1.bf16.msra.mxu0 0
  %3144 = vmatprep.subr.bf16.mxu0 0
  %3145 = vmatpush1.bf16.msra.mxu0 0
  %3146 = vmatprep.subr.bf16.mxu0 0
  %3147 = vmatpush1.bf16.msra.mxu0 0
  %3148 = vmatprep.mubr.bf16.mxu0 0
  %3149 = vmatmul.mubr.bf16.gmra.mrb[0].mxu0 %v3111
  %v3150 = vpop.f32.mrb[0].mxu0
  %v3151 = vadd.f32 %v3090, %v3150
  %v3152 = vpop.f32.mrb[0].mxu0
  %v3153 = vpop.f32.mrb[0].mxu0
  %v3154 = vadd.f32 %v3093, %v3153
  %v3155 = vpop.f32.mrb[0].mxu0
  %3156 = vmatprep.mubr.bf16.mxu0 0
  %3157 = vmatmul.mubr.bf16.gmra.mrb[0].mxu0 %v3114
  %v3158 = vpop.f32.mrb[0].mxu0
  %v3159 = vadd.f32 %v3098, %v3158
  %v3160 = vpop.f32.mrb[0].mxu0
  %v3161 = vpop.f32.mrb[0].mxu0
  %v3162 = vadd.f32 %v3101, %v3161
  %v3163 = vpop.f32.mrb[0].mxu0
  %3164 = vdwg.mxu0
  %v3169 = vcombine.high %v3151, %v3151
  %v3170 = vcombine.high %v3154, %v3154
  %v3171 = vcombine.high %v3159, %v3159
  %v3172 = vcombine.high %v3162, %v3162
  %v3177 = vadd.f32 %v435, %v3151
  %v3178 = vadd.f32 %v436, %v3169
  %v3179 = vadd.f32 %v437, %v3154
  %v3180 = vadd.f32 %v438, %v3170
  %v3181 = vadd.f32 %v439, %v3159
  %v3182 = vadd.f32 %v440, %v3171
  %v3183 = vadd.f32 %v441, %v3162
  %v3184 = vadd.f32 %v442, %v3172
  %v3185 = vld [vmem:[%s10] sm:$0x1]
  %v3187 = vlaneseq
  %v3188 = vshrl.u32 %v3187, 7
  %v3189 = vsub.s32 0, %v3188
  %v3190 = vrot.slane %v3185, %v3189
  %v3192 = vcombine.high %v3190, %v3190
  %v3194 = vadd.f32 %v3177, %v3190
  %v3195 = vadd.f32 %v3178, %v3192
  %v3196 = vadd.f32 %v3179, %v3190
  %v3197 = vadd.f32 %v3180, %v3192
  %v3198 = vadd.f32 %v3181, %v3190
  %v3199 = vadd.f32 %v3182, %v3192
  %v3200 = vadd.f32 %v3183, %v3190
  %v3201 = vadd.f32 %v3184, %v3192
  %v3202 = vld [vmem:[%s11] sm:$0x1]
  %v3203 = vld [vmem:[%s12] sm:$0x1]
  %v3212 = vcombine.low %v3194, %v3195
  %v3213 = vcombine.low %v3196, %v3197
  %v3214 = vcombine.low %v3198, %v3199
  %v3215 = vcombine.low %v3200, %v3201
  %v3220 = vsel %vm466, %v3212, 0.0
  %3221 = vadd.xlane.f32.xlu0 %v3220
  %v3222 = vpop.xlane.xlu0 %3221
  %v3223 = vsel %vm466, %v3213, 0.0
  %3224 = vadd.xlane.f32.xlu0 %v3223
  %v3225 = vpop.xlane.xlu0 %3224
  %v3226 = vsel %vm466, %v3214, 0.0
  %3227 = vadd.xlane.f32.xlu0 %v3226
  %v3228 = vpop.xlane.xlu0 %3227
  %v3229 = vsel %vm466, %v3215, 0.0
  %3230 = vadd.xlane.f32.xlu0 %v3229
  %v3231 = vpop.xlane.xlu0 %3230
  %v3232 = vmul.f32 %v3222, %v479
  %v3233 = vmul.f32 %v3225, %v479
  %v3234 = vmul.f32 %v3228, %v479
  %v3235 = vmul.f32 %v3231, %v479
  %v3241 = vunpack.c.l.s4 839922192
  %v3242 = vunpack.c.0.s8 %v3241
  %v3243 = vlaneseq
  %v3244 = vshrl.u32 %v3243, 7
  %v3245 = vsub.s32 %v3242, %v3244
  %v3246 = vrot.slane %v3232, %v3245
  %v3248 = vunpack.c.l.s4 1985246804
  %v3249 = vunpack.c.0.s8 %v3248
  %v3250 = vlaneseq
  %v3251 = vshrl.u32 %v3250, 7
  %v3252 = vsub.s32 %v3249, %v3251
  %v3253 = vrot.slane %v3232, %v3252
  %v3255 = vunpack.c.l.s4 839922192
  %v3256 = vunpack.c.0.s8 %v3255
  %v3257 = vlaneseq
  %v3258 = vshrl.u32 %v3257, 7
  %v3259 = vsub.s32 %v3256, %v3258
  %v3260 = vrot.slane %v3233, %v3259
  %v3262 = vunpack.c.l.s4 1985246804
  %v3263 = vunpack.c.0.s8 %v3262
  %v3264 = vlaneseq
  %v3265 = vshrl.u32 %v3264, 7
  %v3266 = vsub.s32 %v3263, %v3265
  %v3267 = vrot.slane %v3233, %v3266
  %v3269 = vunpack.c.l.s4 839922192
  %v3270 = vunpack.c.0.s8 %v3269
  %v3271 = vlaneseq
  %v3272 = vshrl.u32 %v3271, 7
  %v3273 = vsub.s32 %v3270, %v3272
  %v3274 = vrot.slane %v3234, %v3273
  %v3276 = vunpack.c.l.s4 1985246804
  %v3277 = vunpack.c.0.s8 %v3276
  %v3278 = vlaneseq
  %v3279 = vshrl.u32 %v3278, 7
  %v3280 = vsub.s32 %v3277, %v3279
  %v3281 = vrot.slane %v3234, %v3280
  %v3283 = vunpack.c.l.s4 839922192
  %v3284 = vunpack.c.0.s8 %v3283
  %v3285 = vlaneseq
  %v3286 = vshrl.u32 %v3285, 7
  %v3287 = vsub.s32 %v3284, %v3286
  %v3288 = vrot.slane %v3235, %v3287
  %v3290 = vunpack.c.l.s4 1985246804
  %v3291 = vunpack.c.0.s8 %v3290
  %v3292 = vlaneseq
  %v3293 = vshrl.u32 %v3292, 7
  %v3294 = vsub.s32 %v3291, %v3293
  %v3295 = vrot.slane %v3235, %v3294
  %v3304 = vsub.f32 %v3194, %v3246
  %v3305 = vsub.f32 %v3195, %v3253
  %v3306 = vsub.f32 %v3196, %v3260
  %v3307 = vsub.f32 %v3197, %v3267
  %v3308 = vsub.f32 %v3198, %v3274
  %v3309 = vsub.f32 %v3199, %v3281
  %v3310 = vsub.f32 %v3200, %v3288
  %v3311 = vsub.f32 %v3201, %v3295
  %v3312 = vmul.f32 %v3304, %v3304
  %v3313 = vmul.f32 %v3305, %v3305
  %v3314 = vmul.f32 %v3306, %v3306
  %v3315 = vmul.f32 %v3307, %v3307
  %v3316 = vmul.f32 %v3308, %v3308
  %v3317 = vmul.f32 %v3309, %v3309
  %v3318 = vmul.f32 %v3310, %v3310
  %v3319 = vmul.f32 %v3311, %v3311
  %v3328 = vcombine.low %v3312, %v3313
  %v3329 = vcombine.low %v3314, %v3315
  %v3330 = vcombine.low %v3316, %v3317
  %v3331 = vcombine.low %v3318, %v3319
  %v3336 = vsel %vm466, %v3328, 0.0
  %3337 = vadd.xlane.f32.xlu0 %v3336
  %v3338 = vpop.xlane.xlu0 %3337
  %v3339 = vsel %vm466, %v3329, 0.0
  %3340 = vadd.xlane.f32.xlu0 %v3339
  %v3341 = vpop.xlane.xlu0 %3340
  %v3342 = vsel %vm466, %v3330, 0.0
  %3343 = vadd.xlane.f32.xlu0 %v3342
  %v3344 = vpop.xlane.xlu0 %3343
  %v3345 = vsel %vm466, %v3331, 0.0
  %3346 = vadd.xlane.f32.xlu0 %v3345
  %v3347 = vpop.xlane.xlu0 %3346
  %v3348 = vmul.f32 %v3338, %v479
  %v3349 = vmul.f32 %v3341, %v479
  %v3350 = vmul.f32 %v3344, %v479
  %v3351 = vmul.f32 %v3347, %v479
  %v3352 = vadd.f32 %v3348, 1e-05
  %v3353 = vadd.f32 %v3349, 1e-05
  %v3354 = vadd.f32 %v3350, 1e-05
  %v3355 = vadd.f32 %v3351, 1e-05
  %v3356 = vrsqrt.pop %v3352
  %v3357 = vrsqrt.pop %v3353
  %v3358 = vrsqrt.pop %v3354
  %v3359 = vrsqrt.pop %v3355
  %v3365 = vunpack.c.l.s4 839922192
  %v3366 = vunpack.c.0.s8 %v3365
  %v3367 = vlaneseq
  %v3368 = vshrl.u32 %v3367, 7
  %v3369 = vsub.s32 %v3366, %v3368
  %v3370 = vrot.slane %v3356, %v3369
  %v3372 = vunpack.c.l.s4 1985246804
  %v3373 = vunpack.c.0.s8 %v3372
  %v3374 = vlaneseq
  %v3375 = vshrl.u32 %v3374, 7
  %v3376 = vsub.s32 %v3373, %v3375
  %v3377 = vrot.slane %v3356, %v3376
  %v3379 = vunpack.c.l.s4 839922192
  %v3380 = vunpack.c.0.s8 %v3379
  %v3381 = vlaneseq
  %v3382 = vshrl.u32 %v3381, 7
  %v3383 = vsub.s32 %v3380, %v3382
  %v3384 = vrot.slane %v3357, %v3383
  %v3386 = vunpack.c.l.s4 1985246804
  %v3387 = vunpack.c.0.s8 %v3386
  %v3388 = vlaneseq
  %v3389 = vshrl.u32 %v3388, 7
  %v3390 = vsub.s32 %v3387, %v3389
  %v3391 = vrot.slane %v3357, %v3390
  %v3393 = vunpack.c.l.s4 839922192
  %v3394 = vunpack.c.0.s8 %v3393
  %v3395 = vlaneseq
  %v3396 = vshrl.u32 %v3395, 7
  %v3397 = vsub.s32 %v3394, %v3396
  %v3398 = vrot.slane %v3358, %v3397
  %v3400 = vunpack.c.l.s4 1985246804
  %v3401 = vunpack.c.0.s8 %v3400
  %v3402 = vlaneseq
  %v3403 = vshrl.u32 %v3402, 7
  %v3404 = vsub.s32 %v3401, %v3403
  %v3405 = vrot.slane %v3358, %v3404
  %v3407 = vunpack.c.l.s4 839922192
  %v3408 = vunpack.c.0.s8 %v3407
  %v3409 = vlaneseq
  %v3410 = vshrl.u32 %v3409, 7
  %v3411 = vsub.s32 %v3408, %v3410
  %v3412 = vrot.slane %v3359, %v3411
  %v3414 = vunpack.c.l.s4 1985246804
  %v3415 = vunpack.c.0.s8 %v3414
  %v3416 = vlaneseq
  %v3417 = vshrl.u32 %v3416, 7
  %v3418 = vsub.s32 %v3415, %v3417
  %v3419 = vrot.slane %v3359, %v3418
  %v3428 = vmul.f32 %v3304, %v3370
  %v3429 = vmul.f32 %v3305, %v3377
  %v3430 = vmul.f32 %v3306, %v3384
  %v3431 = vmul.f32 %v3307, %v3391
  %v3432 = vmul.f32 %v3308, %v3398
  %v3433 = vmul.f32 %v3309, %v3405
  %v3434 = vmul.f32 %v3310, %v3412
  %v3435 = vmul.f32 %v3311, %v3419
  %v3437 = vlaneseq
  %v3438 = vshrl.u32 %v3437, 7
  %v3439 = vsub.s32 0, %v3438
  %v3440 = vrot.slane %v3202, %v3439
  %v3442 = vcombine.high %v3440, %v3440
  %v3444 = vmul.f32 %v3428, %v3440
  %v3445 = vmul.f32 %v3429, %v3442
  %v3446 = vmul.f32 %v3430, %v3440
  %v3447 = vmul.f32 %v3431, %v3442
  %v3448 = vmul.f32 %v3432, %v3440
  %v3449 = vmul.f32 %v3433, %v3442
  %v3450 = vmul.f32 %v3434, %v3440
  %v3451 = vmul.f32 %v3435, %v3442
  %v3453 = vlaneseq
  %v3454 = vshrl.u32 %v3453, 7
  %v3455 = vsub.s32 0, %v3454
  %v3456 = vrot.slane %v3203, %v3455
  %v3458 = vcombine.high %v3456, %v3456
  %v3460 = vadd.f32 %v3444, %v3456
  %v3461 = vadd.f32 %v3445, %v3458
  %v3462 = vadd.f32 %v3446, %v3456
  %v3463 = vadd.f32 %v3447, %v3458
  %v3464 = vadd.f32 %v3448, %v3456
  %v3465 = vadd.f32 %v3449, %v3458
  %v3466 = vadd.f32 %v3450, %v3456
  %v3467 = vadd.f32 %v3451, %v3458
  %v3468 = vld [vmem:[%s13] sm:$0xf]
  %v3469 = vld [vmem:[%s13 + $0x4] sm:$0xf]
  %v3470 = vld [vmem:[%s13 + $0x8] sm:$0xf]
  %v3471 = vld [vmem:[%s13 + $0xc] sm:$0xf]
  %v3480 = vcombine.low %v3460, %v3461
  %v3481 = vcombine.low %v3462, %v3463
  %v3482 = vcombine.low %v3464, %v3465
  %v3483 = vcombine.low %v3466, %v3467
  %v3488 = vpack.c.bf16 %v3481, %v3480
  %v3489 = vpack.c.bf16 %v3483, %v3482
  %v3490 = vld [vmem:[%s14] sm:$0x1]
  %v3492 = vlaneseq
  %v3493 = vshrl.u32 %v3492, 7
  %v3494 = vsub.s32 0, %v3493
  %v3495 = vrot.slane %v3490, %v3494
  %v3501 = vunpack.c.l.b16 %v3468
  %v3502 = vunpack.c.l.b16 %v3469
  %v3503 = vunpack.c.l.b16 %v3470
  %v3504 = vunpack.c.l.b16 %v3471
  %v3505 = vpack.c.b16 %v3502, %v3501
  %v3506 = vpack.c.b16 %v3504, %v3503
  %v3510 = vsel %vm466, %v3488, 0
  %v3513 = vsel %vm466, %v3489, 0
  %3515 = vmatprep.subr.bf16.mxu0 0
  %3516 = vmatpush1.bf16.msra.mxu0 %v3505
  %3517 = vmatprep.subr.bf16.mxu0 0
  %3518 = vmatpush1.bf16.msra.mxu0 %v3506
  %3519 = vmatprep.subr.bf16.mxu0 0
  %3520 = vmatpush1.bf16.msra.mxu0 0
  %3521 = vmatprep.subr.bf16.mxu0 0
  %3522 = vmatpush1.bf16.msra.mxu0 0
  %3523 = vmatprep.subr.bf16.mxu0 0
  %3524 = vmatpush1.bf16.msra.mxu0 0
  %3525 = vmatprep.subr.bf16.mxu0 0
  %3526 = vmatpush1.bf16.msra.mxu0 0
  %3527 = vmatprep.subr.bf16.mxu0 0
  %3528 = vmatpush1.bf16.msra.mxu0 0
  %3529 = vmatprep.subr.bf16.mxu0 0
  %3530 = vmatpush1.bf16.msra.mxu0 0
  %3531 = vmatprep.subr.bf16.mxu0 0
  %3532 = vmatpush1.bf16.msra.mxu0 0
  %3533 = vmatprep.subr.bf16.mxu0 0
  %3534 = vmatpush1.bf16.msra.mxu0 0
  %3535 = vmatprep.subr.bf16.mxu0 0
  %3536 = vmatpush1.bf16.msra.mxu0 0
  %3537 = vmatprep.subr.bf16.mxu0 0
  %3538 = vmatpush1.bf16.msra.mxu0 0
  %3539 = vmatprep.subr.bf16.mxu0 0
  %3540 = vmatpush1.bf16.msra.mxu0 0
  %3541 = vmatprep.subr.bf16.mxu0 0
  %3542 = vmatpush1.bf16.msra.mxu0 0
  %3543 = vmatprep.subr.bf16.mxu0 0
  %3544 = vmatpush1.bf16.msra.mxu0 0
  %3545 = vmatprep.subr.bf16.mxu0 0
  %3546 = vmatpush1.bf16.msra.mxu0 0
  %3547 = vmatprep.mubr.bf16.mxu0 0
  %3548 = vmatmul.mubr.bf16.gmra.mrb[0].mxu0 %v3510
  %v3549 = vpop.f32.mrb[0].mxu0
  %v3550 = vadd.f32 %v3495, %v3549
  %v3551 = vpop.f32.mrb[0].mxu0
  %v3552 = vpop.f32.mrb[0].mxu0
  %v3553 = vadd.f32 %v3495, %v3552
  %v3554 = vpop.f32.mrb[0].mxu0
  %3555 = vmatprep.mubr.bf16.mxu0 0
  %3556 = vmatmul.mubr.bf16.gmra.mrb[0].mxu0 %v3513
  %v3557 = vpop.f32.mrb[0].mxu0
  %v3558 = vadd.f32 %v3495, %v3557
  %v3559 = vpop.f32.mrb[0].mxu0
  %v3560 = vpop.f32.mrb[0].mxu0
  %v3561 = vadd.f32 %v3495, %v3560
  %v3562 = vpop.f32.mrb[0].mxu0
  %3563 = vdwg.mxu0
  %v3564 = vmul.f32 %v3550, 0.5
  %v3565 = vmul.f32 %v3553, 0.5
  %v3566 = vmul.f32 %v3558, 0.5
  %v3567 = vmul.f32 %v3561, 0.5
  %v3568 = vmul.f32 %v3550, 0.044715
  %v3569 = vmul.f32 %v3553, 0.044715
  %v3570 = vmul.f32 %v3558, 0.044715
  %v3571 = vmul.f32 %v3561, 0.044715
  %v3572 = vmul.f32 %v3568, %v3550
  %v3573 = vmul.f32 %v3569, %v3553
  %v3574 = vmul.f32 %v3570, %v3558
  %v3575 = vmul.f32 %v3571, %v3561
  %v3576 = vmul.f32 %v3572, %v3550
  %v3577 = vmul.f32 %v3573, %v3553
  %v3578 = vmul.f32 %v3574, %v3558
  %v3579 = vmul.f32 %v3575, %v3561
  %v3580 = vadd.f32 %v3550, %v3576
  %v3581 = vadd.f32 %v3553, %v3577
  %v3582 = vadd.f32 %v3558, %v3578
  %v3583 = vadd.f32 %v3561, %v3579
  %v3584 = vmul.f32 %v3580, 0.7978846
  %v3585 = vmul.f32 %v3581, 0.7978846
  %v3586 = vmul.f32 %v3582, 0.7978846
  %v3587 = vmul.f32 %v3583, 0.7978846
  %v3588 = vtanh.pop %v3584
  %v3589 = vtanh.pop %v3585
  %v3590 = vtanh.pop %v3586
  %v3591 = vtanh.pop %v3587
  %v3592 = vadd.f32 %v3588, 1.0
  %v3593 = vadd.f32 %v3589, 1.0
  %v3594 = vadd.f32 %v3590, 1.0
  %v3595 = vadd.f32 %v3591, 1.0
  %v3596 = vmul.f32 %v3564, %v3592
  %v3597 = vmul.f32 %v3565, %v3593
  %v3598 = vmul.f32 %v3566, %v3594
  %v3599 = vmul.f32 %v3567, %v3595
  %v3600 = vpack.c.bf16 %v3597, %v3596
  %v3601 = vpack.c.bf16 %v3599, %v3598
  %v3602 = vld [vmem:[%s15] sm:$0xf]
  %v3603 = vld [vmem:[%s15 + $0x4] sm:$0xf]
  %v3604 = vld [vmem:[%s15 + $0x8] sm:$0xf]
  %v3605 = vld [vmem:[%s15 + $0xc] sm:$0xf]
  %v3606 = vld [vmem:[%s15 + $0x10] sm:$0xf]
  %v3607 = vld [vmem:[%s15 + $0x14] sm:$0xf]
  %v3608 = vld [vmem:[%s15 + $0x18] sm:$0xf]
  %v3609 = vld [vmem:[%s15 + $0x1c] sm:$0xf]
  %v3610 = vld [vmem:[%s15 + $0x20] sm:$0xf]
  %v3611 = vld [vmem:[%s15 + $0x24] sm:$0xf]
  %v3612 = vld [vmem:[%s15 + $0x28] sm:$0xf]
  %v3613 = vld [vmem:[%s15 + $0x2c] sm:$0xf]
  %v3614 = vld [vmem:[%s15 + $0x30] sm:$0xf]
  %v3615 = vld [vmem:[%s15 + $0x34] sm:$0xf]
  %v3616 = vld [vmem:[%s15 + $0x38] sm:$0xf]
  %v3617 = vld [vmem:[%s15 + $0x3c] sm:$0xf]
  %v3634 = vunpack.c.l.b16 %v3602
  %v3635 = vunpack.c.l.b16 %v3603
  %v3636 = vunpack.c.l.b16 %v3604
  %v3637 = vunpack.c.l.b16 %v3605
  %v3638 = vunpack.c.l.b16 %v3606
  %v3639 = vunpack.c.l.b16 %v3607
  %v3640 = vunpack.c.l.b16 %v3608
  %v3641 = vunpack.c.l.b16 %v3609
  %v3642 = vunpack.c.l.b16 %v3610
  %v3643 = vunpack.c.l.b16 %v3611
  %v3644 = vunpack.c.l.b16 %v3612
  %v3645 = vunpack.c.l.b16 %v3613
  %v3646 = vunpack.c.l.b16 %v3614
  %v3647 = vunpack.c.l.b16 %v3615
  %v3648 = vunpack.c.l.b16 %v3616
  %v3649 = vunpack.c.l.b16 %v3617
  %v3650 = vpack.c.b16 %v3635, %v3634
  %v3651 = vpack.c.b16 %v3637, %v3636
  %v3652 = vpack.c.b16 %v3639, %v3638
  %v3653 = vpack.c.b16 %v3641, %v3640
  %v3654 = vpack.c.b16 %v3643, %v3642
  %v3655 = vpack.c.b16 %v3645, %v3644
  %v3656 = vpack.c.b16 %v3647, %v3646
  %v3657 = vpack.c.b16 %v3649, %v3648
  %3666 = vmatprep.subr.bf16.mxu0 0
  %3667 = vmatpush1.bf16.msra.mxu0 %v3650
  %3668 = vmatprep.subr.bf16.mxu0 0
  %3669 = vmatpush1.bf16.msra.mxu0 %v3651
  %3670 = vmatprep.subr.bf16.mxu0 0
  %3671 = vmatpush1.bf16.msra.mxu0 %v3652
  %3672 = vmatprep.subr.bf16.mxu0 0
  %3673 = vmatpush1.bf16.msra.mxu0 %v3653
  %3674 = vmatprep.subr.bf16.mxu0 0
  %3675 = vmatpush1.bf16.msra.mxu0 %v3654
  %3676 = vmatprep.subr.bf16.mxu0 0
  %3677 = vmatpush1.bf16.msra.mxu0 %v3655
  %3678 = vmatprep.subr.bf16.mxu0 0
  %3679 = vmatpush1.bf16.msra.mxu0 %v3656
  %3680 = vmatprep.subr.bf16.mxu0 0
  %3681 = vmatpush1.bf16.msra.mxu0 %v3657
  %3682 = vmatprep.subr.bf16.mxu0 0
  %3683 = vmatpush1.bf16.msra.mxu0 0
  %3684 = vmatprep.subr.bf16.mxu0 0
  %3685 = vmatpush1.bf16.msra.mxu0 0
  %3686 = vmatprep.subr.bf16.mxu0 0
  %3687 = vmatpush1.bf16.msra.mxu0 0
  %3688 = vmatprep.subr.bf16.mxu0 0
  %3689 = vmatpush1.bf16.msra.mxu0 0
  %3690 = vmatprep.subr.bf16.mxu0 0
  %3691 = vmatpush1.bf16.msra.mxu0 0
  %3692 = vmatprep.subr.bf16.mxu0 0
  %3693 = vmatpush1.bf16.msra.mxu0 0
  %3694 = vmatprep.subr.bf16.mxu0 0
  %3695 = vmatpush1.bf16.msra.mxu0 0
  %3696 = vmatprep.subr.bf16.mxu0 0
  %3697 = vmatpush1.bf16.msra.mxu0 0
  %3698 = vmatprep.mubr.bf16.mxu0 0
  %3699 = vmatmul.mubr.bf16.gmra.mrb[0].mxu0 %v3600
  %v3700 = vpop.f32.mrb[0].mxu0
  %v3701 = vadd.f32 0.0, %v3700
  %v3702 = vpop.f32.mrb[0].mxu0
  %v3703 = vpop.f32.mrb[0].mxu0
  %v3704 = vadd.f32 0.0, %v3703
  %v3705 = vpop.f32.mrb[0].mxu0
  %3706 = vmatprep.mubr.bf16.mxu0 0
  %3707 = vmatmul.mubr.bf16.gmra.mrb[0].mxu0 %v3601
  %v3708 = vpop.f32.mrb[0].mxu0
  %v3709 = vadd.f32 0.0, %v3708
  %v3710 = vpop.f32.mrb[0].mxu0
  %v3711 = vpop.f32.mrb[0].mxu0
  %v3712 = vadd.f32 0.0, %v3711
  %v3713 = vpop.f32.mrb[0].mxu0
  %3714 = vdwg.mxu0
  %v3719 = vcombine.high %v3701, %v3701
  %v3720 = vcombine.high %v3704, %v3704
  %v3721 = vcombine.high %v3709, %v3709
  %v3722 = vcombine.high %v3712, %v3712
  %v3727 = vadd.f32 %v3194, %v3701
  %v3728 = vadd.f32 %v3195, %v3719
  %v3729 = vadd.f32 %v3196, %v3704
  %v3730 = vadd.f32 %v3197, %v3720
  %v3731 = vadd.f32 %v3198, %v3709
  %v3732 = vadd.f32 %v3199, %v3721
  %v3733 = vadd.f32 %v3200, %v3712
  %v3734 = vadd.f32 %v3201, %v3722
  %v3735 = vld [vmem:[%s16] sm:$0x1]
  %v3737 = vlaneseq
  %v3738 = vshrl.u32 %v3737, 7
  %v3739 = vsub.s32 0, %v3738
  %v3740 = vrot.slane %v3735, %v3739
  %v3742 = vcombine.high %v3740, %v3740
  %v3744 = vadd.f32 %v3727, %v3740
  %v3745 = vadd.f32 %v3728, %v3742
  %v3746 = vadd.f32 %v3729, %v3740
  %v3747 = vadd.f32 %v3730, %v3742
  %v3748 = vadd.f32 %v3731, %v3740
  %v3749 = vadd.f32 %v3732, %v3742
  %v3750 = vadd.f32 %v3733, %v3740
  %v3751 = vadd.f32 %v3734, %v3742
  %s3752 = scalar_lea.vmem %s5, 1
  %v3753 = vld [vmem:[%s3752] sm:$0x1]
  %s3754 = scalar_lea.vmem %s6, 1
  %v3755 = vld [vmem:[%s3754] sm:$0x1]
  %v3764 = vcombine.low %v3744, %v3745
  %v3765 = vcombine.low %v3746, %v3747
  %v3766 = vcombine.low %v3748, %v3749
  %v3767 = vcombine.low %v3750, %v3751
  %v3772 = vsel %vm466, %v3764, 0.0
  %3773 = vadd.xlane.f32.xlu0 %v3772
  %v3774 = vpop.xlane.xlu0 %3773
  %v3775 = vsel %vm466, %v3765, 0.0
  %3776 = vadd.xlane.f32.xlu0 %v3775
  %v3777 = vpop.xlane.xlu0 %3776
  %v3778 = vsel %vm466, %v3766, 0.0
  %3779 = vadd.xlane.f32.xlu0 %v3778
  %v3780 = vpop.xlane.xlu0 %3779
  %v3781 = vsel %vm466, %v3767, 0.0
  %3782 = vadd.xlane.f32.xlu0 %v3781
  %v3783 = vpop.xlane.xlu0 %3782
  %v3784 = vmul.f32 %v3774, %v479
  %v3785 = vmul.f32 %v3777, %v479
  %v3786 = vmul.f32 %v3780, %v479
  %v3787 = vmul.f32 %v3783, %v479
  %v3793 = vunpack.c.l.s4 839922192
  %v3794 = vunpack.c.0.s8 %v3793
  %v3795 = vlaneseq
  %v3796 = vshrl.u32 %v3795, 7
  %v3797 = vsub.s32 %v3794, %v3796
  %v3798 = vrot.slane %v3784, %v3797
  %v3800 = vunpack.c.l.s4 1985246804
  %v3801 = vunpack.c.0.s8 %v3800
  %v3802 = vlaneseq
  %v3803 = vshrl.u32 %v3802, 7
  %v3804 = vsub.s32 %v3801, %v3803
  %v3805 = vrot.slane %v3784, %v3804
  %v3807 = vunpack.c.l.s4 839922192
  %v3808 = vunpack.c.0.s8 %v3807
  %v3809 = vlaneseq
  %v3810 = vshrl.u32 %v3809, 7
  %v3811 = vsub.s32 %v3808, %v3810
  %v3812 = vrot.slane %v3785, %v3811
  %v3814 = vunpack.c.l.s4 1985246804
  %v3815 = vunpack.c.0.s8 %v3814
  %v3816 = vlaneseq
  %v3817 = vshrl.u32 %v3816, 7
  %v3818 = vsub.s32 %v3815, %v3817
  %v3819 = vrot.slane %v3785, %v3818
  %v3821 = vunpack.c.l.s4 839922192
  %v3822 = vunpack.c.0.s8 %v3821
  %v3823 = vlaneseq
  %v3824 = vshrl.u32 %v3823, 7
  %v3825 = vsub.s32 %v3822, %v3824
  %v3826 = vrot.slane %v3786, %v3825
  %v3828 = vunpack.c.l.s4 1985246804
  %v3829 = vunpack.c.0.s8 %v3828
  %v3830 = vlaneseq
  %v3831 = vshrl.u32 %v3830, 7
  %v3832 = vsub.s32 %v3829, %v3831
  %v3833 = vrot.slane %v3786, %v3832
  %v3835 = vunpack.c.l.s4 839922192
  %v3836 = vunpack.c.0.s8 %v3835
  %v3837 = vlaneseq
  %v3838 = vshrl.u32 %v3837, 7
  %v3839 = vsub.s32 %v3836, %v3838
  %v3840 = vrot.slane %v3787, %v3839
  %v3842 = vunpack.c.l.s4 1985246804
  %v3843 = vunpack.c.0.s8 %v3842
  %v3844 = vlaneseq
  %v3845 = vshrl.u32 %v3844, 7
  %v3846 = vsub.s32 %v3843, %v3845
  %v3847 = vrot.slane %v3787, %v3846
  %v3856 = vsub.f32 %v3744, %v3798
  %v3857 = vsub.f32 %v3745, %v3805
  %v3858 = vsub.f32 %v3746, %v3812
  %v3859 = vsub.f32 %v3747, %v3819
  %v3860 = vsub.f32 %v3748, %v3826
  %v3861 = vsub.f32 %v3749, %v3833
  %v3862 = vsub.f32 %v3750, %v3840
  %v3863 = vsub.f32 %v3751, %v3847
  %v3864 = vmul.f32 %v3856, %v3856
  %v3865 = vmul.f32 %v3857, %v3857
  %v3866 = vmul.f32 %v3858, %v3858
  %v3867 = vmul.f32 %v3859, %v3859
  %v3868 = vmul.f32 %v3860, %v3860
  %v3869 = vmul.f32 %v3861, %v3861
  %v3870 = vmul.f32 %v3862, %v3862
  %v3871 = vmul.f32 %v3863, %v3863
  %v3880 = vcombine.low %v3864, %v3865
  %v3881 = vcombine.low %v3866, %v3867
  %v3882 = vcombine.low %v3868, %v3869
  %v3883 = vcombine.low %v3870, %v3871
  %v3888 = vsel %vm466, %v3880, 0.0
  %3889 = vadd.xlane.f32.xlu0 %v3888
  %v3890 = vpop.xlane.xlu0 %3889
  %v3891 = vsel %vm466, %v3881, 0.0
  %3892 = vadd.xlane.f32.xlu0 %v3891
  %v3893 = vpop.xlane.xlu0 %3892
  %v3894 = vsel %vm466, %v3882, 0.0
  %3895 = vadd.xlane.f32.xlu0 %v3894
  %v3896 = vpop.xlane.xlu0 %3895
  %v3897 = vsel %vm466, %v3883, 0.0
  %3898 = vadd.xlane.f32.xlu0 %v3897
  %v3899 = vpop.xlane.xlu0 %3898
  %v3900 = vmul.f32 %v3890, %v479
  %v3901 = vmul.f32 %v3893, %v479
  %v3902 = vmul.f32 %v3896, %v479
  %v3903 = vmul.f32 %v3899, %v479
  %v3904 = vadd.f32 %v3900, 1e-05
  %v3905 = vadd.f32 %v3901, 1e-05
  %v3906 = vadd.f32 %v3902, 1e-05
  %v3907 = vadd.f32 %v3903, 1e-05
  %v3908 = vrsqrt.pop %v3904
  %v3909 = vrsqrt.pop %v3905
  %v3910 = vrsqrt.pop %v3906
  %v3911 = vrsqrt.pop %v3907
  %v3917 = vunpack.c.l.s4 839922192
  %v3918 = vunpack.c.0.s8 %v3917
  %v3919 = vlaneseq
  %v3920 = vshrl.u32 %v3919, 7
  %v3921 = vsub.s32 %v3918, %v3920
  %v3922 = vrot.slane %v3908, %v3921
  %v3924 = vunpack.c.l.s4 1985246804
  %v3925 = vunpack.c.0.s8 %v3924
  %v3926 = vlaneseq
  %v3927 = vshrl.u32 %v3926, 7
  %v3928 = vsub.s32 %v3925, %v3927
  %v3929 = vrot.slane %v3908, %v3928
  %v3931 = vunpack.c.l.s4 839922192
  %v3932 = vunpack.c.0.s8 %v3931
  %v3933 = vlaneseq
  %v3934 = vshrl.u32 %v3933, 7
  %v3935 = vsub.s32 %v3932, %v3934
  %v3936 = vrot.slane %v3909, %v3935
  %v3938 = vunpack.c.l.s4 1985246804
  %v3939 = vunpack.c.0.s8 %v3938
  %v3940 = vlaneseq
  %v3941 = vshrl.u32 %v3940, 7
  %v3942 = vsub.s32 %v3939, %v3941
  %v3943 = vrot.slane %v3909, %v3942
  %v3945 = vunpack.c.l.s4 839922192
  %v3946 = vunpack.c.0.s8 %v3945
  %v3947 = vlaneseq
  %v3948 = vshrl.u32 %v3947, 7
  %v3949 = vsub.s32 %v3946, %v3948
  %v3950 = vrot.slane %v3910, %v3949
  %v3952 = vunpack.c.l.s4 1985246804
  %v3953 = vunpack.c.0.s8 %v3952
  %v3954 = vlaneseq
  %v3955 = vshrl.u32 %v3954, 7
  %v3956 = vsub.s32 %v3953, %v3955
  %v3957 = vrot.slane %v3910, %v3956
  %v3959 = vunpack.c.l.s4 839922192
  %v3960 = vunpack.c.0.s8 %v3959
  %v3961 = vlaneseq
  %v3962 = vshrl.u32 %v3961, 7
  %v3963 = vsub.s32 %v3960, %v3962
  %v3964 = vrot.slane %v3911, %v3963
  %v3966 = vunpack.c.l.s4 1985246804
  %v3967 = vunpack.c.0.s8 %v3966
  %v3968 = vlaneseq
  %v3969 = vshrl.u32 %v3968, 7
  %v3970 = vsub.s32 %v3967, %v3969
  %v3971 = vrot.slane %v3911, %v3970
  %v3980 = vmul.f32 %v3856, %v3922
  %v3981 = vmul.f32 %v3857, %v3929
  %v3982 = vmul.f32 %v3858, %v3936
  %v3983 = vmul.f32 %v3859, %v3943
  %v3984 = vmul.f32 %v3860, %v3950
  %v3985 = vmul.f32 %v3861, %v3957
  %v3986 = vmul.f32 %v3862, %v3964
  %v3987 = vmul.f32 %v3863, %v3971
  %v3989 = vlaneseq
  %v3990 = vshrl.u32 %v3989, 7
  %v3991 = vsub.s32 0, %v3990
  %v3992 = vrot.slane %v3753, %v3991
  %v3994 = vcombine.high %v3992, %v3992
  %v3996 = vmul.f32 %v3980, %v3992
  %v3997 = vmul.f32 %v3981, %v3994
  %v3998 = vmul.f32 %v3982, %v3992
  %v3999 = vmul.f32 %v3983, %v3994
  %v4000 = vmul.f32 %v3984, %v3992
  %v4001 = vmul.f32 %v3985, %v3994
  %v4002 = vmul.f32 %v3986, %v3992
  %v4003 = vmul.f32 %v3987, %v3994
  %v4005 = vlaneseq
  %v4006 = vshrl.u32 %v4005, 7
  %v4007 = vsub.s32 0, %v4006
  %v4008 = vrot.slane %v3755, %v4007
  %v4010 = vcombine.high %v4008, %v4008
  %v4012 = vadd.f32 %v3996, %v4008
  %v4013 = vadd.f32 %v3997, %v4010
  %v4014 = vadd.f32 %v3998, %v4008
  %v4015 = vadd.f32 %v3999, %v4010
  %v4016 = vadd.f32 %v4000, %v4008
  %v4017 = vadd.f32 %v4001, %v4010
  %v4018 = vadd.f32 %v4002, %v4008
  %v4019 = vadd.f32 %v4003, %v4010
  %v4028 = vcombine.low %v4012, %v4013
  %v4029 = vcombine.low %v4014, %v4015
  %v4030 = vcombine.low %v4016, %v4017
  %v4031 = vcombine.low %v4018, %v4019
  %v4036 = vpack.c.bf16 %v4029, %v4028
  %v4037 = vpack.c.bf16 %v4031, %v4030
  %s4038 = scalar_lea.vmem %s7, 96
  %v4039 = vld [vmem:[%s4038] sm:$0xf]
  %v4040 = vld [vmem:[%s4038 + $0x4] sm:$0xf]
  %v4041 = vld [vmem:[%s4038 + $0x8] sm:$0xf]
  %v4042 = vld [vmem:[%s4038 + $0xc] sm:$0xf]
  %s4043 = scalar_lea.vmem %s8, 6
  %v4044 = vld [vmem:[%s4043] sm:$0x1]
  %v4046 = vlaneseq
  %v4047 = vshrl.u32 %v4046, 7
  %v4048 = vsub.s32 0, %v4047
  %v4049 = vrot.slane %v4044, %v4048
  %v4055 = vunpack.c.l.b16 %v4039
  %v4056 = vunpack.c.l.b16 %v4040
  %v4057 = vunpack.c.l.b16 %v4041
  %v4058 = vunpack.c.l.b16 %v4042
  %v4059 = vpack.c.b16 %v4056, %v4055
  %v4060 = vpack.c.b16 %v4058, %v4057
  %v4064 = vsel %vm466, %v4036, 0
  %v4067 = vsel %vm466, %v4037, 0
  %4069 = vmatprep.subr.bf16.mxu0 0
  %4070 = vmatpush1.bf16.msra.mxu0 %v4059
  %4071 = vmatprep.subr.bf16.mxu0 0
  %4072 = vmatpush1.bf16.msra.mxu0 %v4060
  %4073 = vmatprep.subr.bf16.mxu0 0
  %4074 = vmatpush1.bf16.msra.mxu0 0
  %4075 = vmatprep.subr.bf16.mxu0 0
  %4076 = vmatpush1.bf16.msra.mxu0 0
  %4077 = vmatprep.subr.bf16.mxu0 0
  %4078 = vmatpush1.bf16.msra.mxu0 0
  %4079 = vmatprep.subr.bf16.mxu0 0
  %4080 = vmatpush1.bf16.msra.mxu0 0
  %4081 = vmatprep.subr.bf16.mxu0 0
  %4082 = vmatpush1.bf16.msra.mxu0 0
  %4083 = vmatprep.subr.bf16.mxu0 0
  %4084 = vmatpush1.bf16.msra.mxu0 0
  %4085 = vmatprep.subr.bf16.mxu0 0
  %4086 = vmatpush1.bf16.msra.mxu0 0
  %4087 = vmatprep.subr.bf16.mxu0 0
  %4088 = vmatpush1.bf16.msra.mxu0 0
  %4089 = vmatprep.subr.bf16.mxu0 0
  %4090 = vmatpush1.bf16.msra.mxu0 0
  %4091 = vmatprep.subr.bf16.mxu0 0
  %4092 = vmatpush1.bf16.msra.mxu0 0
  %4093 = vmatprep.subr.bf16.mxu0 0
  %4094 = vmatpush1.bf16.msra.mxu0 0
  %4095 = vmatprep.subr.bf16.mxu0 0
  %4096 = vmatpush1.bf16.msra.mxu0 0
  %4097 = vmatprep.subr.bf16.mxu0 0
  %4098 = vmatpush1.bf16.msra.mxu0 0
  %4099 = vmatprep.subr.bf16.mxu0 0
  %4100 = vmatpush1.bf16.msra.mxu0 0
  %4101 = vmatprep.mubr.bf16.mxu0 0
  %4102 = vmatmul.mubr.bf16.gmra.mrb[0].mxu0 %v4064
  %v4103 = vpop.f32.mrb[0].mxu0
  %v4104 = vadd.f32 %v4049, %v4103
  %v4105 = vpop.f32.mrb[0].mxu0
  %v4106 = vpop.f32.mrb[0].mxu0
  %v4107 = vadd.f32 %v4049, %v4106
  %v4108 = vpop.f32.mrb[0].mxu0
  %4109 = vmatprep.mubr.bf16.mxu0 0
  %4110 = vmatmul.mubr.bf16.gmra.mrb[0].mxu0 %v4067
  %v4111 = vpop.f32.mrb[0].mxu0
  %v4112 = vadd.f32 %v4049, %v4111
  %v4113 = vpop.f32.mrb[0].mxu0
  %v4114 = vpop.f32.mrb[0].mxu0
  %v4115 = vadd.f32 %v4049, %v4114
  %v4116 = vpop.f32.mrb[0].mxu0
  %4117 = vdwg.mxu0
  %v4122 = vcombine.high %v4104, %v4104
  %v4123 = vcombine.high %v4107, %v4107
  %v4124 = vcombine.high %v4112, %v4112
  %v4125 = vcombine.high %v4115, %v4115
  %s4130 = scalar_lea.vmem %s7, 128
  %v4131 = vld [vmem:[%s4130] sm:$0xf]
  %v4132 = vld [vmem:[%s4130 + $0x4] sm:$0xf]
  %v4133 = vld [vmem:[%s4130 + $0x8] sm:$0xf]
  %v4134 = vld [vmem:[%s4130 + $0xc] sm:$0xf]
  %s4135 = scalar_lea.vmem %s8, 8
  %v4136 = vld [vmem:[%s4135] sm:$0x1]
  %v4138 = vlaneseq
  %v4139 = vshrl.u32 %v4138, 7
  %v4140 = vsub.s32 0, %v4139
  %v4141 = vrot.slane %v4136, %v4140
  %v4147 = vunpack.c.l.b16 %v4131
  %v4148 = vunpack.c.l.b16 %v4132
  %v4149 = vunpack.c.l.b16 %v4133
  %v4150 = vunpack.c.l.b16 %v4134
  %v4151 = vpack.c.b16 %v4148, %v4147
  %v4152 = vpack.c.b16 %v4150, %v4149
  %4155 = vmatprep.subr.bf16.mxu0 0
  %4156 = vmatpush1.bf16.msra.mxu0 %v4151
  %4157 = vmatprep.subr.bf16.mxu0 0
  %4158 = vmatpush1.bf16.msra.mxu0 %v4152
  %4159 = vmatprep.subr.bf16.mxu0 0
  %4160 = vmatpush1.bf16.msra.mxu0 0
  %4161 = vmatprep.subr.bf16.mxu0 0
  %4162 = vmatpush1.bf16.msra.mxu0 0
  %4163 = vmatprep.subr.bf16.mxu0 0
  %4164 = vmatpush1.bf16.msra.mxu0 0
  %4165 = vmatprep.subr.bf16.mxu0 0
  %4166 = vmatpush1.bf16.msra.mxu0 0
  %4167 = vmatprep.subr.bf16.mxu0 0
  %4168 = vmatpush1.bf16.msra.mxu0 0
  %4169 = vmatprep.subr.bf16.mxu0 0
  %4170 = vmatpush1.bf16.msra.mxu0 0
  %4171 = vmatprep.subr.bf16.mxu0 0
  %4172 = vmatpush1.bf16.msra.mxu0 0
  %4173 = vmatprep.subr.bf16.mxu0 0
  %4174 = vmatpush1.bf16.msra.mxu0 0
  %4175 = vmatprep.subr.bf16.mxu0 0
  %4176 = vmatpush1.bf16.msra.mxu0 0
  %4177 = vmatprep.subr.bf16.mxu0 0
  %4178 = vmatpush1.bf16.msra.mxu0 0
  %4179 = vmatprep.subr.bf16.mxu0 0
  %4180 = vmatpush1.bf16.msra.mxu0 0
  %4181 = vmatprep.subr.bf16.mxu0 0
  %4182 = vmatpush1.bf16.msra.mxu0 0
  %4183 = vmatprep.subr.bf16.mxu0 0
  %4184 = vmatpush1.bf16.msra.mxu0 0
  %4185 = vmatprep.subr.bf16.mxu0 0
  %4186 = vmatpush1.bf16.msra.mxu0 0
  %4187 = vmatprep.mubr.bf16.mxu0 0
  %4188 = vmatmul.mubr.bf16.gmra.mrb[0].mxu0 %v4064
  %v4189 = vpop.f32.mrb[0].mxu0
  %v4190 = vadd.f32 %v4141, %v4189
  %v4191 = vpop.f32.mrb[0].mxu0
  %v4192 = vpop.f32.mrb[0].mxu0
  %v4193 = vadd.f32 %v4141, %v4192
  %v4194 = vpop.f32.mrb[0].mxu0
  %4195 = vmatprep.mubr.bf16.mxu0 0
  %4196 = vmatmul.mubr.bf16.gmra.mrb[0].mxu0 %v4067
  %v4197 = vpop.f32.mrb[0].mxu0
  %v4198 = vadd.f32 %v4141, %v4197
  %v4199 = vpop.f32.mrb[0].mxu0
  %v4200 = vpop.f32.mrb[0].mxu0
  %v4201 = vadd.f32 %v4141, %v4200
  %v4202 = vpop.f32.mrb[0].mxu0
  %4203 = vdwg.mxu0
  %v4208 = vcombine.high %v4190, %v4190
  %v4209 = vcombine.high %v4193, %v4193
  %v4210 = vcombine.high %v4198, %v4198
  %v4211 = vcombine.high %v4201, %v4201
  %s4216 = scalar_lea.vmem %s7, 160
  %v4217 = vld [vmem:[%s4216] sm:$0xf]
  %v4218 = vld [vmem:[%s4216 + $0x4] sm:$0xf]
  %v4219 = vld [vmem:[%s4216 + $0x8] sm:$0xf]
  %v4220 = vld [vmem:[%s4216 + $0xc] sm:$0xf]
  %s4221 = scalar_lea.vmem %s8, 10
  %v4222 = vld [vmem:[%s4221] sm:$0x1]
  %v4224 = vlaneseq
  %v4225 = vshrl.u32 %v4224, 7
  %v4226 = vsub.s32 0, %v4225
  %v4227 = vrot.slane %v4222, %v4226
  %v4233 = vunpack.c.l.b16 %v4217
  %v4234 = vunpack.c.l.b16 %v4218
  %v4235 = vunpack.c.l.b16 %v4219
  %v4236 = vunpack.c.l.b16 %v4220
  %v4237 = vpack.c.b16 %v4234, %v4233
  %v4238 = vpack.c.b16 %v4236, %v4235
  %4241 = vmatprep.subr.bf16.mxu0 0
  %4242 = vmatpush1.bf16.msra.mxu0 %v4237
  %4243 = vmatprep.subr.bf16.mxu0 0
  %4244 = vmatpush1.bf16.msra.mxu0 %v4238
  %4245 = vmatprep.subr.bf16.mxu0 0
  %4246 = vmatpush1.bf16.msra.mxu0 0
  %4247 = vmatprep.subr.bf16.mxu0 0
  %4248 = vmatpush1.bf16.msra.mxu0 0
  %4249 = vmatprep.subr.bf16.mxu0 0
  %4250 = vmatpush1.bf16.msra.mxu0 0
  %4251 = vmatprep.subr.bf16.mxu0 0
  %4252 = vmatpush1.bf16.msra.mxu0 0
  %4253 = vmatprep.subr.bf16.mxu0 0
  %4254 = vmatpush1.bf16.msra.mxu0 0
  %4255 = vmatprep.subr.bf16.mxu0 0
  %4256 = vmatpush1.bf16.msra.mxu0 0
  %4257 = vmatprep.subr.bf16.mxu0 0
  %4258 = vmatpush1.bf16.msra.mxu0 0
  %4259 = vmatprep.subr.bf16.mxu0 0
  %4260 = vmatpush1.bf16.msra.mxu0 0
  %4261 = vmatprep.subr.bf16.mxu0 0
  %4262 = vmatpush1.bf16.msra.mxu0 0
  %4263 = vmatprep.subr.bf16.mxu0 0
  %4264 = vmatpush1.bf16.msra.mxu0 0
  %4265 = vmatprep.subr.bf16.mxu0 0
  %4266 = vmatpush1.bf16.msra.mxu0 0
  %4267 = vmatprep.subr.bf16.mxu0 0
  %4268 = vmatpush1.bf16.msra.mxu0 0
  %4269 = vmatprep.subr.bf16.mxu0 0
  %4270 = vmatpush1.bf16.msra.mxu0 0
  %4271 = vmatprep.subr.bf16.mxu0 0
  %4272 = vmatpush1.bf16.msra.mxu0 0
  %4273 = vmatprep.mubr.bf16.mxu0 0
  %4274 = vmatmul.mubr.bf16.gmra.mrb[0].mxu0 %v4064
  %v4275 = vpop.f32.mrb[0].mxu0
  %v4276 = vadd.f32 %v4227, %v4275
  %v4277 = vpop.f32.mrb[0].mxu0
  %v4278 = vpop.f32.mrb[0].mxu0
  %v4279 = vadd.f32 %v4227, %v4278
  %v4280 = vpop.f32.mrb[0].mxu0
  %4281 = vmatprep.mubr.bf16.mxu0 0
  %4282 = vmatmul.mubr.bf16.gmra.mrb[0].mxu0 %v4067
  %v4283 = vpop.f32.mrb[0].mxu0
  %v4284 = vadd.f32 %v4227, %v4283
  %v4285 = vpop.f32.mrb[0].mxu0
  %v4286 = vpop.f32.mrb[0].mxu0
  %v4287 = vadd.f32 %v4227, %v4286
  %v4288 = vpop.f32.mrb[0].mxu0
  %4289 = vdwg.mxu0
  %v4294 = vcombine.high %v4276, %v4276
  %v4295 = vcombine.high %v4279, %v4279
  %v4296 = vcombine.high %v4284, %v4284
  %v4297 = vcombine.high %v4287, %v4287
  %v4302 = vpack.c.bf16 %v4104, %v4104
  %v4303 = vpack.c.bf16 %v4122, %v4122
  %v4304 = vpack.c.bf16 %v4107, %v4107
  %v4305 = vpack.c.bf16 %v4123, %v4123
  %v4306 = vpack.c.bf16 %v4112, %v4112
  %v4307 = vpack.c.bf16 %v4124, %v4124
  %v4308 = vpack.c.bf16 %v4115, %v4115
  %v4309 = vpack.c.bf16 %v4125, %v4125
  %v4310 = vpack.c.bf16 %v4190, %v4190
  %v4311 = vpack.c.bf16 %v4208, %v4208
  %v4312 = vpack.c.bf16 %v4193, %v4193
  %v4313 = vpack.c.bf16 %v4209, %v4209
  %v4314 = vpack.c.bf16 %v4198, %v4198
  %v4315 = vpack.c.bf16 %v4210, %v4210
  %v4316 = vpack.c.bf16 %v4201, %v4201
  %v4317 = vpack.c.bf16 %v4211, %v4211
  %v4319 = vsel %vm1012, %v4302, 0
  %v4322 = vsel %vm1012, %v4310, 0
  %4324 = vmatprep.subr.bf16.mxu0 0
  %4325 = vmatpush1.bf16.xpose.msra.mxu0 %v4322
  %4326 = vmatprep.subr.bf16.mxu0 0
  %4327 = vmatpush1.bf16.xpose.msra.mxu0 0
  %4328 = vmatprep.subr.bf16.mxu0 0
  %4329 = vmatpush1.bf16.xpose.msra.mxu0 0
  %4330 = vmatprep.subr.bf16.mxu0 0
  %4331 = vmatpush1.bf16.xpose.msra.mxu0 0
  %4332 = vmatprep.subr.bf16.mxu0 0
  %4333 = vmatpush1.bf16.xpose.msra.mxu0 0
  %4334 = vmatprep.subr.bf16.mxu0 0
  %4335 = vmatpush1.bf16.xpose.msra.mxu0 0
  %4336 = vmatprep.subr.bf16.mxu0 0
  %4337 = vmatpush1.bf16.xpose.msra.mxu0 0
  %4338 = vmatprep.subr.bf16.mxu0 0
  %4339 = vmatpush1.bf16.xpose.msra.mxu0 0
  %4340 = vmatprep.subr.bf16.mxu0 0
  %4341 = vmatpush1.bf16.xpose.msra.mxu0 0
  %4342 = vmatprep.subr.bf16.mxu0 0
  %4343 = vmatpush1.bf16.xpose.msra.mxu0 0
  %4344 = vmatprep.subr.bf16.mxu0 0
  %4345 = vmatpush1.bf16.xpose.msra.mxu0 0
  %4346 = vmatprep.subr.bf16.mxu0 0
  %4347 = vmatpush1.bf16.xpose.msra.mxu0 0
  %4348 = vmatprep.subr.bf16.mxu0 0
  %4349 = vmatpush1.bf16.xpose.msra.mxu0 0
  %4350 = vmatprep.subr.bf16.mxu0 0
  %4351 = vmatpush1.bf16.xpose.msra.mxu0 0
  %4352 = vmatprep.subr.bf16.mxu0 0
  %4353 = vmatpush1.bf16.xpose.msra.mxu0 0
  %4354 = vmatprep.subr.bf16.mxu0 0
  %4355 = vmatpush1.bf16.xpose.msra.mxu0 0
  %4356 = vmatprep.mubr.bf16.mxu0 0
  %4357 = vmatmul.mubr.bf16.gmra.mrb[0].mxu0 %v4319
  %v4358 = vpop.f32.mrb[0].mxu0
  %v4359 = vadd.f32 0.0, %v4358
  %v4360 = vpop.f32.mrb[0].mxu0
  %v4361 = vpop.f32.mrb[0].mxu0
  %v4362 = vpop.f32.mrb[0].mxu0
  %4363 = vdwg.mxu0
  %v4365 = vsel %vm1012, %v4303, 0
  %v4368 = vsel %vm1012, %v4311, 0
  %4370 = vmatprep.subr.bf16.mxu0 0
  %4371 = vmatpush1.bf16.xpose.msra.mxu0 %v4368
  %4372 = vmatprep.subr.bf16.mxu0 0
  %4373 = vmatpush1.bf16.xpose.msra.mxu0 0
  %4374 = vmatprep.subr.bf16.mxu0 0
  %4375 = vmatpush1.bf16.xpose.msra.mxu0 0
  %4376 = vmatprep.subr.bf16.mxu0 0
  %4377 = vmatpush1.bf16.xpose.msra.mxu0 0
  %4378 = vmatprep.subr.bf16.mxu0 0
  %4379 = vmatpush1.bf16.xpose.msra.mxu0 0
  %4380 = vmatprep.subr.bf16.mxu0 0
  %4381 = vmatpush1.bf16.xpose.msra.mxu0 0
  %4382 = vmatprep.subr.bf16.mxu0 0
  %4383 = vmatpush1.bf16.xpose.msra.mxu0 0
  %4384 = vmatprep.subr.bf16.mxu0 0
  %4385 = vmatpush1.bf16.xpose.msra.mxu0 0
  %4386 = vmatprep.subr.bf16.mxu0 0
  %4387 = vmatpush1.bf16.xpose.msra.mxu0 0
  %4388 = vmatprep.subr.bf16.mxu0 0
  %4389 = vmatpush1.bf16.xpose.msra.mxu0 0
  %4390 = vmatprep.subr.bf16.mxu0 0
  %4391 = vmatpush1.bf16.xpose.msra.mxu0 0
  %4392 = vmatprep.subr.bf16.mxu0 0
  %4393 = vmatpush1.bf16.xpose.msra.mxu0 0
  %4394 = vmatprep.subr.bf16.mxu0 0
  %4395 = vmatpush1.bf16.xpose.msra.mxu0 0
  %4396 = vmatprep.subr.bf16.mxu0 0
  %4397 = vmatpush1.bf16.xpose.msra.mxu0 0
  %4398 = vmatprep.subr.bf16.mxu0 0
  %4399 = vmatpush1.bf16.xpose.msra.mxu0 0
  %4400 = vmatprep.subr.bf16.mxu0 0
  %4401 = vmatpush1.bf16.xpose.msra.mxu0 0
  %4402 = vmatprep.mubr.bf16.mxu0 0
  %4403 = vmatmul.mubr.bf16.gmra.mrb[0].mxu0 %v4365
  %v4404 = vpop.f32.mrb[0].mxu0
  %v4405 = vadd.f32 0.0, %v4404
  %v4406 = vpop.f32.mrb[0].mxu0
  %v4407 = vpop.f32.mrb[0].mxu0
  %v4408 = vpop.f32.mrb[0].mxu0
  %4409 = vdwg.mxu0
  %v4411 = vsel %vm1012, %v4304, 0
  %v4414 = vsel %vm1012, %v4312, 0
  %4416 = vmatprep.subr.bf16.mxu0 0
  %4417 = vmatpush1.bf16.xpose.msra.mxu0 %v4414
  %4418 = vmatprep.subr.bf16.mxu0 0
  %4419 = vmatpush1.bf16.xpose.msra.mxu0 0
  %4420 = vmatprep.subr.bf16.mxu0 0
  %4421 = vmatpush1.bf16.xpose.msra.mxu0 0
  %4422 = vmatprep.subr.bf16.mxu0 0
  %4423 = vmatpush1.bf16.xpose.msra.mxu0 0
  %4424 = vmatprep.subr.bf16.mxu0 0
  %4425 = vmatpush1.bf16.xpose.msra.mxu0 0
  %4426 = vmatprep.subr.bf16.mxu0 0
  %4427 = vmatpush1.bf16.xpose.msra.mxu0 0
  %4428 = vmatprep.subr.bf16.mxu0 0
  %4429 = vmatpush1.bf16.xpose.msra.mxu0 0
  %4430 = vmatprep.subr.bf16.mxu0 0
  %4431 = vmatpush1.bf16.xpose.msra.mxu0 0
  %4432 = vmatprep.subr.bf16.mxu0 0
  %4433 = vmatpush1.bf16.xpose.msra.mxu0 0
  %4434 = vmatprep.subr.bf16.mxu0 0
  %4435 = vmatpush1.bf16.xpose.msra.mxu0 0
  %4436 = vmatprep.subr.bf16.mxu0 0
  %4437 = vmatpush1.bf16.xpose.msra.mxu0 0
  %4438 = vmatprep.subr.bf16.mxu0 0
  %4439 = vmatpush1.bf16.xpose.msra.mxu0 0
  %4440 = vmatprep.subr.bf16.mxu0 0
  %4441 = vmatpush1.bf16.xpose.msra.mxu0 0
  %4442 = vmatprep.subr.bf16.mxu0 0
  %4443 = vmatpush1.bf16.xpose.msra.mxu0 0
  %4444 = vmatprep.subr.bf16.mxu0 0
  %4445 = vmatpush1.bf16.xpose.msra.mxu0 0
  %4446 = vmatprep.subr.bf16.mxu0 0
  %4447 = vmatpush1.bf16.xpose.msra.mxu0 0
  %4448 = vmatprep.mubr.bf16.mxu0 0
  %4449 = vmatmul.mubr.bf16.gmra.mrb[0].mxu0 %v4411
  %v4450 = vpop.f32.mrb[0].mxu0
  %v4451 = vadd.f32 0.0, %v4450
  %v4452 = vpop.f32.mrb[0].mxu0
  %v4453 = vpop.f32.mrb[0].mxu0
  %v4454 = vpop.f32.mrb[0].mxu0
  %4455 = vdwg.mxu0
  %v4457 = vsel %vm1012, %v4305, 0
  %v4460 = vsel %vm1012, %v4313, 0
  %4462 = vmatprep.subr.bf16.mxu0 0
  %4463 = vmatpush1.bf16.xpose.msra.mxu0 %v4460
  %4464 = vmatprep.subr.bf16.mxu0 0
  %4465 = vmatpush1.bf16.xpose.msra.mxu0 0
  %4466 = vmatprep.subr.bf16.mxu0 0
  %4467 = vmatpush1.bf16.xpose.msra.mxu0 0
  %4468 = vmatprep.subr.bf16.mxu0 0
  %4469 = vmatpush1.bf16.xpose.msra.mxu0 0
  %4470 = vmatprep.subr.bf16.mxu0 0
  %4471 = vmatpush1.bf16.xpose.msra.mxu0 0
  %4472 = vmatprep.subr.bf16.mxu0 0
  %4473 = vmatpush1.bf16.xpose.msra.mxu0 0
  %4474 = vmatprep.subr.bf16.mxu0 0
  %4475 = vmatpush1.bf16.xpose.msra.mxu0 0
  %4476 = vmatprep.subr.bf16.mxu0 0
  %4477 = vmatpush1.bf16.xpose.msra.mxu0 0
  %4478 = vmatprep.subr.bf16.mxu0 0
  %4479 = vmatpush1.bf16.xpose.msra.mxu0 0
  %4480 = vmatprep.subr.bf16.mxu0 0
  %4481 = vmatpush1.bf16.xpose.msra.mxu0 0
  %4482 = vmatprep.subr.bf16.mxu0 0
  %4483 = vmatpush1.bf16.xpose.msra.mxu0 0
  %4484 = vmatprep.subr.bf16.mxu0 0
  %4485 = vmatpush1.bf16.xpose.msra.mxu0 0
  %4486 = vmatprep.subr.bf16.mxu0 0
  %4487 = vmatpush1.bf16.xpose.msra.mxu0 0
  %4488 = vmatprep.subr.bf16.mxu0 0
  %4489 = vmatpush1.bf16.xpose.msra.mxu0 0
  %4490 = vmatprep.subr.bf16.mxu0 0
  %4491 = vmatpush1.bf16.xpose.msra.mxu0 0
  %4492 = vmatprep.subr.bf16.mxu0 0
  %4493 = vmatpush1.bf16.xpose.msra.mxu0 0
  %4494 = vmatprep.mubr.bf16.mxu0 0
  %4495 = vmatmul.mubr.bf16.gmra.mrb[0].mxu0 %v4457
  %v4496 = vpop.f32.mrb[0].mxu0
  %v4497 = vadd.f32 0.0, %v4496
  %v4498 = vpop.f32.mrb[0].mxu0
  %v4499 = vpop.f32.mrb[0].mxu0
  %v4500 = vpop.f32.mrb[0].mxu0
  %4501 = vdwg.mxu0
  %v4503 = vsel %vm1012, %v4306, 0
  %v4506 = vsel %vm1012, %v4314, 0
  %4508 = vmatprep.subr.bf16.mxu0 0
  %4509 = vmatpush1.bf16.xpose.msra.mxu0 %v4506
  %4510 = vmatprep.subr.bf16.mxu0 0
  %4511 = vmatpush1.bf16.xpose.msra.mxu0 0
  %4512 = vmatprep.subr.bf16.mxu0 0
  %4513 = vmatpush1.bf16.xpose.msra.mxu0 0
  %4514 = vmatprep.subr.bf16.mxu0 0
  %4515 = vmatpush1.bf16.xpose.msra.mxu0 0
  %4516 = vmatprep.subr.bf16.mxu0 0
  %4517 = vmatpush1.bf16.xpose.msra.mxu0 0
  %4518 = vmatprep.subr.bf16.mxu0 0
  %4519 = vmatpush1.bf16.xpose.msra.mxu0 0
  %4520 = vmatprep.subr.bf16.mxu0 0
  %4521 = vmatpush1.bf16.xpose.msra.mxu0 0
  %4522 = vmatprep.subr.bf16.mxu0 0
  %4523 = vmatpush1.bf16.xpose.msra.mxu0 0
  %4524 = vmatprep.subr.bf16.mxu0 0
  %4525 = vmatpush1.bf16.xpose.msra.mxu0 0
  %4526 = vmatprep.subr.bf16.mxu0 0
  %4527 = vmatpush1.bf16.xpose.msra.mxu0 0
  %4528 = vmatprep.subr.bf16.mxu0 0
  %4529 = vmatpush1.bf16.xpose.msra.mxu0 0
  %4530 = vmatprep.subr.bf16.mxu0 0
  %4531 = vmatpush1.bf16.xpose.msra.mxu0 0
  %4532 = vmatprep.subr.bf16.mxu0 0
  %4533 = vmatpush1.bf16.xpose.msra.mxu0 0
  %4534 = vmatprep.subr.bf16.mxu0 0
  %4535 = vmatpush1.bf16.xpose.msra.mxu0 0
  %4536 = vmatprep.subr.bf16.mxu0 0
  %4537 = vmatpush1.bf16.xpose.msra.mxu0 0
  %4538 = vmatprep.subr.bf16.mxu0 0
  %4539 = vmatpush1.bf16.xpose.msra.mxu0 0
  %4540 = vmatprep.mubr.bf16.mxu0 0
  %4541 = vmatmul.mubr.bf16.gmra.mrb[0].mxu0 %v4503
  %v4542 = vpop.f32.mrb[0].mxu0
  %v4543 = vadd.f32 0.0, %v4542
  %v4544 = vpop.f32.mrb[0].mxu0
  %v4545 = vpop.f32.mrb[0].mxu0
  %v4546 = vpop.f32.mrb[0].mxu0
  %4547 = vdwg.mxu0
  %v4549 = vsel %vm1012, %v4307, 0
  %v4552 = vsel %vm1012, %v4315, 0
  %4554 = vmatprep.subr.bf16.mxu0 0
  %4555 = vmatpush1.bf16.xpose.msra.mxu0 %v4552
  %4556 = vmatprep.subr.bf16.mxu0 0
  %4557 = vmatpush1.bf16.xpose.msra.mxu0 0
  %4558 = vmatprep.subr.bf16.mxu0 0
  %4559 = vmatpush1.bf16.xpose.msra.mxu0 0
  %4560 = vmatprep.subr.bf16.mxu0 0
  %4561 = vmatpush1.bf16.xpose.msra.mxu0 0
  %4562 = vmatprep.subr.bf16.mxu0 0
  %4563 = vmatpush1.bf16.xpose.msra.mxu0 0
  %4564 = vmatprep.subr.bf16.mxu0 0
  %4565 = vmatpush1.bf16.xpose.msra.mxu0 0
  %4566 = vmatprep.subr.bf16.mxu0 0
  %4567 = vmatpush1.bf16.xpose.msra.mxu0 0
  %4568 = vmatprep.subr.bf16.mxu0 0
  %4569 = vmatpush1.bf16.xpose.msra.mxu0 0
  %4570 = vmatprep.subr.bf16.mxu0 0
  %4571 = vmatpush1.bf16.xpose.msra.mxu0 0
  %4572 = vmatprep.subr.bf16.mxu0 0
  %4573 = vmatpush1.bf16.xpose.msra.mxu0 0
  %4574 = vmatprep.subr.bf16.mxu0 0
  %4575 = vmatpush1.bf16.xpose.msra.mxu0 0
  %4576 = vmatprep.subr.bf16.mxu0 0
  %4577 = vmatpush1.bf16.xpose.msra.mxu0 0
  %4578 = vmatprep.subr.bf16.mxu0 0
  %4579 = vmatpush1.bf16.xpose.msra.mxu0 0
  %4580 = vmatprep.subr.bf16.mxu0 0
  %4581 = vmatpush1.bf16.xpose.msra.mxu0 0
  %4582 = vmatprep.subr.bf16.mxu0 0
  %4583 = vmatpush1.bf16.xpose.msra.mxu0 0
  %4584 = vmatprep.subr.bf16.mxu0 0
  %4585 = vmatpush1.bf16.xpose.msra.mxu0 0
  %4586 = vmatprep.mubr.bf16.mxu0 0
  %4587 = vmatmul.mubr.bf16.gmra.mrb[0].mxu0 %v4549
  %v4588 = vpop.f32.mrb[0].mxu0
  %v4589 = vadd.f32 0.0, %v4588
  %v4590 = vpop.f32.mrb[0].mxu0
  %v4591 = vpop.f32.mrb[0].mxu0
  %v4592 = vpop.f32.mrb[0].mxu0
  %4593 = vdwg.mxu0
  %v4595 = vsel %vm1012, %v4308, 0
  %v4598 = vsel %vm1012, %v4316, 0
  %4600 = vmatprep.subr.bf16.mxu0 0
  %4601 = vmatpush1.bf16.xpose.msra.mxu0 %v4598
  %4602 = vmatprep.subr.bf16.mxu0 0
  %4603 = vmatpush1.bf16.xpose.msra.mxu0 0
  %4604 = vmatprep.subr.bf16.mxu0 0
  %4605 = vmatpush1.bf16.xpose.msra.mxu0 0
  %4606 = vmatprep.subr.bf16.mxu0 0
  %4607 = vmatpush1.bf16.xpose.msra.mxu0 0
  %4608 = vmatprep.subr.bf16.mxu0 0
  %4609 = vmatpush1.bf16.xpose.msra.mxu0 0
  %4610 = vmatprep.subr.bf16.mxu0 0
  %4611 = vmatpush1.bf16.xpose.msra.mxu0 0
  %4612 = vmatprep.subr.bf16.mxu0 0
  %4613 = vmatpush1.bf16.xpose.msra.mxu0 0
  %4614 = vmatprep.subr.bf16.mxu0 0
  %4615 = vmatpush1.bf16.xpose.msra.mxu0 0
  %4616 = vmatprep.subr.bf16.mxu0 0
  %4617 = vmatpush1.bf16.xpose.msra.mxu0 0
  %4618 = vmatprep.subr.bf16.mxu0 0
  %4619 = vmatpush1.bf16.xpose.msra.mxu0 0
  %4620 = vmatprep.subr.bf16.mxu0 0
  %4621 = vmatpush1.bf16.xpose.msra.mxu0 0
  %4622 = vmatprep.subr.bf16.mxu0 0
  %4623 = vmatpush1.bf16.xpose.msra.mxu0 0
  %4624 = vmatprep.subr.bf16.mxu0 0
  %4625 = vmatpush1.bf16.xpose.msra.mxu0 0
  %4626 = vmatprep.subr.bf16.mxu0 0
  %4627 = vmatpush1.bf16.xpose.msra.mxu0 0
  %4628 = vmatprep.subr.bf16.mxu0 0
  %4629 = vmatpush1.bf16.xpose.msra.mxu0 0
  %4630 = vmatprep.subr.bf16.mxu0 0
  %4631 = vmatpush1.bf16.xpose.msra.mxu0 0
  %4632 = vmatprep.mubr.bf16.mxu0 0
  %4633 = vmatmul.mubr.bf16.gmra.mrb[0].mxu0 %v4595
  %v4634 = vpop.f32.mrb[0].mxu0
  %v4635 = vadd.f32 0.0, %v4634
  %v4636 = vpop.f32.mrb[0].mxu0
  %v4637 = vpop.f32.mrb[0].mxu0
  %v4638 = vpop.f32.mrb[0].mxu0
  %4639 = vdwg.mxu0
  %v4641 = vsel %vm1012, %v4309, 0
  %v4644 = vsel %vm1012, %v4317, 0
  %4646 = vmatprep.subr.bf16.mxu0 0
  %4647 = vmatpush1.bf16.xpose.msra.mxu0 %v4644
  %4648 = vmatprep.subr.bf16.mxu0 0
  %4649 = vmatpush1.bf16.xpose.msra.mxu0 0
  %4650 = vmatprep.subr.bf16.mxu0 0
  %4651 = vmatpush1.bf16.xpose.msra.mxu0 0
  %4652 = vmatprep.subr.bf16.mxu0 0
  %4653 = vmatpush1.bf16.xpose.msra.mxu0 0
  %4654 = vmatprep.subr.bf16.mxu0 0
  %4655 = vmatpush1.bf16.xpose.msra.mxu0 0
  %4656 = vmatprep.subr.bf16.mxu0 0
  %4657 = vmatpush1.bf16.xpose.msra.mxu0 0
  %4658 = vmatprep.subr.bf16.mxu0 0
  %4659 = vmatpush1.bf16.xpose.msra.mxu0 0
  %4660 = vmatprep.subr.bf16.mxu0 0
  %4661 = vmatpush1.bf16.xpose.msra.mxu0 0
  %4662 = vmatprep.subr.bf16.mxu0 0
  %4663 = vmatpush1.bf16.xpose.msra.mxu0 0
  %4664 = vmatprep.subr.bf16.mxu0 0
  %4665 = vmatpush1.bf16.xpose.msra.mxu0 0
  %4666 = vmatprep.subr.bf16.mxu0 0
  %4667 = vmatpush1.bf16.xpose.msra.mxu0 0
  %4668 = vmatprep.subr.bf16.mxu0 0
  %4669 = vmatpush1.bf16.xpose.msra.mxu0 0
  %4670 = vmatprep.subr.bf16.mxu0 0
  %4671 = vmatpush1.bf16.xpose.msra.mxu0 0
  %4672 = vmatprep.subr.bf16.mxu0 0
  %4673 = vmatpush1.bf16.xpose.msra.mxu0 0
  %4674 = vmatprep.subr.bf16.mxu0 0
  %4675 = vmatpush1.bf16.xpose.msra.mxu0 0
  %4676 = vmatprep.subr.bf16.mxu0 0
  %4677 = vmatpush1.bf16.xpose.msra.mxu0 0
  %4678 = vmatprep.mubr.bf16.mxu0 0
  %4679 = vmatmul.mubr.bf16.gmra.mrb[0].mxu0 %v4641
  %v4680 = vpop.f32.mrb[0].mxu0
  %v4681 = vadd.f32 0.0, %v4680
  %v4682 = vpop.f32.mrb[0].mxu0
  %v4683 = vpop.f32.mrb[0].mxu0
  %v4684 = vpop.f32.mrb[0].mxu0
  %4685 = vdwg.mxu0
  %v4686 = vmul.f32 %v4359, 0.25
  %v4687 = vmul.f32 %v4405, 0.25
  %v4688 = vmul.f32 %v4451, 0.25
  %v4689 = vmul.f32 %v4497, 0.25
  %v4690 = vmul.f32 %v4543, 0.25
  %v4691 = vmul.f32 %v4589, 0.25
  %v4692 = vmul.f32 %v4635, 0.25
  %v4693 = vmul.f32 %v4681, 0.25
  %v4694 = vsel %vm1390, %v4686, -1e+30
  %v4695 = vsel %vm1390, %v4687, -1e+30
  %v4696 = vsel %vm1390, %v4688, -1e+30
  %v4697 = vsel %vm1390, %v4689, -1e+30
  %v4698 = vsel %vm1390, %v4690, -1e+30
  %v4699 = vsel %vm1390, %v4691, -1e+30
  %v4700 = vsel %vm1390, %v4692, -1e+30
  %v4701 = vsel %vm1390, %v4693, -1e+30
  %v4702 = vsel %vm1399, %v4694, -inf
  %4703 = vmax.xlane.f32.xlu0 %v4702
  %v4704 = vpop.xlane.xlu0 %4703
  %v4705 = vsel %vm1399, %v4695, -inf
  %4706 = vmax.xlane.f32.xlu0 %v4705
  %v4707 = vpop.xlane.xlu0 %4706
  %v4708 = vsel %vm1399, %v4696, -inf
  %4709 = vmax.xlane.f32.xlu0 %v4708
  %v4710 = vpop.xlane.xlu0 %4709
  %v4711 = vsel %vm1399, %v4697, -inf
  %4712 = vmax.xlane.f32.xlu0 %v4711
  %v4713 = vpop.xlane.xlu0 %4712
  %v4714 = vsel %vm1399, %v4698, -inf
  %4715 = vmax.xlane.f32.xlu0 %v4714
  %v4716 = vpop.xlane.xlu0 %4715
  %v4717 = vsel %vm1399, %v4699, -inf
  %4718 = vmax.xlane.f32.xlu0 %v4717
  %v4719 = vpop.xlane.xlu0 %4718
  %v4720 = vsel %vm1399, %v4700, -inf
  %4721 = vmax.xlane.f32.xlu0 %v4720
  %v4722 = vpop.xlane.xlu0 %4721
  %v4723 = vsel %vm1399, %v4701, -inf
  %4724 = vmax.xlane.f32.xlu0 %v4723
  %v4725 = vpop.xlane.xlu0 %4724
  %v4726 = vsub.f32 %v4694, %v4704
  %v4727 = vsub.f32 %v4695, %v4707
  %v4728 = vsub.f32 %v4696, %v4710
  %v4729 = vsub.f32 %v4697, %v4713
  %v4730 = vsub.f32 %v4698, %v4716
  %v4731 = vsub.f32 %v4699, %v4719
  %v4732 = vsub.f32 %v4700, %v4722
  %v4733 = vsub.f32 %v4701, %v4725
  %v4734 = vmul.f32 %v4726, 1.442695
  %v4735 = vpow.pop %v4734
  %v4736 = vmul.f32 %v4727, 1.442695
  %v4737 = vpow.pop %v4736
  %v4738 = vmul.f32 %v4728, 1.442695
  %v4739 = vpow.pop %v4738
  %v4740 = vmul.f32 %v4729, 1.442695
  %v4741 = vpow.pop %v4740
  %v4742 = vmul.f32 %v4730, 1.442695
  %v4743 = vpow.pop %v4742
  %v4744 = vmul.f32 %v4731, 1.442695
  %v4745 = vpow.pop %v4744
  %v4746 = vmul.f32 %v4732, 1.442695
  %v4747 = vpow.pop %v4746
  %v4748 = vmul.f32 %v4733, 1.442695
  %v4749 = vpow.pop %v4748
  %v4750 = vsel %vm1399, %v4735, 0.0
  %4751 = vadd.xlane.f32.xlu0 %v4750
  %v4752 = vpop.xlane.xlu0 %4751
  %v4753 = vsel %vm1399, %v4737, 0.0
  %4754 = vadd.xlane.f32.xlu0 %v4753
  %v4755 = vpop.xlane.xlu0 %4754
  %v4756 = vsel %vm1399, %v4739, 0.0
  %4757 = vadd.xlane.f32.xlu0 %v4756
  %v4758 = vpop.xlane.xlu0 %4757
  %v4759 = vsel %vm1399, %v4741, 0.0
  %4760 = vadd.xlane.f32.xlu0 %v4759
  %v4761 = vpop.xlane.xlu0 %4760
  %v4762 = vsel %vm1399, %v4743, 0.0
  %4763 = vadd.xlane.f32.xlu0 %v4762
  %v4764 = vpop.xlane.xlu0 %4763
  %v4765 = vsel %vm1399, %v4745, 0.0
  %4766 = vadd.xlane.f32.xlu0 %v4765
  %v4767 = vpop.xlane.xlu0 %4766
  %v4768 = vsel %vm1399, %v4747, 0.0
  %4769 = vadd.xlane.f32.xlu0 %v4768
  %v4770 = vpop.xlane.xlu0 %4769
  %v4771 = vsel %vm1399, %v4749, 0.0
  %4772 = vadd.xlane.f32.xlu0 %v4771
  %v4773 = vpop.xlane.xlu0 %4772
  %v4774 = vrcp.pop %v4752
  %v4775 = vmul.f32 %v4735, %v4774
  %v4776 = vrcp.pop %v4755
  %v4777 = vmul.f32 %v4737, %v4776
  %v4778 = vrcp.pop %v4758
  %v4779 = vmul.f32 %v4739, %v4778
  %v4780 = vrcp.pop %v4761
  %v4781 = vmul.f32 %v4741, %v4780
  %v4782 = vrcp.pop %v4764
  %v4783 = vmul.f32 %v4743, %v4782
  %v4784 = vrcp.pop %v4767
  %v4785 = vmul.f32 %v4745, %v4784
  %v4786 = vrcp.pop %v4770
  %v4787 = vmul.f32 %v4747, %v4786
  %v4788 = vrcp.pop %v4773
  %v4789 = vmul.f32 %v4749, %v4788
  %v4790 = vpack.c.bf16 %v4775, %v4775
  %v4791 = vpack.c.bf16 %v4777, %v4777
  %v4792 = vpack.c.bf16 %v4779, %v4779
  %v4793 = vpack.c.bf16 %v4781, %v4781
  %v4794 = vpack.c.bf16 %v4783, %v4783
  %v4795 = vpack.c.bf16 %v4785, %v4785
  %v4796 = vpack.c.bf16 %v4787, %v4787
  %v4797 = vpack.c.bf16 %v4789, %v4789
  %v4798 = vpack.c.bf16 %v4276, %v4276
  %v4799 = vpack.c.bf16 %v4294, %v4294
  %v4800 = vpack.c.bf16 %v4279, %v4279
  %v4801 = vpack.c.bf16 %v4295, %v4295
  %v4802 = vpack.c.bf16 %v4284, %v4284
  %v4803 = vpack.c.bf16 %v4296, %v4296
  %v4804 = vpack.c.bf16 %v4287, %v4287
  %v4805 = vpack.c.bf16 %v4297, %v4297
  %v4807 = vsel %vm362, %v4790, 0
  %v4810 = vsel %vm369, %v4798, 0
  %4812 = vmatprep.subr.bf16.mxu0 0
  %4813 = vmatpush1.bf16.msra.mxu0 %v4810
  %4814 = vmatprep.subr.bf16.mxu0 0
  %4815 = vmatpush1.bf16.msra.mxu0 0
  %4816 = vmatprep.subr.bf16.mxu0 0
  %4817 = vmatpush1.bf16.msra.mxu0 0
  %4818 = vmatprep.subr.bf16.mxu0 0
  %4819 = vmatpush1.bf16.msra.mxu0 0
  %4820 = vmatprep.subr.bf16.mxu0 0
  %4821 = vmatpush1.bf16.msra.mxu0 0
  %4822 = vmatprep.subr.bf16.mxu0 0
  %4823 = vmatpush1.bf16.msra.mxu0 0
  %4824 = vmatprep.subr.bf16.mxu0 0
  %4825 = vmatpush1.bf16.msra.mxu0 0
  %4826 = vmatprep.subr.bf16.mxu0 0
  %4827 = vmatpush1.bf16.msra.mxu0 0
  %4828 = vmatprep.subr.bf16.mxu0 0
  %4829 = vmatpush1.bf16.msra.mxu0 0
  %4830 = vmatprep.subr.bf16.mxu0 0
  %4831 = vmatpush1.bf16.msra.mxu0 0
  %4832 = vmatprep.subr.bf16.mxu0 0
  %4833 = vmatpush1.bf16.msra.mxu0 0
  %4834 = vmatprep.subr.bf16.mxu0 0
  %4835 = vmatpush1.bf16.msra.mxu0 0
  %4836 = vmatprep.subr.bf16.mxu0 0
  %4837 = vmatpush1.bf16.msra.mxu0 0
  %4838 = vmatprep.subr.bf16.mxu0 0
  %4839 = vmatpush1.bf16.msra.mxu0 0
  %4840 = vmatprep.subr.bf16.mxu0 0
  %4841 = vmatpush1.bf16.msra.mxu0 0
  %4842 = vmatprep.subr.bf16.mxu0 0
  %4843 = vmatpush1.bf16.msra.mxu0 0
  %4844 = vmatprep.mubr.bf16.mxu0 0
  %4845 = vmatmul.mubr.bf16.gmra.mrb[0].mxu0 %v4807
  %v4846 = vpop.f32.mrb[0].mxu0
  %v4847 = vadd.f32 0.0, %v4846
  %v4848 = vpop.f32.mrb[0].mxu0
  %v4849 = vpop.f32.mrb[0].mxu0
  %v4850 = vpop.f32.mrb[0].mxu0
  %4851 = vdwg.mxu0
  %v4853 = vsel %vm362, %v4791, 0
  %v4856 = vsel %vm369, %v4799, 0
  %4858 = vmatprep.subr.bf16.mxu0 0
  %4859 = vmatpush1.bf16.msra.mxu0 %v4856
  %4860 = vmatprep.subr.bf16.mxu0 0
  %4861 = vmatpush1.bf16.msra.mxu0 0
  %4862 = vmatprep.subr.bf16.mxu0 0
  %4863 = vmatpush1.bf16.msra.mxu0 0
  %4864 = vmatprep.subr.bf16.mxu0 0
  %4865 = vmatpush1.bf16.msra.mxu0 0
  %4866 = vmatprep.subr.bf16.mxu0 0
  %4867 = vmatpush1.bf16.msra.mxu0 0
  %4868 = vmatprep.subr.bf16.mxu0 0
  %4869 = vmatpush1.bf16.msra.mxu0 0
  %4870 = vmatprep.subr.bf16.mxu0 0
  %4871 = vmatpush1.bf16.msra.mxu0 0
  %4872 = vmatprep.subr.bf16.mxu0 0
  %4873 = vmatpush1.bf16.msra.mxu0 0
  %4874 = vmatprep.subr.bf16.mxu0 0
  %4875 = vmatpush1.bf16.msra.mxu0 0
  %4876 = vmatprep.subr.bf16.mxu0 0
  %4877 = vmatpush1.bf16.msra.mxu0 0
  %4878 = vmatprep.subr.bf16.mxu0 0
  %4879 = vmatpush1.bf16.msra.mxu0 0
  %4880 = vmatprep.subr.bf16.mxu0 0
  %4881 = vmatpush1.bf16.msra.mxu0 0
  %4882 = vmatprep.subr.bf16.mxu0 0
  %4883 = vmatpush1.bf16.msra.mxu0 0
  %4884 = vmatprep.subr.bf16.mxu0 0
  %4885 = vmatpush1.bf16.msra.mxu0 0
  %4886 = vmatprep.subr.bf16.mxu0 0
  %4887 = vmatpush1.bf16.msra.mxu0 0
  %4888 = vmatprep.subr.bf16.mxu0 0
  %4889 = vmatpush1.bf16.msra.mxu0 0
  %4890 = vmatprep.mubr.bf16.mxu0 0
  %4891 = vmatmul.mubr.bf16.gmra.mrb[0].mxu0 %v4853
  %v4892 = vpop.f32.mrb[0].mxu0
  %v4893 = vadd.f32 0.0, %v4892
  %v4894 = vpop.f32.mrb[0].mxu0
  %v4895 = vpop.f32.mrb[0].mxu0
  %v4896 = vpop.f32.mrb[0].mxu0
  %4897 = vdwg.mxu0
  %v4899 = vsel %vm362, %v4792, 0
  %v4902 = vsel %vm369, %v4800, 0
  %4904 = vmatprep.subr.bf16.mxu0 0
  %4905 = vmatpush1.bf16.msra.mxu0 %v4902
  %4906 = vmatprep.subr.bf16.mxu0 0
  %4907 = vmatpush1.bf16.msra.mxu0 0
  %4908 = vmatprep.subr.bf16.mxu0 0
  %4909 = vmatpush1.bf16.msra.mxu0 0
  %4910 = vmatprep.subr.bf16.mxu0 0
  %4911 = vmatpush1.bf16.msra.mxu0 0
  %4912 = vmatprep.subr.bf16.mxu0 0
  %4913 = vmatpush1.bf16.msra.mxu0 0
  %4914 = vmatprep.subr.bf16.mxu0 0
  %4915 = vmatpush1.bf16.msra.mxu0 0
  %4916 = vmatprep.subr.bf16.mxu0 0
  %4917 = vmatpush1.bf16.msra.mxu0 0
  %4918 = vmatprep.subr.bf16.mxu0 0
  %4919 = vmatpush1.bf16.msra.mxu0 0
  %4920 = vmatprep.subr.bf16.mxu0 0
  %4921 = vmatpush1.bf16.msra.mxu0 0
  %4922 = vmatprep.subr.bf16.mxu0 0
  %4923 = vmatpush1.bf16.msra.mxu0 0
  %4924 = vmatprep.subr.bf16.mxu0 0
  %4925 = vmatpush1.bf16.msra.mxu0 0
  %4926 = vmatprep.subr.bf16.mxu0 0
  %4927 = vmatpush1.bf16.msra.mxu0 0
  %4928 = vmatprep.subr.bf16.mxu0 0
  %4929 = vmatpush1.bf16.msra.mxu0 0
  %4930 = vmatprep.subr.bf16.mxu0 0
  %4931 = vmatpush1.bf16.msra.mxu0 0
  %4932 = vmatprep.subr.bf16.mxu0 0
  %4933 = vmatpush1.bf16.msra.mxu0 0
  %4934 = vmatprep.subr.bf16.mxu0 0
  %4935 = vmatpush1.bf16.msra.mxu0 0
  %4936 = vmatprep.mubr.bf16.mxu0 0
  %4937 = vmatmul.mubr.bf16.gmra.mrb[0].mxu0 %v4899
  %v4938 = vpop.f32.mrb[0].mxu0
  %v4939 = vadd.f32 0.0, %v4938
  %v4940 = vpop.f32.mrb[0].mxu0
  %v4941 = vpop.f32.mrb[0].mxu0
  %v4942 = vpop.f32.mrb[0].mxu0
  %4943 = vdwg.mxu0
  %v4945 = vsel %vm362, %v4793, 0
  %v4948 = vsel %vm369, %v4801, 0
  %4950 = vmatprep.subr.bf16.mxu0 0
  %4951 = vmatpush1.bf16.msra.mxu0 %v4948
  %4952 = vmatprep.subr.bf16.mxu0 0
  %4953 = vmatpush1.bf16.msra.mxu0 0
  %4954 = vmatprep.subr.bf16.mxu0 0
  %4955 = vmatpush1.bf16.msra.mxu0 0
  %4956 = vmatprep.subr.bf16.mxu0 0
  %4957 = vmatpush1.bf16.msra.mxu0 0
  %4958 = vmatprep.subr.bf16.mxu0 0
  %4959 = vmatpush1.bf16.msra.mxu0 0
  %4960 = vmatprep.subr.bf16.mxu0 0
  %4961 = vmatpush1.bf16.msra.mxu0 0
  %4962 = vmatprep.subr.bf16.mxu0 0
  %4963 = vmatpush1.bf16.msra.mxu0 0
  %4964 = vmatprep.subr.bf16.mxu0 0
  %4965 = vmatpush1.bf16.msra.mxu0 0
  %4966 = vmatprep.subr.bf16.mxu0 0
  %4967 = vmatpush1.bf16.msra.mxu0 0
  %4968 = vmatprep.subr.bf16.mxu0 0
  %4969 = vmatpush1.bf16.msra.mxu0 0
  %4970 = vmatprep.subr.bf16.mxu0 0
  %4971 = vmatpush1.bf16.msra.mxu0 0
  %4972 = vmatprep.subr.bf16.mxu0 0
  %4973 = vmatpush1.bf16.msra.mxu0 0
  %4974 = vmatprep.subr.bf16.mxu0 0
  %4975 = vmatpush1.bf16.msra.mxu0 0
  %4976 = vmatprep.subr.bf16.mxu0 0
  %4977 = vmatpush1.bf16.msra.mxu0 0
  %4978 = vmatprep.subr.bf16.mxu0 0
  %4979 = vmatpush1.bf16.msra.mxu0 0
  %4980 = vmatprep.subr.bf16.mxu0 0
  %4981 = vmatpush1.bf16.msra.mxu0 0
  %4982 = vmatprep.mubr.bf16.mxu0 0
  %4983 = vmatmul.mubr.bf16.gmra.mrb[0].mxu0 %v4945
  %v4984 = vpop.f32.mrb[0].mxu0
  %v4985 = vadd.f32 0.0, %v4984
  %v4986 = vpop.f32.mrb[0].mxu0
  %v4987 = vpop.f32.mrb[0].mxu0
  %v4988 = vpop.f32.mrb[0].mxu0
  %4989 = vdwg.mxu0
  %v4991 = vsel %vm362, %v4794, 0
  %v4994 = vsel %vm369, %v4802, 0
  %4996 = vmatprep.subr.bf16.mxu0 0
  %4997 = vmatpush1.bf16.msra.mxu0 %v4994
  %4998 = vmatprep.subr.bf16.mxu0 0
  %4999 = vmatpush1.bf16.msra.mxu0 0
  %5000 = vmatprep.subr.bf16.mxu0 0
  %5001 = vmatpush1.bf16.msra.mxu0 0
  %5002 = vmatprep.subr.bf16.mxu0 0
  %5003 = vmatpush1.bf16.msra.mxu0 0
  %5004 = vmatprep.subr.bf16.mxu0 0
  %5005 = vmatpush1.bf16.msra.mxu0 0
  %5006 = vmatprep.subr.bf16.mxu0 0
  %5007 = vmatpush1.bf16.msra.mxu0 0
  %5008 = vmatprep.subr.bf16.mxu0 0
  %5009 = vmatpush1.bf16.msra.mxu0 0
  %5010 = vmatprep.subr.bf16.mxu0 0
  %5011 = vmatpush1.bf16.msra.mxu0 0
  %5012 = vmatprep.subr.bf16.mxu0 0
  %5013 = vmatpush1.bf16.msra.mxu0 0
  %5014 = vmatprep.subr.bf16.mxu0 0
  %5015 = vmatpush1.bf16.msra.mxu0 0
  %5016 = vmatprep.subr.bf16.mxu0 0
  %5017 = vmatpush1.bf16.msra.mxu0 0
  %5018 = vmatprep.subr.bf16.mxu0 0
  %5019 = vmatpush1.bf16.msra.mxu0 0
  %5020 = vmatprep.subr.bf16.mxu0 0
  %5021 = vmatpush1.bf16.msra.mxu0 0
  %5022 = vmatprep.subr.bf16.mxu0 0
  %5023 = vmatpush1.bf16.msra.mxu0 0
  %5024 = vmatprep.subr.bf16.mxu0 0
  %5025 = vmatpush1.bf16.msra.mxu0 0
  %5026 = vmatprep.subr.bf16.mxu0 0
  %5027 = vmatpush1.bf16.msra.mxu0 0
  %5028 = vmatprep.mubr.bf16.mxu0 0
  %5029 = vmatmul.mubr.bf16.gmra.mrb[0].mxu0 %v4991
  %v5030 = vpop.f32.mrb[0].mxu0
  %v5031 = vadd.f32 0.0, %v5030
  %v5032 = vpop.f32.mrb[0].mxu0
  %v5033 = vpop.f32.mrb[0].mxu0
  %v5034 = vpop.f32.mrb[0].mxu0
  %5035 = vdwg.mxu0
  %v5037 = vsel %vm362, %v4795, 0
  %v5040 = vsel %vm369, %v4803, 0
  %5042 = vmatprep.subr.bf16.mxu0 0
  %5043 = vmatpush1.bf16.msra.mxu0 %v5040
  %5044 = vmatprep.subr.bf16.mxu0 0
  %5045 = vmatpush1.bf16.msra.mxu0 0
  %5046 = vmatprep.subr.bf16.mxu0 0
  %5047 = vmatpush1.bf16.msra.mxu0 0
  %5048 = vmatprep.subr.bf16.mxu0 0
  %5049 = vmatpush1.bf16.msra.mxu0 0
  %5050 = vmatprep.subr.bf16.mxu0 0
  %5051 = vmatpush1.bf16.msra.mxu0 0
  %5052 = vmatprep.subr.bf16.mxu0 0
  %5053 = vmatpush1.bf16.msra.mxu0 0
  %5054 = vmatprep.subr.bf16.mxu0 0
  %5055 = vmatpush1.bf16.msra.mxu0 0
  %5056 = vmatprep.subr.bf16.mxu0 0
  %5057 = vmatpush1.bf16.msra.mxu0 0
  %5058 = vmatprep.subr.bf16.mxu0 0
  %5059 = vmatpush1.bf16.msra.mxu0 0
  %5060 = vmatprep.subr.bf16.mxu0 0
  %5061 = vmatpush1.bf16.msra.mxu0 0
  %5062 = vmatprep.subr.bf16.mxu0 0
  %5063 = vmatpush1.bf16.msra.mxu0 0
  %5064 = vmatprep.subr.bf16.mxu0 0
  %5065 = vmatpush1.bf16.msra.mxu0 0
  %5066 = vmatprep.subr.bf16.mxu0 0
  %5067 = vmatpush1.bf16.msra.mxu0 0
  %5068 = vmatprep.subr.bf16.mxu0 0
  %5069 = vmatpush1.bf16.msra.mxu0 0
  %5070 = vmatprep.subr.bf16.mxu0 0
  %5071 = vmatpush1.bf16.msra.mxu0 0
  %5072 = vmatprep.subr.bf16.mxu0 0
  %5073 = vmatpush1.bf16.msra.mxu0 0
  %5074 = vmatprep.mubr.bf16.mxu0 0
  %5075 = vmatmul.mubr.bf16.gmra.mrb[0].mxu0 %v5037
  %v5076 = vpop.f32.mrb[0].mxu0
  %v5077 = vadd.f32 0.0, %v5076
  %v5078 = vpop.f32.mrb[0].mxu0
  %v5079 = vpop.f32.mrb[0].mxu0
  %v5080 = vpop.f32.mrb[0].mxu0
  %5081 = vdwg.mxu0
  %v5083 = vsel %vm362, %v4796, 0
  %v5086 = vsel %vm369, %v4804, 0
  %5088 = vmatprep.subr.bf16.mxu0 0
  %5089 = vmatpush1.bf16.msra.mxu0 %v5086
  %5090 = vmatprep.subr.bf16.mxu0 0
  %5091 = vmatpush1.bf16.msra.mxu0 0
  %5092 = vmatprep.subr.bf16.mxu0 0
  %5093 = vmatpush1.bf16.msra.mxu0 0
  %5094 = vmatprep.subr.bf16.mxu0 0
  %5095 = vmatpush1.bf16.msra.mxu0 0
  %5096 = vmatprep.subr.bf16.mxu0 0
  %5097 = vmatpush1.bf16.msra.mxu0 0
  %5098 = vmatprep.subr.bf16.mxu0 0
  %5099 = vmatpush1.bf16.msra.mxu0 0
  %5100 = vmatprep.subr.bf16.mxu0 0
  %5101 = vmatpush1.bf16.msra.mxu0 0
  %5102 = vmatprep.subr.bf16.mxu0 0
  %5103 = vmatpush1.bf16.msra.mxu0 0
  %5104 = vmatprep.subr.bf16.mxu0 0
  %5105 = vmatpush1.bf16.msra.mxu0 0
  %5106 = vmatprep.subr.bf16.mxu0 0
  %5107 = vmatpush1.bf16.msra.mxu0 0
  %5108 = vmatprep.subr.bf16.mxu0 0
  %5109 = vmatpush1.bf16.msra.mxu0 0
  %5110 = vmatprep.subr.bf16.mxu0 0
  %5111 = vmatpush1.bf16.msra.mxu0 0
  %5112 = vmatprep.subr.bf16.mxu0 0
  %5113 = vmatpush1.bf16.msra.mxu0 0
  %5114 = vmatprep.subr.bf16.mxu0 0
  %5115 = vmatpush1.bf16.msra.mxu0 0
  %5116 = vmatprep.subr.bf16.mxu0 0
  %5117 = vmatpush1.bf16.msra.mxu0 0
  %5118 = vmatprep.subr.bf16.mxu0 0
  %5119 = vmatpush1.bf16.msra.mxu0 0
  %5120 = vmatprep.mubr.bf16.mxu0 0
  %5121 = vmatmul.mubr.bf16.gmra.mrb[0].mxu0 %v5083
  %v5122 = vpop.f32.mrb[0].mxu0
  %v5123 = vadd.f32 0.0, %v5122
  %v5124 = vpop.f32.mrb[0].mxu0
  %v5125 = vpop.f32.mrb[0].mxu0
  %v5126 = vpop.f32.mrb[0].mxu0
  %5127 = vdwg.mxu0
  %v5129 = vsel %vm362, %v4797, 0
  %v5132 = vsel %vm369, %v4805, 0
  %5134 = vmatprep.subr.bf16.mxu0 0
  %5135 = vmatpush1.bf16.msra.mxu0 %v5132
  %5136 = vmatprep.subr.bf16.mxu0 0
  %5137 = vmatpush1.bf16.msra.mxu0 0
  %5138 = vmatprep.subr.bf16.mxu0 0
  %5139 = vmatpush1.bf16.msra.mxu0 0
  %5140 = vmatprep.subr.bf16.mxu0 0
  %5141 = vmatpush1.bf16.msra.mxu0 0
  %5142 = vmatprep.subr.bf16.mxu0 0
  %5143 = vmatpush1.bf16.msra.mxu0 0
  %5144 = vmatprep.subr.bf16.mxu0 0
  %5145 = vmatpush1.bf16.msra.mxu0 0
  %5146 = vmatprep.subr.bf16.mxu0 0
  %5147 = vmatpush1.bf16.msra.mxu0 0
  %5148 = vmatprep.subr.bf16.mxu0 0
  %5149 = vmatpush1.bf16.msra.mxu0 0
  %5150 = vmatprep.subr.bf16.mxu0 0
  %5151 = vmatpush1.bf16.msra.mxu0 0
  %5152 = vmatprep.subr.bf16.mxu0 0
  %5153 = vmatpush1.bf16.msra.mxu0 0
  %5154 = vmatprep.subr.bf16.mxu0 0
  %5155 = vmatpush1.bf16.msra.mxu0 0
  %5156 = vmatprep.subr.bf16.mxu0 0
  %5157 = vmatpush1.bf16.msra.mxu0 0
  %5158 = vmatprep.subr.bf16.mxu0 0
  %5159 = vmatpush1.bf16.msra.mxu0 0
  %5160 = vmatprep.subr.bf16.mxu0 0
  %5161 = vmatpush1.bf16.msra.mxu0 0
  %5162 = vmatprep.subr.bf16.mxu0 0
  %5163 = vmatpush1.bf16.msra.mxu0 0
  %5164 = vmatprep.subr.bf16.mxu0 0
  %5165 = vmatpush1.bf16.msra.mxu0 0
  %5166 = vmatprep.mubr.bf16.mxu0 0
  %5167 = vmatmul.mubr.bf16.gmra.mrb[0].mxu0 %v5129
  %v5168 = vpop.f32.mrb[0].mxu0
  %v5169 = vadd.f32 0.0, %v5168
  %v5170 = vpop.f32.mrb[0].mxu0
  %v5171 = vpop.f32.mrb[0].mxu0
  %v5172 = vpop.f32.mrb[0].mxu0
  %5173 = vdwg.mxu0
  %v5182 = vcombine.low %v4847, %v4893
  %v5183 = vcombine.low %v4939, %v4985
  %v5184 = vcombine.low %v5031, %v5077
  %v5185 = vcombine.low %v5123, %v5169
  %v5190 = vpack.c.bf16 %v5183, %v5182
  %v5191 = vpack.c.bf16 %v5185, %v5184
  %s5192 = scalar_lea.vmem %s9, 16
  %v5193 = vld [vmem:[%s5192] sm:$0xf]
  %v5194 = vld [vmem:[%s5192 + $0x4] sm:$0xf]
  %s5195 = scalar_lea.vmem %s7, 112
  %v5196 = vld [vmem:[%s5195] sm:$0xf]
  %v5197 = vld [vmem:[%s5195 + $0x4] sm:$0xf]
  %v5198 = vld [vmem:[%s5195 + $0x8] sm:$0xf]
  %v5199 = vld [vmem:[%s5195 + $0xc] sm:$0xf]
  %s5200 = scalar_lea.vmem %s8, 7
  %v5201 = vld [vmem:[%s5200] sm:$0x1]
  %v5203 = vlaneseq
  %v5204 = vshrl.u32 %v5203, 7
  %v5205 = vsub.s32 0, %v5204
  %v5206 = vrot.slane %v5201, %v5205
  %v5212 = vunpack.c.l.b16 %v5196
  %v5213 = vunpack.c.l.b16 %v5197
  %v5214 = vunpack.c.l.b16 %v5198
  %v5215 = vunpack.c.l.b16 %v5199
  %v5216 = vpack.c.b16 %v5213, %v5212
  %v5217 = vpack.c.b16 %v5215, %v5214
  %5220 = vmatprep.subr.bf16.mxu0 0
  %5221 = vmatpush1.bf16.msra.mxu0 %v5216
  %5222 = vmatprep.subr.bf16.mxu0 0
  %5223 = vmatpush1.bf16.msra.mxu0 %v5217
  %5224 = vmatprep.subr.bf16.mxu0 0
  %5225 = vmatpush1.bf16.msra.mxu0 0
  %5226 = vmatprep.subr.bf16.mxu0 0
  %5227 = vmatpush1.bf16.msra.mxu0 0
  %5228 = vmatprep.subr.bf16.mxu0 0
  %5229 = vmatpush1.bf16.msra.mxu0 0
  %5230 = vmatprep.subr.bf16.mxu0 0
  %5231 = vmatpush1.bf16.msra.mxu0 0
  %5232 = vmatprep.subr.bf16.mxu0 0
  %5233 = vmatpush1.bf16.msra.mxu0 0
  %5234 = vmatprep.subr.bf16.mxu0 0
  %5235 = vmatpush1.bf16.msra.mxu0 0
  %5236 = vmatprep.subr.bf16.mxu0 0
  %5237 = vmatpush1.bf16.msra.mxu0 0
  %5238 = vmatprep.subr.bf16.mxu0 0
  %5239 = vmatpush1.bf16.msra.mxu0 0
  %5240 = vmatprep.subr.bf16.mxu0 0
  %5241 = vmatpush1.bf16.msra.mxu0 0
  %5242 = vmatprep.subr.bf16.mxu0 0
  %5243 = vmatpush1.bf16.msra.mxu0 0
  %5244 = vmatprep.subr.bf16.mxu0 0
  %5245 = vmatpush1.bf16.msra.mxu0 0
  %5246 = vmatprep.subr.bf16.mxu0 0
  %5247 = vmatpush1.bf16.msra.mxu0 0
  %5248 = vmatprep.subr.bf16.mxu0 0
  %5249 = vmatpush1.bf16.msra.mxu0 0
  %5250 = vmatprep.subr.bf16.mxu0 0
  %5251 = vmatpush1.bf16.msra.mxu0 0
  %5252 = vmatprep.mubr.bf16.mxu0 0
  %5253 = vmatmul.mubr.bf16.gmra.mrb[0].mxu0 %v4064
  %v5254 = vpop.f32.mrb[0].mxu0
  %v5255 = vadd.f32 %v5206, %v5254
  %v5256 = vpop.f32.mrb[0].mxu0
  %v5257 = vpop.f32.mrb[0].mxu0
  %v5258 = vadd.f32 %v5206, %v5257
  %v5259 = vpop.f32.mrb[0].mxu0
  %5260 = vmatprep.mubr.bf16.mxu0 0
  %5261 = vmatmul.mubr.bf16.gmra.mrb[0].mxu0 %v4067
  %v5262 = vpop.f32.mrb[0].mxu0
  %v5263 = vadd.f32 %v5206, %v5262
  %v5264 = vpop.f32.mrb[0].mxu0
  %v5265 = vpop.f32.mrb[0].mxu0
  %v5266 = vadd.f32 %v5206, %v5265
  %v5267 = vpop.f32.mrb[0].mxu0
  %5268 = vdwg.mxu0
  %v5273 = vcombine.high %v5255, %v5255
  %v5274 = vcombine.high %v5258, %v5258
  %v5275 = vcombine.high %v5263, %v5263
  %v5276 = vcombine.high %v5266, %v5266
  %s5281 = scalar_lea.vmem %s7, 144
  %v5282 = vld [vmem:[%s5281] sm:$0xf]
  %v5283 = vld [vmem:[%s5281 + $0x4] sm:$0xf]
  %v5284 = vld [vmem:[%s5281 + $0x8] sm:$0xf]
  %v5285 = vld [vmem:[%s5281 + $0xc] sm:$0xf]
  %s5286 = scalar_lea.vmem %s8, 9
  %v5287 = vld [vmem:[%s5286] sm:$0x1]
  %v5289 = vlaneseq
  %v5290 = vshrl.u32 %v5289, 7
  %v5291 = vsub.s32 0, %v5290
  %v5292 = vrot.slane %v5287, %v5291
  %v5298 = vunpack.c.l.b16 %v5282
  %v5299 = vunpack.c.l.b16 %v5283
  %v5300 = vunpack.c.l.b16 %v5284
  %v5301 = vunpack.c.l.b16 %v5285
  %v5302 = vpack.c.b16 %v5299, %v5298
  %v5303 = vpack.c.b16 %v5301, %v5300
  %5306 = vmatprep.subr.bf16.mxu0 0
  %5307 = vmatpush1.bf16.msra.mxu0 %v5302
  %5308 = vmatprep.subr.bf16.mxu0 0
  %5309 = vmatpush1.bf16.msra.mxu0 %v5303
  %5310 = vmatprep.subr.bf16.mxu0 0
  %5311 = vmatpush1.bf16.msra.mxu0 0
  %5312 = vmatprep.subr.bf16.mxu0 0
  %5313 = vmatpush1.bf16.msra.mxu0 0
  %5314 = vmatprep.subr.bf16.mxu0 0
  %5315 = vmatpush1.bf16.msra.mxu0 0
  %5316 = vmatprep.subr.bf16.mxu0 0
  %5317 = vmatpush1.bf16.msra.mxu0 0
  %5318 = vmatprep.subr.bf16.mxu0 0
  %5319 = vmatpush1.bf16.msra.mxu0 0
  %5320 = vmatprep.subr.bf16.mxu0 0
  %5321 = vmatpush1.bf16.msra.mxu0 0
  %5322 = vmatprep.subr.bf16.mxu0 0
  %5323 = vmatpush1.bf16.msra.mxu0 0
  %5324 = vmatprep.subr.bf16.mxu0 0
  %5325 = vmatpush1.bf16.msra.mxu0 0
  %5326 = vmatprep.subr.bf16.mxu0 0
  %5327 = vmatpush1.bf16.msra.mxu0 0
  %5328 = vmatprep.subr.bf16.mxu0 0
  %5329 = vmatpush1.bf16.msra.mxu0 0
  %5330 = vmatprep.subr.bf16.mxu0 0
  %5331 = vmatpush1.bf16.msra.mxu0 0
  %5332 = vmatprep.subr.bf16.mxu0 0
  %5333 = vmatpush1.bf16.msra.mxu0 0
  %5334 = vmatprep.subr.bf16.mxu0 0
  %5335 = vmatpush1.bf16.msra.mxu0 0
  %5336 = vmatprep.subr.bf16.mxu0 0
  %5337 = vmatpush1.bf16.msra.mxu0 0
  %5338 = vmatprep.mubr.bf16.mxu0 0
  %5339 = vmatmul.mubr.bf16.gmra.mrb[0].mxu0 %v4064
  %v5340 = vpop.f32.mrb[0].mxu0
  %v5341 = vadd.f32 %v5292, %v5340
  %v5342 = vpop.f32.mrb[0].mxu0
  %v5343 = vpop.f32.mrb[0].mxu0
  %v5344 = vadd.f32 %v5292, %v5343
  %v5345 = vpop.f32.mrb[0].mxu0
  %5346 = vmatprep.mubr.bf16.mxu0 0
  %5347 = vmatmul.mubr.bf16.gmra.mrb[0].mxu0 %v4067
  %v5348 = vpop.f32.mrb[0].mxu0
  %v5349 = vadd.f32 %v5292, %v5348
  %v5350 = vpop.f32.mrb[0].mxu0
  %v5351 = vpop.f32.mrb[0].mxu0
  %v5352 = vadd.f32 %v5292, %v5351
  %v5353 = vpop.f32.mrb[0].mxu0
  %5354 = vdwg.mxu0
  %v5359 = vcombine.high %v5341, %v5341
  %v5360 = vcombine.high %v5344, %v5344
  %v5361 = vcombine.high %v5349, %v5349
  %v5362 = vcombine.high %v5352, %v5352
  %s5367 = scalar_lea.vmem %s7, 176
  %v5368 = vld [vmem:[%s5367] sm:$0xf]
  %v5369 = vld [vmem:[%s5367 + $0x4] sm:$0xf]
  %v5370 = vld [vmem:[%s5367 + $0x8] sm:$0xf]
  %v5371 = vld [vmem:[%s5367 + $0xc] sm:$0xf]
  %s5372 = scalar_lea.vmem %s8, 11
  %v5373 = vld [vmem:[%s5372] sm:$0x1]
  %v5375 = vlaneseq
  %v5376 = vshrl.u32 %v5375, 7
  %v5377 = vsub.s32 0, %v5376
  %v5378 = vrot.slane %v5373, %v5377
  %v5384 = vunpack.c.l.b16 %v5368
  %v5385 = vunpack.c.l.b16 %v5369
  %v5386 = vunpack.c.l.b16 %v5370
  %v5387 = vunpack.c.l.b16 %v5371
  %v5388 = vpack.c.b16 %v5385, %v5384
  %v5389 = vpack.c.b16 %v5387, %v5386
  %5392 = vmatprep.subr.bf16.mxu0 0
  %5393 = vmatpush1.bf16.msra.mxu0 %v5388
  %5394 = vmatprep.subr.bf16.mxu0 0
  %5395 = vmatpush1.bf16.msra.mxu0 %v5389
  %5396 = vmatprep.subr.bf16.mxu0 0
  %5397 = vmatpush1.bf16.msra.mxu0 0
  %5398 = vmatprep.subr.bf16.mxu0 0
  %5399 = vmatpush1.bf16.msra.mxu0 0
  %5400 = vmatprep.subr.bf16.mxu0 0
  %5401 = vmatpush1.bf16.msra.mxu0 0
  %5402 = vmatprep.subr.bf16.mxu0 0
  %5403 = vmatpush1.bf16.msra.mxu0 0
  %5404 = vmatprep.subr.bf16.mxu0 0
  %5405 = vmatpush1.bf16.msra.mxu0 0
  %5406 = vmatprep.subr.bf16.mxu0 0
  %5407 = vmatpush1.bf16.msra.mxu0 0
  %5408 = vmatprep.subr.bf16.mxu0 0
  %5409 = vmatpush1.bf16.msra.mxu0 0
  %5410 = vmatprep.subr.bf16.mxu0 0
  %5411 = vmatpush1.bf16.msra.mxu0 0
  %5412 = vmatprep.subr.bf16.mxu0 0
  %5413 = vmatpush1.bf16.msra.mxu0 0
  %5414 = vmatprep.subr.bf16.mxu0 0
  %5415 = vmatpush1.bf16.msra.mxu0 0
  %5416 = vmatprep.subr.bf16.mxu0 0
  %5417 = vmatpush1.bf16.msra.mxu0 0
  %5418 = vmatprep.subr.bf16.mxu0 0
  %5419 = vmatpush1.bf16.msra.mxu0 0
  %5420 = vmatprep.subr.bf16.mxu0 0
  %5421 = vmatpush1.bf16.msra.mxu0 0
  %5422 = vmatprep.subr.bf16.mxu0 0
  %5423 = vmatpush1.bf16.msra.mxu0 0
  %5424 = vmatprep.mubr.bf16.mxu0 0
  %5425 = vmatmul.mubr.bf16.gmra.mrb[0].mxu0 %v4064
  %v5426 = vpop.f32.mrb[0].mxu0
  %v5427 = vadd.f32 %v5378, %v5426
  %v5428 = vpop.f32.mrb[0].mxu0
  %v5429 = vpop.f32.mrb[0].mxu0
  %v5430 = vadd.f32 %v5378, %v5429
  %v5431 = vpop.f32.mrb[0].mxu0
  %5432 = vmatprep.mubr.bf16.mxu0 0
  %5433 = vmatmul.mubr.bf16.gmra.mrb[0].mxu0 %v4067
  %v5434 = vpop.f32.mrb[0].mxu0
  %v5435 = vadd.f32 %v5378, %v5434
  %v5436 = vpop.f32.mrb[0].mxu0
  %v5437 = vpop.f32.mrb[0].mxu0
  %v5438 = vadd.f32 %v5378, %v5437
  %v5439 = vpop.f32.mrb[0].mxu0
  %5440 = vdwg.mxu0
  %v5445 = vcombine.high %v5427, %v5427
  %v5446 = vcombine.high %v5430, %v5430
  %v5447 = vcombine.high %v5435, %v5435
  %v5448 = vcombine.high %v5438, %v5438
  %v5453 = vpack.c.bf16 %v5255, %v5255
  %v5454 = vpack.c.bf16 %v5273, %v5273
  %v5455 = vpack.c.bf16 %v5258, %v5258
  %v5456 = vpack.c.bf16 %v5274, %v5274
  %v5457 = vpack.c.bf16 %v5263, %v5263
  %v5458 = vpack.c.bf16 %v5275, %v5275
  %v5459 = vpack.c.bf16 %v5266, %v5266
  %v5460 = vpack.c.bf16 %v5276, %v5276
  %v5461 = vpack.c.bf16 %v5341, %v5341
  %v5462 = vpack.c.bf16 %v5359, %v5359
  %v5463 = vpack.c.bf16 %v5344, %v5344
  %v5464 = vpack.c.bf16 %v5360, %v5360
  %v5465 = vpack.c.bf16 %v5349, %v5349
  %v5466 = vpack.c.bf16 %v5361, %v5361
  %v5467 = vpack.c.bf16 %v5352, %v5352
  %v5468 = vpack.c.bf16 %v5362, %v5362
  %v5470 = vsel %vm1012, %v5453, 0
  %v5473 = vsel %vm1012, %v5461, 0
  %5475 = vmatprep.subr.bf16.mxu0 0
  %5476 = vmatpush1.bf16.xpose.msra.mxu0 %v5473
  %5477 = vmatprep.subr.bf16.mxu0 0
  %5478 = vmatpush1.bf16.xpose.msra.mxu0 0
  %5479 = vmatprep.subr.bf16.mxu0 0
  %5480 = vmatpush1.bf16.xpose.msra.mxu0 0
  %5481 = vmatprep.subr.bf16.mxu0 0
  %5482 = vmatpush1.bf16.xpose.msra.mxu0 0
  %5483 = vmatprep.subr.bf16.mxu0 0
  %5484 = vmatpush1.bf16.xpose.msra.mxu0 0
  %5485 = vmatprep.subr.bf16.mxu0 0
  %5486 = vmatpush1.bf16.xpose.msra.mxu0 0
  %5487 = vmatprep.subr.bf16.mxu0 0
  %5488 = vmatpush1.bf16.xpose.msra.mxu0 0
  %5489 = vmatprep.subr.bf16.mxu0 0
  %5490 = vmatpush1.bf16.xpose.msra.mxu0 0
  %5491 = vmatprep.subr.bf16.mxu0 0
  %5492 = vmatpush1.bf16.xpose.msra.mxu0 0
  %5493 = vmatprep.subr.bf16.mxu0 0
  %5494 = vmatpush1.bf16.xpose.msra.mxu0 0
  %5495 = vmatprep.subr.bf16.mxu0 0
  %5496 = vmatpush1.bf16.xpose.msra.mxu0 0
  %5497 = vmatprep.subr.bf16.mxu0 0
  %5498 = vmatpush1.bf16.xpose.msra.mxu0 0
  %5499 = vmatprep.subr.bf16.mxu0 0
  %5500 = vmatpush1.bf16.xpose.msra.mxu0 0
  %5501 = vmatprep.subr.bf16.mxu0 0
  %5502 = vmatpush1.bf16.xpose.msra.mxu0 0
  %5503 = vmatprep.subr.bf16.mxu0 0
  %5504 = vmatpush1.bf16.xpose.msra.mxu0 0
  %5505 = vmatprep.subr.bf16.mxu0 0
  %5506 = vmatpush1.bf16.xpose.msra.mxu0 0
  %5507 = vmatprep.mubr.bf16.mxu0 0
  %5508 = vmatmul.mubr.bf16.gmra.mrb[0].mxu0 %v5470
  %v5509 = vpop.f32.mrb[0].mxu0
  %v5510 = vadd.f32 0.0, %v5509
  %v5511 = vpop.f32.mrb[0].mxu0
  %v5512 = vpop.f32.mrb[0].mxu0
  %v5513 = vpop.f32.mrb[0].mxu0
  %5514 = vdwg.mxu0
  %v5516 = vsel %vm1012, %v5454, 0
  %v5519 = vsel %vm1012, %v5462, 0
  %5521 = vmatprep.subr.bf16.mxu0 0
  %5522 = vmatpush1.bf16.xpose.msra.mxu0 %v5519
  %5523 = vmatprep.subr.bf16.mxu0 0
  %5524 = vmatpush1.bf16.xpose.msra.mxu0 0
  %5525 = vmatprep.subr.bf16.mxu0 0
  %5526 = vmatpush1.bf16.xpose.msra.mxu0 0
  %5527 = vmatprep.subr.bf16.mxu0 0
  %5528 = vmatpush1.bf16.xpose.msra.mxu0 0
  %5529 = vmatprep.subr.bf16.mxu0 0
  %5530 = vmatpush1.bf16.xpose.msra.mxu0 0
  %5531 = vmatprep.subr.bf16.mxu0 0
  %5532 = vmatpush1.bf16.xpose.msra.mxu0 0
  %5533 = vmatprep.subr.bf16.mxu0 0
  %5534 = vmatpush1.bf16.xpose.msra.mxu0 0
  %5535 = vmatprep.subr.bf16.mxu0 0
  %5536 = vmatpush1.bf16.xpose.msra.mxu0 0
  %5537 = vmatprep.subr.bf16.mxu0 0
  %5538 = vmatpush1.bf16.xpose.msra.mxu0 0
  %5539 = vmatprep.subr.bf16.mxu0 0
  %5540 = vmatpush1.bf16.xpose.msra.mxu0 0
  %5541 = vmatprep.subr.bf16.mxu0 0
  %5542 = vmatpush1.bf16.xpose.msra.mxu0 0
  %5543 = vmatprep.subr.bf16.mxu0 0
  %5544 = vmatpush1.bf16.xpose.msra.mxu0 0
  %5545 = vmatprep.subr.bf16.mxu0 0
  %5546 = vmatpush1.bf16.xpose.msra.mxu0 0
  %5547 = vmatprep.subr.bf16.mxu0 0
  %5548 = vmatpush1.bf16.xpose.msra.mxu0 0
  %5549 = vmatprep.subr.bf16.mxu0 0
  %5550 = vmatpush1.bf16.xpose.msra.mxu0 0
  %5551 = vmatprep.subr.bf16.mxu0 0
  %5552 = vmatpush1.bf16.xpose.msra.mxu0 0
  %5553 = vmatprep.mubr.bf16.mxu0 0
  %5554 = vmatmul.mubr.bf16.gmra.mrb[0].mxu0 %v5516
  %v5555 = vpop.f32.mrb[0].mxu0
  %v5556 = vadd.f32 0.0, %v5555
  %v5557 = vpop.f32.mrb[0].mxu0
  %v5558 = vpop.f32.mrb[0].mxu0
  %v5559 = vpop.f32.mrb[0].mxu0
  %5560 = vdwg.mxu0
  %v5562 = vsel %vm1012, %v5455, 0
  %v5565 = vsel %vm1012, %v5463, 0
  %5567 = vmatprep.subr.bf16.mxu0 0
  %5568 = vmatpush1.bf16.xpose.msra.mxu0 %v5565
  %5569 = vmatprep.subr.bf16.mxu0 0
  %5570 = vmatpush1.bf16.xpose.msra.mxu0 0
  %5571 = vmatprep.subr.bf16.mxu0 0
  %5572 = vmatpush1.bf16.xpose.msra.mxu0 0
  %5573 = vmatprep.subr.bf16.mxu0 0
  %5574 = vmatpush1.bf16.xpose.msra.mxu0 0
  %5575 = vmatprep.subr.bf16.mxu0 0
  %5576 = vmatpush1.bf16.xpose.msra.mxu0 0
  %5577 = vmatprep.subr.bf16.mxu0 0
  %5578 = vmatpush1.bf16.xpose.msra.mxu0 0
  %5579 = vmatprep.subr.bf16.mxu0 0
  %5580 = vmatpush1.bf16.xpose.msra.mxu0 0
  %5581 = vmatprep.subr.bf16.mxu0 0
  %5582 = vmatpush1.bf16.xpose.msra.mxu0 0
  %5583 = vmatprep.subr.bf16.mxu0 0
  %5584 = vmatpush1.bf16.xpose.msra.mxu0 0
  %5585 = vmatprep.subr.bf16.mxu0 0
  %5586 = vmatpush1.bf16.xpose.msra.mxu0 0
  %5587 = vmatprep.subr.bf16.mxu0 0
  %5588 = vmatpush1.bf16.xpose.msra.mxu0 0
  %5589 = vmatprep.subr.bf16.mxu0 0
  %5590 = vmatpush1.bf16.xpose.msra.mxu0 0
  %5591 = vmatprep.subr.bf16.mxu0 0
  %5592 = vmatpush1.bf16.xpose.msra.mxu0 0
  %5593 = vmatprep.subr.bf16.mxu0 0
  %5594 = vmatpush1.bf16.xpose.msra.mxu0 0
  %5595 = vmatprep.subr.bf16.mxu0 0
  %5596 = vmatpush1.bf16.xpose.msra.mxu0 0
  %5597 = vmatprep.subr.bf16.mxu0 0
  %5598 = vmatpush1.bf16.xpose.msra.mxu0 0
  %5599 = vmatprep.mubr.bf16.mxu0 0
  %5600 = vmatmul.mubr.bf16.gmra.mrb[0].mxu0 %v5562
  %v5601 = vpop.f32.mrb[0].mxu0
  %v5602 = vadd.f32 0.0, %v5601
  %v5603 = vpop.f32.mrb[0].mxu0
  %v5604 = vpop.f32.mrb[0].mxu0
  %v5605 = vpop.f32.mrb[0].mxu0
  %5606 = vdwg.mxu0
  %v5608 = vsel %vm1012, %v5456, 0
  %v5611 = vsel %vm1012, %v5464, 0
  %5613 = vmatprep.subr.bf16.mxu0 0
  %5614 = vmatpush1.bf16.xpose.msra.mxu0 %v5611
  %5615 = vmatprep.subr.bf16.mxu0 0
  %5616 = vmatpush1.bf16.xpose.msra.mxu0 0
  %5617 = vmatprep.subr.bf16.mxu0 0
  %5618 = vmatpush1.bf16.xpose.msra.mxu0 0
  %5619 = vmatprep.subr.bf16.mxu0 0
  %5620 = vmatpush1.bf16.xpose.msra.mxu0 0
  %5621 = vmatprep.subr.bf16.mxu0 0
  %5622 = vmatpush1.bf16.xpose.msra.mxu0 0
  %5623 = vmatprep.subr.bf16.mxu0 0
  %5624 = vmatpush1.bf16.xpose.msra.mxu0 0
  %5625 = vmatprep.subr.bf16.mxu0 0
  %5626 = vmatpush1.bf16.xpose.msra.mxu0 0
  %5627 = vmatprep.subr.bf16.mxu0 0
  %5628 = vmatpush1.bf16.xpose.msra.mxu0 0
  %5629 = vmatprep.subr.bf16.mxu0 0
  %5630 = vmatpush1.bf16.xpose.msra.mxu0 0
  %5631 = vmatprep.subr.bf16.mxu0 0
  %5632 = vmatpush1.bf16.xpose.msra.mxu0 0
  %5633 = vmatprep.subr.bf16.mxu0 0
  %5634 = vmatpush1.bf16.xpose.msra.mxu0 0
  %5635 = vmatprep.subr.bf16.mxu0 0
  %5636 = vmatpush1.bf16.xpose.msra.mxu0 0
  %5637 = vmatprep.subr.bf16.mxu0 0
  %5638 = vmatpush1.bf16.xpose.msra.mxu0 0
  %5639 = vmatprep.subr.bf16.mxu0 0
  %5640 = vmatpush1.bf16.xpose.msra.mxu0 0
  %5641 = vmatprep.subr.bf16.mxu0 0
  %5642 = vmatpush1.bf16.xpose.msra.mxu0 0
  %5643 = vmatprep.subr.bf16.mxu0 0
  %5644 = vmatpush1.bf16.xpose.msra.mxu0 0
  %5645 = vmatprep.mubr.bf16.mxu0 0
  %5646 = vmatmul.mubr.bf16.gmra.mrb[0].mxu0 %v5608
  %v5647 = vpop.f32.mrb[0].mxu0
  %v5648 = vadd.f32 0.0, %v5647
  %v5649 = vpop.f32.mrb[0].mxu0
  %v5650 = vpop.f32.mrb[0].mxu0
  %v5651 = vpop.f32.mrb[0].mxu0
  %5652 = vdwg.mxu0
  %v5654 = vsel %vm1012, %v5457, 0
  %v5657 = vsel %vm1012, %v5465, 0
  %5659 = vmatprep.subr.bf16.mxu0 0
  %5660 = vmatpush1.bf16.xpose.msra.mxu0 %v5657
  %5661 = vmatprep.subr.bf16.mxu0 0
  %5662 = vmatpush1.bf16.xpose.msra.mxu0 0
  %5663 = vmatprep.subr.bf16.mxu0 0
  %5664 = vmatpush1.bf16.xpose.msra.mxu0 0
  %5665 = vmatprep.subr.bf16.mxu0 0
  %5666 = vmatpush1.bf16.xpose.msra.mxu0 0
  %5667 = vmatprep.subr.bf16.mxu0 0
  %5668 = vmatpush1.bf16.xpose.msra.mxu0 0
  %5669 = vmatprep.subr.bf16.mxu0 0
  %5670 = vmatpush1.bf16.xpose.msra.mxu0 0
  %5671 = vmatprep.subr.bf16.mxu0 0
  %5672 = vmatpush1.bf16.xpose.msra.mxu0 0
  %5673 = vmatprep.subr.bf16.mxu0 0
  %5674 = vmatpush1.bf16.xpose.msra.mxu0 0
  %5675 = vmatprep.subr.bf16.mxu0 0
  %5676 = vmatpush1.bf16.xpose.msra.mxu0 0
  %5677 = vmatprep.subr.bf16.mxu0 0
  %5678 = vmatpush1.bf16.xpose.msra.mxu0 0
  %5679 = vmatprep.subr.bf16.mxu0 0
  %5680 = vmatpush1.bf16.xpose.msra.mxu0 0
  %5681 = vmatprep.subr.bf16.mxu0 0
  %5682 = vmatpush1.bf16.xpose.msra.mxu0 0
  %5683 = vmatprep.subr.bf16.mxu0 0
  %5684 = vmatpush1.bf16.xpose.msra.mxu0 0
  %5685 = vmatprep.subr.bf16.mxu0 0
  %5686 = vmatpush1.bf16.xpose.msra.mxu0 0
  %5687 = vmatprep.subr.bf16.mxu0 0
  %5688 = vmatpush1.bf16.xpose.msra.mxu0 0
  %5689 = vmatprep.subr.bf16.mxu0 0
  %5690 = vmatpush1.bf16.xpose.msra.mxu0 0
  %5691 = vmatprep.mubr.bf16.mxu0 0
  %5692 = vmatmul.mubr.bf16.gmra.mrb[0].mxu0 %v5654
  %v5693 = vpop.f32.mrb[0].mxu0
  %v5694 = vadd.f32 0.0, %v5693
  %v5695 = vpop.f32.mrb[0].mxu0
  %v5696 = vpop.f32.mrb[0].mxu0
  %v5697 = vpop.f32.mrb[0].mxu0
  %5698 = vdwg.mxu0
  %v5700 = vsel %vm1012, %v5458, 0
  %v5703 = vsel %vm1012, %v5466, 0
  %5705 = vmatprep.subr.bf16.mxu0 0
  %5706 = vmatpush1.bf16.xpose.msra.mxu0 %v5703
  %5707 = vmatprep.subr.bf16.mxu0 0
  %5708 = vmatpush1.bf16.xpose.msra.mxu0 0
  %5709 = vmatprep.subr.bf16.mxu0 0
  %5710 = vmatpush1.bf16.xpose.msra.mxu0 0
  %5711 = vmatprep.subr.bf16.mxu0 0
  %5712 = vmatpush1.bf16.xpose.msra.mxu0 0
  %5713 = vmatprep.subr.bf16.mxu0 0
  %5714 = vmatpush1.bf16.xpose.msra.mxu0 0
  %5715 = vmatprep.subr.bf16.mxu0 0
  %5716 = vmatpush1.bf16.xpose.msra.mxu0 0
  %5717 = vmatprep.subr.bf16.mxu0 0
  %5718 = vmatpush1.bf16.xpose.msra.mxu0 0
  %5719 = vmatprep.subr.bf16.mxu0 0
  %5720 = vmatpush1.bf16.xpose.msra.mxu0 0
  %5721 = vmatprep.subr.bf16.mxu0 0
  %5722 = vmatpush1.bf16.xpose.msra.mxu0 0
  %5723 = vmatprep.subr.bf16.mxu0 0
  %5724 = vmatpush1.bf16.xpose.msra.mxu0 0
  %5725 = vmatprep.subr.bf16.mxu0 0
  %5726 = vmatpush1.bf16.xpose.msra.mxu0 0
  %5727 = vmatprep.subr.bf16.mxu0 0
  %5728 = vmatpush1.bf16.xpose.msra.mxu0 0
  %5729 = vmatprep.subr.bf16.mxu0 0
  %5730 = vmatpush1.bf16.xpose.msra.mxu0 0
  %5731 = vmatprep.subr.bf16.mxu0 0
  %5732 = vmatpush1.bf16.xpose.msra.mxu0 0
  %5733 = vmatprep.subr.bf16.mxu0 0
  %5734 = vmatpush1.bf16.xpose.msra.mxu0 0
  %5735 = vmatprep.subr.bf16.mxu0 0
  %5736 = vmatpush1.bf16.xpose.msra.mxu0 0
  %5737 = vmatprep.mubr.bf16.mxu0 0
  %5738 = vmatmul.mubr.bf16.gmra.mrb[0].mxu0 %v5700
  %v5739 = vpop.f32.mrb[0].mxu0
  %v5740 = vadd.f32 0.0, %v5739
  %v5741 = vpop.f32.mrb[0].mxu0
  %v5742 = vpop.f32.mrb[0].mxu0
  %v5743 = vpop.f32.mrb[0].mxu0
  %5744 = vdwg.mxu0
  %v5746 = vsel %vm1012, %v5459, 0
  %v5749 = vsel %vm1012, %v5467, 0
  %5751 = vmatprep.subr.bf16.mxu0 0
  %5752 = vmatpush1.bf16.xpose.msra.mxu0 %v5749
  %5753 = vmatprep.subr.bf16.mxu0 0
  %5754 = vmatpush1.bf16.xpose.msra.mxu0 0
  %5755 = vmatprep.subr.bf16.mxu0 0
  %5756 = vmatpush1.bf16.xpose.msra.mxu0 0
  %5757 = vmatprep.subr.bf16.mxu0 0
  %5758 = vmatpush1.bf16.xpose.msra.mxu0 0
  %5759 = vmatprep.subr.bf16.mxu0 0
  %5760 = vmatpush1.bf16.xpose.msra.mxu0 0
  %5761 = vmatprep.subr.bf16.mxu0 0
  %5762 = vmatpush1.bf16.xpose.msra.mxu0 0
  %5763 = vmatprep.subr.bf16.mxu0 0
  %5764 = vmatpush1.bf16.xpose.msra.mxu0 0
  %5765 = vmatprep.subr.bf16.mxu0 0
  %5766 = vmatpush1.bf16.xpose.msra.mxu0 0
  %5767 = vmatprep.subr.bf16.mxu0 0
  %5768 = vmatpush1.bf16.xpose.msra.mxu0 0
  %5769 = vmatprep.subr.bf16.mxu0 0
  %5770 = vmatpush1.bf16.xpose.msra.mxu0 0
  %5771 = vmatprep.subr.bf16.mxu0 0
  %5772 = vmatpush1.bf16.xpose.msra.mxu0 0
  %5773 = vmatprep.subr.bf16.mxu0 0
  %5774 = vmatpush1.bf16.xpose.msra.mxu0 0
  %5775 = vmatprep.subr.bf16.mxu0 0
  %5776 = vmatpush1.bf16.xpose.msra.mxu0 0
  %5777 = vmatprep.subr.bf16.mxu0 0
  %5778 = vmatpush1.bf16.xpose.msra.mxu0 0
  %5779 = vmatprep.subr.bf16.mxu0 0
  %5780 = vmatpush1.bf16.xpose.msra.mxu0 0
  %5781 = vmatprep.subr.bf16.mxu0 0
  %5782 = vmatpush1.bf16.xpose.msra.mxu0 0
  %5783 = vmatprep.mubr.bf16.mxu0 0
  %5784 = vmatmul.mubr.bf16.gmra.mrb[0].mxu0 %v5746
  %v5785 = vpop.f32.mrb[0].mxu0
  %v5786 = vadd.f32 0.0, %v5785
  %v5787 = vpop.f32.mrb[0].mxu0
  %v5788 = vpop.f32.mrb[0].mxu0
  %v5789 = vpop.f32.mrb[0].mxu0
  %5790 = vdwg.mxu0
  %v5792 = vsel %vm1012, %v5460, 0
  %v5795 = vsel %vm1012, %v5468, 0
  %5797 = vmatprep.subr.bf16.mxu0 0
  %5798 = vmatpush1.bf16.xpose.msra.mxu0 %v5795
  %5799 = vmatprep.subr.bf16.mxu0 0
  %5800 = vmatpush1.bf16.xpose.msra.mxu0 0
  %5801 = vmatprep.subr.bf16.mxu0 0
  %5802 = vmatpush1.bf16.xpose.msra.mxu0 0
  %5803 = vmatprep.subr.bf16.mxu0 0
  %5804 = vmatpush1.bf16.xpose.msra.mxu0 0
  %5805 = vmatprep.subr.bf16.mxu0 0
  %5806 = vmatpush1.bf16.xpose.msra.mxu0 0
  %5807 = vmatprep.subr.bf16.mxu0 0
  %5808 = vmatpush1.bf16.xpose.msra.mxu0 0
  %5809 = vmatprep.subr.bf16.mxu0 0
  %5810 = vmatpush1.bf16.xpose.msra.mxu0 0
  %5811 = vmatprep.subr.bf16.mxu0 0
  %5812 = vmatpush1.bf16.xpose.msra.mxu0 0
  %5813 = vmatprep.subr.bf16.mxu0 0
  %5814 = vmatpush1.bf16.xpose.msra.mxu0 0
  %5815 = vmatprep.subr.bf16.mxu0 0
  %5816 = vmatpush1.bf16.xpose.msra.mxu0 0
  %5817 = vmatprep.subr.bf16.mxu0 0
  %5818 = vmatpush1.bf16.xpose.msra.mxu0 0
  %5819 = vmatprep.subr.bf16.mxu0 0
  %5820 = vmatpush1.bf16.xpose.msra.mxu0 0
  %5821 = vmatprep.subr.bf16.mxu0 0
  %5822 = vmatpush1.bf16.xpose.msra.mxu0 0
  %5823 = vmatprep.subr.bf16.mxu0 0
  %5824 = vmatpush1.bf16.xpose.msra.mxu0 0
  %5825 = vmatprep.subr.bf16.mxu0 0
  %5826 = vmatpush1.bf16.xpose.msra.mxu0 0
  %5827 = vmatprep.subr.bf16.mxu0 0
  %5828 = vmatpush1.bf16.xpose.msra.mxu0 0
  %5829 = vmatprep.mubr.bf16.mxu0 0
  %5830 = vmatmul.mubr.bf16.gmra.mrb[0].mxu0 %v5792
  %v5831 = vpop.f32.mrb[0].mxu0
  %v5832 = vadd.f32 0.0, %v5831
  %v5833 = vpop.f32.mrb[0].mxu0
  %v5834 = vpop.f32.mrb[0].mxu0
  %v5835 = vpop.f32.mrb[0].mxu0
  %5836 = vdwg.mxu0
  %v5837 = vmul.f32 %v5510, 0.25
  %v5838 = vmul.f32 %v5556, 0.25
  %v5839 = vmul.f32 %v5602, 0.25
  %v5840 = vmul.f32 %v5648, 0.25
  %v5841 = vmul.f32 %v5694, 0.25
  %v5842 = vmul.f32 %v5740, 0.25
  %v5843 = vmul.f32 %v5786, 0.25
  %v5844 = vmul.f32 %v5832, 0.25
  %v5845 = vsel %vm1390, %v5837, -1e+30
  %v5846 = vsel %vm1390, %v5838, -1e+30
  %v5847 = vsel %vm1390, %v5839, -1e+30
  %v5848 = vsel %vm1390, %v5840, -1e+30
  %v5849 = vsel %vm1390, %v5841, -1e+30
  %v5850 = vsel %vm1390, %v5842, -1e+30
  %v5851 = vsel %vm1390, %v5843, -1e+30
  %v5852 = vsel %vm1390, %v5844, -1e+30
  %v5853 = vsel %vm1399, %v5845, -inf
  %5854 = vmax.xlane.f32.xlu0 %v5853
  %v5855 = vpop.xlane.xlu0 %5854
  %v5856 = vsel %vm1399, %v5846, -inf
  %5857 = vmax.xlane.f32.xlu0 %v5856
  %v5858 = vpop.xlane.xlu0 %5857
  %v5859 = vsel %vm1399, %v5847, -inf
  %5860 = vmax.xlane.f32.xlu0 %v5859
  %v5861 = vpop.xlane.xlu0 %5860
  %v5862 = vsel %vm1399, %v5848, -inf
  %5863 = vmax.xlane.f32.xlu0 %v5862
  %v5864 = vpop.xlane.xlu0 %5863
  %v5865 = vsel %vm1399, %v5849, -inf
  %5866 = vmax.xlane.f32.xlu0 %v5865
  %v5867 = vpop.xlane.xlu0 %5866
  %v5868 = vsel %vm1399, %v5850, -inf
  %5869 = vmax.xlane.f32.xlu0 %v5868
  %v5870 = vpop.xlane.xlu0 %5869
  %v5871 = vsel %vm1399, %v5851, -inf
  %5872 = vmax.xlane.f32.xlu0 %v5871
  %v5873 = vpop.xlane.xlu0 %5872
  %v5874 = vsel %vm1399, %v5852, -inf
  %5875 = vmax.xlane.f32.xlu0 %v5874
  %v5876 = vpop.xlane.xlu0 %5875
  %v5877 = vsub.f32 %v5845, %v5855
  %v5878 = vsub.f32 %v5846, %v5858
  %v5879 = vsub.f32 %v5847, %v5861
  %v5880 = vsub.f32 %v5848, %v5864
  %v5881 = vsub.f32 %v5849, %v5867
  %v5882 = vsub.f32 %v5850, %v5870
  %v5883 = vsub.f32 %v5851, %v5873
  %v5884 = vsub.f32 %v5852, %v5876
  %v5885 = vmul.f32 %v5877, 1.442695
  %v5886 = vpow.pop %v5885
  %v5887 = vmul.f32 %v5878, 1.442695
  %v5888 = vpow.pop %v5887
  %v5889 = vmul.f32 %v5879, 1.442695
  %v5890 = vpow.pop %v5889
  %v5891 = vmul.f32 %v5880, 1.442695
  %v5892 = vpow.pop %v5891
  %v5893 = vmul.f32 %v5881, 1.442695
  %v5894 = vpow.pop %v5893
  %v5895 = vmul.f32 %v5882, 1.442695
  %v5896 = vpow.pop %v5895
  %v5897 = vmul.f32 %v5883, 1.442695
  %v5898 = vpow.pop %v5897
  %v5899 = vmul.f32 %v5884, 1.442695
  %v5900 = vpow.pop %v5899
  %v5901 = vsel %vm1399, %v5886, 0.0
  %5902 = vadd.xlane.f32.xlu0 %v5901
  %v5903 = vpop.xlane.xlu0 %5902
  %v5904 = vsel %vm1399, %v5888, 0.0
  %5905 = vadd.xlane.f32.xlu0 %v5904
  %v5906 = vpop.xlane.xlu0 %5905
  %v5907 = vsel %vm1399, %v5890, 0.0
  %5908 = vadd.xlane.f32.xlu0 %v5907
  %v5909 = vpop.xlane.xlu0 %5908
  %v5910 = vsel %vm1399, %v5892, 0.0
  %5911 = vadd.xlane.f32.xlu0 %v5910
  %v5912 = vpop.xlane.xlu0 %5911
  %v5913 = vsel %vm1399, %v5894, 0.0
  %5914 = vadd.xlane.f32.xlu0 %v5913
  %v5915 = vpop.xlane.xlu0 %5914
  %v5916 = vsel %vm1399, %v5896, 0.0
  %5917 = vadd.xlane.f32.xlu0 %v5916
  %v5918 = vpop.xlane.xlu0 %5917
  %v5919 = vsel %vm1399, %v5898, 0.0
  %5920 = vadd.xlane.f32.xlu0 %v5919
  %v5921 = vpop.xlane.xlu0 %5920
  %v5922 = vsel %vm1399, %v5900, 0.0
  %5923 = vadd.xlane.f32.xlu0 %v5922
  %v5924 = vpop.xlane.xlu0 %5923
  %v5925 = vrcp.pop %v5903
  %v5926 = vmul.f32 %v5886, %v5925
  %v5927 = vrcp.pop %v5906
  %v5928 = vmul.f32 %v5888, %v5927
  %v5929 = vrcp.pop %v5909
  %v5930 = vmul.f32 %v5890, %v5929
  %v5931 = vrcp.pop %v5912
  %v5932 = vmul.f32 %v5892, %v5931
  %v5933 = vrcp.pop %v5915
  %v5934 = vmul.f32 %v5894, %v5933
  %v5935 = vrcp.pop %v5918
  %v5936 = vmul.f32 %v5896, %v5935
  %v5937 = vrcp.pop %v5921
  %v5938 = vmul.f32 %v5898, %v5937
  %v5939 = vrcp.pop %v5924
  %v5940 = vmul.f32 %v5900, %v5939
  %v5941 = vpack.c.bf16 %v5926, %v5926
  %v5942 = vpack.c.bf16 %v5928, %v5928
  %v5943 = vpack.c.bf16 %v5930, %v5930
  %v5944 = vpack.c.bf16 %v5932, %v5932
  %v5945 = vpack.c.bf16 %v5934, %v5934
  %v5946 = vpack.c.bf16 %v5936, %v5936
  %v5947 = vpack.c.bf16 %v5938, %v5938
  %v5948 = vpack.c.bf16 %v5940, %v5940
  %v5949 = vpack.c.bf16 %v5427, %v5427
  %v5950 = vpack.c.bf16 %v5445, %v5445
  %v5951 = vpack.c.bf16 %v5430, %v5430
  %v5952 = vpack.c.bf16 %v5446, %v5446
  %v5953 = vpack.c.bf16 %v5435, %v5435
  %v5954 = vpack.c.bf16 %v5447, %v5447
  %v5955 = vpack.c.bf16 %v5438, %v5438
  %v5956 = vpack.c.bf16 %v5448, %v5448
  %v5958 = vsel %vm362, %v5941, 0
  %v5961 = vsel %vm369, %v5949, 0
  %5963 = vmatprep.subr.bf16.mxu0 0
  %5964 = vmatpush1.bf16.msra.mxu0 %v5961
  %5965 = vmatprep.subr.bf16.mxu0 0
  %5966 = vmatpush1.bf16.msra.mxu0 0
  %5967 = vmatprep.subr.bf16.mxu0 0
  %5968 = vmatpush1.bf16.msra.mxu0 0
  %5969 = vmatprep.subr.bf16.mxu0 0
  %5970 = vmatpush1.bf16.msra.mxu0 0
  %5971 = vmatprep.subr.bf16.mxu0 0
  %5972 = vmatpush1.bf16.msra.mxu0 0
  %5973 = vmatprep.subr.bf16.mxu0 0
  %5974 = vmatpush1.bf16.msra.mxu0 0
  %5975 = vmatprep.subr.bf16.mxu0 0
  %5976 = vmatpush1.bf16.msra.mxu0 0
  %5977 = vmatprep.subr.bf16.mxu0 0
  %5978 = vmatpush1.bf16.msra.mxu0 0
  %5979 = vmatprep.subr.bf16.mxu0 0
  %5980 = vmatpush1.bf16.msra.mxu0 0
  %5981 = vmatprep.subr.bf16.mxu0 0
  %5982 = vmatpush1.bf16.msra.mxu0 0
  %5983 = vmatprep.subr.bf16.mxu0 0
  %5984 = vmatpush1.bf16.msra.mxu0 0
  %5985 = vmatprep.subr.bf16.mxu0 0
  %5986 = vmatpush1.bf16.msra.mxu0 0
  %5987 = vmatprep.subr.bf16.mxu0 0
  %5988 = vmatpush1.bf16.msra.mxu0 0
  %5989 = vmatprep.subr.bf16.mxu0 0
  %5990 = vmatpush1.bf16.msra.mxu0 0
  %5991 = vmatprep.subr.bf16.mxu0 0
  %5992 = vmatpush1.bf16.msra.mxu0 0
  %5993 = vmatprep.subr.bf16.mxu0 0
  %5994 = vmatpush1.bf16.msra.mxu0 0
  %5995 = vmatprep.mubr.bf16.mxu0 0
  %5996 = vmatmul.mubr.bf16.gmra.mrb[0].mxu0 %v5958
  %v5997 = vpop.f32.mrb[0].mxu0
  %v5998 = vadd.f32 0.0, %v5997
  %v5999 = vpop.f32.mrb[0].mxu0
  %v6000 = vpop.f32.mrb[0].mxu0
  %v6001 = vpop.f32.mrb[0].mxu0
  %6002 = vdwg.mxu0
  %v6004 = vsel %vm362, %v5942, 0
  %v6007 = vsel %vm369, %v5950, 0
  %6009 = vmatprep.subr.bf16.mxu0 0
  %6010 = vmatpush1.bf16.msra.mxu0 %v6007
  %6011 = vmatprep.subr.bf16.mxu0 0
  %6012 = vmatpush1.bf16.msra.mxu0 0
  %6013 = vmatprep.subr.bf16.mxu0 0
  %6014 = vmatpush1.bf16.msra.mxu0 0
  %6015 = vmatprep.subr.bf16.mxu0 0
  %6016 = vmatpush1.bf16.msra.mxu0 0
  %6017 = vmatprep.subr.bf16.mxu0 0
  %6018 = vmatpush1.bf16.msra.mxu0 0
  %6019 = vmatprep.subr.bf16.mxu0 0
  %6020 = vmatpush1.bf16.msra.mxu0 0
  %6021 = vmatprep.subr.bf16.mxu0 0
  %6022 = vmatpush1.bf16.msra.mxu0 0
  %6023 = vmatprep.subr.bf16.mxu0 0
  %6024 = vmatpush1.bf16.msra.mxu0 0
  %6025 = vmatprep.subr.bf16.mxu0 0
  %6026 = vmatpush1.bf16.msra.mxu0 0
  %6027 = vmatprep.subr.bf16.mxu0 0
  %6028 = vmatpush1.bf16.msra.mxu0 0
  %6029 = vmatprep.subr.bf16.mxu0 0
  %6030 = vmatpush1.bf16.msra.mxu0 0
  %6031 = vmatprep.subr.bf16.mxu0 0
  %6032 = vmatpush1.bf16.msra.mxu0 0
  %6033 = vmatprep.subr.bf16.mxu0 0
  %6034 = vmatpush1.bf16.msra.mxu0 0
  %6035 = vmatprep.subr.bf16.mxu0 0
  %6036 = vmatpush1.bf16.msra.mxu0 0
  %6037 = vmatprep.subr.bf16.mxu0 0
  %6038 = vmatpush1.bf16.msra.mxu0 0
  %6039 = vmatprep.subr.bf16.mxu0 0
  %6040 = vmatpush1.bf16.msra.mxu0 0
  %6041 = vmatprep.mubr.bf16.mxu0 0
  %6042 = vmatmul.mubr.bf16.gmra.mrb[0].mxu0 %v6004
  %v6043 = vpop.f32.mrb[0].mxu0
  %v6044 = vadd.f32 0.0, %v6043
  %v6045 = vpop.f32.mrb[0].mxu0
  %v6046 = vpop.f32.mrb[0].mxu0
  %v6047 = vpop.f32.mrb[0].mxu0
  %6048 = vdwg.mxu0
  %v6050 = vsel %vm362, %v5943, 0
  %v6053 = vsel %vm369, %v5951, 0
  %6055 = vmatprep.subr.bf16.mxu0 0
  %6056 = vmatpush1.bf16.msra.mxu0 %v6053
  %6057 = vmatprep.subr.bf16.mxu0 0
  %6058 = vmatpush1.bf16.msra.mxu0 0
  %6059 = vmatprep.subr.bf16.mxu0 0
  %6060 = vmatpush1.bf16.msra.mxu0 0
  %6061 = vmatprep.subr.bf16.mxu0 0
  %6062 = vmatpush1.bf16.msra.mxu0 0
  %6063 = vmatprep.subr.bf16.mxu0 0
  %6064 = vmatpush1.bf16.msra.mxu0 0
  %6065 = vmatprep.subr.bf16.mxu0 0
  %6066 = vmatpush1.bf16.msra.mxu0 0
  %6067 = vmatprep.subr.bf16.mxu0 0
  %6068 = vmatpush1.bf16.msra.mxu0 0
  %6069 = vmatprep.subr.bf16.mxu0 0
  %6070 = vmatpush1.bf16.msra.mxu0 0
  %6071 = vmatprep.subr.bf16.mxu0 0
  %6072 = vmatpush1.bf16.msra.mxu0 0
  %6073 = vmatprep.subr.bf16.mxu0 0
  %6074 = vmatpush1.bf16.msra.mxu0 0
  %6075 = vmatprep.subr.bf16.mxu0 0
  %6076 = vmatpush1.bf16.msra.mxu0 0
  %6077 = vmatprep.subr.bf16.mxu0 0
  %6078 = vmatpush1.bf16.msra.mxu0 0
  %6079 = vmatprep.subr.bf16.mxu0 0
  %6080 = vmatpush1.bf16.msra.mxu0 0
  %6081 = vmatprep.subr.bf16.mxu0 0
  %6082 = vmatpush1.bf16.msra.mxu0 0
  %6083 = vmatprep.subr.bf16.mxu0 0
  %6084 = vmatpush1.bf16.msra.mxu0 0
  %6085 = vmatprep.subr.bf16.mxu0 0
  %6086 = vmatpush1.bf16.msra.mxu0 0
  %6087 = vmatprep.mubr.bf16.mxu0 0
  %6088 = vmatmul.mubr.bf16.gmra.mrb[0].mxu0 %v6050
  %v6089 = vpop.f32.mrb[0].mxu0
  %v6090 = vadd.f32 0.0, %v6089
  %v6091 = vpop.f32.mrb[0].mxu0
  %v6092 = vpop.f32.mrb[0].mxu0
  %v6093 = vpop.f32.mrb[0].mxu0
  %6094 = vdwg.mxu0
  %v6096 = vsel %vm362, %v5944, 0
  %v6099 = vsel %vm369, %v5952, 0
  %6101 = vmatprep.subr.bf16.mxu0 0
  %6102 = vmatpush1.bf16.msra.mxu0 %v6099
  %6103 = vmatprep.subr.bf16.mxu0 0
  %6104 = vmatpush1.bf16.msra.mxu0 0
  %6105 = vmatprep.subr.bf16.mxu0 0
  %6106 = vmatpush1.bf16.msra.mxu0 0
  %6107 = vmatprep.subr.bf16.mxu0 0
  %6108 = vmatpush1.bf16.msra.mxu0 0
  %6109 = vmatprep.subr.bf16.mxu0 0
  %6110 = vmatpush1.bf16.msra.mxu0 0
  %6111 = vmatprep.subr.bf16.mxu0 0
  %6112 = vmatpush1.bf16.msra.mxu0 0
  %6113 = vmatprep.subr.bf16.mxu0 0
  %6114 = vmatpush1.bf16.msra.mxu0 0
  %6115 = vmatprep.subr.bf16.mxu0 0
  %6116 = vmatpush1.bf16.msra.mxu0 0
  %6117 = vmatprep.subr.bf16.mxu0 0
  %6118 = vmatpush1.bf16.msra.mxu0 0
  %6119 = vmatprep.subr.bf16.mxu0 0
  %6120 = vmatpush1.bf16.msra.mxu0 0
  %6121 = vmatprep.subr.bf16.mxu0 0
  %6122 = vmatpush1.bf16.msra.mxu0 0
  %6123 = vmatprep.subr.bf16.mxu0 0
  %6124 = vmatpush1.bf16.msra.mxu0 0
  %6125 = vmatprep.subr.bf16.mxu0 0
  %6126 = vmatpush1.bf16.msra.mxu0 0
  %6127 = vmatprep.subr.bf16.mxu0 0
  %6128 = vmatpush1.bf16.msra.mxu0 0
  %6129 = vmatprep.subr.bf16.mxu0 0
  %6130 = vmatpush1.bf16.msra.mxu0 0
  %6131 = vmatprep.subr.bf16.mxu0 0
  %6132 = vmatpush1.bf16.msra.mxu0 0
  %6133 = vmatprep.mubr.bf16.mxu0 0
  %6134 = vmatmul.mubr.bf16.gmra.mrb[0].mxu0 %v6096
  %v6135 = vpop.f32.mrb[0].mxu0
  %v6136 = vadd.f32 0.0, %v6135
  %v6137 = vpop.f32.mrb[0].mxu0
  %v6138 = vpop.f32.mrb[0].mxu0
  %v6139 = vpop.f32.mrb[0].mxu0
  %6140 = vdwg.mxu0
  %v6142 = vsel %vm362, %v5945, 0
  %v6145 = vsel %vm369, %v5953, 0
  %6147 = vmatprep.subr.bf16.mxu0 0
  %6148 = vmatpush1.bf16.msra.mxu0 %v6145
  %6149 = vmatprep.subr.bf16.mxu0 0
  %6150 = vmatpush1.bf16.msra.mxu0 0
  %6151 = vmatprep.subr.bf16.mxu0 0
  %6152 = vmatpush1.bf16.msra.mxu0 0
  %6153 = vmatprep.subr.bf16.mxu0 0
  %6154 = vmatpush1.bf16.msra.mxu0 0
  %6155 = vmatprep.subr.bf16.mxu0 0
  %6156 = vmatpush1.bf16.msra.mxu0 0
  %6157 = vmatprep.subr.bf16.mxu0 0
  %6158 = vmatpush1.bf16.msra.mxu0 0
  %6159 = vmatprep.subr.bf16.mxu0 0
  %6160 = vmatpush1.bf16.msra.mxu0 0
  %6161 = vmatprep.subr.bf16.mxu0 0
  %6162 = vmatpush1.bf16.msra.mxu0 0
  %6163 = vmatprep.subr.bf16.mxu0 0
  %6164 = vmatpush1.bf16.msra.mxu0 0
  %6165 = vmatprep.subr.bf16.mxu0 0
  %6166 = vmatpush1.bf16.msra.mxu0 0
  %6167 = vmatprep.subr.bf16.mxu0 0
  %6168 = vmatpush1.bf16.msra.mxu0 0
  %6169 = vmatprep.subr.bf16.mxu0 0
  %6170 = vmatpush1.bf16.msra.mxu0 0
  %6171 = vmatprep.subr.bf16.mxu0 0
  %6172 = vmatpush1.bf16.msra.mxu0 0
  %6173 = vmatprep.subr.bf16.mxu0 0
  %6174 = vmatpush1.bf16.msra.mxu0 0
  %6175 = vmatprep.subr.bf16.mxu0 0
  %6176 = vmatpush1.bf16.msra.mxu0 0
  %6177 = vmatprep.subr.bf16.mxu0 0
  %6178 = vmatpush1.bf16.msra.mxu0 0
  %6179 = vmatprep.mubr.bf16.mxu0 0
  %6180 = vmatmul.mubr.bf16.gmra.mrb[0].mxu0 %v6142
  %v6181 = vpop.f32.mrb[0].mxu0
  %v6182 = vadd.f32 0.0, %v6181
  %v6183 = vpop.f32.mrb[0].mxu0
  %v6184 = vpop.f32.mrb[0].mxu0
  %v6185 = vpop.f32.mrb[0].mxu0
  %6186 = vdwg.mxu0
  %v6188 = vsel %vm362, %v5946, 0
  %v6191 = vsel %vm369, %v5954, 0
  %6193 = vmatprep.subr.bf16.mxu0 0
  %6194 = vmatpush1.bf16.msra.mxu0 %v6191
  %6195 = vmatprep.subr.bf16.mxu0 0
  %6196 = vmatpush1.bf16.msra.mxu0 0
  %6197 = vmatprep.subr.bf16.mxu0 0
  %6198 = vmatpush1.bf16.msra.mxu0 0
  %6199 = vmatprep.subr.bf16.mxu0 0
  %6200 = vmatpush1.bf16.msra.mxu0 0
  %6201 = vmatprep.subr.bf16.mxu0 0
  %6202 = vmatpush1.bf16.msra.mxu0 0
  %6203 = vmatprep.subr.bf16.mxu0 0
  %6204 = vmatpush1.bf16.msra.mxu0 0
  %6205 = vmatprep.subr.bf16.mxu0 0
  %6206 = vmatpush1.bf16.msra.mxu0 0
  %6207 = vmatprep.subr.bf16.mxu0 0
  %6208 = vmatpush1.bf16.msra.mxu0 0
  %6209 = vmatprep.subr.bf16.mxu0 0
  %6210 = vmatpush1.bf16.msra.mxu0 0
  %6211 = vmatprep.subr.bf16.mxu0 0
  %6212 = vmatpush1.bf16.msra.mxu0 0
  %6213 = vmatprep.subr.bf16.mxu0 0
  %6214 = vmatpush1.bf16.msra.mxu0 0
  %6215 = vmatprep.subr.bf16.mxu0 0
  %6216 = vmatpush1.bf16.msra.mxu0 0
  %6217 = vmatprep.subr.bf16.mxu0 0
  %6218 = vmatpush1.bf16.msra.mxu0 0
  %6219 = vmatprep.subr.bf16.mxu0 0
  %6220 = vmatpush1.bf16.msra.mxu0 0
  %6221 = vmatprep.subr.bf16.mxu0 0
  %6222 = vmatpush1.bf16.msra.mxu0 0
  %6223 = vmatprep.subr.bf16.mxu0 0
  %6224 = vmatpush1.bf16.msra.mxu0 0
  %6225 = vmatprep.mubr.bf16.mxu0 0
  %6226 = vmatmul.mubr.bf16.gmra.mrb[0].mxu0 %v6188
  %v6227 = vpop.f32.mrb[0].mxu0
  %v6228 = vadd.f32 0.0, %v6227
  %v6229 = vpop.f32.mrb[0].mxu0
  %v6230 = vpop.f32.mrb[0].mxu0
  %v6231 = vpop.f32.mrb[0].mxu0
  %6232 = vdwg.mxu0
  %v6234 = vsel %vm362, %v5947, 0
  %v6237 = vsel %vm369, %v5955, 0
  %6239 = vmatprep.subr.bf16.mxu0 0
  %6240 = vmatpush1.bf16.msra.mxu0 %v6237
  %6241 = vmatprep.subr.bf16.mxu0 0
  %6242 = vmatpush1.bf16.msra.mxu0 0
  %6243 = vmatprep.subr.bf16.mxu0 0
  %6244 = vmatpush1.bf16.msra.mxu0 0
  %6245 = vmatprep.subr.bf16.mxu0 0
  %6246 = vmatpush1.bf16.msra.mxu0 0
  %6247 = vmatprep.subr.bf16.mxu0 0
  %6248 = vmatpush1.bf16.msra.mxu0 0
  %6249 = vmatprep.subr.bf16.mxu0 0
  %6250 = vmatpush1.bf16.msra.mxu0 0
  %6251 = vmatprep.subr.bf16.mxu0 0
  %6252 = vmatpush1.bf16.msra.mxu0 0
  %6253 = vmatprep.subr.bf16.mxu0 0
  %6254 = vmatpush1.bf16.msra.mxu0 0
  %6255 = vmatprep.subr.bf16.mxu0 0
  %6256 = vmatpush1.bf16.msra.mxu0 0
  %6257 = vmatprep.subr.bf16.mxu0 0
  %6258 = vmatpush1.bf16.msra.mxu0 0
  %6259 = vmatprep.subr.bf16.mxu0 0
  %6260 = vmatpush1.bf16.msra.mxu0 0
  %6261 = vmatprep.subr.bf16.mxu0 0
  %6262 = vmatpush1.bf16.msra.mxu0 0
  %6263 = vmatprep.subr.bf16.mxu0 0
  %6264 = vmatpush1.bf16.msra.mxu0 0
  %6265 = vmatprep.subr.bf16.mxu0 0
  %6266 = vmatpush1.bf16.msra.mxu0 0
  %6267 = vmatprep.subr.bf16.mxu0 0
  %6268 = vmatpush1.bf16.msra.mxu0 0
  %6269 = vmatprep.subr.bf16.mxu0 0
  %6270 = vmatpush1.bf16.msra.mxu0 0
  %6271 = vmatprep.mubr.bf16.mxu0 0
  %6272 = vmatmul.mubr.bf16.gmra.mrb[0].mxu0 %v6234
  %v6273 = vpop.f32.mrb[0].mxu0
  %v6274 = vadd.f32 0.0, %v6273
  %v6275 = vpop.f32.mrb[0].mxu0
  %v6276 = vpop.f32.mrb[0].mxu0
  %v6277 = vpop.f32.mrb[0].mxu0
  %6278 = vdwg.mxu0
  %v6280 = vsel %vm362, %v5948, 0
  %v6283 = vsel %vm369, %v5956, 0
  %6285 = vmatprep.subr.bf16.mxu0 0
  %6286 = vmatpush1.bf16.msra.mxu0 %v6283
  %6287 = vmatprep.subr.bf16.mxu0 0
  %6288 = vmatpush1.bf16.msra.mxu0 0
  %6289 = vmatprep.subr.bf16.mxu0 0
  %6290 = vmatpush1.bf16.msra.mxu0 0
  %6291 = vmatprep.subr.bf16.mxu0 0
  %6292 = vmatpush1.bf16.msra.mxu0 0
  %6293 = vmatprep.subr.bf16.mxu0 0
  %6294 = vmatpush1.bf16.msra.mxu0 0
  %6295 = vmatprep.subr.bf16.mxu0 0
  %6296 = vmatpush1.bf16.msra.mxu0 0
  %6297 = vmatprep.subr.bf16.mxu0 0
  %6298 = vmatpush1.bf16.msra.mxu0 0
  %6299 = vmatprep.subr.bf16.mxu0 0
  %6300 = vmatpush1.bf16.msra.mxu0 0
  %6301 = vmatprep.subr.bf16.mxu0 0
  %6302 = vmatpush1.bf16.msra.mxu0 0
  %6303 = vmatprep.subr.bf16.mxu0 0
  %6304 = vmatpush1.bf16.msra.mxu0 0
  %6305 = vmatprep.subr.bf16.mxu0 0
  %6306 = vmatpush1.bf16.msra.mxu0 0
  %6307 = vmatprep.subr.bf16.mxu0 0
  %6308 = vmatpush1.bf16.msra.mxu0 0
  %6309 = vmatprep.subr.bf16.mxu0 0
  %6310 = vmatpush1.bf16.msra.mxu0 0
  %6311 = vmatprep.subr.bf16.mxu0 0
  %6312 = vmatpush1.bf16.msra.mxu0 0
  %6313 = vmatprep.subr.bf16.mxu0 0
  %6314 = vmatpush1.bf16.msra.mxu0 0
  %6315 = vmatprep.subr.bf16.mxu0 0
  %6316 = vmatpush1.bf16.msra.mxu0 0
  %6317 = vmatprep.mubr.bf16.mxu0 0
  %6318 = vmatmul.mubr.bf16.gmra.mrb[0].mxu0 %v6280
  %v6319 = vpop.f32.mrb[0].mxu0
  %v6320 = vadd.f32 0.0, %v6319
  %v6321 = vpop.f32.mrb[0].mxu0
  %v6322 = vpop.f32.mrb[0].mxu0
  %v6323 = vpop.f32.mrb[0].mxu0
  %6324 = vdwg.mxu0
  %v6333 = vcombine.low %v5998, %v6044
  %v6334 = vcombine.low %v6090, %v6136
  %v6335 = vcombine.low %v6182, %v6228
  %v6336 = vcombine.low %v6274, %v6320
  %v6341 = vpack.c.bf16 %v6334, %v6333
  %v6342 = vpack.c.bf16 %v6336, %v6335
  %s6343 = scalar_lea.vmem %s9, 24
  %v6344 = vld [vmem:[%s6343] sm:$0xf]
  %v6345 = vld [vmem:[%s6343 + $0x4] sm:$0xf]
  %v6348 = vunpack.c.l.b16 %v6344
  %v6349 = vunpack.c.l.b16 %v6345
  %v6350 = vpack.c.b16 %v6349, %v6348
  %v6353 = vsel %vm1012, %v6341, 0
  %v6356 = vsel %vm1012, %v6342, 0
  %6358 = vmatprep.subr.bf16.mxu0 0
  %6359 = vmatpush1.bf16.msra.mxu0 %v6350
  %6360 = vmatprep.subr.bf16.mxu0 0
  %6361 = vmatpush1.bf16.msra.mxu0 0
  %6362 = vmatprep.subr.bf16.mxu0 0
  %6363 = vmatpush1.bf16.msra.mxu0 0
  %6364 = vmatprep.subr.bf16.mxu0 0
  %6365 = vmatpush1.bf16.msra.mxu0 0
  %6366 = vmatprep.subr.bf16.mxu0 0
  %6367 = vmatpush1.bf16.msra.mxu0 0
  %6368 = vmatprep.subr.bf16.mxu0 0
  %6369 = vmatpush1.bf16.msra.mxu0 0
  %6370 = vmatprep.subr.bf16.mxu0 0
  %6371 = vmatpush1.bf16.msra.mxu0 0
  %6372 = vmatprep.subr.bf16.mxu0 0
  %6373 = vmatpush1.bf16.msra.mxu0 0
  %6374 = vmatprep.subr.bf16.mxu0 0
  %6375 = vmatpush1.bf16.msra.mxu0 0
  %6376 = vmatprep.subr.bf16.mxu0 0
  %6377 = vmatpush1.bf16.msra.mxu0 0
  %6378 = vmatprep.subr.bf16.mxu0 0
  %6379 = vmatpush1.bf16.msra.mxu0 0
  %6380 = vmatprep.subr.bf16.mxu0 0
  %6381 = vmatpush1.bf16.msra.mxu0 0
  %6382 = vmatprep.subr.bf16.mxu0 0
  %6383 = vmatpush1.bf16.msra.mxu0 0
  %6384 = vmatprep.subr.bf16.mxu0 0
  %6385 = vmatpush1.bf16.msra.mxu0 0
  %6386 = vmatprep.subr.bf16.mxu0 0
  %6387 = vmatpush1.bf16.msra.mxu0 0
  %6388 = vmatprep.subr.bf16.mxu0 0
  %6389 = vmatpush1.bf16.msra.mxu0 0
  %6390 = vmatprep.mubr.bf16.mxu0 0
  %6391 = vmatmul.mubr.bf16.gmra.mrb[0].mxu0 %v6353
  %v6392 = vpop.f32.mrb[0].mxu0
  %v6393 = vadd.f32 0.0, %v6392
  %v6394 = vpop.f32.mrb[0].mxu0
  %v6395 = vpop.f32.mrb[0].mxu0
  %v6396 = vadd.f32 0.0, %v6395
  %v6397 = vpop.f32.mrb[0].mxu0
  %6398 = vmatprep.mubr.bf16.mxu0 0
  %6399 = vmatmul.mubr.bf16.gmra.mrb[0].mxu0 %v6356
  %v6400 = vpop.f32.mrb[0].mxu0
  %v6401 = vadd.f32 0.0, %v6400
  %v6402 = vpop.f32.mrb[0].mxu0
  %v6403 = vpop.f32.mrb[0].mxu0
  %v6404 = vadd.f32 0.0, %v6403
  %v6405 = vpop.f32.mrb[0].mxu0
  %6406 = vdwg.mxu0
  %v6409 = vunpack.c.l.b16 %v5193
  %v6410 = vunpack.c.l.b16 %v5194
  %v6411 = vpack.c.b16 %v6410, %v6409
  %v6414 = vsel %vm1012, %v5190, 0
  %v6417 = vsel %vm1012, %v5191, 0
  %6419 = vmatprep.subr.bf16.mxu0 0
  %6420 = vmatpush1.bf16.msra.mxu0 %v6411
  %6421 = vmatprep.subr.bf16.mxu0 0
  %6422 = vmatpush1.bf16.msra.mxu0 0
  %6423 = vmatprep.subr.bf16.mxu0 0
  %6424 = vmatpush1.bf16.msra.mxu0 0
  %6425 = vmatprep.subr.bf16.mxu0 0
  %6426 = vmatpush1.bf16.msra.mxu0 0
  %6427 = vmatprep.subr.bf16.mxu0 0
  %6428 = vmatpush1.bf16.msra.mxu0 0
  %6429 = vmatprep.subr.bf16.mxu0 0
  %6430 = vmatpush1.bf16.msra.mxu0 0
  %6431 = vmatprep.subr.bf16.mxu0 0
  %6432 = vmatpush1.bf16.msra.mxu0 0
  %6433 = vmatprep.subr.bf16.mxu0 0
  %6434 = vmatpush1.bf16.msra.mxu0 0
  %6435 = vmatprep.subr.bf16.mxu0 0
  %6436 = vmatpush1.bf16.msra.mxu0 0
  %6437 = vmatprep.subr.bf16.mxu0 0
  %6438 = vmatpush1.bf16.msra.mxu0 0
  %6439 = vmatprep.subr.bf16.mxu0 0
  %6440 = vmatpush1.bf16.msra.mxu0 0
  %6441 = vmatprep.subr.bf16.mxu0 0
  %6442 = vmatpush1.bf16.msra.mxu0 0
  %6443 = vmatprep.subr.bf16.mxu0 0
  %6444 = vmatpush1.bf16.msra.mxu0 0
  %6445 = vmatprep.subr.bf16.mxu0 0
  %6446 = vmatpush1.bf16.msra.mxu0 0
  %6447 = vmatprep.subr.bf16.mxu0 0
  %6448 = vmatpush1.bf16.msra.mxu0 0
  %6449 = vmatprep.subr.bf16.mxu0 0
  %6450 = vmatpush1.bf16.msra.mxu0 0
  %6451 = vmatprep.mubr.bf16.mxu0 0
  %6452 = vmatmul.mubr.bf16.gmra.mrb[0].mxu0 %v6414
  %v6453 = vpop.f32.mrb[0].mxu0
  %v6454 = vadd.f32 %v6393, %v6453
  %v6455 = vpop.f32.mrb[0].mxu0
  %v6456 = vpop.f32.mrb[0].mxu0
  %v6457 = vadd.f32 %v6396, %v6456
  %v6458 = vpop.f32.mrb[0].mxu0
  %6459 = vmatprep.mubr.bf16.mxu0 0
  %6460 = vmatmul.mubr.bf16.gmra.mrb[0].mxu0 %v6417
  %v6461 = vpop.f32.mrb[0].mxu0
  %v6462 = vadd.f32 %v6401, %v6461
  %v6463 = vpop.f32.mrb[0].mxu0
  %v6464 = vpop.f32.mrb[0].mxu0
  %v6465 = vadd.f32 %v6404, %v6464
  %v6466 = vpop.f32.mrb[0].mxu0
  %6467 = vdwg.mxu0
  %v6472 = vcombine.high %v6454, %v6454
  %v6473 = vcombine.high %v6457, %v6457
  %v6474 = vcombine.high %v6462, %v6462
  %v6475 = vcombine.high %v6465, %v6465
  %v6480 = vadd.f32 %v3744, %v6454
  %v6481 = vadd.f32 %v3745, %v6472
  %v6482 = vadd.f32 %v3746, %v6457
  %v6483 = vadd.f32 %v3747, %v6473
  %v6484 = vadd.f32 %v3748, %v6462
  %v6485 = vadd.f32 %v3749, %v6474
  %v6486 = vadd.f32 %v3750, %v6465
  %v6487 = vadd.f32 %v3751, %v6475
  %s6488 = scalar_lea.vmem %s10, 1
  %v6489 = vld [vmem:[%s6488] sm:$0x1]
  %v6491 = vlaneseq
  %v6492 = vshrl.u32 %v6491, 7
  %v6493 = vsub.s32 0, %v6492
  %v6494 = vrot.slane %v6489, %v6493
  %v6496 = vcombine.high %v6494, %v6494
  %v6498 = vadd.f32 %v6480, %v6494
  %v6499 = vadd.f32 %v6481, %v6496
  %v6500 = vadd.f32 %v6482, %v6494
  %v6501 = vadd.f32 %v6483, %v6496
  %v6502 = vadd.f32 %v6484, %v6494
  %v6503 = vadd.f32 %v6485, %v6496
  %v6504 = vadd.f32 %v6486, %v6494
  %v6505 = vadd.f32 %v6487, %v6496
  %s6506 = scalar_lea.vmem %s11, 1
  %v6507 = vld [vmem:[%s6506] sm:$0x1]
  %s6508 = scalar_lea.vmem %s12, 1
  %v6509 = vld [vmem:[%s6508] sm:$0x1]
  %v6518 = vcombine.low %v6498, %v6499
  %v6519 = vcombine.low %v6500, %v6501
  %v6520 = vcombine.low %v6502, %v6503
  %v6521 = vcombine.low %v6504, %v6505
  %v6526 = vsel %vm466, %v6518, 0.0
  %6527 = vadd.xlane.f32.xlu0 %v6526
  %v6528 = vpop.xlane.xlu0 %6527
  %v6529 = vsel %vm466, %v6519, 0.0
  %6530 = vadd.xlane.f32.xlu0 %v6529
  %v6531 = vpop.xlane.xlu0 %6530
  %v6532 = vsel %vm466, %v6520, 0.0
  %6533 = vadd.xlane.f32.xlu0 %v6532
  %v6534 = vpop.xlane.xlu0 %6533
  %v6535 = vsel %vm466, %v6521, 0.0
  %6536 = vadd.xlane.f32.xlu0 %v6535
  %v6537 = vpop.xlane.xlu0 %6536
  %v6538 = vmul.f32 %v6528, %v479
  %v6539 = vmul.f32 %v6531, %v479
  %v6540 = vmul.f32 %v6534, %v479
  %v6541 = vmul.f32 %v6537, %v479
  %v6547 = vunpack.c.l.s4 839922192
  %v6548 = vunpack.c.0.s8 %v6547
  %v6549 = vlaneseq
  %v6550 = vshrl.u32 %v6549, 7
  %v6551 = vsub.s32 %v6548, %v6550
  %v6552 = vrot.slane %v6538, %v6551
  %v6554 = vunpack.c.l.s4 1985246804
  %v6555 = vunpack.c.0.s8 %v6554
  %v6556 = vlaneseq
  %v6557 = vshrl.u32 %v6556, 7
  %v6558 = vsub.s32 %v6555, %v6557
  %v6559 = vrot.slane %v6538, %v6558
  %v6561 = vunpack.c.l.s4 839922192
  %v6562 = vunpack.c.0.s8 %v6561
  %v6563 = vlaneseq
  %v6564 = vshrl.u32 %v6563, 7
  %v6565 = vsub.s32 %v6562, %v6564
  %v6566 = vrot.slane %v6539, %v6565
  %v6568 = vunpack.c.l.s4 1985246804
  %v6569 = vunpack.c.0.s8 %v6568
  %v6570 = vlaneseq
  %v6571 = vshrl.u32 %v6570, 7
  %v6572 = vsub.s32 %v6569, %v6571
  %v6573 = vrot.slane %v6539, %v6572
  %v6575 = vunpack.c.l.s4 839922192
  %v6576 = vunpack.c.0.s8 %v6575
  %v6577 = vlaneseq
  %v6578 = vshrl.u32 %v6577, 7
  %v6579 = vsub.s32 %v6576, %v6578
  %v6580 = vrot.slane %v6540, %v6579
  %v6582 = vunpack.c.l.s4 1985246804
  %v6583 = vunpack.c.0.s8 %v6582
  %v6584 = vlaneseq
  %v6585 = vshrl.u32 %v6584, 7
  %v6586 = vsub.s32 %v6583, %v6585
  %v6587 = vrot.slane %v6540, %v6586
  %v6589 = vunpack.c.l.s4 839922192
  %v6590 = vunpack.c.0.s8 %v6589
  %v6591 = vlaneseq
  %v6592 = vshrl.u32 %v6591, 7
  %v6593 = vsub.s32 %v6590, %v6592
  %v6594 = vrot.slane %v6541, %v6593
  %v6596 = vunpack.c.l.s4 1985246804
  %v6597 = vunpack.c.0.s8 %v6596
  %v6598 = vlaneseq
  %v6599 = vshrl.u32 %v6598, 7
  %v6600 = vsub.s32 %v6597, %v6599
  %v6601 = vrot.slane %v6541, %v6600
  %v6610 = vsub.f32 %v6498, %v6552
  %v6611 = vsub.f32 %v6499, %v6559
  %v6612 = vsub.f32 %v6500, %v6566
  %v6613 = vsub.f32 %v6501, %v6573
  %v6614 = vsub.f32 %v6502, %v6580
  %v6615 = vsub.f32 %v6503, %v6587
  %v6616 = vsub.f32 %v6504, %v6594
  %v6617 = vsub.f32 %v6505, %v6601
  %v6618 = vmul.f32 %v6610, %v6610
  %v6619 = vmul.f32 %v6611, %v6611
  %v6620 = vmul.f32 %v6612, %v6612
  %v6621 = vmul.f32 %v6613, %v6613
  %v6622 = vmul.f32 %v6614, %v6614
  %v6623 = vmul.f32 %v6615, %v6615
  %v6624 = vmul.f32 %v6616, %v6616
  %v6625 = vmul.f32 %v6617, %v6617
  %v6634 = vcombine.low %v6618, %v6619
  %v6635 = vcombine.low %v6620, %v6621
  %v6636 = vcombine.low %v6622, %v6623
  %v6637 = vcombine.low %v6624, %v6625
  %v6642 = vsel %vm466, %v6634, 0.0
  %6643 = vadd.xlane.f32.xlu0 %v6642
  %v6644 = vpop.xlane.xlu0 %6643
  %v6645 = vsel %vm466, %v6635, 0.0
  %6646 = vadd.xlane.f32.xlu0 %v6645
  %v6647 = vpop.xlane.xlu0 %6646
  %v6648 = vsel %vm466, %v6636, 0.0
  %6649 = vadd.xlane.f32.xlu0 %v6648
  %v6650 = vpop.xlane.xlu0 %6649
  %v6651 = vsel %vm466, %v6637, 0.0
  %6652 = vadd.xlane.f32.xlu0 %v6651
  %v6653 = vpop.xlane.xlu0 %6652
  %v6654 = vmul.f32 %v6644, %v479
  %v6655 = vmul.f32 %v6647, %v479
  %v6656 = vmul.f32 %v6650, %v479
  %v6657 = vmul.f32 %v6653, %v479
  %v6658 = vadd.f32 %v6654, 1e-05
  %v6659 = vadd.f32 %v6655, 1e-05
  %v6660 = vadd.f32 %v6656, 1e-05
  %v6661 = vadd.f32 %v6657, 1e-05
  %v6662 = vrsqrt.pop %v6658
  %v6663 = vrsqrt.pop %v6659
  %v6664 = vrsqrt.pop %v6660
  %v6665 = vrsqrt.pop %v6661
  %v6671 = vunpack.c.l.s4 839922192
  %v6672 = vunpack.c.0.s8 %v6671
  %v6673 = vlaneseq
  %v6674 = vshrl.u32 %v6673, 7
  %v6675 = vsub.s32 %v6672, %v6674
  %v6676 = vrot.slane %v6662, %v6675
  %v6678 = vunpack.c.l.s4 1985246804
  %v6679 = vunpack.c.0.s8 %v6678
  %v6680 = vlaneseq
  %v6681 = vshrl.u32 %v6680, 7
  %v6682 = vsub.s32 %v6679, %v6681
  %v6683 = vrot.slane %v6662, %v6682
  %v6685 = vunpack.c.l.s4 839922192
  %v6686 = vunpack.c.0.s8 %v6685
  %v6687 = vlaneseq
  %v6688 = vshrl.u32 %v6687, 7
  %v6689 = vsub.s32 %v6686, %v6688
  %v6690 = vrot.slane %v6663, %v6689
  %v6692 = vunpack.c.l.s4 1985246804
  %v6693 = vunpack.c.0.s8 %v6692
  %v6694 = vlaneseq
  %v6695 = vshrl.u32 %v6694, 7
  %v6696 = vsub.s32 %v6693, %v6695
  %v6697 = vrot.slane %v6663, %v6696
  %v6699 = vunpack.c.l.s4 839922192
  %v6700 = vunpack.c.0.s8 %v6699
  %v6701 = vlaneseq
  %v6702 = vshrl.u32 %v6701, 7
  %v6703 = vsub.s32 %v6700, %v6702
  %v6704 = vrot.slane %v6664, %v6703
  %v6706 = vunpack.c.l.s4 1985246804
  %v6707 = vunpack.c.0.s8 %v6706
  %v6708 = vlaneseq
  %v6709 = vshrl.u32 %v6708, 7
  %v6710 = vsub.s32 %v6707, %v6709
  %v6711 = vrot.slane %v6664, %v6710
  %v6713 = vunpack.c.l.s4 839922192
  %v6714 = vunpack.c.0.s8 %v6713
  %v6715 = vlaneseq
  %v6716 = vshrl.u32 %v6715, 7
  %v6717 = vsub.s32 %v6714, %v6716
  %v6718 = vrot.slane %v6665, %v6717
  %v6720 = vunpack.c.l.s4 1985246804
  %v6721 = vunpack.c.0.s8 %v6720
  %v6722 = vlaneseq
  %v6723 = vshrl.u32 %v6722, 7
  %v6724 = vsub.s32 %v6721, %v6723
  %v6725 = vrot.slane %v6665, %v6724
  %v6734 = vmul.f32 %v6610, %v6676
  %v6735 = vmul.f32 %v6611, %v6683
  %v6736 = vmul.f32 %v6612, %v6690
  %v6737 = vmul.f32 %v6613, %v6697
  %v6738 = vmul.f32 %v6614, %v6704
  %v6739 = vmul.f32 %v6615, %v6711
  %v6740 = vmul.f32 %v6616, %v6718
  %v6741 = vmul.f32 %v6617, %v6725
  %v6743 = vlaneseq
  %v6744 = vshrl.u32 %v6743, 7
  %v6745 = vsub.s32 0, %v6744
  %v6746 = vrot.slane %v6507, %v6745
  %v6748 = vcombine.high %v6746, %v6746
  %v6750 = vmul.f32 %v6734, %v6746
  %v6751 = vmul.f32 %v6735, %v6748
  %v6752 = vmul.f32 %v6736, %v6746
  %v6753 = vmul.f32 %v6737, %v6748
  %v6754 = vmul.f32 %v6738, %v6746
  %v6755 = vmul.f32 %v6739, %v6748
  %v6756 = vmul.f32 %v6740, %v6746
  %v6757 = vmul.f32 %v6741, %v6748
  %v6759 = vlaneseq
  %v6760 = vshrl.u32 %v6759, 7
  %v6761 = vsub.s32 0, %v6760
  %v6762 = vrot.slane %v6509, %v6761
  %v6764 = vcombine.high %v6762, %v6762
  %v6766 = vadd.f32 %v6750, %v6762
  %v6767 = vadd.f32 %v6751, %v6764
  %v6768 = vadd.f32 %v6752, %v6762
  %v6769 = vadd.f32 %v6753, %v6764
  %v6770 = vadd.f32 %v6754, %v6762
  %v6771 = vadd.f32 %v6755, %v6764
  %v6772 = vadd.f32 %v6756, %v6762
  %v6773 = vadd.f32 %v6757, %v6764
  %s6774 = scalar_lea.vmem %s13, 16
  %v6775 = vld [vmem:[%s6774] sm:$0xf]
  %v6776 = vld [vmem:[%s6774 + $0x4] sm:$0xf]
  %v6777 = vld [vmem:[%s6774 + $0x8] sm:$0xf]
  %v6778 = vld [vmem:[%s6774 + $0xc] sm:$0xf]
  %v6787 = vcombine.low %v6766, %v6767
  %v6788 = vcombine.low %v6768, %v6769
  %v6789 = vcombine.low %v6770, %v6771
  %v6790 = vcombine.low %v6772, %v6773
  %v6795 = vpack.c.bf16 %v6788, %v6787
  %v6796 = vpack.c.bf16 %v6790, %v6789
  %s6797 = scalar_lea.vmem %s14, 1
  %v6798 = vld [vmem:[%s6797] sm:$0x1]
  %v6800 = vlaneseq
  %v6801 = vshrl.u32 %v6800, 7
  %v6802 = vsub.s32 0, %v6801
  %v6803 = vrot.slane %v6798, %v6802
  %v6809 = vunpack.c.l.b16 %v6775
  %v6810 = vunpack.c.l.b16 %v6776
  %v6811 = vunpack.c.l.b16 %v6777
  %v6812 = vunpack.c.l.b16 %v6778
  %v6813 = vpack.c.b16 %v6810, %v6809
  %v6814 = vpack.c.b16 %v6812, %v6811
  %v6818 = vsel %vm466, %v6795, 0
  %v6821 = vsel %vm466, %v6796, 0
  %6823 = vmatprep.subr.bf16.mxu0 0
  %6824 = vmatpush1.bf16.msra.mxu0 %v6813
  %6825 = vmatprep.subr.bf16.mxu0 0
  %6826 = vmatpush1.bf16.msra.mxu0 %v6814
  %6827 = vmatprep.subr.bf16.mxu0 0
  %6828 = vmatpush1.bf16.msra.mxu0 0
  %6829 = vmatprep.subr.bf16.mxu0 0
  %6830 = vmatpush1.bf16.msra.mxu0 0
  %6831 = vmatprep.subr.bf16.mxu0 0
  %6832 = vmatpush1.bf16.msra.mxu0 0
  %6833 = vmatprep.subr.bf16.mxu0 0
  %6834 = vmatpush1.bf16.msra.mxu0 0
  %6835 = vmatprep.subr.bf16.mxu0 0
  %6836 = vmatpush1.bf16.msra.mxu0 0
  %6837 = vmatprep.subr.bf16.mxu0 0
  %6838 = vmatpush1.bf16.msra.mxu0 0
  %6839 = vmatprep.subr.bf16.mxu0 0
  %6840 = vmatpush1.bf16.msra.mxu0 0
  %6841 = vmatprep.subr.bf16.mxu0 0
  %6842 = vmatpush1.bf16.msra.mxu0 0
  %6843 = vmatprep.subr.bf16.mxu0 0
  %6844 = vmatpush1.bf16.msra.mxu0 0
  %6845 = vmatprep.subr.bf16.mxu0 0
  %6846 = vmatpush1.bf16.msra.mxu0 0
  %6847 = vmatprep.subr.bf16.mxu0 0
  %6848 = vmatpush1.bf16.msra.mxu0 0
  %6849 = vmatprep.subr.bf16.mxu0 0
  %6850 = vmatpush1.bf16.msra.mxu0 0
  %6851 = vmatprep.subr.bf16.mxu0 0
  %6852 = vmatpush1.bf16.msra.mxu0 0
  %6853 = vmatprep.subr.bf16.mxu0 0
  %6854 = vmatpush1.bf16.msra.mxu0 0
  %6855 = vmatprep.mubr.bf16.mxu0 0
  %6856 = vmatmul.mubr.bf16.gmra.mrb[0].mxu0 %v6818
  %v6857 = vpop.f32.mrb[0].mxu0
  %v6858 = vadd.f32 %v6803, %v6857
  %v6859 = vpop.f32.mrb[0].mxu0
  %v6860 = vpop.f32.mrb[0].mxu0
  %v6861 = vadd.f32 %v6803, %v6860
  %v6862 = vpop.f32.mrb[0].mxu0
  %6863 = vmatprep.mubr.bf16.mxu0 0
  %6864 = vmatmul.mubr.bf16.gmra.mrb[0].mxu0 %v6821
  %v6865 = vpop.f32.mrb[0].mxu0
  %v6866 = vadd.f32 %v6803, %v6865
  %v6867 = vpop.f32.mrb[0].mxu0
  %v6868 = vpop.f32.mrb[0].mxu0
  %v6869 = vadd.f32 %v6803, %v6868
  %v6870 = vpop.f32.mrb[0].mxu0
  %6871 = vdwg.mxu0
  %v6872 = vmul.f32 %v6858, 0.5
  %v6873 = vmul.f32 %v6861, 0.5
  %v6874 = vmul.f32 %v6866, 0.5
  %v6875 = vmul.f32 %v6869, 0.5
  %v6876 = vmul.f32 %v6858, 0.044715
  %v6877 = vmul.f32 %v6861, 0.044715
  %v6878 = vmul.f32 %v6866, 0.044715
  %v6879 = vmul.f32 %v6869, 0.044715
  %v6880 = vmul.f32 %v6876, %v6858
  %v6881 = vmul.f32 %v6877, %v6861
  %v6882 = vmul.f32 %v6878, %v6866
  %v6883 = vmul.f32 %v6879, %v6869
  %v6884 = vmul.f32 %v6880, %v6858
  %v6885 = vmul.f32 %v6881, %v6861
  %v6886 = vmul.f32 %v6882, %v6866
  %v6887 = vmul.f32 %v6883, %v6869
  %v6888 = vadd.f32 %v6858, %v6884
  %v6889 = vadd.f32 %v6861, %v6885
  %v6890 = vadd.f32 %v6866, %v6886
  %v6891 = vadd.f32 %v6869, %v6887
  %v6892 = vmul.f32 %v6888, 0.7978846
  %v6893 = vmul.f32 %v6889, 0.7978846
  %v6894 = vmul.f32 %v6890, 0.7978846
  %v6895 = vmul.f32 %v6891, 0.7978846
  %v6896 = vtanh.pop %v6892
  %v6897 = vtanh.pop %v6893
  %v6898 = vtanh.pop %v6894
  %v6899 = vtanh.pop %v6895
  %v6900 = vadd.f32 %v6896, 1.0
  %v6901 = vadd.f32 %v6897, 1.0
  %v6902 = vadd.f32 %v6898, 1.0
  %v6903 = vadd.f32 %v6899, 1.0
  %v6904 = vmul.f32 %v6872, %v6900
  %v6905 = vmul.f32 %v6873, %v6901
  %v6906 = vmul.f32 %v6874, %v6902
  %v6907 = vmul.f32 %v6875, %v6903
  %v6908 = vpack.c.bf16 %v6905, %v6904
  %v6909 = vpack.c.bf16 %v6907, %v6906
  %s6910 = scalar_lea.vmem %s15, 64
  %v6911 = vld [vmem:[%s6910] sm:$0xf]
  %v6912 = vld [vmem:[%s6910 + $0x4] sm:$0xf]
  %v6913 = vld [vmem:[%s6910 + $0x8] sm:$0xf]
  %v6914 = vld [vmem:[%s6910 + $0xc] sm:$0xf]
  %v6915 = vld [vmem:[%s6910 + $0x10] sm:$0xf]
  %v6916 = vld [vmem:[%s6910 + $0x14] sm:$0xf]
  %v6917 = vld [vmem:[%s6910 + $0x18] sm:$0xf]
  %v6918 = vld [vmem:[%s6910 + $0x1c] sm:$0xf]
  %v6919 = vld [vmem:[%s6910 + $0x20] sm:$0xf]
  %v6920 = vld [vmem:[%s6910 + $0x24] sm:$0xf]
  %v6921 = vld [vmem:[%s6910 + $0x28] sm:$0xf]
  %v6922 = vld [vmem:[%s6910 + $0x2c] sm:$0xf]
  %v6923 = vld [vmem:[%s6910 + $0x30] sm:$0xf]
  %v6924 = vld [vmem:[%s6910 + $0x34] sm:$0xf]
  %v6925 = vld [vmem:[%s6910 + $0x38] sm:$0xf]
  %v6926 = vld [vmem:[%s6910 + $0x3c] sm:$0xf]
  %v6943 = vunpack.c.l.b16 %v6911
  %v6944 = vunpack.c.l.b16 %v6912
  %v6945 = vunpack.c.l.b16 %v6913
  %v6946 = vunpack.c.l.b16 %v6914
  %v6947 = vunpack.c.l.b16 %v6915
  %v6948 = vunpack.c.l.b16 %v6916
  %v6949 = vunpack.c.l.b16 %v6917
  %v6950 = vunpack.c.l.b16 %v6918
  %v6951 = vunpack.c.l.b16 %v6919
  %v6952 = vunpack.c.l.b16 %v6920
  %v6953 = vunpack.c.l.b16 %v6921
  %v6954 = vunpack.c.l.b16 %v6922
  %v6955 = vunpack.c.l.b16 %v6923
  %v6956 = vunpack.c.l.b16 %v6924
  %v6957 = vunpack.c.l.b16 %v6925
  %v6958 = vunpack.c.l.b16 %v6926
  %v6959 = vpack.c.b16 %v6944, %v6943
  %v6960 = vpack.c.b16 %v6946, %v6945
  %v6961 = vpack.c.b16 %v6948, %v6947
  %v6962 = vpack.c.b16 %v6950, %v6949
  %v6963 = vpack.c.b16 %v6952, %v6951
  %v6964 = vpack.c.b16 %v6954, %v6953
  %v6965 = vpack.c.b16 %v6956, %v6955
  %v6966 = vpack.c.b16 %v6958, %v6957
  %6975 = vmatprep.subr.bf16.mxu0 0
  %6976 = vmatpush1.bf16.msra.mxu0 %v6959
  %6977 = vmatprep.subr.bf16.mxu0 0
  %6978 = vmatpush1.bf16.msra.mxu0 %v6960
  %6979 = vmatprep.subr.bf16.mxu0 0
  %6980 = vmatpush1.bf16.msra.mxu0 %v6961
  %6981 = vmatprep.subr.bf16.mxu0 0
  %6982 = vmatpush1.bf16.msra.mxu0 %v6962
  %6983 = vmatprep.subr.bf16.mxu0 0
  %6984 = vmatpush1.bf16.msra.mxu0 %v6963
  %6985 = vmatprep.subr.bf16.mxu0 0
  %6986 = vmatpush1.bf16.msra.mxu0 %v6964
  %6987 = vmatprep.subr.bf16.mxu0 0
  %6988 = vmatpush1.bf16.msra.mxu0 %v6965
  %6989 = vmatprep.subr.bf16.mxu0 0
  %6990 = vmatpush1.bf16.msra.mxu0 %v6966
  %6991 = vmatprep.subr.bf16.mxu0 0
  %6992 = vmatpush1.bf16.msra.mxu0 0
  %6993 = vmatprep.subr.bf16.mxu0 0
  %6994 = vmatpush1.bf16.msra.mxu0 0
  %6995 = vmatprep.subr.bf16.mxu0 0
  %6996 = vmatpush1.bf16.msra.mxu0 0
  %6997 = vmatprep.subr.bf16.mxu0 0
  %6998 = vmatpush1.bf16.msra.mxu0 0
  %6999 = vmatprep.subr.bf16.mxu0 0
  %7000 = vmatpush1.bf16.msra.mxu0 0
  %7001 = vmatprep.subr.bf16.mxu0 0
  %7002 = vmatpush1.bf16.msra.mxu0 0
  %7003 = vmatprep.subr.bf16.mxu0 0
  %7004 = vmatpush1.bf16.msra.mxu0 0
  %7005 = vmatprep.subr.bf16.mxu0 0
  %7006 = vmatpush1.bf16.msra.mxu0 0
  %7007 = vmatprep.mubr.bf16.mxu0 0
  %7008 = vmatmul.mubr.bf16.gmra.mrb[0].mxu0 %v6908
  %v7009 = vpop.f32.mrb[0].mxu0
  %v7010 = vadd.f32 0.0, %v7009
  %v7011 = vpop.f32.mrb[0].mxu0
  %v7012 = vpop.f32.mrb[0].mxu0
  %v7013 = vadd.f32 0.0, %v7012
  %v7014 = vpop.f32.mrb[0].mxu0
  %7015 = vmatprep.mubr.bf16.mxu0 0
  %7016 = vmatmul.mubr.bf16.gmra.mrb[0].mxu0 %v6909
  %v7017 = vpop.f32.mrb[0].mxu0
  %v7018 = vadd.f32 0.0, %v7017
  %v7019 = vpop.f32.mrb[0].mxu0
  %v7020 = vpop.f32.mrb[0].mxu0
  %v7021 = vadd.f32 0.0, %v7020
  %v7022 = vpop.f32.mrb[0].mxu0
  %7023 = vdwg.mxu0
  %v7028 = vcombine.high %v7010, %v7010
  %v7029 = vcombine.high %v7013, %v7013
  %v7030 = vcombine.high %v7018, %v7018
  %v7031 = vcombine.high %v7021, %v7021
  %v7036 = vadd.f32 %v6498, %v7010
  %v7037 = vadd.f32 %v6499, %v7028
  %v7038 = vadd.f32 %v6500, %v7013
  %v7039 = vadd.f32 %v6501, %v7029
  %v7040 = vadd.f32 %v6502, %v7018
  %v7041 = vadd.f32 %v6503, %v7030
  %v7042 = vadd.f32 %v6504, %v7021
  %v7043 = vadd.f32 %v6505, %v7031
  %s7044 = scalar_lea.vmem %s16, 1
  %v7045 = vld [vmem:[%s7044] sm:$0x1]
  %v7047 = vlaneseq
  %v7048 = vshrl.u32 %v7047, 7
  %v7049 = vsub.s32 0, %v7048
  %v7050 = vrot.slane %v7045, %v7049
  %v7052 = vcombine.high %v7050, %v7050
  %v7054 = vadd.f32 %v7036, %v7050
  %v7055 = vadd.f32 %v7037, %v7052
  %v7056 = vadd.f32 %v7038, %v7050
  %v7057 = vadd.f32 %v7039, %v7052
  %v7058 = vadd.f32 %v7040, %v7050
  %v7059 = vadd.f32 %v7041, %v7052
  %v7060 = vadd.f32 %v7042, %v7050
  %v7061 = vadd.f32 %v7043, %v7052
  %v7062 = vld [vmem:[%s17] sm:$0x1]
  %v7063 = vld [vmem:[%s18] sm:$0x1]
  %v7072 = vcombine.low %v7054, %v7055
  %v7073 = vcombine.low %v7056, %v7057
  %v7074 = vcombine.low %v7058, %v7059
  %v7075 = vcombine.low %v7060, %v7061
  %v7080 = vsel %vm466, %v7072, 0.0
  %7081 = vadd.xlane.f32.xlu0 %v7080
  %v7082 = vpop.xlane.xlu0 %7081
  %v7083 = vsel %vm466, %v7073, 0.0
  %7084 = vadd.xlane.f32.xlu0 %v7083
  %v7085 = vpop.xlane.xlu0 %7084
  %v7086 = vsel %vm466, %v7074, 0.0
  %7087 = vadd.xlane.f32.xlu0 %v7086
  %v7088 = vpop.xlane.xlu0 %7087
  %v7089 = vsel %vm466, %v7075, 0.0
  %7090 = vadd.xlane.f32.xlu0 %v7089
  %v7091 = vpop.xlane.xlu0 %7090
  %v7092 = vmul.f32 %v7082, %v479
  %v7093 = vmul.f32 %v7085, %v479
  %v7094 = vmul.f32 %v7088, %v479
  %v7095 = vmul.f32 %v7091, %v479
  %v7101 = vunpack.c.l.s4 839922192
  %v7102 = vunpack.c.0.s8 %v7101
  %v7103 = vlaneseq
  %v7104 = vshrl.u32 %v7103, 7
  %v7105 = vsub.s32 %v7102, %v7104
  %v7106 = vrot.slane %v7092, %v7105
  %v7108 = vunpack.c.l.s4 1985246804
  %v7109 = vunpack.c.0.s8 %v7108
  %v7110 = vlaneseq
  %v7111 = vshrl.u32 %v7110, 7
  %v7112 = vsub.s32 %v7109, %v7111
  %v7113 = vrot.slane %v7092, %v7112
  %v7115 = vunpack.c.l.s4 839922192
  %v7116 = vunpack.c.0.s8 %v7115
  %v7117 = vlaneseq
  %v7118 = vshrl.u32 %v7117, 7
  %v7119 = vsub.s32 %v7116, %v7118
  %v7120 = vrot.slane %v7093, %v7119
  %v7122 = vunpack.c.l.s4 1985246804
  %v7123 = vunpack.c.0.s8 %v7122
  %v7124 = vlaneseq
  %v7125 = vshrl.u32 %v7124, 7
  %v7126 = vsub.s32 %v7123, %v7125
  %v7127 = vrot.slane %v7093, %v7126
  %v7129 = vunpack.c.l.s4 839922192
  %v7130 = vunpack.c.0.s8 %v7129
  %v7131 = vlaneseq
  %v7132 = vshrl.u32 %v7131, 7
  %v7133 = vsub.s32 %v7130, %v7132
  %v7134 = vrot.slane %v7094, %v7133
  %v7136 = vunpack.c.l.s4 1985246804
  %v7137 = vunpack.c.0.s8 %v7136
  %v7138 = vlaneseq
  %v7139 = vshrl.u32 %v7138, 7
  %v7140 = vsub.s32 %v7137, %v7139
  %v7141 = vrot.slane %v7094, %v7140
  %v7143 = vunpack.c.l.s4 839922192
  %v7144 = vunpack.c.0.s8 %v7143
  %v7145 = vlaneseq
  %v7146 = vshrl.u32 %v7145, 7
  %v7147 = vsub.s32 %v7144, %v7146
  %v7148 = vrot.slane %v7095, %v7147
  %v7150 = vunpack.c.l.s4 1985246804
  %v7151 = vunpack.c.0.s8 %v7150
  %v7152 = vlaneseq
  %v7153 = vshrl.u32 %v7152, 7
  %v7154 = vsub.s32 %v7151, %v7153
  %v7155 = vrot.slane %v7095, %v7154
  %v7164 = vsub.f32 %v7054, %v7106
  %v7165 = vsub.f32 %v7055, %v7113
  %v7166 = vsub.f32 %v7056, %v7120
  %v7167 = vsub.f32 %v7057, %v7127
  %v7168 = vsub.f32 %v7058, %v7134
  %v7169 = vsub.f32 %v7059, %v7141
  %v7170 = vsub.f32 %v7060, %v7148
  %v7171 = vsub.f32 %v7061, %v7155
  %v7172 = vmul.f32 %v7164, %v7164
  %v7173 = vmul.f32 %v7165, %v7165
  %v7174 = vmul.f32 %v7166, %v7166
  %v7175 = vmul.f32 %v7167, %v7167
  %v7176 = vmul.f32 %v7168, %v7168
  %v7177 = vmul.f32 %v7169, %v7169
  %v7178 = vmul.f32 %v7170, %v7170
  %v7179 = vmul.f32 %v7171, %v7171
  %v7188 = vcombine.low %v7172, %v7173
  %v7189 = vcombine.low %v7174, %v7175
  %v7190 = vcombine.low %v7176, %v7177
  %v7191 = vcombine.low %v7178, %v7179
  %v7196 = vsel %vm466, %v7188, 0.0
  %7197 = vadd.xlane.f32.xlu0 %v7196
  %v7198 = vpop.xlane.xlu0 %7197
  %v7199 = vsel %vm466, %v7189, 0.0
  %7200 = vadd.xlane.f32.xlu0 %v7199
  %v7201 = vpop.xlane.xlu0 %7200
  %v7202 = vsel %vm466, %v7190, 0.0
  %7203 = vadd.xlane.f32.xlu0 %v7202
  %v7204 = vpop.xlane.xlu0 %7203
  %v7205 = vsel %vm466, %v7191, 0.0
  %7206 = vadd.xlane.f32.xlu0 %v7205
  %v7207 = vpop.xlane.xlu0 %7206
  %v7208 = vmul.f32 %v7198, %v479
  %v7209 = vmul.f32 %v7201, %v479
  %v7210 = vmul.f32 %v7204, %v479
  %v7211 = vmul.f32 %v7207, %v479
  %v7212 = vadd.f32 %v7208, 1e-05
  %v7213 = vadd.f32 %v7209, 1e-05
  %v7214 = vadd.f32 %v7210, 1e-05
  %v7215 = vadd.f32 %v7211, 1e-05
  %v7216 = vrsqrt.pop %v7212
  %v7217 = vrsqrt.pop %v7213
  %v7218 = vrsqrt.pop %v7214
  %v7219 = vrsqrt.pop %v7215
  %v7225 = vunpack.c.l.s4 839922192
  %v7226 = vunpack.c.0.s8 %v7225
  %v7227 = vlaneseq
  %v7228 = vshrl.u32 %v7227, 7
  %v7229 = vsub.s32 %v7226, %v7228
  %v7230 = vrot.slane %v7216, %v7229
  %v7232 = vunpack.c.l.s4 1985246804
  %v7233 = vunpack.c.0.s8 %v7232
  %v7234 = vlaneseq
  %v7235 = vshrl.u32 %v7234, 7
  %v7236 = vsub.s32 %v7233, %v7235
  %v7237 = vrot.slane %v7216, %v7236
  %v7239 = vunpack.c.l.s4 839922192
  %v7240 = vunpack.c.0.s8 %v7239
  %v7241 = vlaneseq
  %v7242 = vshrl.u32 %v7241, 7
  %v7243 = vsub.s32 %v7240, %v7242
  %v7244 = vrot.slane %v7217, %v7243
  %v7246 = vunpack.c.l.s4 1985246804
  %v7247 = vunpack.c.0.s8 %v7246
  %v7248 = vlaneseq
  %v7249 = vshrl.u32 %v7248, 7
  %v7250 = vsub.s32 %v7247, %v7249
  %v7251 = vrot.slane %v7217, %v7250
  %v7253 = vunpack.c.l.s4 839922192
  %v7254 = vunpack.c.0.s8 %v7253
  %v7255 = vlaneseq
  %v7256 = vshrl.u32 %v7255, 7
  %v7257 = vsub.s32 %v7254, %v7256
  %v7258 = vrot.slane %v7218, %v7257
  %v7260 = vunpack.c.l.s4 1985246804
  %v7261 = vunpack.c.0.s8 %v7260
  %v7262 = vlaneseq
  %v7263 = vshrl.u32 %v7262, 7
  %v7264 = vsub.s32 %v7261, %v7263
  %v7265 = vrot.slane %v7218, %v7264
  %v7267 = vunpack.c.l.s4 839922192
  %v7268 = vunpack.c.0.s8 %v7267
  %v7269 = vlaneseq
  %v7270 = vshrl.u32 %v7269, 7
  %v7271 = vsub.s32 %v7268, %v7270
  %v7272 = vrot.slane %v7219, %v7271
  %v7274 = vunpack.c.l.s4 1985246804
  %v7275 = vunpack.c.0.s8 %v7274
  %v7276 = vlaneseq
  %v7277 = vshrl.u32 %v7276, 7
  %v7278 = vsub.s32 %v7275, %v7277
  %v7279 = vrot.slane %v7219, %v7278
  %v7288 = vmul.f32 %v7164, %v7230
  %v7289 = vmul.f32 %v7165, %v7237
  %v7290 = vmul.f32 %v7166, %v7244
  %v7291 = vmul.f32 %v7167, %v7251
  %v7292 = vmul.f32 %v7168, %v7258
  %v7293 = vmul.f32 %v7169, %v7265
  %v7294 = vmul.f32 %v7170, %v7272
  %v7295 = vmul.f32 %v7171, %v7279
  %v7297 = vlaneseq
  %v7298 = vshrl.u32 %v7297, 7
  %v7299 = vsub.s32 0, %v7298
  %v7300 = vrot.slane %v7062, %v7299
  %v7302 = vcombine.high %v7300, %v7300
  %v7304 = vmul.f32 %v7288, %v7300
  %v7305 = vmul.f32 %v7289, %v7302
  %v7306 = vmul.f32 %v7290, %v7300
  %v7307 = vmul.f32 %v7291, %v7302
  %v7308 = vmul.f32 %v7292, %v7300
  %v7309 = vmul.f32 %v7293, %v7302
  %v7310 = vmul.f32 %v7294, %v7300
  %v7311 = vmul.f32 %v7295, %v7302
  %v7313 = vlaneseq
  %v7314 = vshrl.u32 %v7313, 7
  %v7315 = vsub.s32 0, %v7314
  %v7316 = vrot.slane %v7063, %v7315
  %v7318 = vcombine.high %v7316, %v7316
  %v7320 = vadd.f32 %v7304, %v7316
  %v7321 = vadd.f32 %v7305, %v7318
  %v7322 = vadd.f32 %v7306, %v7316
  %v7323 = vadd.f32 %v7307, %v7318
  %v7324 = vadd.f32 %v7308, %v7316
  %v7325 = vadd.f32 %v7309, %v7318
  %v7326 = vadd.f32 %v7310, %v7316
  %v7327 = vadd.f32 %v7311, %v7318
  %v7328 = vld [vmem:[%s19] sm:$0xf]
  %v7329 = vld [vmem:[%s19 + $0x4] sm:$0xf]
  %v7330 = vld [vmem:[%s19 + $0x8] sm:$0xf]
  %v7331 = vld [vmem:[%s19 + $0xc] sm:$0xf]
  %v7340 = vcombine.low %v7320, %v7321
  %v7341 = vcombine.low %v7322, %v7323
  %v7342 = vcombine.low %v7324, %v7325
  %v7343 = vcombine.low %v7326, %v7327
  %v7348 = vpack.c.bf16 %v7341, %v7340
  %v7349 = vpack.c.bf16 %v7343, %v7342
  %v7350 = vld [vmem:[%s20] sm:$0x1]
  %v7352 = vlaneseq
  %v7353 = vshrl.u32 %v7352, 7
  %v7354 = vsub.s32 0, %v7353
  %v7355 = vrot.slane %v7350, %v7354
  %v7361 = vunpack.c.l.b16 %v7328
  %v7362 = vunpack.c.l.b16 %v7329
  %v7363 = vunpack.c.l.b16 %v7330
  %v7364 = vunpack.c.l.b16 %v7331
  %v7365 = vpack.c.b16 %v7362, %v7361
  %v7366 = vpack.c.b16 %v7364, %v7363
  %v7370 = vsel %vm466, %v7348, 0
  %v7373 = vsel %vm466, %v7349, 0
  %7375 = vmatprep.subr.bf16.mxu0 0
  %7376 = vmatpush1.bf16.msra.mxu0 %v7365
  %7377 = vmatprep.subr.bf16.mxu0 0
  %7378 = vmatpush1.bf16.msra.mxu0 %v7366
  %7379 = vmatprep.subr.bf16.mxu0 0
  %7380 = vmatpush1.bf16.msra.mxu0 0
  %7381 = vmatprep.subr.bf16.mxu0 0
  %7382 = vmatpush1.bf16.msra.mxu0 0
  %7383 = vmatprep.subr.bf16.mxu0 0
  %7384 = vmatpush1.bf16.msra.mxu0 0
  %7385 = vmatprep.subr.bf16.mxu0 0
  %7386 = vmatpush1.bf16.msra.mxu0 0
  %7387 = vmatprep.subr.bf16.mxu0 0
  %7388 = vmatpush1.bf16.msra.mxu0 0
  %7389 = vmatprep.subr.bf16.mxu0 0
  %7390 = vmatpush1.bf16.msra.mxu0 0
  %7391 = vmatprep.subr.bf16.mxu0 0
  %7392 = vmatpush1.bf16.msra.mxu0 0
  %7393 = vmatprep.subr.bf16.mxu0 0
  %7394 = vmatpush1.bf16.msra.mxu0 0
  %7395 = vmatprep.subr.bf16.mxu0 0
  %7396 = vmatpush1.bf16.msra.mxu0 0
  %7397 = vmatprep.subr.bf16.mxu0 0
  %7398 = vmatpush1.bf16.msra.mxu0 0
  %7399 = vmatprep.subr.bf16.mxu0 0
  %7400 = vmatpush1.bf16.msra.mxu0 0
  %7401 = vmatprep.subr.bf16.mxu0 0
  %7402 = vmatpush1.bf16.msra.mxu0 0
  %7403 = vmatprep.subr.bf16.mxu0 0
  %7404 = vmatpush1.bf16.msra.mxu0 0
  %7405 = vmatprep.subr.bf16.mxu0 0
  %7406 = vmatpush1.bf16.msra.mxu0 0
  %7407 = vmatprep.mubr.bf16.mxu0 0
  %7408 = vmatmul.mubr.bf16.gmra.mrb[0].mxu0 %v7370
  %v7409 = vpop.f32.mrb[0].mxu0
  %v7410 = vadd.f32 %v7355, %v7409
  %v7411 = vpop.f32.mrb[0].mxu0
  %v7412 = vpop.f32.mrb[0].mxu0
  %v7413 = vadd.f32 %v7355, %v7412
  %v7414 = vpop.f32.mrb[0].mxu0
  %7415 = vmatprep.mubr.bf16.mxu0 0
  %7416 = vmatmul.mubr.bf16.gmra.mrb[0].mxu0 %v7373
  %v7417 = vpop.f32.mrb[0].mxu0
  %v7418 = vadd.f32 %v7355, %v7417
  %v7419 = vpop.f32.mrb[0].mxu0
  %v7420 = vpop.f32.mrb[0].mxu0
  %v7421 = vadd.f32 %v7355, %v7420
  %v7422 = vpop.f32.mrb[0].mxu0
  %7423 = vdwg.mxu0
  %v7428 = vcombine.high %v7410, %v7410
  %v7429 = vcombine.high %v7413, %v7413
  %v7430 = vcombine.high %v7418, %v7418
  %v7431 = vcombine.high %v7421, %v7421
  %v7436 = vsub.f32 %v7410, %v298
  %v7437 = vsub.f32 %v7428, %v302
  %v7438 = vsub.f32 %v7413, %v306
  %v7439 = vsub.f32 %v7429, %v310
  %v7440 = vsub.f32 %v7418, %v314
  %v7441 = vsub.f32 %v7430, %v318
  %v7442 = vsub.f32 %v7421, %v322
  %v7443 = vsub.f32 %v7431, %v326
  %v7444 = vadd.f32 %v102, 1e-10
  %v7445 = vadd.f32 %v116, 1e-10
  %v7446 = vadd.f32 %v124, 1e-10
  %v7447 = vadd.f32 %v126, 1e-10
  %v7448 = vadd.f32 %v109, 1e-10
  %v7449 = vadd.f32 %v123, 1e-10
  %v7450 = vadd.f32 %v125, 1e-10
  %v7451 = vadd.f32 %v127, 1e-10
  %v7460 = vlaneseq
  %v7461 = vshrl.u32 %v7460, 7
  %v7462 = vsub.s32 0, %v7461
  %v7463 = vrot.slane %v7444, %v7462
  %v7464 = vlaneseq
  %v7465 = vshrl.u32 %v7464, 7
  %v7466 = vsub.s32 0, %v7465
  %v7467 = vrot.slane %v7445, %v7466
  %v7468 = vlaneseq
  %v7469 = vshrl.u32 %v7468, 7
  %v7470 = vsub.s32 0, %v7469
  %v7471 = vrot.slane %v7446, %v7470
  %v7472 = vlaneseq
  %v7473 = vshrl.u32 %v7472, 7
  %v7474 = vsub.s32 0, %v7473
  %v7475 = vrot.slane %v7447, %v7474
  %v7476 = vlaneseq
  %v7477 = vshrl.u32 %v7476, 7
  %v7478 = vsub.s32 0, %v7477
  %v7479 = vrot.slane %v7448, %v7478
  %v7480 = vlaneseq
  %v7481 = vshrl.u32 %v7480, 7
  %v7482 = vsub.s32 0, %v7481
  %v7483 = vrot.slane %v7449, %v7482
  %v7484 = vlaneseq
  %v7485 = vshrl.u32 %v7484, 7
  %v7486 = vsub.s32 0, %v7485
  %v7487 = vrot.slane %v7450, %v7486
  %v7488 = vlaneseq
  %v7489 = vshrl.u32 %v7488, 7
  %v7490 = vsub.s32 0, %v7489
  %v7491 = vrot.slane %v7451, %v7490
  %7492 = vset.pattern.permute.xlu0 2
  %7493 = vperm.xlu0 %7492, %v7463
  %v7494 = vpop.permute.xlu0 %7493
  %7496 = vset.pattern.permute.xlu0 2
  %7497 = vperm.xlu0 %7496, %v7467
  %v7498 = vpop.permute.xlu0 %7497
  %7500 = vset.pattern.permute.xlu0 2
  %7501 = vperm.xlu0 %7500, %v7471
  %v7502 = vpop.permute.xlu0 %7501
  %7504 = vset.pattern.permute.xlu0 2
  %7505 = vperm.xlu0 %7504, %v7475
  %v7506 = vpop.permute.xlu0 %7505
  %7508 = vset.pattern.permute.xlu0 2
  %7509 = vperm.xlu0 %7508, %v7479
  %v7510 = vpop.permute.xlu0 %7509
  %7512 = vset.pattern.permute.xlu0 2
  %7513 = vperm.xlu0 %7512, %v7483
  %v7514 = vpop.permute.xlu0 %7513
  %7516 = vset.pattern.permute.xlu0 2
  %7517 = vperm.xlu0 %7516, %v7487
  %v7518 = vpop.permute.xlu0 %7517
  %7520 = vset.pattern.permute.xlu0 2
  %7521 = vperm.xlu0 %7520, %v7491
  %v7522 = vpop.permute.xlu0 %7521
  %v7524 = vrcp.pop %v7494
  %v7525 = vmul.f32 %v7436, %v7524
  %v7526 = vrcp.pop %v7498
  %v7527 = vmul.f32 %v7437, %v7526
  %v7528 = vrcp.pop %v7502
  %v7529 = vmul.f32 %v7438, %v7528
  %v7530 = vrcp.pop %v7506
  %v7531 = vmul.f32 %v7439, %v7530
  %v7532 = vrcp.pop %v7510
  %v7533 = vmul.f32 %v7440, %v7532
  %v7534 = vrcp.pop %v7514
  %v7535 = vmul.f32 %v7441, %v7534
  %v7536 = vrcp.pop %v7518
  %v7537 = vmul.f32 %v7442, %v7536
  %v7538 = vrcp.pop %v7522
  %v7539 = vmul.f32 %v7443, %v7538
  %v7540 = vmul.f32 %v7525, %v202
  %v7541 = vmul.f32 %v7527, %v206
  %v7542 = vmul.f32 %v7529, %v210
  %v7543 = vmul.f32 %v7531, %v214
  %v7544 = vmul.f32 %v7533, %v218
  %v7545 = vmul.f32 %v7535, %v222
  %v7546 = vmul.f32 %v7537, %v226
  %v7547 = vmul.f32 %v7539, %v230
  %v7548 = vadd.f32 %v7540, %v162
  %v7549 = vadd.f32 %v7541, %v166
  %v7550 = vadd.f32 %v7542, %v170
  %v7551 = vadd.f32 %v7543, %v174
  %v7552 = vadd.f32 %v7544, %v178
  %v7553 = vadd.f32 %v7545, %v182
  %v7554 = vadd.f32 %v7546, %v186
  %v7555 = vadd.f32 %v7547, %v190
  %v7564 = vlaneseq
  %v7565 = vshrl.u32 %v7564, 7
  %v7566 = vsub.s32 0, %v7565
  %v7567 = vrot.slane %v7548, %v7566
  %v7568 = vlaneseq
  %v7569 = vshrl.u32 %v7568, 7
  %v7570 = vsub.s32 0, %v7569
  %v7571 = vrot.slane %v7549, %v7570
  %v7572 = vlaneseq
  %v7573 = vshrl.u32 %v7572, 7
  %v7574 = vsub.s32 0, %v7573
  %v7575 = vrot.slane %v7550, %v7574
  %v7576 = vlaneseq
  %v7577 = vshrl.u32 %v7576, 7
  %v7578 = vsub.s32 0, %v7577
  %v7579 = vrot.slane %v7551, %v7578
  %v7580 = vlaneseq
  %v7581 = vshrl.u32 %v7580, 7
  %v7582 = vsub.s32 0, %v7581
  %v7583 = vrot.slane %v7552, %v7582
  %v7584 = vlaneseq
  %v7585 = vshrl.u32 %v7584, 7
  %v7586 = vsub.s32 0, %v7585
  %v7587 = vrot.slane %v7553, %v7586
  %v7588 = vlaneseq
  %v7589 = vshrl.u32 %v7588, 7
  %v7590 = vsub.s32 0, %v7589
  %v7591 = vrot.slane %v7554, %v7590
  %v7592 = vlaneseq
  %v7593 = vshrl.u32 %v7592, 7
  %v7594 = vsub.s32 0, %v7593
  %v7595 = vrot.slane %v7555, %v7594
  %vm7596 = vcmask 1041409
  %v7597 = vsel %vm7596, %v7571, %v7567
  %vm7598 = vcmask 1042434
  %v7599 = vsel %vm7598, %v7575, %v7597
  %vm7600 = vcmask 1043459
  %v7601 = vsel %vm7600, %v7579, %v7599
  %vm7602 = vcmask 1044484
  %v7603 = vsel %vm7602, %v7583, %v7601
  %vm7604 = vcmask 1045509
  %v7605 = vsel %vm7604, %v7587, %v7603
  %vm7606 = vcmask 1046534
  %v7607 = vsel %vm7606, %v7591, %v7605
  %vm7608 = vcmask 1047559
  %v7609 = vsel %vm7608, %v7595, %v7607
  %v7611 = vlaneseq
  %v7612 = vshrl.u32 %v7611, 7
  %v7613 = vsub.s32 1, %v7612
  %v7614 = vrot.slane %v7548, %v7613
  %v7615 = vlaneseq
  %v7616 = vshrl.u32 %v7615, 7
  %v7617 = vsub.s32 1, %v7616
  %v7618 = vrot.slane %v7549, %v7617
  %v7619 = vlaneseq
  %v7620 = vshrl.u32 %v7619, 7
  %v7621 = vsub.s32 1, %v7620
  %v7622 = vrot.slane %v7550, %v7621
  %v7623 = vlaneseq
  %v7624 = vshrl.u32 %v7623, 7
  %v7625 = vsub.s32 1, %v7624
  %v7626 = vrot.slane %v7551, %v7625
  %v7627 = vlaneseq
  %v7628 = vshrl.u32 %v7627, 7
  %v7629 = vsub.s32 1, %v7628
  %v7630 = vrot.slane %v7552, %v7629
  %v7631 = vlaneseq
  %v7632 = vshrl.u32 %v7631, 7
  %v7633 = vsub.s32 1, %v7632
  %v7634 = vrot.slane %v7553, %v7633
  %v7635 = vlaneseq
  %v7636 = vshrl.u32 %v7635, 7
  %v7637 = vsub.s32 1, %v7636
  %v7638 = vrot.slane %v7554, %v7637
  %v7639 = vlaneseq
  %v7640 = vshrl.u32 %v7639, 7
  %v7641 = vsub.s32 1, %v7640
  %v7642 = vrot.slane %v7555, %v7641
  %v7643 = vsel %vm7596, %v7618, %v7614
  %v7644 = vsel %vm7598, %v7622, %v7643
  %v7645 = vsel %vm7600, %v7626, %v7644
  %v7646 = vsel %vm7602, %v7630, %v7645
  %v7647 = vsel %vm7604, %v7634, %v7646
  %v7648 = vsel %vm7606, %v7638, %v7647
  %v7649 = vsel %vm7608, %v7642, %v7648
  %7650 = vrot.lane.b32.xlu0 %v7649, 4
  %v7651 = vpop.permute.xlu0 %7650
  %v7653 = vlaneseq
  %v7654 = vshrl.u32 %v7653, 7
  %v7655 = vsub.s32 2, %v7654
  %v7656 = vrot.slane %v7548, %v7655
  %v7657 = vlaneseq
  %v7658 = vshrl.u32 %v7657, 7
  %v7659 = vsub.s32 2, %v7658
  %v7660 = vrot.slane %v7549, %v7659
  %v7661 = vlaneseq
  %v7662 = vshrl.u32 %v7661, 7
  %v7663 = vsub.s32 2, %v7662
  %v7664 = vrot.slane %v7550, %v7663
  %v7665 = vlaneseq
  %v7666 = vshrl.u32 %v7665, 7
  %v7667 = vsub.s32 2, %v7666
  %v7668 = vrot.slane %v7551, %v7667
  %v7669 = vlaneseq
  %v7670 = vshrl.u32 %v7669, 7
  %v7671 = vsub.s32 2, %v7670
  %v7672 = vrot.slane %v7552, %v7671
  %v7673 = vlaneseq
  %v7674 = vshrl.u32 %v7673, 7
  %v7675 = vsub.s32 2, %v7674
  %v7676 = vrot.slane %v7553, %v7675
  %v7677 = vlaneseq
  %v7678 = vshrl.u32 %v7677, 7
  %v7679 = vsub.s32 2, %v7678
  %v7680 = vrot.slane %v7554, %v7679
  %v7681 = vlaneseq
  %v7682 = vshrl.u32 %v7681, 7
  %v7683 = vsub.s32 2, %v7682
  %v7684 = vrot.slane %v7555, %v7683
  %v7685 = vsel %vm7596, %v7660, %v7656
  %v7686 = vsel %vm7598, %v7664, %v7685
  %v7687 = vsel %vm7600, %v7668, %v7686
  %v7688 = vsel %vm7602, %v7672, %v7687
  %v7689 = vsel %vm7604, %v7676, %v7688
  %v7690 = vsel %vm7606, %v7680, %v7689
  %v7691 = vsel %vm7608, %v7684, %v7690
  %7692 = vrot.lane.b32.xlu0 %v7691, 8
  %v7693 = vpop.permute.xlu0 %7692
  %v7695 = vlaneseq
  %v7696 = vshrl.u32 %v7695, 7
  %v7697 = vsub.s32 3, %v7696
  %v7698 = vrot.slane %v7548, %v7697
  %v7699 = vlaneseq
  %v7700 = vshrl.u32 %v7699, 7
  %v7701 = vsub.s32 3, %v7700
  %v7702 = vrot.slane %v7549, %v7701
  %v7703 = vlaneseq
  %v7704 = vshrl.u32 %v7703, 7
  %v7705 = vsub.s32 3, %v7704
  %v7706 = vrot.slane %v7550, %v7705
  %v7707 = vlaneseq
  %v7708 = vshrl.u32 %v7707, 7
  %v7709 = vsub.s32 3, %v7708
  %v7710 = vrot.slane %v7551, %v7709
  %v7711 = vlaneseq
  %v7712 = vshrl.u32 %v7711, 7
  %v7713 = vsub.s32 3, %v7712
  %v7714 = vrot.slane %v7552, %v7713
  %v7715 = vlaneseq
  %v7716 = vshrl.u32 %v7715, 7
  %v7717 = vsub.s32 3, %v7716
  %v7718 = vrot.slane %v7553, %v7717
  %v7719 = vlaneseq
  %v7720 = vshrl.u32 %v7719, 7
  %v7721 = vsub.s32 3, %v7720
  %v7722 = vrot.slane %v7554, %v7721
  %v7723 = vlaneseq
  %v7724 = vshrl.u32 %v7723, 7
  %v7725 = vsub.s32 3, %v7724
  %v7726 = vrot.slane %v7555, %v7725
  %v7727 = vsel %vm7596, %v7702, %v7698
  %v7728 = vsel %vm7598, %v7706, %v7727
  %v7729 = vsel %vm7600, %v7710, %v7728
  %v7730 = vsel %vm7602, %v7714, %v7729
  %v7731 = vsel %vm7604, %v7718, %v7730
  %v7732 = vsel %vm7606, %v7722, %v7731
  %v7733 = vsel %vm7608, %v7726, %v7732
  %7734 = vrot.lane.b32.xlu0 %v7733, 12
  %v7735 = vpop.permute.xlu0 %7734
  %v7737 = vsel %vm362, %v7609, %v7651
  %vm7738 = vcmask 64512
  %v7739 = vsel %vm7738, %v7737, %v7693
  %vm7740 = vcmask 97280
  %v7741 = vsel %vm7740, %v7739, %v7735
  %7742 = vst.msk [vmem:[%s21] sm:$0xff] %vm1012, %v7741
  // Predicated region
  $region86: #{model_forward.1} parent=0 // pred_check
    _
  $region87: #{model_forward.1} parent=0 // pred_check_branch
    %7744 = sbr.rel (0) target = $region89
  $region88: #{model_forward.1} parent=0 // pred_region
    _
  $region89: #{model_forward.1} parent=0 // pred_fallthru
    _
  // Predicated region
  $region90: #{model_forward.1} parent=0 // pred_check
    _
  $region91: #{model_forward.1} parent=0 // pred_check_branch
    %7746 = sbr.rel (0) target = $region93
  $region92: #{model_forward.1} parent=0 // pred_region
    _
  $region93: #{model_forward.1} parent=0 // pred_fallthru
    _

</llo_original>
